<compile_context>
chip_gen: v5e
topology: v5e:2x2
jax: 0.10.0
libtpu: 0.0.40
codegen_flags: <defaults>
</compile_context>

<pallas_src>
import jax
import jax.numpy as jnp
from jax import lax
from jax.experimental import pallas as pl
from jax.experimental.pallas import tpu as pltpu

# ----------------------------- config ---------------------------------------
BATCH = 2
NUM_CELL = 4
NN = NUM_CELL * NUM_CELL                       # 16 cells per batch row
Z_WHAT_DIM = 32
INP_CHANNEL = 3
TAU_PRES = 1.0
DEC_FILTERS = [64, 32, 16, INP_CHANNEL + 1]    # last layer = rgb + alpha
DEC_UPSCALES = [2, 2, 2, 1]                    # all conv kernels are 1x1
DEC_GROUPS = [8, 4, 2, 1]                      # last entry unused (no final norm)
GLIMPSE = 8                                    # prod(upscales)
OUT_PIX = GLIMPSE * GLIMPSE                    # 64 pixels per glimpse
OUT_LANES = OUT_PIX * DEC_FILTERS[-1]          # 256 = lane-dense glimpse width
GN_EPS = 1e-5

# ---- derived lane-dense decoder layout (activations stay 2-D (M, p*c)) ------
def _dec_layout():
    w_in, w_out, rows = [], [], [0]
    c_in, p_in = Z_WHAT_DIM, 1
    for c_out, up in zip(DEC_FILTERS, DEC_UPSCALES):
        w_in.append(p_in * c_in)
        p_out = p_in * up * up
        w_out.append(p_out * c_out)
        rows.append(rows[-1] + p_in * c_in)
        c_in, p_in = c_out, p_out
    return tuple(w_in), tuple(w_out), tuple(rows)

W_IN, W_OUT, W_ROWS = _dec_layout()            # (32,256,512,1024), (256,512,1024,256)
WPK_W = max(W_OUT)                             # 1024-wide packed weight array
N_GROUPS = tuple(DEC_GROUPS[:3])               # (8, 4, 2)
GN_DENOM = tuple(float(W_OUT[i] // DEC_GROUPS[i]) for i in range(3))  # p*cg

# packed small-constant (vector) array row layout
GT_ROW = (0, 8, 12)                            # group-indicator matrices (8/4/2 rows)
B_ROW0, G_ROW0, BE_ROW0 = 14, 18, 21           # biases / gammas / betas
VPK_ROWS, VPK_W = 24, WPK_W

# packed per-batch sampler input/output lane layout
ROW_W = 128                                    # where(64) | depth(16) | pad  /  logits|u|offset|pad
LAT_W = 256                                    # z_pres(16) z_where(64) z_depth(16) z_where_origin(64) pad(96)


# --------------------- fused sampler + decoder kernel ------------------------
def local_sampler_kernel(row_ref, what_ref, wpk_ref, vpk_ref,
                         lat_ref, zwhat_ref, glimpse_ref):
    nn = NN

    # ---------------- latent sampling on one packed 128-lane row block -------
    # rows of row_ref: 0=mean, 1=std, 2=eps, 3=misc(logits|u|offset|pad)
    gauss = row_ref[0] + row_ref[1] * row_ref[2]          # Normal rsample, (R, 128)
    misc = row_ref[3]

    zw = gauss[:, 0:4 * nn]                               # raw z_where sample (R, 64)
    z_depth = gauss[:, 4 * nn:5 * nn]                     # (R, 16)

    logits = misc[:, 0:nn]
    u = misc[:, nn:2 * nn]
    offset = misc[:, 2 * nn:4 * nn]                       # baked-in offset buffer

    # RelaxedBernoulli(logits, temperature=tau).rsample()
    z_pres = jax.nn.sigmoid((logits + jnp.log(u) - jnp.log(1.0 - u)) / TAU_PRES)

    # GNM z_where transform
    scale_raw = zw[:, 0:nn]
    ratio_raw = zw[:, nn:2 * nn]
    shift_raw = zw[:, 2 * nn:4 * nn]
    s = jax.nn.sigmoid(scale_raw)
    e_pos = jnp.exp(0.5 * ratio_raw)       # sqrt(exp(r)) without overflow, EUP slot
    e_neg = jnp.exp(-0.5 * ratio_raw)      # 1/sqrt(exp(r)) without a vector divide
    shift = (2.0 / NUM_CELL) * (offset + 0.5 + jnp.tanh(shift_raw)) - 1.0
    z_where = jnp.concatenate([s * e_neg, s * e_pos, shift], axis=1)

    pad = jnp.zeros((z_pres.shape[0], LAT_W - 10 * nn), jnp.float32)
    lat_ref[...] = jnp.concatenate([z_pres, z_where, z_depth, zw, pad], axis=1)
    # TODO(synk): phase_use_mode=True branch (use means / hard z_pres) not implemented.

    # ---------------- z_what sample == decoder input (already cell-major) ----
    x = what_ref[0] + what_ref[1] * what_ref[2]           # (M, 32), M = rows*16 cells
    zwhat_ref[...] = x

    # ---------------- decoder: lane-dense block-diagonal conv stack ----------
    # Every layer: (M, p_in*c_in) @ block-diag W -> (M, p_out*c_out), columns in
    # hierarchical (pixel, channel) PixelShuffle order; no reshapes anywhere.
    for li in range(3):
        w = wpk_ref[W_ROWS[li]:W_ROWS[li + 1], 0:W_OUT[li]]             # bf16
        bias = vpk_ref[B_ROW0 + li:B_ROW0 + li + 1, 0:W_OUT[li]]        # (1, W) f32
        h = jnp.dot(x.astype(jnp.bfloat16), w,
                    preferred_element_type=jnp.float32) + bias          # conv+shuffle

        # GroupNorm via 0/1 indicator matmuls (stats stay f32, all lane-dense).
        gt = vpk_ref[GT_ROW[li]:GT_ROW[li] + N_GROUPS[li], 0:W_OUT[li]] # (g, W)
        inv = 1.0 / GN_DENOM[li]
        mean = lax.dot_general(h, gt, (((1,), (1,)), ((), ())),
                               preferred_element_type=jnp.float32) * inv        # (M, g)
        d = h - jnp.dot(mean, gt, preferred_element_type=jnp.float32)
        var = lax.dot_general(d * d, gt, (((1,), (1,)), ((), ())),
                              preferred_element_type=jnp.float32) * inv
        rstd = jnp.dot(lax.rsqrt(var + GN_EPS), gt,
                       preferred_element_type=jnp.float32)                      # (M, W)
        gamma = vpk_ref[G_ROW0 + li:G_ROW0 + li + 1, 0:W_OUT[li]]
        beta = vpk_ref[BE_ROW0 + li:BE_ROW0 + li + 1, 0:W_OUT[li]]
        y = d * rstd * gamma + beta
        x = jnp.where(y > 0.0, y, jnp.exp(jnp.minimum(y, 0.0)) - 1.0)   # CELU(1)

    # Final 1x1 conv (no upscale / norm / act); sigmoid over rgb and alpha alike.
    w3 = wpk_ref[W_ROWS[3]:W_ROWS[4], 0:W_OUT[3]]
    b3 = vpk_ref[B_ROW0 + 3:B_ROW0 + 4, 0:W_OUT[3]]
    h = jnp.dot(x.astype(jnp.bfloat16), w3, preferred_element_type=jnp.float32) + b3
    glimpse_ref[...] = jax.nn.sigmoid(h)                  # (M, 256) unmasked store


# ------------------------------ constants ------------------------------------
def init_decoder_consts(key):
    """Build the two packed constant arrays:
       wpk (bf16): the 4 block-diagonal, PixelShuffle-permuted conv weights.
       vpk (f32) : group-indicator matrices + tiled biases / gammas / betas."""
    w_blocks, b_rows, g_rows, be_rows, gt_rows = [], [], [], [], []
    c_in, p_in = Z_WHAT_DIM, 1
    for li, (c_out, up) in enumerate(zip(DEC_FILTERS, DEC_UPSCALES)):
        key, k1, k2 = jax.random.split(key, 3)
        full_out = c_out * up * up
        w = jax.random.normal(k1, (full_out, c_in), jnp.float32) / jnp.sqrt(c_in)
        bias = 0.01 * jax.random.normal(k2, (full_out,), jnp.float32)
        if up > 1:
            # torch conv-out ordering (c*r^2 + s) -> sub-pixel-major (s*C + c) so a
            # plain matmul realizes Conv1x1 + PixelShuffle at once.
            w = w.reshape(c_out, up * up, c_in).transpose(1, 0, 2).reshape(full_out, c_in)
            bias = bias.reshape(c_out, up * up).T.reshape(full_out)
        wp = w.T                                                    # (c_in, full_out)
        w_blocks.append(jnp.kron(jnp.eye(p_in, dtype=jnp.float32), wp))
        b_rows.append(jnp.tile(bias, p_in))                         # width = p_out*c_out
        p_out = p_in * up * up
        if li < 3:
            g, width = DEC_GROUPS[li], p_out * c_out
            cg = c_out // g
            ch = jnp.arange(width) % c_out
            gt_rows.append((ch[None, :] // cg == jnp.arange(g)[:, None]).astype(jnp.float32))
            g_rows.append(jnp.ones((width,), jnp.float32))          # nn.GroupNorm defaults
            be_rows.append(jnp.zeros((width,), jnp.float32))
        c_in, p_in = c_out, p_out

    wpk = jnp.concatenate(
        [jnp.pad(wb, ((0, 0), (0, WPK_W - wb.shape[1]))) for wb in w_blocks],
        axis=0).astype(jnp.bfloat16)
    assert wpk.shape == (W_ROWS[-1], WPK_W)

    def _row(v):
        return jnp.pad(v, (0, VPK_W - v.shape[0]))[None, :]

    vrows = [jnp.pad(gt, ((0, 0), (0, VPK_W - gt.shape[1]))) for gt in gt_rows]
    vrows += [_row(v) for v in b_rows] + [_row(v) for v in g_rows] + [_row(v) for v in be_rows]
    vpk = jnp.concatenate(vrows, axis=0)
    assert vpk.shape == (VPK_ROWS, VPK_W)
    return wpk, vpk


# ------------------------------ wrappers -------------------------------------
def unscramble_pixels(y):
    """(M, 64, C) hierarchical sub-pixel order -> (M, C, 8, 8) true spatial order."""
    m, _, c = y.shape
    y = y.reshape(m, 2, 2, 2, 2, 2, 2, c)            # (dy0,dx0,dy1,dx1,dy2,dx2)
    y = y.transpose(0, 7, 1, 3, 5, 2, 4, 6)          # (M, C, dy0,dy1,dy2, dx0,dx1,dx2)
    return y.reshape(m, c, GLIMPSE, GLIMPSE)


def local_sampler_forward(ss, rand, dec_consts, rows_per_step=None):
    (p_pres_logits, p_where_mean, p_where_std, p_depth_mean, p_depth_std,
     p_what_mean, p_what_std) = ss
    u_pres, eps_where, eps_depth, eps_what = rand
    wpk, vpk = dec_consts
    b, n, nn = p_pres_logits.shape[0], NUM_CELL, NN

    # Default: fold the whole batch into one grid step (overhead-bound kernel).
    # For large B on v7x pick rows_per_step = ceil(B/2) so each TC gets a step.
    rps = b if rows_per_step is None else rows_per_step
    assert b % rps == 0
    grid = (b // rps,)

    # offset buffer: stack(meshgrid(arange,arange)[::-1]) flattened = [jj, ii].
    ii, jj = jnp.meshgrid(jnp.arange(n, dtype=jnp.float32),
                          jnp.arange(n, dtype=jnp.float32), indexing="ij")
    offset = jnp.concatenate([jj.reshape(-1), ii.reshape(-1)])       # (32,)

    def chflat(x):                       # (B, C, n, n) -> (B, C*nn), channel-major
        return x.reshape(b, -1)

    pad_g = jnp.zeros((b, ROW_W - 5 * nn), jnp.float32)
    pad_m = jnp.zeros((b, ROW_W - 4 * nn), jnp.float32)
    row_pack = jnp.stack([
        jnp.concatenate([chflat(p_where_mean), chflat(p_depth_mean), pad_g], axis=1),
        jnp.concatenate([chflat(p_where_std), chflat(p_depth_std), pad_g], axis=1),
        jnp.concatenate([chflat(eps_where), chflat(eps_depth), pad_g], axis=1),
        jnp.concatenate([chflat(p_pres_logits), chflat(u_pres),
                         jnp.broadcast_to(offset[None], (b, 2 * nn)), pad_m], axis=1),
    ], axis=0)                                                       # (4, B, 128)

    def cellmajor(x):                    # (B, 32, n, n) -> (B*nn, 32)
        return x.transpose(0, 2, 3, 1).reshape(b * nn, Z_WHAT_DIM)

    what_pack = jnp.stack([cellmajor(p_what_mean), cellmajor(p_what_std),
                           cellmajor(eps_what)], axis=0)             # (3, B*nn, 32)

    out_shapes = (
        jax.ShapeDtypeStruct((b, LAT_W), jnp.float32),               # packed latents
        jax.ShapeDtypeStruct((b * nn, Z_WHAT_DIM), jnp.float32),     # z_what (cell-major)
        jax.ShapeDtypeStruct((b * nn, OUT_LANES), jnp.float32),      # glimpses
    )
    grid_spec = pltpu.PrefetchScalarGridSpec(
        num_scalar_prefetch=0,
        grid=grid,
        in_specs=[
            pl.BlockSpec((4, rps, ROW_W), lambda i: (0, i, 0)),
            pl.BlockSpec((3, rps * nn, Z_WHAT_DIM), lambda i: (0, i, 0)),
            pl.BlockSpec(wpk.shape, lambda i: (0, 0)),
            pl.BlockSpec(vpk.shape, lambda i: (0, 0)),
        ],
        out_specs=(
            pl.BlockSpec((rps, LAT_W), lambda i: (i, 0)),
            pl.BlockSpec((rps * nn, Z_WHAT_DIM), lambda i: (i, 0)),
            pl.BlockSpec((rps * nn, OUT_LANES), lambda i: (i, 0)),
        ),
    )
    lat, z_what_cm, dec = pl.pallas_call(
        local_sampler_kernel,
        out_shape=out_shapes,
        grid_spec=grid_spec,
        compiler_params=pltpu.CompilerParams(
            dimension_semantics=("parallel",)),
    )(row_pack, what_pack, wpk, vpk)

    # free XLA slices / reshapes back to the module's NCHW latent layout
    z_pres = lat[:, 0:nn].reshape(b, 1, n, n)
    z_where = lat[:, nn:5 * nn].reshape(b, 4, n, n)
    z_depth = lat[:, 5 * nn:6 * nn].reshape(b, 1, n, n)
    z_where_origin = lat[:, 6 * nn:10 * nn].reshape(b, 4, n, n)
    z_what = z_what_cm.reshape(b, nn, Z_WHAT_DIM).transpose(0, 2, 1).reshape(
        b, Z_WHAT_DIM, n, n)

    dec = unscramble_pixels(dec.reshape(b * nn, OUT_PIX, DEC_FILTERS[-1]))
    o = dec[:, :INP_CHANNEL]                         # phase_overlap & inp_channel==3
    a = dec[:, INP_CHANNEL:]
    return [o, a], [z_pres, z_where, z_depth, z_what, z_where_origin]


# -------------------------------- main ---------------------------------------
if __name__ == "__main__":
    key = jax.random.PRNGKey(0)
    ks = jax.random.split(key, 13)
    b, n, d = BATCH, NUM_CELL, Z_WHAT_DIM

    p_pres_logits = jax.random.normal(ks[0], (b, 1, n, n), jnp.float32)
    p_where_mean = jax.random.normal(ks[1], (b, 4, n, n), jnp.float32)
    p_where_std = jax.nn.softplus(jax.random.normal(ks[2], (b, 4, n, n))) + 1e-4
    p_depth_mean = jax.random.normal(ks[3], (b, 1, n, n), jnp.float32)
    p_depth_std = jax.nn.softplus(jax.random.normal(ks[4], (b, 1, n, n))) + 1e-4
    p_what_mean = jax.random.normal(ks[5], (b, d, n, n), jnp.float32)
    p_what_std = jax.nn.softplus(jax.random.normal(ks[6], (b, d, n, n))) + 1e-4
    ss = [p_pres_logits, p_where_mean, p_where_std, p_depth_mean, p_depth_std,
          p_what_mean, p_what_std]

    # reparameterization noise (generated host-side; consumed inside the kernel)
    u_pres = jax.random.uniform(ks[7], (b, 1, n, n), jnp.float32,
                                minval=1e-6, maxval=1.0 - 1e-6)
    eps_where = jax.random.normal(ks[8], (b, 4, n, n), jnp.float32)
    eps_depth = jax.random.normal(ks[9], (b, 1, n, n), jnp.float32)
    eps_what = jax.random.normal(ks[10], (b, d, n, n), jnp.float32)
    rand = (u_pres, eps_where, eps_depth, eps_what)

    dec_consts = init_decoder_consts(ks[11])

    pa, lv = local_sampler_forward(ss, rand, dec_consts)
    jax.block_until_ready(pa)
    jax.block_until_ready(lv)

    o, a = pa
    z_pres, z_where, z_depth, z_what, z_where_origin = lv
    assert o.shape == (b * n * n, INP_CHANNEL, GLIMPSE, GLIMPSE)
    assert a.shape == (b * n * n, 1, GLIMPSE, GLIMPSE)
    assert z_pres.shape == (b, 1, n, n) and z_depth.shape == (b, 1, n, n)
    assert z_where.shape == (b, 4, n, n) and z_where_origin.shape == (b, 4, n, n)
    assert z_what.shape == (b, d, n, n)
    assert bool(jnp.isfinite(o).all()) and bool(jnp.isfinite(z_where).all())
    assert bool((o >= 0).all() and (o <= 1).all())
    print("KERNEL_OK")
</pallas_src>

<mosaic_0001>
module attributes {stable_mosaic.version = 11 : i64} {
  func.func @local_sampler_kernel(%arg0: i32, %arg1: memref<4x2x128xf32, #tpu.memory_space<vmem>>, %arg2: memref<3x32x32xf32, #tpu.memory_space<vmem>>, %arg3: memref<1824x1024xbf16, #tpu.memory_space<vmem>>, %arg4: memref<24x1024xf32, #tpu.memory_space<vmem>>, %arg5: memref<2x256xf32, #tpu.memory_space<vmem>>, %arg6: memref<32x32xf32, #tpu.memory_space<vmem>>, %arg7: memref<32x256xf32, #tpu.memory_space<vmem>>) attributes {dimension_semantics = [#tpu.dimension_semantics<parallel>], iteration_bounds = array<i64: 1>, scalar_prefetch = 0 : i64, scratch_operands = 0 : i64, tpu.core_type = #tpu.core_type<tc>, window_params = [{transform_indices = @transform_0, window_bounds = array<i64: 4, 2, 128>}, {transform_indices = @transform_1, window_bounds = array<i64: 3, 32, 32>}, {pipeline_mode = #tpu.pipeline_mode<synchronous>, transform_indices = @transform_2, window_bounds = array<i64: 1824, 1024>}, {pipeline_mode = #tpu.pipeline_mode<synchronous>, transform_indices = @transform_3, window_bounds = array<i64: 24, 1024>}, {transform_indices = @transform_4, window_bounds = array<i64: 2, 256>}, {transform_indices = @transform_5, window_bounds = array<i64: 32, 32>}, {transform_indices = @transform_6, window_bounds = array<i64: 32, 256>}]} {
    %c0 = arith.constant 0 : index
    %c0_0 = arith.constant 0 : index
    %c0_1 = arith.constant 0 : index
    %0 = vector.load %arg1[%c0, %c0_0, %c0_1] : memref<4x2x128xf32, #tpu.memory_space<vmem>>, vector<1x2x128xf32>
    %1 = vector.shape_cast %0 : vector<1x2x128xf32> to vector<2x128xf32>
    %c1 = arith.constant 1 : index
    %c0_2 = arith.constant 0 : index
    %c0_3 = arith.constant 0 : index
    %2 = vector.load %arg1[%c1, %c0_2, %c0_3] : memref<4x2x128xf32, #tpu.memory_space<vmem>>, vector<1x2x128xf32>
    %3 = vector.shape_cast %2 : vector<1x2x128xf32> to vector<2x128xf32>
    %c2 = arith.constant 2 : index
    %c0_4 = arith.constant 0 : index
    %c0_5 = arith.constant 0 : index
    %4 = vector.load %arg1[%c2, %c0_4, %c0_5] : memref<4x2x128xf32, #tpu.memory_space<vmem>>, vector<1x2x128xf32>
    %5 = vector.shape_cast %4 : vector<1x2x128xf32> to vector<2x128xf32>
    %6 = arith.mulf %3, %5 : vector<2x128xf32>
    %7 = arith.addf %1, %6 : vector<2x128xf32>
    %c3 = arith.constant 3 : index
    %c0_6 = arith.constant 0 : index
    %c0_7 = arith.constant 0 : index
    %8 = vector.load %arg1[%c3, %c0_6, %c0_7] : memref<4x2x128xf32, #tpu.memory_space<vmem>>, vector<1x2x128xf32>
    %9 = vector.shape_cast %8 : vector<1x2x128xf32> to vector<2x128xf32>
    %10 = vector.extract_strided_slice %7 {offsets = [0, 0], sizes = [2, 64], strides = [1, 1]} : vector<2x128xf32> to vector<2x64xf32>
    %11 = vector.extract_strided_slice %7 {offsets = [0, 64], sizes = [2, 16], strides = [1, 1]} : vector<2x128xf32> to vector<2x16xf32>
    %12 = vector.extract_strided_slice %9 {offsets = [0, 0], sizes = [2, 16], strides = [1, 1]} : vector<2x128xf32> to vector<2x16xf32>
    %13 = vector.extract_strided_slice %9 {offsets = [0, 16], sizes = [2, 16], strides = [1, 1]} : vector<2x128xf32> to vector<2x16xf32>
    %14 = vector.extract_strided_slice %9 {offsets = [0, 32], sizes = [2, 32], strides = [1, 1]} : vector<2x128xf32> to vector<2x32xf32>
    %15 = math.log %13 : vector<2x16xf32>
    %16 = arith.addf %12, %15 : vector<2x16xf32>
    %cst = arith.constant 1.000000e+00 : f32
    %17 = vector.broadcast %cst : f32 to vector<2x16xf32>
    %18 = arith.subf %17, %13 : vector<2x16xf32>
    %19 = math.log %18 : vector<2x16xf32>
    %20 = arith.subf %16, %19 : vector<2x16xf32>
    %cst_8 = arith.constant 1.000000e+00 : f32
    %21 = vector.broadcast %cst_8 : f32 to vector<2x16xf32>
    %22 = arith.divf %20, %21 : vector<2x16xf32>
    %23 = arith.negf %22 : vector<2x16xf32>
    %24 = math.exp %23 : vector<2x16xf32>
    %cst_9 = arith.constant 1.000000e+00 : f32
    %25 = vector.broadcast %cst_9 : f32 to vector<2x16xf32>
    %26 = arith.addf %25, %24 : vector<2x16xf32>
    %27 = arith.divf %25, %26 : vector<2x16xf32>
    %28 = vector.extract_strided_slice %10 {offsets = [0, 0], sizes = [2, 16], strides = [1, 1]} : vector<2x64xf32> to vector<2x16xf32>
    %29 = vector.extract_strided_slice %10 {offsets = [0, 16], sizes = [2, 16], strides = [1, 1]} : vector<2x64xf32> to vector<2x16xf32>
    %30 = vector.extract_strided_slice %10 {offsets = [0, 32], sizes = [2, 32], strides = [1, 1]} : vector<2x64xf32> to vector<2x32xf32>
    %31 = arith.negf %28 : vector<2x16xf32>
    %32 = math.exp %31 : vector<2x16xf32>
    %cst_10 = arith.constant 1.000000e+00 : f32
    %33 = vector.broadcast %cst_10 : f32 to vector<2x16xf32>
    %34 = arith.addf %33, %32 : vector<2x16xf32>
    %35 = arith.divf %33, %34 : vector<2x16xf32>
    %cst_11 = arith.constant 5.000000e-01 : f32
    %36 = vector.broadcast %cst_11 : f32 to vector<2x16xf32>
    %37 = arith.mulf %36, %29 : vector<2x16xf32>
    %38 = math.exp %37 : vector<2x16xf32>
    %cst_12 = arith.constant -5.000000e-01 : f32
    %39 = vector.broadcast %cst_12 : f32 to vector<2x16xf32>
    %40 = arith.mulf %39, %29 : vector<2x16xf32>
    %41 = math.exp %40 : vector<2x16xf32>
    %cst_13 = arith.constant 5.000000e-01 : f32
    %42 = vector.broadcast %cst_13 : f32 to vector<2x32xf32>
    %43 = arith.addf %14, %42 : vector<2x32xf32>
    %44 = math.tanh %30 : vector<2x32xf32>
    %45 = arith.addf %43, %44 : vector<2x32xf32>
    %cst_14 = arith.constant 5.000000e-01 : f32
    %46 = vector.broadcast %cst_14 : f32 to vector<2x32xf32>
    %47 = arith.mulf %46, %45 : vector<2x32xf32>
    %cst_15 = arith.constant 1.000000e+00 : f32
    %48 = vector.broadcast %cst_15 : f32 to vector<2x32xf32>
    %49 = arith.subf %47, %48 : vector<2x32xf32>
    %50 = arith.mulf %35, %41 : vector<2x16xf32>
    %51 = arith.mulf %35, %38 : vector<2x16xf32>
    %52 = tpu.concatenate %50, %51, %49 in 1 : vector<2x16xf32>, vector<2x16xf32>, vector<2x32xf32> -> vector<2x64xf32>
    %cst_16 = arith.constant 0.000000e+00 : f32
    %53 = vector.broadcast %cst_16 : f32 to vector<2x96xf32>
    %54 = tpu.concatenate %27, %52, %11, %10, %53 in 1 : vector<2x16xf32>, vector<2x64xf32>, vector<2x16xf32>, vector<2x64xf32>, vector<2x96xf32> -> vector<2x256xf32>
    %c0_17 = arith.constant 0 : index
    %c0_18 = arith.constant 0 : index
    %55 = vector.load %arg5[%c0_17, %c0_18] : memref<2x256xf32, #tpu.memory_space<vmem>>, vector<2x256xf32>
    tpu.vector_store %arg5[%c0_17, %c0_18], %54 {strides = array<i32>} : memref<2x256xf32, #tpu.memory_space<vmem>>, vector<2x256xf32>,
    %c0_19 = arith.constant 0 : index
    %c0_20 = arith.constant 0 : index
    %c0_21 = arith.constant 0 : index
    %56 = vector.load %arg2[%c0_19, %c0_20, %c0_21] : memref<3x32x32xf32, #tpu.memory_space<vmem>>, vector<1x32x32xf32>
    %57 = vector.shape_cast %56 : vector<1x32x32xf32> to vector<32x32xf32>
    %c1_22 = arith.constant 1 : index
    %c0_23 = arith.constant 0 : index
    %c0_24 = arith.constant 0 : index
    %58 = vector.load %arg2[%c1_22, %c0_23, %c0_24] : memref<3x32x32xf32, #tpu.memory_space<vmem>>, vector<1x32x32xf32>
    %59 = vector.shape_cast %58 : vector<1x32x32xf32> to vector<32x32xf32>
    %c2_25 = arith.constant 2 : index
    %c0_26 = arith.constant 0 : index
    %c0_27 = arith.constant 0 : index
    %60 = vector.load %arg2[%c2_25, %c0_26, %c0_27] : memref<3x32x32xf32, #tpu.memory_space<vmem>>, vector<1x32x32xf32>
    %61 = vector.shape_cast %60 : vector<1x32x32xf32> to vector<32x32xf32>
    %62 = arith.mulf %59, %61 : vector<32x32xf32>
    %63 = arith.addf %57, %62 : vector<32x32xf32>
    %c0_28 = arith.constant 0 : index
    %c0_29 = arith.constant 0 : index
    %64 = vector.load %arg6[%c0_28, %c0_29] : memref<32x32xf32, #tpu.memory_space<vmem>>, vector<32x32xf32>
    tpu.vector_store %arg6[%c0_28, %c0_29], %63 {strides = array<i32>} : memref<32x32xf32, #tpu.memory_space<vmem>>, vector<32x32xf32>,
    %c0_30 = arith.constant 0 : index
    %c0_31 = arith.constant 0 : index
    %65 = vector.load %arg3[%c0_30, %c0_31] : memref<1824x1024xbf16, #tpu.memory_space<vmem>>, vector<32x256xbf16>
    %c14 = arith.constant 14 : index
    %c0_32 = arith.constant 0 : index
    %66 = vector.load %arg4[%c14, %c0_32] : memref<24x1024xf32, #tpu.memory_space<vmem>>, vector<1x256xf32>
    %67 = arith.truncf %63 : vector<32x32xf32> to vector<32x32xbf16>
    %cst_33 = arith.constant dense<0.000000e+00> : vector<32x256xf32>
    %68 = tpu.matmul %67, %65, %cst_33 {dimension_numbers = #tpu.dot_dimension_numbers<[1], [0], [0], [1], [0, 0, 1, 1], [], []>} : vector<32x32xbf16>, vector<32x256xbf16>, vector<32x256xf32> -> vector<32x256xf32>
    %69 = vector.broadcast %66 : vector<1x256xf32> to vector<32x256xf32>
    %70 = arith.addf %68, %69 : vector<32x256xf32>
    %c0_34 = arith.constant 0 : index
    %c0_35 = arith.constant 0 : index
    %71 = vector.load %arg4[%c0_34, %c0_35] : memref<24x1024xf32, #tpu.memory_space<vmem>>, vector<8x256xf32>
    %cst_36 = arith.constant dense<0.000000e+00> : vector<32x8xf32>
    %72 = tpu.matmul %70, %71, %cst_36 {dimension_numbers = #tpu.dot_dimension_numbers<[1], [1], [0], [0], [0, 0, 1, 0], [], []>} : vector<32x256xf32>, vector<8x256xf32>, vector<32x8xf32> -> vector<32x8xf32>
    %cst_37 = arith.constant 3.125000e-02 : f32
    %73 = vector.broadcast %cst_37 : f32 to vector<32x8xf32>
    %74 = arith.mulf %72, %73 : vector<32x8xf32>
    %cst_38 = arith.constant dense<0.000000e+00> : vector<32x256xf32>
    %75 = tpu.matmul %74, %71, %cst_38 {dimension_numbers = #tpu.dot_dimension_numbers<[1], [0], [0], [1], [0, 0, 1, 1], [], []>} : vector<32x8xf32>, vector<8x256xf32>, vector<32x256xf32> -> vector<32x256xf32>
    %76 = arith.subf %70, %75 : vector<32x256xf32>
    %77 = arith.mulf %76, %76 : vector<32x256xf32>
    %cst_39 = arith.constant dense<0.000000e+00> : vector<32x8xf32>
    %78 = tpu.matmul %77, %71, %cst_39 {dimension_numbers = #tpu.dot_dimension_numbers<[1], [1], [0], [0], [0, 0, 1, 0], [], []>} : vector<32x256xf32>, vector<8x256xf32>, vector<32x8xf32> -> vector<32x8xf32>
    %cst_40 = arith.constant 3.125000e-02 : f32
    %79 = vector.broadcast %cst_40 : f32 to vector<32x8xf32>
    %80 = arith.mulf %78, %79 : vector<32x8xf32>
    %cst_41 = arith.constant 9.99999974E-6 : f32
    %81 = vector.broadcast %cst_41 : f32 to vector<32x8xf32>
    %82 = arith.addf %80, %81 : vector<32x8xf32>
    %83 = math.rsqrt %82 : vector<32x8xf32>
    %cst_42 = arith.constant dense<0.000000e+00> : vector<32x256xf32>
    %84 = tpu.matmul %83, %71, %cst_42 {dimension_numbers = #tpu.dot_dimension_numbers<[1], [0], [0], [1], [0, 0, 1, 1], [], []>} : vector<32x8xf32>, vector<8x256xf32>, vector<32x256xf32> -> vector<32x256xf32>
    %c18 = arith.constant 18 : index
    %c0_43 = arith.constant 0 : index
    %85 = vector.load %arg4[%c18, %c0_43] : memref<24x1024xf32, #tpu.memory_space<vmem>>, vector<1x256xf32>
    %c21 = arith.constant 21 : index
    %c0_44 = arith.constant 0 : index
    %86 = vector.load %arg4[%c21, %c0_44] : memref<24x1024xf32, #tpu.memory_space<vmem>>, vector<1x256xf32>
    %87 = arith.mulf %76, %84 : vector<32x256xf32>
    %88 = vector.broadcast %85 : vector<1x256xf32> to vector<32x256xf32>
    %89 = arith.mulf %87, %88 : vector<32x256xf32>
    %90 = vector.broadcast %86 : vector<1x256xf32> to vector<32x256xf32>
    %91 = arith.addf %89, %90 : vector<32x256xf32>
    %cst_45 = arith.constant 0.000000e+00 : f32
    %92 = vector.broadcast %cst_45 : f32 to vector<32x256xf32>
    %93 = arith.cmpf ogt, %91, %92 : vector<32x256xf32>
    %cst_46 = arith.constant 0.000000e+00 : f32
    %94 = vector.broadcast %cst_46 : f32 to vector<32x256xf32>
    %95 = arith.minimumf %91, %94 : vector<32x256xf32>
    %96 = math.exp %95 : vector<32x256xf32>
    %cst_47 = arith.constant 1.000000e+00 : f32
    %97 = vector.broadcast %cst_47 : f32 to vector<32x256xf32>
    %98 = arith.subf %96, %97 : vector<32x256xf32>
    %99 = arith.select %93, %91, %98 : vector<32x256xi1>, vector<32x256xf32>
    %c32 = arith.constant 32 : index
    %c0_48 = arith.constant 0 : index
    %100 = vector.load %arg3[%c32, %c0_48] : memref<1824x1024xbf16, #tpu.memory_space<vmem>>, vector<256x512xbf16>
    %c15 = arith.constant 15 : index
    %c0_49 = arith.constant 0 : index
    %101 = vector.load %arg4[%c15, %c0_49] : memref<24x1024xf32, #tpu.memory_space<vmem>>, vector<1x512xf32>
    %102 = arith.truncf %99 : vector<32x256xf32> to vector<32x256xbf16>
    %cst_50 = arith.constant dense<0.000000e+00> : vector<32x512xf32>
    %103 = tpu.matmul %102, %100, %cst_50 {dimension_numbers = #tpu.dot_dimension_numbers<[1], [0], [0], [1], [0, 0, 1, 1], [], []>} : vector<32x256xbf16>, vector<256x512xbf16>, vector<32x512xf32> -> vector<32x512xf32>
    %104 = vector.broadcast %101 : vector<1x512xf32> to vector<32x512xf32>
    %105 = arith.addf %103, %104 : vector<32x512xf32>
    %c8 = arith.constant 8 : index
    %c0_51 = arith.constant 0 : index
    %106 = vector.load %arg4[%c8, %c0_51] : memref<24x1024xf32, #tpu.memory_space<vmem>>, vector<4x512xf32>
    %cst_52 = arith.constant dense<0.000000e+00> : vector<32x4xf32>
    %107 = tpu.matmul %105, %106, %cst_52 {dimension_numbers = #tpu.dot_dimension_numbers<[1], [1], [0], [0], [0, 0, 1, 0], [], []>} : vector<32x512xf32>, vector<4x512xf32>, vector<32x4xf32> -> vector<32x4xf32>
    %cst_53 = arith.constant 7.812500e-03 : f32
    %108 = vector.broadcast %cst_53 : f32 to vector<32x4xf32>
    %109 = arith.mulf %107, %108 : vector<32x4xf32>
    %cst_54 = arith.constant dense<0.000000e+00> : vector<32x512xf32>
    %110 = tpu.matmul %109, %106, %cst_54 {dimension_numbers = #tpu.dot_dimension_numbers<[1], [0], [0], [1], [0, 0, 1, 1], [], []>} : vector<32x4xf32>, vector<4x512xf32>, vector<32x512xf32> -> vector<32x512xf32>
    %111 = arith.subf %105, %110 : vector<32x512xf32>
    %112 = arith.mulf %111, %111 : vector<32x512xf32>
    %cst_55 = arith.constant dense<0.000000e+00> : vector<32x4xf32>
    %113 = tpu.matmul %112, %106, %cst_55 {dimension_numbers = #tpu.dot_dimension_numbers<[1], [1], [0], [0], [0, 0, 1, 0], [], []>} : vector<32x512xf32>, vector<4x512xf32>, vector<32x4xf32> -> vector<32x4xf32>
    %cst_56 = arith.constant 7.812500e-03 : f32
    %114 = vector.broadcast %cst_56 : f32 to vector<32x4xf32>
    %115 = arith.mulf %113, %114 : vector<32x4xf32>
    %cst_57 = arith.constant 9.99999974E-6 : f32
    %116 = vector.broadcast %cst_57 : f32 to vector<32x4xf32>
    %117 = arith.addf %115, %116 : vector<32x4xf32>
    %118 = math.rsqrt %117 : vector<32x4xf32>
    %cst_58 = arith.constant dense<0.000000e+00> : vector<32x512xf32>
    %119 = tpu.matmul %118, %106, %cst_58 {dimension_numbers = #tpu.dot_dimension_numbers<[1], [0], [0], [1], [0, 0, 1, 1], [], []>} : vector<32x4xf32>, vector<4x512xf32>, vector<32x512xf32> -> vector<32x512xf32>
    %c19 = arith.constant 19 : index
    %c0_59 = arith.constant 0 : index
    %120 = vector.load %arg4[%c19, %c0_59] : memref<24x1024xf32, #tpu.memory_space<vmem>>, vector<1x512xf32>
    %c22 = arith.constant 22 : index
    %c0_60 = arith.constant 0 : index
    %121 = vector.load %arg4[%c22, %c0_60] : memref<24x1024xf32, #tpu.memory_space<vmem>>, vector<1x512xf32>
    %122 = arith.mulf %111, %119 : vector<32x512xf32>
    %123 = vector.broadcast %120 : vector<1x512xf32> to vector<32x512xf32>
    %124 = arith.mulf %122, %123 : vector<32x512xf32>
    %125 = vector.broadcast %121 : vector<1x512xf32> to vector<32x512xf32>
    %126 = arith.addf %124, %125 : vector<32x512xf32>
    %cst_61 = arith.constant 0.000000e+00 : f32
    %127 = vector.broadcast %cst_61 : f32 to vector<32x512xf32>
    %128 = arith.cmpf ogt, %126, %127 : vector<32x512xf32>
    %cst_62 = arith.constant 0.000000e+00 : f32
    %129 = vector.broadcast %cst_62 : f32 to vector<32x512xf32>
    %130 = arith.minimumf %126, %129 : vector<32x512xf32>
    %131 = math.exp %130 : vector<32x512xf32>
    %cst_63 = arith.constant 1.000000e+00 : f32
    %132 = vector.broadcast %cst_63 : f32 to vector<32x512xf32>
    %133 = arith.subf %131, %132 : vector<32x512xf32>
    %134 = arith.select %128, %126, %133 : vector<32x512xi1>, vector<32x512xf32>
    %c288 = arith.constant 288 : index
    %c0_64 = arith.constant 0 : index
    %135 = vector.load %arg3[%c288, %c0_64] : memref<1824x1024xbf16, #tpu.memory_space<vmem>>, vector<512x1024xbf16>
    %c16 = arith.constant 16 : index
    %c0_65 = arith.constant 0 : index
    %136 = vector.load %arg4[%c16, %c0_65] : memref<24x1024xf32, #tpu.memory_space<vmem>>, vector<1x1024xf32>
    %137 = arith.truncf %134 : vector<32x512xf32> to vector<32x512xbf16>
    %cst_66 = arith.constant dense<0.000000e+00> : vector<32x1024xf32>
    %138 = tpu.matmul %137, %135, %cst_66 {dimension_numbers = #tpu.dot_dimension_numbers<[1], [0], [0], [1], [0, 0, 1, 1], [], []>} : vector<32x512xbf16>, vector<512x1024xbf16>, vector<32x1024xf32> -> vector<32x1024xf32>
    %139 = vector.broadcast %136 : vector<1x1024xf32> to vector<32x1024xf32>
    %140 = arith.addf %138, %139 : vector<32x1024xf32>
    %c12 = arith.constant 12 : index
    %c0_67 = arith.constant 0 : index
    %141 = vector.load %arg4[%c12, %c0_67] : memref<24x1024xf32, #tpu.memory_space<vmem>>, vector<2x1024xf32>
    %cst_68 = arith.constant dense<0.000000e+00> : vector<32x2xf32>
    %142 = tpu.matmul %140, %141, %cst_68 {dimension_numbers = #tpu.dot_dimension_numbers<[1], [1], [0], [0], [0, 0, 1, 0], [], []>} : vector<32x1024xf32>, vector<2x1024xf32>, vector<32x2xf32> -> vector<32x2xf32>
    %cst_69 = arith.constant 0.001953125 : f32
    %143 = vector.broadcast %cst_69 : f32 to vector<32x2xf32>
    %144 = arith.mulf %142, %143 : vector<32x2xf32>
    %cst_70 = arith.constant dense<0.000000e+00> : vector<32x1024xf32>
    %145 = tpu.matmul %144, %141, %cst_70 {dimension_numbers = #tpu.dot_dimension_numbers<[1], [0], [0], [1], [0, 0, 1, 1], [], []>} : vector<32x2xf32>, vector<2x1024xf32>, vector<32x1024xf32> -> vector<32x1024xf32>
    %146 = arith.subf %140, %145 : vector<32x1024xf32>
    %147 = arith.mulf %146, %146 : vector<32x1024xf32>
    %cst_71 = arith.constant dense<0.000000e+00> : vector<32x2xf32>
    %148 = tpu.matmul %147, %141, %cst_71 {dimension_numbers = #tpu.dot_dimension_numbers<[1], [1], [0], [0], [0, 0, 1, 0], [], []>} : vector<32x1024xf32>, vector<2x1024xf32>, vector<32x2xf32> -> vector<32x2xf32>
    %cst_72 = arith.constant 0.001953125 : f32
    %149 = vector.broadcast %cst_72 : f32 to vector<32x2xf32>
    %150 = arith.mulf %148, %149 : vector<32x2xf32>
    %cst_73 = arith.constant 9.99999974E-6 : f32
    %151 = vector.broadcast %cst_73 : f32 to vector<32x2xf32>
    %152 = arith.addf %150, %151 : vector<32x2xf32>
    %153 = math.rsqrt %152 : vector<32x2xf32>
    %cst_74 = arith.constant dense<0.000000e+00> : vector<32x1024xf32>
    %154 = tpu.matmul %153, %141, %cst_74 {dimension_numbers = #tpu.dot_dimension_numbers<[1], [0], [0], [1], [0, 0, 1, 1], [], []>} : vector<32x2xf32>, vector<2x1024xf32>, vector<32x1024xf32> -> vector<32x1024xf32>
    %c20 = arith.constant 20 : index
    %c0_75 = arith.constant 0 : index
    %155 = vector.load %arg4[%c20, %c0_75] : memref<24x1024xf32, #tpu.memory_space<vmem>>, vector<1x1024xf32>
    %c23 = arith.constant 23 : index
    %c0_76 = arith.constant 0 : index
    %156 = vector.load %arg4[%c23, %c0_76] : memref<24x1024xf32, #tpu.memory_space<vmem>>, vector<1x1024xf32>
    %157 = arith.mulf %146, %154 : vector<32x1024xf32>
    %158 = vector.broadcast %155 : vector<1x1024xf32> to vector<32x1024xf32>
    %159 = arith.mulf %157, %158 : vector<32x1024xf32>
    %160 = vector.broadcast %156 : vector<1x1024xf32> to vector<32x1024xf32>
    %161 = arith.addf %159, %160 : vector<32x1024xf32>
    %cst_77 = arith.constant 0.000000e+00 : f32
    %162 = vector.broadcast %cst_77 : f32 to vector<32x1024xf32>
    %163 = arith.cmpf ogt, %161, %162 : vector<32x1024xf32>
    %cst_78 = arith.constant 0.000000e+00 : f32
    %164 = vector.broadcast %cst_78 : f32 to vector<32x1024xf32>
    %165 = arith.minimumf %161, %164 : vector<32x1024xf32>
    %166 = math.exp %165 : vector<32x1024xf32>
    %cst_79 = arith.constant 1.000000e+00 : f32
    %167 = vector.broadcast %cst_79 : f32 to vector<32x1024xf32>
    %168 = arith.subf %166, %167 : vector<32x1024xf32>
    %169 = arith.select %163, %161, %168 : vector<32x1024xi1>, vector<32x1024xf32>
    %c800 = arith.constant 800 : index
    %c0_80 = arith.constant 0 : index
    %170 = vector.load %arg3[%c800, %c0_80] : memref<1824x1024xbf16, #tpu.memory_space<vmem>>, vector<1024x256xbf16>
    %c17 = arith.constant 17 : index
    %c0_81 = arith.constant 0 : index
    %171 = vector.load %arg4[%c17, %c0_81] : memref<24x1024xf32, #tpu.memory_space<vmem>>, vector<1x256xf32>
    %172 = arith.truncf %169 : vector<32x1024xf32> to vector<32x1024xbf16>
    %cst_82 = arith.constant dense<0.000000e+00> : vector<32x256xf32>
    %173 = tpu.matmul %172, %170, %cst_82 {dimension_numbers = #tpu.dot_dimension_numbers<[1], [0], [0], [1], [0, 0, 1, 1], [], []>} : vector<32x1024xbf16>, vector<1024x256xbf16>, vector<32x256xf32> -> vector<32x256xf32>
    %174 = vector.broadcast %171 : vector<1x256xf32> to vector<32x256xf32>
    %175 = arith.addf %173, %174 : vector<32x256xf32>
    %176 = arith.negf %175 : vector<32x256xf32>
    %177 = math.exp %176 : vector<32x256xf32>
    %cst_83 = arith.constant 1.000000e+00 : f32
    %178 = vector.broadcast %cst_83 : f32 to vector<32x256xf32>
    %179 = arith.addf %178, %177 : vector<32x256xf32>
    %180 = arith.divf %178, %179 : vector<32x256xf32>
    %c0_84 = arith.constant 0 : index
    %c0_85 = arith.constant 0 : index
    %181 = vector.load %arg7[%c0_84, %c0_85] : memref<32x256xf32, #tpu.memory_space<vmem>>, vector<32x256xf32>
    tpu.vector_store %arg7[%c0_84, %c0_85], %180 {strides = array<i32>} : memref<32x256xf32, #tpu.memory_space<vmem>>, vector<32x256xf32>,
    return
  }
  func.func @transform_0(%arg0: i32) -> (i32, i32, i32) {
    %c0_i32 = arith.constant 0 : i32
    %c0_i32_0 = arith.constant 0 : i32
    %c0_i32_1 = arith.constant 0 : i32
    return %c0_i32, %arg0, %c0_i32_0 : i32, i32, i32
  }
  func.func @transform_1(%arg0: i32) -> (i32, i32, i32) {
    %c0_i32 = arith.constant 0 : i32
    %c0_i32_0 = arith.constant 0 : i32
    %c0_i32_1 = arith.constant 0 : i32
    return %c0_i32, %arg0, %c0_i32_0 : i32, i32, i32
  }
  func.func @transform_2(%arg0: i32) -> (i32, i32) {
    %c0_i32 = arith.constant 0 : i32
    %c0_i32_0 = arith.constant 0 : i32
    %c0_i32_1 = arith.constant 0 : i32
    return %c0_i32, %c0_i32_0 : i32, i32
  }
  func.func @transform_3(%arg0: i32) -> (i32, i32) {
    %c0_i32 = arith.constant 0 : i32
    %c0_i32_0 = arith.constant 0 : i32
    %c0_i32_1 = arith.constant 0 : i32
    return %c0_i32, %c0_i32_0 : i32, i32
  }
  func.func @transform_4(%arg0: i32) -> (i32, i32) {
    %c0_i32 = arith.constant 0 : i32
    %c0_i32_0 = arith.constant 0 : i32
    return %arg0, %c0_i32 : i32, i32
  }
  func.func @transform_5(%arg0: i32) -> (i32, i32) {
    %c0_i32 = arith.constant 0 : i32
    %c0_i32_0 = arith.constant 0 : i32
    return %arg0, %c0_i32 : i32, i32
  }
  func.func @transform_6(%arg0: i32) -> (i32, i32) {
    %c0_i32 = arith.constant 0 : i32
    %c0_i32_0 = arith.constant 0 : i32
    return %arg0, %c0_i32 : i32, i32
  }
}

</mosaic_0001>

<llo_original>
// kernel: tpu_custom_call.1
$region0: #{tpu_custom_call.1}
  #allocation0 [shape = 'u32[]', space=smem, size = 0x4, offset = 0x4, fixed_abs, tag = 'smem constant byte address 0x4 - core index']
  #allocation1 [shape = 'u32[72,128]{1,0:T(1,128)}', space=vmem, size = 0x9000, scoped, tag = 'internal scratch']
  %s0 = inlined_call_operand.hbm [shape: f32[4,2,128], index: 0, kind: input, shape index: {}]
  %s1 = inlined_call_operand.hbm [shape: f32[3,32,32], index: 1, kind: input, shape index: {}]
  %s2 = inlined_call_operand.hbm [shape: bf16[1824,1024], index: 2, kind: input, shape index: {}]
  %s3 = inlined_call_operand.hbm [shape: f32[24,1024], index: 3, kind: input, shape index: {}]
  %s4 = inlined_call_operand.hbm [shape: f32[2,256], index: 4, kind: output, shape index: {0}]
  %s5 = inlined_call_operand.hbm [shape: f32[32,32], index: 5, kind: output, shape index: {1}]
  %s6 = inlined_call_operand.hbm [shape: f32[32,256], index: 6, kind: output, shape index: {2}]
  %7 = xla_tuple %s4, %s5, %s6
  %s8 = sld [smem:[#allocation0]]
  $region58: #{tpu_custom_call.1} parent=0
    _
  %s10 = ssub.s32 1, %s8
  %s11 = scalar_select 0, %s10, %s8
  $region1: #{tpu_custom_call.1} parent=0
    #allocation2 [shape = 'u8[4096]{0}', space=vmem, size = 0x1000, scoped, tag = 'input window, operand 0, single buffered']
    #allocation3 [shape = 's32[1]{0}', space=sflag, size = 0x4, scoped, tag = 'scoped memory for tpu_custom_call.1']
    #allocation4 [shape = 's32[1]{0}', space=sflag, size = 0x4, scoped, tag = 'scoped memory for tpu_custom_call.1']
    #allocation5 [shape = 'u8[49152]{0}', space=vmem, size = 0xc000, scoped, tag = 'input window, operand 1, single buffered']
    #allocation6 [shape = 's32[1]{0}', space=sflag, size = 0x4, scoped, tag = 'scoped memory for tpu_custom_call.1']
    #allocation7 [shape = 'u8[3735552]{0}', space=vmem, size = 0x390000, scoped, tag = 'input window, operand 2, single buffered']
    #allocation8 [shape = 'u8[98304]{0}', space=vmem, size = 0x18000, scoped, tag = 'input window, operand 3, single buffered']
    #allocation9 [shape = 's32[1]{0}', space=sflag, size = 0x4, scoped, tag = 'scoped memory for tpu_custom_call.1']
    #allocation10 [shape = 'u8[2048]{0}', space=vmem, size = 0x800, scoped, tag = 'output window, operand 0, single buffered']
    #allocation11 [shape = 'u8[16384]{0}', space=vmem, size = 0x4000, scoped, tag = 'output window, operand 1, single buffered']
    #allocation12 [shape = 's32[1]{0}', space=sflag, size = 0x4, scoped, tag = 'scoped memory for tpu_custom_call.1']
    #allocation13 [shape = 'u8[32768]{0}', space=vmem, size = 0x8000, scoped, tag = 'output window, operand 2, single buffered']
    %12 = vsyncpa [#allocation3], 0
    %13 = vsyncpa [#allocation6], 0
    %14 = vsyncpa [#allocation9], 0
    %15 = vsyncpa [#allocation4], 0
    %16 = vsyncpa [#allocation12], 0
    // Predicated region
    $region2: #{tpu_custom_call.1} parent=1 // pred_check
      _
    $region3: #{tpu_custom_call.1} parent=1 // pred_check_branch
      %18 = sbr.rel (0) target = $region5
    $region4: #{tpu_custom_call.1} parent=1 // pred_region
      %20 = vsyncadd [#allocation3], 0
      %s21 = sshll.u32 %s0, 4
      %s22 = int_to_ptr.hbm [resolvable:$true] %s21
      %s23 = sshll.u32 [#allocation2], 4
      %s24 = int_to_ptr.vmem [resolvable:$true] %s23
      %29 = dma.hbm_to_vmem [thread:$0]  %s22, 128, %s24, [#allocation3], 32, 32, 2
    $region5: #{tpu_custom_call.1} parent=1 // pred_fallthru
      _
    // Predicated region
    $region6: #{tpu_custom_call.1} parent=1 // pred_check
      _
    $region7: #{tpu_custom_call.1} parent=1 // pred_check_branch
      %31 = sbr.rel (0) target = $region9
    $region8: #{tpu_custom_call.1} parent=1 // pred_region
      %33 = vsyncadd [#allocation6], 0
      %s34 = sshll.u32 %s1, 4
      %s35 = int_to_ptr.hbm [resolvable:$true] %s34
      %s36 = sshll.u32 [#allocation5], 4
      %s37 = int_to_ptr.vmem [resolvable:$true] %s36
      %42 = dma.hbm_to_vmem [thread:$0]  %s35, 1536, %s37, [#allocation6], 128, 128, 8
    $region9: #{tpu_custom_call.1} parent=1 // pred_fallthru
      _
    // Predicated region
    $region10: #{tpu_custom_call.1} parent=1 // pred_check
      _
    $region11: #{tpu_custom_call.1} parent=1 // pred_check_branch
      %44 = sbr.rel (0) target = $region13
    $region12: #{tpu_custom_call.1} parent=1 // pred_region
      %46 = vsyncadd [#allocation6], 0
      %s47 = sshll.u32 %s2, 4
      %s48 = int_to_ptr.hbm [resolvable:$true] %s47
      %s49 = sshll.u32 [#allocation7], 4
      %s50 = int_to_ptr.vmem [resolvable:$true] %s49
      %55 = dma.hbm_to_vmem [thread:$0]  %s48, 116736, %s50, [#allocation6], 512, 512, 32
    $region13: #{tpu_custom_call.1} parent=1 // pred_fallthru
      _
    // Predicated region
    $region14: #{tpu_custom_call.1} parent=1 // pred_check
      _
    $region15: #{tpu_custom_call.1} parent=1 // pred_check_branch
      %57 = sbr.rel (0) target = $region17
    $region16: #{tpu_custom_call.1} parent=1 // pred_region
      %59 = vsyncadd [#allocation9], 0
      %s60 = sshll.u32 %s3, 4
      %s61 = int_to_ptr.hbm [resolvable:$true] %s60
      %s62 = sshll.u32 [#allocation8], 4
      %s63 = int_to_ptr.vmem [resolvable:$true] %s62
      %68 = dma.hbm_to_vmem [thread:$0]  %s61, 3072, %s63, [#allocation9], 1024, 1024, 64
    $region17: #{tpu_custom_call.1} parent=1 // pred_fallthru
      _
    // Predicated region
    $region18: #{tpu_custom_call.1} parent=1 // pred_check
      _
    $region19: #{tpu_custom_call.1} parent=1 // pred_check_branch
      %70 = sbr.rel (0) target = $region21
    $region20: #{tpu_custom_call.1} parent=1 // pred_region
      %72 = dma.done [#allocation3], 128
    $region21: #{tpu_custom_call.1} parent=1 // pred_fallthru
      _
    // Predicated region
    $region22: #{tpu_custom_call.1} parent=1 // pred_check
      _
    $region23: #{tpu_custom_call.1} parent=1 // pred_check_branch
      %74 = sbr.rel (0) target = $region25
    $region24: #{tpu_custom_call.1} parent=1 // pred_region
      %76 = dma.done [#allocation6], 1536
    $region25: #{tpu_custom_call.1} parent=1 // pred_fallthru
      _
    // Predicated region
    $region26: #{tpu_custom_call.1} parent=1 // pred_check
      _
    $region27: #{tpu_custom_call.1} parent=1 // pred_check_branch
      %78 = sbr.rel (0) target = $region29
    $region28: #{tpu_custom_call.1} parent=1 // pred_region
      %80 = dma.done [#allocation6], 116736
    $region29: #{tpu_custom_call.1} parent=1 // pred_fallthru
      _
    // Predicated region
    $region30: #{tpu_custom_call.1} parent=1 // pred_check
      _
    $region31: #{tpu_custom_call.1} parent=1 // pred_check_branch
      %82 = sbr.rel (0) target = $region33
    $region32: #{tpu_custom_call.1} parent=1 // pred_region
      %84 = dma.done [#allocation9], 3072
    $region33: #{tpu_custom_call.1} parent=1 // pred_fallthru
      _
    %v86 = vld [vmem:[#allocation2] sm:$0x3]
    %s87 = scalar_lea.vmem [#allocation2], 2
    %v88 = vld [vmem:[%s87] sm:$0x3]
    %s89 = scalar_lea.vmem [#allocation2], 4
    %v90 = vld [vmem:[%s89] sm:$0x3]
    %v91 = vmul.f32 %v88, %v90
    %v92 = vadd.f32 %v86, %v91
    %s93 = scalar_lea.vmem [#allocation2], 6
    %v94 = vld [vmem:[%s93] sm:$0x3]
    %v95 = vlog2.pop %v94
    %v96 = vmul.f32 %v95, 0.6931472
    %98 = vrot.lane.b32.xlu0 %v96, 112
    %v99 = vpop.permute.xlu0 %98
    %v101 = vadd.f32 %v94, %v99
    %v102 = vsub.f32 1.0, %v94
    %v103 = vlog2.pop %v102
    %v104 = vmul.f32 %v103, 0.6931472
    %106 = vrot.lane.b32.xlu0 %v104, 112
    %v107 = vpop.permute.xlu0 %106
    %v109 = vsub.f32 %v101, %v107
    %v110 = vxor.u32 %v109, 2147483648
    %v111 = vmul.f32 %v110, 1.442695
    %v112 = vpow.pop %v111
    %v113 = vadd.f32 %v112, 1.0
    %v114 = vrcp.pop %v113
    %v115 = vmul.f32 %v113, %v114
    %v116 = vsub.f32 1.0, %v115
    %v117 = vmul.f32 %v114, %v116
    %v118 = vadd.f32 %v114, %v117
    %vm119 = vweird.f32 %v113
    %vm120 = vweird.f32 %v114
    %vm121 = vmor %vm119, %vm120
    %v122 = vsel %vm121, %v114, %v118
    %v123 = vand.u32 2147483647, %v113
    %vm124 = vcmp.eq.f32.partialorder %v123, 8.507059e+37
    %v125 = vand.u32 %v113, 2147483648
    %v126 = vor.u32 1.1754944e-38, %v125
    %v127 = vsel %vm124, %v126, %v122
    %v128 = vmul.f32 1.0, %v127
    %v129 = vxor.u32 %v92, 2147483648
    %v130 = vmul.f32 %v129, 1.442695
    %v131 = vpow.pop %v130
    %v132 = vadd.f32 %v131, 1.0
    %v133 = vrcp.pop %v132
    %v134 = vmul.f32 %v132, %v133
    %v135 = vsub.f32 1.0, %v134
    %v136 = vmul.f32 %v133, %v135
    %v137 = vadd.f32 %v133, %v136
    %vm138 = vweird.f32 %v132
    %vm139 = vweird.f32 %v133
    %vm140 = vmor %vm138, %vm139
    %v141 = vsel %vm140, %v133, %v137
    %v142 = vand.u32 2147483647, %v132
    %vm143 = vcmp.eq.f32.partialorder %v142, 8.507059e+37
    %v144 = vand.u32 %v132, 2147483648
    %v145 = vor.u32 1.1754944e-38, %v144
    %v146 = vsel %vm143, %v145, %v141
    %v147 = vmul.f32 1.0, %v146
    %v148 = vmul.f32 %v92, 0.5
    %v149 = vmul.f32 %v148, 1.442695
    %v150 = vpow.pop %v149
    %v151 = vmul.f32 %v92, -0.5
    %v152 = vmul.f32 %v151, 1.442695
    %v153 = vpow.pop %v152
    %v154 = vadd.f32 %v94, 0.5
    %v155 = vtanh.pop %v92
    %v156 = vadd.f32 %v154, %v155
    %v157 = vmul.f32 %v156, 0.5
    %v158 = vsub.f32 %v157, 1.0
    %160 = vrot.lane.b32.xlu0 %v153, 112
    %v161 = vpop.permute.xlu0 %160
    %v163 = vmul.f32 %v147, %v161
    %165 = vrot.lane.b32.xlu0 %v150, 112
    %v166 = vpop.permute.xlu0 %165
    %v168 = vmul.f32 %v147, %v166
    %170 = vrot.lane.b32.xlu0 %v168, 16
    %v171 = vpop.permute.xlu0 %170
    %vm173 = vcmask 130048
    %v174 = vsel %vm173, %v163, %v171
    %vm175 = vcmask 261120
    %v176 = vsel %vm175, %v174, %v158
    %178 = vrot.lane.b32.xlu0 %v176, 16
    %v179 = vpop.permute.xlu0 %178
    %182 = vrot.lane.b32.xlu0 %v92, 16
    %v183 = vpop.permute.xlu0 %182
    %185 = vrot.lane.b32.xlu0 %v92, 96
    %v186 = vpop.permute.xlu0 %185
    %v188 = vsel %vm173, %v128, %v179
    %vm189 = vcmask 654336
    %v190 = vsel %vm189, %v188, %v183
    %vm191 = vcmask 785408
    %v192 = vsel %vm191, %v190, %v186
    %v193 = vsel %vm175, %v186, 0.0
    %v196 = vrot.slane %v193, 6
    %vm197 = vcmask 1041408
    %v198 = vsel %vm197, %v192, %v196
    %200 = vst [vmem:[#allocation10] sm:$0xf] %v198
    %v201 = vld [vmem:[#allocation5] sm:$0xff]
    %v202 = vld [vmem:[#allocation5 + $0x8] sm:$0xff]
    %v203 = vld [vmem:[#allocation5 + $0x10] sm:$0xff]
    %v204 = vld [vmem:[#allocation5 + $0x18] sm:$0xff]
    %s205 = scalar_lea.vmem [#allocation5], 32
    %v206 = vld [vmem:[%s205] sm:$0xff]
    %v207 = vld [vmem:[%s205 + $0x8] sm:$0xff]
    %v208 = vld [vmem:[%s205 + $0x10] sm:$0xff]
    %v209 = vld [vmem:[%s205 + $0x18] sm:$0xff]
    %s210 = scalar_lea.vmem [#allocation5], 64
    %v211 = vld [vmem:[%s210] sm:$0xff]
    %v212 = vld [vmem:[%s210 + $0x8] sm:$0xff]
    %v213 = vld [vmem:[%s210 + $0x10] sm:$0xff]
    %v214 = vld [vmem:[%s210 + $0x18] sm:$0xff]
    %v215 = vmul.f32 %v206, %v211
    %v216 = vmul.f32 %v207, %v212
    %v217 = vmul.f32 %v208, %v213
    %v218 = vmul.f32 %v209, %v214
    %v219 = vadd.f32 %v201, %v215
    %v220 = vadd.f32 %v202, %v216
    %v221 = vadd.f32 %v203, %v217
    %v222 = vadd.f32 %v204, %v218
    %223 = vst.msk [vmem:[#allocation11] sm:$0xff] %vm175, %v219
    %224 = vst.msk [vmem:[#allocation11 + $0x8] sm:$0xff] %vm175, %v220
    %225 = vst.msk [vmem:[#allocation11 + $0x10] sm:$0xff] %vm175, %v221
    %226 = vst.msk [vmem:[#allocation11 + $0x18] sm:$0xff] %vm175, %v222
    %v227 = vld [vmem:[#allocation7] sm:$0xff]
    %v228 = vld [vmem:[#allocation7 + $0x20] sm:$0xff]
    %v229 = vld [vmem:[#allocation7 + $0x40] sm:$0xff]
    %v230 = vld [vmem:[#allocation7 + $0x60] sm:$0xff]
    %s231 = scalar_lea.vmem [#allocation8], 70
    %v232 = vld [vmem:[%s231] ss:$8 sm:$0x3]
    %v233 = vpack.c.bf16 %v220, %v219
    %v234 = vpack.c.bf16 %v222, %v221
    %v236 = vperm.slane %v232, 0
    %v237 = vperm.slane %v232, 1
    %v244 = vunpack.c.l.b16 %v227
    %v245 = vunpack.c.h.b16 %v227
    %v246 = vunpack.c.l.b16 %v228
    %v247 = vunpack.c.h.b16 %v228
    %v248 = vunpack.c.l.b16 %v229
    %v249 = vunpack.c.h.b16 %v229
    %v250 = vunpack.c.l.b16 %v230
    %v251 = vunpack.c.h.b16 %v230
    %v252 = vpack.c.b16 %v246, %v244
    %v253 = vpack.c.b16 %v247, %v245
    %v254 = vpack.c.b16 %v250, %v248
    %v255 = vpack.c.b16 %v251, %v249
    %v261 = vsel %vm175, %v233, 0
    %v264 = vsel %vm175, %v234, 0
    %266 = vmatpush.bf16.msra.mxu0 0
    %267 = vmatpush.bf16.msra.mxu0 0
    %268 = vmatpush.bf16.msra.mxu0 0
    %269 = vmatpush.bf16.msra.mxu0 0
    %270 = vmatpush.bf16.msra.mxu0 0
    %271 = vmatpush.bf16.msra.mxu0 0
    %272 = vmatpush.bf16.msra.mxu0 %v254
    %273 = vmatpush.bf16.msra.mxu0 %v252
    %274 = vmatmul.bf16.gmra.mxu0 %v261
    %v275 = vpop.f32.mrf.mxu0
    %v276 = vadd.f32 %v236, %v275
    %v277 = vpop.f32.mrf.mxu0
    %v278 = vadd.f32 %v236, %v277
    %279 = vmatmul.bf16.gmra.mxu0 %v264
    %v280 = vpop.f32.mrf.mxu0
    %v281 = vadd.f32 %v236, %v280
    %v282 = vpop.f32.mrf.mxu0
    %v283 = vadd.f32 %v236, %v282
    %284 = vdwg.mxu0
    %285 = vmatpush.bf16.msra.mxu0 0
    %286 = vmatpush.bf16.msra.mxu0 0
    %287 = vmatpush.bf16.msra.mxu0 0
    %288 = vmatpush.bf16.msra.mxu0 0
    %289 = vmatpush.bf16.msra.mxu0 0
    %290 = vmatpush.bf16.msra.mxu0 0
    %291 = vmatpush.bf16.msra.mxu0 %v255
    %292 = vmatpush.bf16.msra.mxu0 %v253
    %293 = vmatmul.bf16.gmra.mxu0 %v261
    %v294 = vpop.f32.mrf.mxu0
    %v295 = vadd.f32 %v237, %v294
    %v296 = vpop.f32.mrf.mxu0
    %v297 = vadd.f32 %v237, %v296
    %298 = vmatmul.bf16.gmra.mxu0 %v264
    %v299 = vpop.f32.mrf.mxu0
    %v300 = vadd.f32 %v237, %v299
    %v301 = vpop.f32.mrf.mxu0
    %v302 = vadd.f32 %v237, %v301
    %303 = vdwg.mxu0
    %v304 = vld [vmem:[#allocation8] sm:$0xff]
    %v305 = vld [vmem:[#allocation8 + $0x8] sm:$0xff]
    %306 = vmatpush.xpose.msra.mxu0 0.0
    %307 = vmatpush.xpose.msra.mxu0 0.0
    %308 = vmatpush.xpose.msra.mxu0 0.0
    %309 = vmatpush.xpose.msra.mxu0 0.0
    %310 = vmatpush.xpose.msra.mxu0 0.0
    %311 = vmatpush.xpose.msra.mxu0 0.0
    %312 = vmatpush.xpose.msra.mxu0 0.0
    %313 = vmatpush.xpose.msra.mxu0 0.0
    %314 = vmatpush.xpose.msra.mxu0 0.0
    %315 = vmatpush.xpose.msra.mxu0 0.0
    %316 = vmatpush.xpose.msra.mxu0 0.0
    %317 = vmatpush.xpose.msra.mxu0 0.0
    %318 = vmatpush.xpose.msra.mxu0 0.0
    %319 = vmatpush.xpose.msra.mxu0 0.0
    %320 = vmatpush.xpose.msra.mxu0 0.0
    %321 = vmatpush.xpose.msra.mxu0 %v304
    %322 = vmatmul.f32.gmra.mxu0 %v276
    %v323 = vpop.f32.mrf.mxu0
    %v324 = vadd.f32 0.0, %v323
    %325 = vmatmul.f32.gmra.mxu0 %v278
    %v326 = vpop.f32.mrf.mxu0
    %v327 = vadd.f32 0.0, %v326
    %328 = vmatmul.f32.gmra.mxu0 %v281
    %v329 = vpop.f32.mrf.mxu0
    %v330 = vadd.f32 0.0, %v329
    %331 = vmatmul.f32.gmra.mxu0 %v283
    %v332 = vpop.f32.mrf.mxu0
    %v333 = vadd.f32 0.0, %v332
    %334 = vdwg.mxu0
    %335 = vmatpush.xpose.msra.mxu0 0.0
    %336 = vmatpush.xpose.msra.mxu0 0.0
    %337 = vmatpush.xpose.msra.mxu0 0.0
    %338 = vmatpush.xpose.msra.mxu0 0.0
    %339 = vmatpush.xpose.msra.mxu0 0.0
    %340 = vmatpush.xpose.msra.mxu0 0.0
    %341 = vmatpush.xpose.msra.mxu0 0.0
    %342 = vmatpush.xpose.msra.mxu0 0.0
    %343 = vmatpush.xpose.msra.mxu0 0.0
    %344 = vmatpush.xpose.msra.mxu0 0.0
    %345 = vmatpush.xpose.msra.mxu0 0.0
    %346 = vmatpush.xpose.msra.mxu0 0.0
    %347 = vmatpush.xpose.msra.mxu0 0.0
    %348 = vmatpush.xpose.msra.mxu0 0.0
    %349 = vmatpush.xpose.msra.mxu0 0.0
    %350 = vmatpush.xpose.msra.mxu0 %v305
    %351 = vmatmul.f32.gmra.mxu0 %v295
    %v352 = vpop.f32.mrf.mxu0
    %v353 = vadd.f32 %v324, %v352
    %354 = vmatmul.f32.gmra.mxu0 %v297
    %v355 = vpop.f32.mrf.mxu0
    %v356 = vadd.f32 %v327, %v355
    %357 = vmatmul.f32.gmra.mxu0 %v300
    %v358 = vpop.f32.mrf.mxu0
    %v359 = vadd.f32 %v330, %v358
    %360 = vmatmul.f32.gmra.mxu0 %v302
    %v361 = vpop.f32.mrf.mxu0
    %v362 = vadd.f32 %v333, %v361
    %363 = vdwg.mxu0
    %v364 = vmul.f32 %v353, 0.03125
    %v365 = vmul.f32 %v356, 0.03125
    %v366 = vmul.f32 %v359, 0.03125
    %v367 = vmul.f32 %v362, 0.03125
    %vm368 = vcmask 64512
    %v370 = vsel %vm368, %v364, 0
    %v373 = vsel %vm368, %v365, 0
    %v376 = vsel %vm368, %v366, 0
    %v379 = vsel %vm368, %v367, 0
    %381 = vmatpush.msra.mxu0 0.0
    %382 = vmatpush.msra.mxu0 0.0
    %383 = vmatpush.msra.mxu0 0.0
    %384 = vmatpush.msra.mxu0 0.0
    %385 = vmatpush.msra.mxu0 0.0
    %386 = vmatpush.msra.mxu0 0.0
    %387 = vmatpush.msra.mxu0 0.0
    %388 = vmatpush.msra.mxu0 0.0
    %389 = vmatpush.msra.mxu0 0.0
    %390 = vmatpush.msra.mxu0 0.0
    %391 = vmatpush.msra.mxu0 0.0
    %392 = vmatpush.msra.mxu0 0.0
    %393 = vmatpush.msra.mxu0 0.0
    %394 = vmatpush.msra.mxu0 0.0
    %395 = vmatpush.msra.mxu0 0.0
    %396 = vmatpush.msra.mxu0 %v304
    %397 = vmatmul.f32.gmra.mxu0 %v370
    %v398 = vpop.f32.mrf.mxu0
    %v399 = vadd.f32 0.0, %v398
    %400 = vmatmul.f32.gmra.mxu0 %v373
    %v401 = vpop.f32.mrf.mxu0
    %v402 = vadd.f32 0.0, %v401
    %403 = vmatmul.f32.gmra.mxu0 %v376
    %v404 = vpop.f32.mrf.mxu0
    %v405 = vadd.f32 0.0, %v404
    %406 = vmatmul.f32.gmra.mxu0 %v379
    %v407 = vpop.f32.mrf.mxu0
    %v408 = vadd.f32 0.0, %v407
    %409 = vdwg.mxu0
    %410 = vmatpush.msra.mxu0 0.0
    %411 = vmatpush.msra.mxu0 0.0
    %412 = vmatpush.msra.mxu0 0.0
    %413 = vmatpush.msra.mxu0 0.0
    %414 = vmatpush.msra.mxu0 0.0
    %415 = vmatpush.msra.mxu0 0.0
    %416 = vmatpush.msra.mxu0 0.0
    %417 = vmatpush.msra.mxu0 0.0
    %418 = vmatpush.msra.mxu0 0.0
    %419 = vmatpush.msra.mxu0 0.0
    %420 = vmatpush.msra.mxu0 0.0
    %421 = vmatpush.msra.mxu0 0.0
    %422 = vmatpush.msra.mxu0 0.0
    %423 = vmatpush.msra.mxu0 0.0
    %424 = vmatpush.msra.mxu0 0.0
    %425 = vmatpush.msra.mxu0 %v305
    %426 = vmatmul.f32.gmra.mxu0 %v370
    %v427 = vpop.f32.mrf.mxu0
    %v428 = vadd.f32 0.0, %v427
    %429 = vmatmul.f32.gmra.mxu0 %v373
    %v430 = vpop.f32.mrf.mxu0
    %v431 = vadd.f32 0.0, %v430
    %432 = vmatmul.f32.gmra.mxu0 %v376
    %v433 = vpop.f32.mrf.mxu0
    %v434 = vadd.f32 0.0, %v433
    %435 = vmatmul.f32.gmra.mxu0 %v379
    %v436 = vpop.f32.mrf.mxu0
    %v437 = vadd.f32 0.0, %v436
    %438 = vdwg.mxu0
    %v439 = vsub.f32 %v276, %v399
    %v440 = vsub.f32 %v295, %v428
    %v441 = vsub.f32 %v278, %v402
    %v442 = vsub.f32 %v297, %v431
    %v443 = vsub.f32 %v281, %v405
    %v444 = vsub.f32 %v300, %v434
    %v445 = vsub.f32 %v283, %v408
    %v446 = vsub.f32 %v302, %v437
    %v447 = vmul.f32 %v439, %v439
    %v448 = vmul.f32 %v440, %v440
    %v449 = vmul.f32 %v441, %v441
    %v450 = vmul.f32 %v442, %v442
    %v451 = vmul.f32 %v443, %v443
    %v452 = vmul.f32 %v444, %v444
    %v453 = vmul.f32 %v445, %v445
    %v454 = vmul.f32 %v446, %v446
    %455 = vmatpush.xpose.msra.mxu0 0.0
    %456 = vmatpush.xpose.msra.mxu0 0.0
    %457 = vmatpush.xpose.msra.mxu0 0.0
    %458 = vmatpush.xpose.msra.mxu0 0.0
    %459 = vmatpush.xpose.msra.mxu0 0.0
    %460 = vmatpush.xpose.msra.mxu0 0.0
    %461 = vmatpush.xpose.msra.mxu0 0.0
    %462 = vmatpush.xpose.msra.mxu0 0.0
    %463 = vmatpush.xpose.msra.mxu0 0.0
    %464 = vmatpush.xpose.msra.mxu0 0.0
    %465 = vmatpush.xpose.msra.mxu0 0.0
    %466 = vmatpush.xpose.msra.mxu0 0.0
    %467 = vmatpush.xpose.msra.mxu0 0.0
    %468 = vmatpush.xpose.msra.mxu0 0.0
    %469 = vmatpush.xpose.msra.mxu0 0.0
    %470 = vmatpush.xpose.msra.mxu0 %v304
    %471 = vmatmul.f32.gmra.mxu0 %v447
    %v472 = vpop.f32.mrf.mxu0
    %v473 = vadd.f32 0.0, %v472
    %474 = vmatmul.f32.gmra.mxu0 %v449
    %v475 = vpop.f32.mrf.mxu0
    %v476 = vadd.f32 0.0, %v475
    %477 = vmatmul.f32.gmra.mxu0 %v451
    %v478 = vpop.f32.mrf.mxu0
    %v479 = vadd.f32 0.0, %v478
    %480 = vmatmul.f32.gmra.mxu0 %v453
    %v481 = vpop.f32.mrf.mxu0
    %v482 = vadd.f32 0.0, %v481
    %483 = vdwg.mxu0
    %484 = vmatpush.xpose.msra.mxu0 0.0
    %485 = vmatpush.xpose.msra.mxu0 0.0
    %486 = vmatpush.xpose.msra.mxu0 0.0
    %487 = vmatpush.xpose.msra.mxu0 0.0
    %488 = vmatpush.xpose.msra.mxu0 0.0
    %489 = vmatpush.xpose.msra.mxu0 0.0
    %490 = vmatpush.xpose.msra.mxu0 0.0
    %491 = vmatpush.xpose.msra.mxu0 0.0
    %492 = vmatpush.xpose.msra.mxu0 0.0
    %493 = vmatpush.xpose.msra.mxu0 0.0
    %494 = vmatpush.xpose.msra.mxu0 0.0
    %495 = vmatpush.xpose.msra.mxu0 0.0
    %496 = vmatpush.xpose.msra.mxu0 0.0
    %497 = vmatpush.xpose.msra.mxu0 0.0
    %498 = vmatpush.xpose.msra.mxu0 0.0
    %499 = vmatpush.xpose.msra.mxu0 %v305
    %500 = vmatmul.f32.gmra.mxu0 %v448
    %v501 = vpop.f32.mrf.mxu0
    %v502 = vadd.f32 %v473, %v501
    %503 = vmatmul.f32.gmra.mxu0 %v450
    %v504 = vpop.f32.mrf.mxu0
    %v505 = vadd.f32 %v476, %v504
    %506 = vmatmul.f32.gmra.mxu0 %v452
    %v507 = vpop.f32.mrf.mxu0
    %v508 = vadd.f32 %v479, %v507
    %509 = vmatmul.f32.gmra.mxu0 %v454
    %v510 = vpop.f32.mrf.mxu0
    %v511 = vadd.f32 %v482, %v510
    %512 = vdwg.mxu0
    %v513 = vmul.f32 %v502, 0.03125
    %v514 = vmul.f32 %v505, 0.03125
    %v515 = vmul.f32 %v508, 0.03125
    %v516 = vmul.f32 %v511, 0.03125
    %v517 = vadd.f32 %v513, 1e-05
    %v518 = vadd.f32 %v514, 1e-05
    %v519 = vadd.f32 %v515, 1e-05
    %v520 = vadd.f32 %v516, 1e-05
    %v521 = vrsqrt.pop %v517
    %v522 = vmul.f32 %v521, %v517
    %v523 = vmul.f32 %v522, %v521
    %v524 = vmul.f32 0.5, %v523
    %v525 = vsub.f32 1.5, %v524
    %v526 = vmul.f32 %v521, %v525
    %vm527 = vweird.f32 %v517
    %vm528 = vweird.f32 %v521
    %vm529 = vmor %vm527, %vm528
    %v530 = vsel %vm529, %v521, %v526
    %v531 = vrsqrt.pop %v518
    %v532 = vmul.f32 %v531, %v518
    %v533 = vmul.f32 %v532, %v531
    %v534 = vmul.f32 0.5, %v533
    %v535 = vsub.f32 1.5, %v534
    %v536 = vmul.f32 %v531, %v535
    %vm537 = vweird.f32 %v518
    %vm538 = vweird.f32 %v531
    %vm539 = vmor %vm537, %vm538
    %v540 = vsel %vm539, %v531, %v536
    %v541 = vrsqrt.pop %v519
    %v542 = vmul.f32 %v541, %v519
    %v543 = vmul.f32 %v542, %v541
    %v544 = vmul.f32 0.5, %v543
    %v545 = vsub.f32 1.5, %v544
    %v546 = vmul.f32 %v541, %v545
    %vm547 = vweird.f32 %v519
    %vm548 = vweird.f32 %v541
    %vm549 = vmor %vm547, %vm548
    %v550 = vsel %vm549, %v541, %v546
    %v551 = vrsqrt.pop %v520
    %v552 = vmul.f32 %v551, %v520
    %v553 = vmul.f32 %v552, %v551
    %v554 = vmul.f32 0.5, %v553
    %v555 = vsub.f32 1.5, %v554
    %v556 = vmul.f32 %v551, %v555
    %vm557 = vweird.f32 %v520
    %vm558 = vweird.f32 %v551
    %vm559 = vmor %vm557, %vm558
    %v560 = vsel %vm559, %v551, %v556
    %v562 = vsel %vm368, %v530, 0
    %v565 = vsel %vm368, %v540, 0
    %v568 = vsel %vm368, %v550, 0
    %v571 = vsel %vm368, %v560, 0
    %573 = vmatpush.msra.mxu0 0.0
    %574 = vmatpush.msra.mxu0 0.0
    %575 = vmatpush.msra.mxu0 0.0
    %576 = vmatpush.msra.mxu0 0.0
    %577 = vmatpush.msra.mxu0 0.0
    %578 = vmatpush.msra.mxu0 0.0
    %579 = vmatpush.msra.mxu0 0.0
    %580 = vmatpush.msra.mxu0 0.0
    %581 = vmatpush.msra.mxu0 0.0
    %582 = vmatpush.msra.mxu0 0.0
    %583 = vmatpush.msra.mxu0 0.0
    %584 = vmatpush.msra.mxu0 0.0
    %585 = vmatpush.msra.mxu0 0.0
    %586 = vmatpush.msra.mxu0 0.0
    %587 = vmatpush.msra.mxu0 0.0
    %588 = vmatpush.msra.mxu0 %v304
    %589 = vmatmul.f32.gmra.mxu0 %v562
    %v590 = vpop.f32.mrf.mxu0
    %v591 = vadd.f32 0.0, %v590
    %592 = vmatmul.f32.gmra.mxu0 %v565
    %v593 = vpop.f32.mrf.mxu0
    %v594 = vadd.f32 0.0, %v593
    %595 = vmatmul.f32.gmra.mxu0 %v568
    %v596 = vpop.f32.mrf.mxu0
    %v597 = vadd.f32 0.0, %v596
    %598 = vmatmul.f32.gmra.mxu0 %v571
    %v599 = vpop.f32.mrf.mxu0
    %v600 = vadd.f32 0.0, %v599
    %601 = vdwg.mxu0
    %602 = vmatpush.msra.mxu0 0.0
    %603 = vmatpush.msra.mxu0 0.0
    %604 = vmatpush.msra.mxu0 0.0
    %605 = vmatpush.msra.mxu0 0.0
    %606 = vmatpush.msra.mxu0 0.0
    %607 = vmatpush.msra.mxu0 0.0
    %608 = vmatpush.msra.mxu0 0.0
    %609 = vmatpush.msra.mxu0 0.0
    %610 = vmatpush.msra.mxu0 0.0
    %611 = vmatpush.msra.mxu0 0.0
    %612 = vmatpush.msra.mxu0 0.0
    %613 = vmatpush.msra.mxu0 0.0
    %614 = vmatpush.msra.mxu0 0.0
    %615 = vmatpush.msra.mxu0 0.0
    %616 = vmatpush.msra.mxu0 0.0
    %617 = vmatpush.msra.mxu0 %v305
    %618 = vmatmul.f32.gmra.mxu0 %v562
    %v619 = vpop.f32.mrf.mxu0
    %v620 = vadd.f32 0.0, %v619
    %621 = vmatmul.f32.gmra.mxu0 %v565
    %v622 = vpop.f32.mrf.mxu0
    %v623 = vadd.f32 0.0, %v622
    %624 = vmatmul.f32.gmra.mxu0 %v568
    %v625 = vpop.f32.mrf.mxu0
    %v626 = vadd.f32 0.0, %v625
    %627 = vmatmul.f32.gmra.mxu0 %v571
    %v628 = vpop.f32.mrf.mxu0
    %v629 = vadd.f32 0.0, %v628
    %630 = vdwg.mxu0
    %s631 = scalar_lea.vmem [#allocation8], 130
    %v632 = vld [vmem:[%s631] ss:$8 sm:$0x3]
    %s633 = scalar_lea.vmem [#allocation8], 133
    %v634 = vld [vmem:[%s633] ss:$8 sm:$0x3]
    %v635 = vmul.f32 %v439, %v591
    %v636 = vmul.f32 %v440, %v620
    %v637 = vmul.f32 %v441, %v594
    %v638 = vmul.f32 %v442, %v623
    %v639 = vmul.f32 %v443, %v597
    %v640 = vmul.f32 %v444, %v626
    %v641 = vmul.f32 %v445, %v600
    %v642 = vmul.f32 %v446, %v629
    %v644 = vperm.slane %v632, 0
    %v645 = vperm.slane %v632, 1
    %v648 = vmul.f32 %v635, %v644
    %v649 = vmul.f32 %v636, %v645
    %v650 = vmul.f32 %v637, %v644
    %v651 = vmul.f32 %v638, %v645
    %v652 = vmul.f32 %v639, %v644
    %v653 = vmul.f32 %v640, %v645
    %v654 = vmul.f32 %v641, %v644
    %v655 = vmul.f32 %v642, %v645
    %v657 = vperm.slane %v634, 0
    %v658 = vperm.slane %v634, 1
    %v661 = vadd.f32 %v648, %v657
    %v662 = vadd.f32 %v649, %v658
    %v663 = vadd.f32 %v650, %v657
    %v664 = vadd.f32 %v651, %v658
    %v665 = vadd.f32 %v652, %v657
    %v666 = vadd.f32 %v653, %v658
    %v667 = vadd.f32 %v654, %v657
    %v668 = vadd.f32 %v655, %v658
    %vm669 = vcmp.gt.f32.partialorder %v661, 0.0
    %vm670 = vcmp.gt.f32.partialorder %v662, 0.0
    %vm671 = vcmp.gt.f32.partialorder %v663, 0.0
    %vm672 = vcmp.gt.f32.partialorder %v664, 0.0
    %vm673 = vcmp.gt.f32.partialorder %v665, 0.0
    %vm674 = vcmp.gt.f32.partialorder %v666, 0.0
    %vm675 = vcmp.gt.f32.partialorder %v667, 0.0
    %vm676 = vcmp.gt.f32.partialorder %v668, 0.0
    %v677 = vmin.f32 %v661, 0.0
    %v678 = vmin.f32 %v662, 0.0
    %v679 = vmin.f32 %v663, 0.0
    %v680 = vmin.f32 %v664, 0.0
    %v681 = vmin.f32 %v665, 0.0
    %v682 = vmin.f32 %v666, 0.0
    %v683 = vmin.f32 %v667, 0.0
    %v684 = vmin.f32 %v668, 0.0
    %v685 = vmul.f32 %v677, 1.442695
    %v686 = vpow.pop %v685
    %v687 = vmul.f32 %v678, 1.442695
    %v688 = vpow.pop %v687
    %v689 = vmul.f32 %v679, 1.442695
    %v690 = vpow.pop %v689
    %v691 = vmul.f32 %v680, 1.442695
    %v692 = vpow.pop %v691
    %v693 = vmul.f32 %v681, 1.442695
    %v694 = vpow.pop %v693
    %v695 = vmul.f32 %v682, 1.442695
    %v696 = vpow.pop %v695
    %v697 = vmul.f32 %v683, 1.442695
    %v698 = vpow.pop %v697
    %v699 = vmul.f32 %v684, 1.442695
    %v700 = vpow.pop %v699
    %v701 = vsub.f32 %v686, 1.0
    %v702 = vsub.f32 %v688, 1.0
    %v703 = vsub.f32 %v690, 1.0
    %v704 = vsub.f32 %v692, 1.0
    %v705 = vsub.f32 %v694, 1.0
    %v706 = vsub.f32 %v696, 1.0
    %v707 = vsub.f32 %v698, 1.0
    %v708 = vsub.f32 %v700, 1.0
    %v709 = vsel %vm669, %v661, %v701
    %v710 = vsel %vm670, %v662, %v702
    %v711 = vsel %vm671, %v663, %v703
    %v712 = vsel %vm672, %v664, %v704
    %v713 = vsel %vm673, %v665, %v705
    %v714 = vsel %vm674, %v666, %v706
    %v715 = vsel %vm675, %v667, %v707
    %v716 = vsel %vm676, %v668, %v708
    %v717 = vld [vmem:[#allocation7 + $0x80] sm:$0xff]
    %v718 = vld [vmem:[#allocation7 + $0x88] sm:$0xff]
    %v719 = vld [vmem:[#allocation7 + $0xa0] sm:$0xff]
    %v720 = vld [vmem:[#allocation7 + $0xa8] sm:$0xff]
    %v721 = vld [vmem:[#allocation7 + $0xc0] sm:$0xff]
    %v722 = vld [vmem:[#allocation7 + $0xc8] sm:$0xff]
    %v723 = vld [vmem:[#allocation7 + $0xe0] sm:$0xff]
    %v724 = vld [vmem:[#allocation7 + $0xe8] sm:$0xff]
    %v725 = vld [vmem:[#allocation7 + $0x100] sm:$0xff]
    %v726 = vld [vmem:[#allocation7 + $0x108] sm:$0xff]
    %v727 = vld [vmem:[#allocation7 + $0x120] sm:$0xff]
    %v728 = vld [vmem:[#allocation7 + $0x128] sm:$0xff]
    %v729 = vld [vmem:[#allocation7 + $0x140] sm:$0xff]
    %v730 = vld [vmem:[#allocation7 + $0x148] sm:$0xff]
    %v731 = vld [vmem:[#allocation7 + $0x160] sm:$0xff]
    %v732 = vld [vmem:[#allocation7 + $0x168] sm:$0xff]
    %v733 = vld [vmem:[#allocation7 + $0x180] sm:$0xff]
    %v734 = vld [vmem:[#allocation7 + $0x188] sm:$0xff]
    %v735 = vld [vmem:[#allocation7 + $0x1a0] sm:$0xff]
    %v736 = vld [vmem:[#allocation7 + $0x1a8] sm:$0xff]
    %v737 = vld [vmem:[#allocation7 + $0x1c0] sm:$0xff]
    %v738 = vld [vmem:[#allocation7 + $0x1c8] sm:$0xff]
    %v739 = vld [vmem:[#allocation7 + $0x1e0] sm:$0xff]
    %v740 = vld [vmem:[#allocation7 + $0x1e8] sm:$0xff]
    %v741 = vld [vmem:[#allocation7 + $0x200] sm:$0xff]
    %v742 = vld [vmem:[#allocation7 + $0x208] sm:$0xff]
    %v743 = vld [vmem:[#allocation7 + $0x220] sm:$0xff]
    %v744 = vld [vmem:[#allocation7 + $0x228] sm:$0xff]
    %v745 = vld [vmem:[#allocation7 + $0x240] sm:$0xff]
    %v746 = vld [vmem:[#allocation7 + $0x248] sm:$0xff]
    %v747 = vld [vmem:[#allocation7 + $0x260] sm:$0xff]
    %v748 = vld [vmem:[#allocation7 + $0x268] sm:$0xff]
    %v749 = vld [vmem:[#allocation7 + $0x280] sm:$0xff]
    %v750 = vld [vmem:[#allocation7 + $0x288] sm:$0xff]
    %v751 = vld [vmem:[#allocation7 + $0x2a0] sm:$0xff]
    %v752 = vld [vmem:[#allocation7 + $0x2a8] sm:$0xff]
    %v753 = vld [vmem:[#allocation7 + $0x2c0] sm:$0xff]
    %v754 = vld [vmem:[#allocation7 + $0x2c8] sm:$0xff]
    %v755 = vld [vmem:[#allocation7 + $0x2e0] sm:$0xff]
    %v756 = vld [vmem:[#allocation7 + $0x2e8] sm:$0xff]
    %v757 = vld [vmem:[#allocation7 + $0x300] sm:$0xff]
    %v758 = vld [vmem:[#allocation7 + $0x308] sm:$0xff]
    %v759 = vld [vmem:[#allocation7 + $0x320] sm:$0xff]
    %v760 = vld [vmem:[#allocation7 + $0x328] sm:$0xff]
    %v761 = vld [vmem:[#allocation7 + $0x340] sm:$0xff]
    %v762 = vld [vmem:[#allocation7 + $0x348] sm:$0xff]
    %v763 = vld [vmem:[#allocation7 + $0x360] sm:$0xff]
    %v764 = vld [vmem:[#allocation7 + $0x368] sm:$0xff]
    %v765 = vld [vmem:[#allocation7 + $0x380] sm:$0xff]
    %v766 = vld [vmem:[#allocation7 + $0x388] sm:$0xff]
    %v767 = vld [vmem:[#allocation7 + $0x3a0] sm:$0xff]
    %v768 = vld [vmem:[#allocation7 + $0x3a8] sm:$0xff]
    %v769 = vld [vmem:[#allocation7 + $0x3c0] sm:$0xff]
    %v770 = vld [vmem:[#allocation7 + $0x3c8] sm:$0xff]
    %v771 = vld [vmem:[#allocation7 + $0x3e0] sm:$0xff]
    %v772 = vld [vmem:[#allocation7 + $0x3e8] sm:$0xff]
    %v773 = vld [vmem:[#allocation7 + $0x400] sm:$0xff]
    %v774 = vld [vmem:[#allocation7 + $0x408] sm:$0xff]
    %v775 = vld [vmem:[#allocation7 + $0x420] sm:$0xff]
    %v776 = vld [vmem:[#allocation7 + $0x428] sm:$0xff]
    %v777 = vld [vmem:[#allocation7 + $0x440] sm:$0xff]
    %v778 = vld [vmem:[#allocation7 + $0x448] sm:$0xff]
    %v779 = vld [vmem:[#allocation7 + $0x460] sm:$0xff]
    %v780 = vld [vmem:[#allocation7 + $0x468] sm:$0xff]
    %s781 = scalar_lea.vmem [#allocation8], 71
    %v782 = vld [vmem:[%s781] ss:$8 sm:$0xf]
    %v783 = vpack.c.bf16 %v711, %v709
    %v784 = vpack.c.bf16 %v712, %v710
    %v785 = vpack.c.bf16 %v715, %v713
    %v786 = vpack.c.bf16 %v716, %v714
    %v788 = vperm.slane %v782, 0
    %v789 = vperm.slane %v782, 1
    %v790 = vperm.slane %v782, 2
    %v791 = vperm.slane %v782, 3
    %v860 = vunpack.c.l.b16 %v717
    %v861 = vunpack.c.h.b16 %v717
    %v862 = vunpack.c.l.b16 %v718
    %v863 = vunpack.c.h.b16 %v718
    %v864 = vunpack.c.l.b16 %v719
    %v865 = vunpack.c.h.b16 %v719
    %v866 = vunpack.c.l.b16 %v720
    %v867 = vunpack.c.h.b16 %v720
    %v868 = vunpack.c.l.b16 %v721
    %v869 = vunpack.c.h.b16 %v721
    %v870 = vunpack.c.l.b16 %v722
    %v871 = vunpack.c.h.b16 %v722
    %v872 = vunpack.c.l.b16 %v723
    %v873 = vunpack.c.h.b16 %v723
    %v874 = vunpack.c.l.b16 %v724
    %v875 = vunpack.c.h.b16 %v724
    %v876 = vunpack.c.l.b16 %v725
    %v877 = vunpack.c.h.b16 %v725
    %v878 = vunpack.c.l.b16 %v726
    %v879 = vunpack.c.h.b16 %v726
    %v880 = vunpack.c.l.b16 %v727
    %v881 = vunpack.c.h.b16 %v727
    %v882 = vunpack.c.l.b16 %v728
    %v883 = vunpack.c.h.b16 %v728
    %v884 = vunpack.c.l.b16 %v729
    %v885 = vunpack.c.h.b16 %v729
    %v886 = vunpack.c.l.b16 %v730
    %v887 = vunpack.c.h.b16 %v730
    %v888 = vunpack.c.l.b16 %v731
    %v889 = vunpack.c.h.b16 %v731
    %v890 = vunpack.c.l.b16 %v732
    %v891 = vunpack.c.h.b16 %v732
    %v892 = vunpack.c.l.b16 %v733
    %v893 = vunpack.c.h.b16 %v733
    %v894 = vunpack.c.l.b16 %v734
    %v895 = vunpack.c.h.b16 %v734
    %v896 = vunpack.c.l.b16 %v735
    %v897 = vunpack.c.h.b16 %v735
    %v898 = vunpack.c.l.b16 %v736
    %v899 = vunpack.c.h.b16 %v736
    %v900 = vunpack.c.l.b16 %v737
    %v901 = vunpack.c.h.b16 %v737
    %v902 = vunpack.c.l.b16 %v738
    %v903 = vunpack.c.h.b16 %v738
    %v904 = vunpack.c.l.b16 %v739
    %v905 = vunpack.c.h.b16 %v739
    %v906 = vunpack.c.l.b16 %v740
    %v907 = vunpack.c.h.b16 %v740
    %v908 = vunpack.c.l.b16 %v741
    %v909 = vunpack.c.h.b16 %v741
    %v910 = vunpack.c.l.b16 %v742
    %v911 = vunpack.c.h.b16 %v742
    %v912 = vunpack.c.l.b16 %v743
    %v913 = vunpack.c.h.b16 %v743
    %v914 = vunpack.c.l.b16 %v744
    %v915 = vunpack.c.h.b16 %v744
    %v916 = vunpack.c.l.b16 %v745
    %v917 = vunpack.c.h.b16 %v745
    %v918 = vunpack.c.l.b16 %v746
    %v919 = vunpack.c.h.b16 %v746
    %v920 = vunpack.c.l.b16 %v747
    %v921 = vunpack.c.h.b16 %v747
    %v922 = vunpack.c.l.b16 %v748
    %v923 = vunpack.c.h.b16 %v748
    %v924 = vunpack.c.l.b16 %v749
    %v925 = vunpack.c.h.b16 %v749
    %v926 = vunpack.c.l.b16 %v750
    %v927 = vunpack.c.h.b16 %v750
    %v928 = vunpack.c.l.b16 %v751
    %v929 = vunpack.c.h.b16 %v751
    %v930 = vunpack.c.l.b16 %v752
    %v931 = vunpack.c.h.b16 %v752
    %v932 = vunpack.c.l.b16 %v753
    %v933 = vunpack.c.h.b16 %v753
    %v934 = vunpack.c.l.b16 %v754
    %v935 = vunpack.c.h.b16 %v754
    %v936 = vunpack.c.l.b16 %v755
    %v937 = vunpack.c.h.b16 %v755
    %v938 = vunpack.c.l.b16 %v756
    %v939 = vunpack.c.h.b16 %v756
    %v940 = vunpack.c.l.b16 %v757
    %v941 = vunpack.c.h.b16 %v757
    %v942 = vunpack.c.l.b16 %v758
    %v943 = vunpack.c.h.b16 %v758
    %v944 = vunpack.c.l.b16 %v759
    %v945 = vunpack.c.h.b16 %v759
    %v946 = vunpack.c.l.b16 %v760
    %v947 = vunpack.c.h.b16 %v760
    %v948 = vunpack.c.l.b16 %v761
    %v949 = vunpack.c.h.b16 %v761
    %v950 = vunpack.c.l.b16 %v762
    %v951 = vunpack.c.h.b16 %v762
    %v952 = vunpack.c.l.b16 %v763
    %v953 = vunpack.c.h.b16 %v763
    %v954 = vunpack.c.l.b16 %v764
    %v955 = vunpack.c.h.b16 %v764
    %v956 = vunpack.c.l.b16 %v765
    %v957 = vunpack.c.h.b16 %v765
    %v958 = vunpack.c.l.b16 %v766
    %v959 = vunpack.c.h.b16 %v766
    %v960 = vunpack.c.l.b16 %v767
    %v961 = vunpack.c.h.b16 %v767
    %v962 = vunpack.c.l.b16 %v768
    %v963 = vunpack.c.h.b16 %v768
    %v964 = vunpack.c.l.b16 %v769
    %v965 = vunpack.c.h.b16 %v769
    %v966 = vunpack.c.l.b16 %v770
    %v967 = vunpack.c.h.b16 %v770
    %v968 = vunpack.c.l.b16 %v771
    %v969 = vunpack.c.h.b16 %v771
    %v970 = vunpack.c.l.b16 %v772
    %v971 = vunpack.c.h.b16 %v772
    %v972 = vunpack.c.l.b16 %v773
    %v973 = vunpack.c.h.b16 %v773
    %v974 = vunpack.c.l.b16 %v774
    %v975 = vunpack.c.h.b16 %v774
    %v976 = vunpack.c.l.b16 %v775
    %v977 = vunpack.c.h.b16 %v775
    %v978 = vunpack.c.l.b16 %v776
    %v979 = vunpack.c.h.b16 %v776
    %v980 = vunpack.c.l.b16 %v777
    %v981 = vunpack.c.h.b16 %v777
    %v982 = vunpack.c.l.b16 %v778
    %v983 = vunpack.c.h.b16 %v778
    %v984 = vunpack.c.l.b16 %v779
    %v985 = vunpack.c.h.b16 %v779
    %v986 = vunpack.c.l.b16 %v780
    %v987 = vunpack.c.h.b16 %v780
    %v988 = vpack.c.b16 %v864, %v860
    %v989 = vpack.c.b16 %v865, %v861
    %v990 = vpack.c.b16 %v866, %v862
    %v991 = vpack.c.b16 %v867, %v863
    %v992 = vpack.c.b16 %v872, %v868
    %v993 = vpack.c.b16 %v873, %v869
    %v994 = vpack.c.b16 %v874, %v870
    %v995 = vpack.c.b16 %v875, %v871
    %v996 = vpack.c.b16 %v880, %v876
    %v997 = vpack.c.b16 %v881, %v877
    %v998 = vpack.c.b16 %v882, %v878
    %v999 = vpack.c.b16 %v883, %v879
    %v1000 = vpack.c.b16 %v888, %v884
    %v1001 = vpack.c.b16 %v889, %v885
    %v1002 = vpack.c.b16 %v890, %v886
    %v1003 = vpack.c.b16 %v891, %v887
    %v1004 = vpack.c.b16 %v896, %v892
    %v1005 = vpack.c.b16 %v897, %v893
    %v1006 = vpack.c.b16 %v898, %v894
    %v1007 = vpack.c.b16 %v899, %v895
    %v1008 = vpack.c.b16 %v904, %v900
    %v1009 = vpack.c.b16 %v905, %v901
    %v1010 = vpack.c.b16 %v906, %v902
    %v1011 = vpack.c.b16 %v907, %v903
    %v1012 = vpack.c.b16 %v912, %v908
    %v1013 = vpack.c.b16 %v913, %v909
    %v1014 = vpack.c.b16 %v914, %v910
    %v1015 = vpack.c.b16 %v915, %v911
    %v1016 = vpack.c.b16 %v920, %v916
    %v1017 = vpack.c.b16 %v921, %v917
    %v1018 = vpack.c.b16 %v922, %v918
    %v1019 = vpack.c.b16 %v923, %v919
    %v1020 = vpack.c.b16 %v928, %v924
    %v1021 = vpack.c.b16 %v929, %v925
    %v1022 = vpack.c.b16 %v930, %v926
    %v1023 = vpack.c.b16 %v931, %v927
    %v1024 = vpack.c.b16 %v936, %v932
    %v1025 = vpack.c.b16 %v937, %v933
    %v1026 = vpack.c.b16 %v938, %v934
    %v1027 = vpack.c.b16 %v939, %v935
    %v1028 = vpack.c.b16 %v944, %v940
    %v1029 = vpack.c.b16 %v945, %v941
    %v1030 = vpack.c.b16 %v946, %v942
    %v1031 = vpack.c.b16 %v947, %v943
    %v1032 = vpack.c.b16 %v952, %v948
    %v1033 = vpack.c.b16 %v953, %v949
    %v1034 = vpack.c.b16 %v954, %v950
    %v1035 = vpack.c.b16 %v955, %v951
    %v1036 = vpack.c.b16 %v960, %v956
    %v1037 = vpack.c.b16 %v961, %v957
    %v1038 = vpack.c.b16 %v962, %v958
    %v1039 = vpack.c.b16 %v963, %v959
    %v1040 = vpack.c.b16 %v968, %v964
    %v1041 = vpack.c.b16 %v969, %v965
    %v1042 = vpack.c.b16 %v970, %v966
    %v1043 = vpack.c.b16 %v971, %v967
    %v1044 = vpack.c.b16 %v976, %v972
    %v1045 = vpack.c.b16 %v977, %v973
    %v1046 = vpack.c.b16 %v978, %v974
    %v1047 = vpack.c.b16 %v979, %v975
    %v1048 = vpack.c.b16 %v984, %v980
    %v1049 = vpack.c.b16 %v985, %v981
    %v1050 = vpack.c.b16 %v986, %v982
    %v1051 = vpack.c.b16 %v987, %v983
    %1116 = vmatpush.bf16.msra.mxu0 %v1016
    %1117 = vmatpush.bf16.msra.mxu0 %v1012
    %1118 = vmatpush.bf16.msra.mxu0 %v1008
    %1119 = vmatpush.bf16.msra.mxu0 %v1004
    %1120 = vmatpush.bf16.msra.mxu0 %v1000
    %1121 = vmatpush.bf16.msra.mxu0 %v996
    %1122 = vmatpush.bf16.msra.mxu0 %v992
    %1123 = vmatpush.bf16.msra.mxu0 %v988
    %1124 = vmatmul.bf16.gmra.mxu0 %v783
    %v1125 = vpop.f32.mrf.mxu0
    %v1126 = vadd.f32 %v788, %v1125
    %v1127 = vpop.f32.mrf.mxu0
    %v1128 = vadd.f32 %v788, %v1127
    %1129 = vmatmul.bf16.gmra.mxu0 %v785
    %v1130 = vpop.f32.mrf.mxu0
    %v1131 = vadd.f32 %v788, %v1130
    %v1132 = vpop.f32.mrf.mxu0
    %v1133 = vadd.f32 %v788, %v1132
    %1134 = vdwg.mxu0
    %1135 = vmatpush.bf16.msra.mxu0 %v1048
    %1136 = vmatpush.bf16.msra.mxu0 %v1044
    %1137 = vmatpush.bf16.msra.mxu0 %v1040
    %1138 = vmatpush.bf16.msra.mxu0 %v1036
    %1139 = vmatpush.bf16.msra.mxu0 %v1032
    %1140 = vmatpush.bf16.msra.mxu0 %v1028
    %1141 = vmatpush.bf16.msra.mxu0 %v1024
    %1142 = vmatpush.bf16.msra.mxu0 %v1020
    %1143 = vmatmul.bf16.gmra.mxu0 %v784
    %v1144 = vpop.f32.mrf.mxu0
    %v1145 = vadd.f32 %v1126, %v1144
    %v1146 = vpop.f32.mrf.mxu0
    %v1147 = vadd.f32 %v1128, %v1146
    %1148 = vmatmul.bf16.gmra.mxu0 %v786
    %v1149 = vpop.f32.mrf.mxu0
    %v1150 = vadd.f32 %v1131, %v1149
    %v1151 = vpop.f32.mrf.mxu0
    %v1152 = vadd.f32 %v1133, %v1151
    %1153 = vdwg.mxu0
    %1154 = vmatpush.bf16.msra.mxu0 %v1017
    %1155 = vmatpush.bf16.msra.mxu0 %v1013
    %1156 = vmatpush.bf16.msra.mxu0 %v1009
    %1157 = vmatpush.bf16.msra.mxu0 %v1005
    %1158 = vmatpush.bf16.msra.mxu0 %v1001
    %1159 = vmatpush.bf16.msra.mxu0 %v997
    %1160 = vmatpush.bf16.msra.mxu0 %v993
    %1161 = vmatpush.bf16.msra.mxu0 %v989
    %1162 = vmatmul.bf16.gmra.mxu0 %v783
    %v1163 = vpop.f32.mrf.mxu0
    %v1164 = vadd.f32 %v789, %v1163
    %v1165 = vpop.f32.mrf.mxu0
    %v1166 = vadd.f32 %v789, %v1165
    %1167 = vmatmul.bf16.gmra.mxu0 %v785
    %v1168 = vpop.f32.mrf.mxu0
    %v1169 = vadd.f32 %v789, %v1168
    %v1170 = vpop.f32.mrf.mxu0
    %v1171 = vadd.f32 %v789, %v1170
    %1172 = vdwg.mxu0
    %1173 = vmatpush.bf16.msra.mxu0 %v1049
    %1174 = vmatpush.bf16.msra.mxu0 %v1045
    %1175 = vmatpush.bf16.msra.mxu0 %v1041
    %1176 = vmatpush.bf16.msra.mxu0 %v1037
    %1177 = vmatpush.bf16.msra.mxu0 %v1033
    %1178 = vmatpush.bf16.msra.mxu0 %v1029
    %1179 = vmatpush.bf16.msra.mxu0 %v1025
    %1180 = vmatpush.bf16.msra.mxu0 %v1021
    %1181 = vmatmul.bf16.gmra.mxu0 %v784
    %v1182 = vpop.f32.mrf.mxu0
    %v1183 = vadd.f32 %v1164, %v1182
    %v1184 = vpop.f32.mrf.mxu0
    %v1185 = vadd.f32 %v1166, %v1184
    %1186 = vmatmul.bf16.gmra.mxu0 %v786
    %v1187 = vpop.f32.mrf.mxu0
    %v1188 = vadd.f32 %v1169, %v1187
    %v1189 = vpop.f32.mrf.mxu0
    %v1190 = vadd.f32 %v1171, %v1189
    %1191 = vdwg.mxu0
    %1192 = vmatpush.bf16.msra.mxu0 %v1018
    %1193 = vmatpush.bf16.msra.mxu0 %v1014
    %1194 = vmatpush.bf16.msra.mxu0 %v1010
    %1195 = vmatpush.bf16.msra.mxu0 %v1006
    %1196 = vmatpush.bf16.msra.mxu0 %v1002
    %1197 = vmatpush.bf16.msra.mxu0 %v998
    %1198 = vmatpush.bf16.msra.mxu0 %v994
    %1199 = vmatpush.bf16.msra.mxu0 %v990
    %1200 = vmatmul.bf16.gmra.mxu0 %v783
    %v1201 = vpop.f32.mrf.mxu0
    %v1202 = vadd.f32 %v790, %v1201
    %v1203 = vpop.f32.mrf.mxu0
    %v1204 = vadd.f32 %v790, %v1203
    %1205 = vmatmul.bf16.gmra.mxu0 %v785
    %v1206 = vpop.f32.mrf.mxu0
    %v1207 = vadd.f32 %v790, %v1206
    %v1208 = vpop.f32.mrf.mxu0
    %v1209 = vadd.f32 %v790, %v1208
    %1210 = vdwg.mxu0
    %1211 = vmatpush.bf16.msra.mxu0 %v1050
    %1212 = vmatpush.bf16.msra.mxu0 %v1046
    %1213 = vmatpush.bf16.msra.mxu0 %v1042
    %1214 = vmatpush.bf16.msra.mxu0 %v1038
    %1215 = vmatpush.bf16.msra.mxu0 %v1034
    %1216 = vmatpush.bf16.msra.mxu0 %v1030
    %1217 = vmatpush.bf16.msra.mxu0 %v1026
    %1218 = vmatpush.bf16.msra.mxu0 %v1022
    %1219 = vmatmul.bf16.gmra.mxu0 %v784
    %v1220 = vpop.f32.mrf.mxu0
    %v1221 = vadd.f32 %v1202, %v1220
    %v1222 = vpop.f32.mrf.mxu0
    %v1223 = vadd.f32 %v1204, %v1222
    %1224 = vmatmul.bf16.gmra.mxu0 %v786
    %v1225 = vpop.f32.mrf.mxu0
    %v1226 = vadd.f32 %v1207, %v1225
    %v1227 = vpop.f32.mrf.mxu0
    %v1228 = vadd.f32 %v1209, %v1227
    %1229 = vdwg.mxu0
    %1230 = vmatpush.bf16.msra.mxu0 %v1019
    %1231 = vmatpush.bf16.msra.mxu0 %v1015
    %1232 = vmatpush.bf16.msra.mxu0 %v1011
    %1233 = vmatpush.bf16.msra.mxu0 %v1007
    %1234 = vmatpush.bf16.msra.mxu0 %v1003
    %1235 = vmatpush.bf16.msra.mxu0 %v999
    %1236 = vmatpush.bf16.msra.mxu0 %v995
    %1237 = vmatpush.bf16.msra.mxu0 %v991
    %1238 = vmatmul.bf16.gmra.mxu0 %v783
    %v1239 = vpop.f32.mrf.mxu0
    %v1240 = vadd.f32 %v791, %v1239
    %v1241 = vpop.f32.mrf.mxu0
    %v1242 = vadd.f32 %v791, %v1241
    %1243 = vmatmul.bf16.gmra.mxu0 %v785
    %v1244 = vpop.f32.mrf.mxu0
    %v1245 = vadd.f32 %v791, %v1244
    %v1246 = vpop.f32.mrf.mxu0
    %v1247 = vadd.f32 %v791, %v1246
    %1248 = vdwg.mxu0
    %1249 = vmatpush.bf16.msra.mxu0 %v1051
    %1250 = vmatpush.bf16.msra.mxu0 %v1047
    %1251 = vmatpush.bf16.msra.mxu0 %v1043
    %1252 = vmatpush.bf16.msra.mxu0 %v1039
    %1253 = vmatpush.bf16.msra.mxu0 %v1035
    %1254 = vmatpush.bf16.msra.mxu0 %v1031
    %1255 = vmatpush.bf16.msra.mxu0 %v1027
    %1256 = vmatpush.bf16.msra.mxu0 %v1023
    %1257 = vmatmul.bf16.gmra.mxu0 %v784
    %v1258 = vpop.f32.mrf.mxu0
    %v1259 = vadd.f32 %v1240, %v1258
    %v1260 = vpop.f32.mrf.mxu0
    %v1261 = vadd.f32 %v1242, %v1260
    %1262 = vmatmul.bf16.gmra.mxu0 %v786
    %v1263 = vpop.f32.mrf.mxu0
    %v1264 = vadd.f32 %v1245, %v1263
    %v1265 = vpop.f32.mrf.mxu0
    %v1266 = vadd.f32 %v1247, %v1265
    %1267 = vdwg.mxu0
    %v1268 = vld [vmem:[#allocation8 + $0x40] sm:$0xf]
    %v1269 = vld [vmem:[#allocation8 + $0x48] sm:$0xf]
    %v1270 = vld [vmem:[#allocation8 + $0x50] sm:$0xf]
    %v1271 = vld [vmem:[#allocation8 + $0x58] sm:$0xf]
    %1272 = vmatpush.xpose.msra.mxu0 0.0
    %1273 = vmatpush.xpose.msra.mxu0 0.0
    %1274 = vmatpush.xpose.msra.mxu0 0.0
    %1275 = vmatpush.xpose.msra.mxu0 0.0
    %1276 = vmatpush.xpose.msra.mxu0 0.0
    %1277 = vmatpush.xpose.msra.mxu0 0.0
    %1278 = vmatpush.xpose.msra.mxu0 0.0
    %1279 = vmatpush.xpose.msra.mxu0 0.0
    %1280 = vmatpush.xpose.msra.mxu0 0.0
    %1281 = vmatpush.xpose.msra.mxu0 0.0
    %1282 = vmatpush.xpose.msra.mxu0 0.0
    %1283 = vmatpush.xpose.msra.mxu0 0.0
    %1284 = vmatpush.xpose.msra.mxu0 0.0
    %1285 = vmatpush.xpose.msra.mxu0 0.0
    %1286 = vmatpush.xpose.msra.mxu0 0.0
    %1287 = vmatpush.xpose.msra.mxu0 %v1268
    %1288 = vmatmul.f32.gmra.mxu0 %v1145
    %v1289 = vpop.f32.mrf.mxu0
    %v1290 = vadd.f32 0.0, %v1289
    %1291 = vmatmul.f32.gmra.mxu0 %v1147
    %v1292 = vpop.f32.mrf.mxu0
    %v1293 = vadd.f32 0.0, %v1292
    %1294 = vmatmul.f32.gmra.mxu0 %v1150
    %v1295 = vpop.f32.mrf.mxu0
    %v1296 = vadd.f32 0.0, %v1295
    %1297 = vmatmul.f32.gmra.mxu0 %v1152
    %v1298 = vpop.f32.mrf.mxu0
    %v1299 = vadd.f32 0.0, %v1298
    %1300 = vdwg.mxu0
    %1301 = vmatpush.xpose.msra.mxu0 0.0
    %1302 = vmatpush.xpose.msra.mxu0 0.0
    %1303 = vmatpush.xpose.msra.mxu0 0.0
    %1304 = vmatpush.xpose.msra.mxu0 0.0
    %1305 = vmatpush.xpose.msra.mxu0 0.0
    %1306 = vmatpush.xpose.msra.mxu0 0.0
    %1307 = vmatpush.xpose.msra.mxu0 0.0
    %1308 = vmatpush.xpose.msra.mxu0 0.0
    %1309 = vmatpush.xpose.msra.mxu0 0.0
    %1310 = vmatpush.xpose.msra.mxu0 0.0
    %1311 = vmatpush.xpose.msra.mxu0 0.0
    %1312 = vmatpush.xpose.msra.mxu0 0.0
    %1313 = vmatpush.xpose.msra.mxu0 0.0
    %1314 = vmatpush.xpose.msra.mxu0 0.0
    %1315 = vmatpush.xpose.msra.mxu0 0.0
    %1316 = vmatpush.xpose.msra.mxu0 %v1269
    %1317 = vmatmul.f32.gmra.mxu0 %v1183
    %v1318 = vpop.f32.mrf.mxu0
    %v1319 = vadd.f32 %v1290, %v1318
    %1320 = vmatmul.f32.gmra.mxu0 %v1185
    %v1321 = vpop.f32.mrf.mxu0
    %v1322 = vadd.f32 %v1293, %v1321
    %1323 = vmatmul.f32.gmra.mxu0 %v1188
    %v1324 = vpop.f32.mrf.mxu0
    %v1325 = vadd.f32 %v1296, %v1324
    %1326 = vmatmul.f32.gmra.mxu0 %v1190
    %v1327 = vpop.f32.mrf.mxu0
    %v1328 = vadd.f32 %v1299, %v1327
    %1329 = vdwg.mxu0
    %1330 = vmatpush.xpose.msra.mxu0 0.0
    %1331 = vmatpush.xpose.msra.mxu0 0.0
    %1332 = vmatpush.xpose.msra.mxu0 0.0
    %1333 = vmatpush.xpose.msra.mxu0 0.0
    %1334 = vmatpush.xpose.msra.mxu0 0.0
    %1335 = vmatpush.xpose.msra.mxu0 0.0
    %1336 = vmatpush.xpose.msra.mxu0 0.0
    %1337 = vmatpush.xpose.msra.mxu0 0.0
    %1338 = vmatpush.xpose.msra.mxu0 0.0
    %1339 = vmatpush.xpose.msra.mxu0 0.0
    %1340 = vmatpush.xpose.msra.mxu0 0.0
    %1341 = vmatpush.xpose.msra.mxu0 0.0
    %1342 = vmatpush.xpose.msra.mxu0 0.0
    %1343 = vmatpush.xpose.msra.mxu0 0.0
    %1344 = vmatpush.xpose.msra.mxu0 0.0
    %1345 = vmatpush.xpose.msra.mxu0 %v1270
    %1346 = vmatmul.f32.gmra.mxu0 %v1221
    %v1347 = vpop.f32.mrf.mxu0
    %v1348 = vadd.f32 %v1319, %v1347
    %1349 = vmatmul.f32.gmra.mxu0 %v1223
    %v1350 = vpop.f32.mrf.mxu0
    %v1351 = vadd.f32 %v1322, %v1350
    %1352 = vmatmul.f32.gmra.mxu0 %v1226
    %v1353 = vpop.f32.mrf.mxu0
    %v1354 = vadd.f32 %v1325, %v1353
    %1355 = vmatmul.f32.gmra.mxu0 %v1228
    %v1356 = vpop.f32.mrf.mxu0
    %v1357 = vadd.f32 %v1328, %v1356
    %1358 = vdwg.mxu0
    %1359 = vmatpush.xpose.msra.mxu0 0.0
    %1360 = vmatpush.xpose.msra.mxu0 0.0
    %1361 = vmatpush.xpose.msra.mxu0 0.0
    %1362 = vmatpush.xpose.msra.mxu0 0.0
    %1363 = vmatpush.xpose.msra.mxu0 0.0
    %1364 = vmatpush.xpose.msra.mxu0 0.0
    %1365 = vmatpush.xpose.msra.mxu0 0.0
    %1366 = vmatpush.xpose.msra.mxu0 0.0
    %1367 = vmatpush.xpose.msra.mxu0 0.0
    %1368 = vmatpush.xpose.msra.mxu0 0.0
    %1369 = vmatpush.xpose.msra.mxu0 0.0
    %1370 = vmatpush.xpose.msra.mxu0 0.0
    %1371 = vmatpush.xpose.msra.mxu0 0.0
    %1372 = vmatpush.xpose.msra.mxu0 0.0
    %1373 = vmatpush.xpose.msra.mxu0 0.0
    %1374 = vmatpush.xpose.msra.mxu0 %v1271
    %1375 = vmatmul.f32.gmra.mxu0 %v1259
    %v1376 = vpop.f32.mrf.mxu0
    %v1377 = vadd.f32 %v1348, %v1376
    %1378 = vmatmul.f32.gmra.mxu0 %v1261
    %v1379 = vpop.f32.mrf.mxu0
    %v1380 = vadd.f32 %v1351, %v1379
    %1381 = vmatmul.f32.gmra.mxu0 %v1264
    %v1382 = vpop.f32.mrf.mxu0
    %v1383 = vadd.f32 %v1354, %v1382
    %1384 = vmatmul.f32.gmra.mxu0 %v1266
    %v1385 = vpop.f32.mrf.mxu0
    %v1386 = vadd.f32 %v1357, %v1385
    %1387 = vdwg.mxu0
    %v1388 = vmul.f32 %v1377, 0.0078125
    %v1389 = vmul.f32 %v1380, 0.0078125
    %v1390 = vmul.f32 %v1383, 0.0078125
    %v1391 = vmul.f32 %v1386, 0.0078125
    %vm1392 = vcmask 31744
    %v1394 = vsel %vm1392, %v1388, 0
    %v1397 = vsel %vm1392, %v1389, 0
    %v1400 = vsel %vm1392, %v1390, 0
    %v1403 = vsel %vm1392, %v1391, 0
    %vm1405 = vcmask 1043456
    %v1407 = vsel %vm1405, %v1268, 0
    %v1410 = vsel %vm1405, %v1269, 0
    %v1413 = vsel %vm1405, %v1270, 0
    %v1416 = vsel %vm1405, %v1271, 0
    %1418 = vmatpush.msra.mxu0 0.0
    %1419 = vmatpush.msra.mxu0 0.0
    %1420 = vmatpush.msra.mxu0 0.0
    %1421 = vmatpush.msra.mxu0 0.0
    %1422 = vmatpush.msra.mxu0 0.0
    %1423 = vmatpush.msra.mxu0 0.0
    %1424 = vmatpush.msra.mxu0 0.0
    %1425 = vmatpush.msra.mxu0 0.0
    %1426 = vmatpush.msra.mxu0 0.0
    %1427 = vmatpush.msra.mxu0 0.0
    %1428 = vmatpush.msra.mxu0 0.0
    %1429 = vmatpush.msra.mxu0 0.0
    %1430 = vmatpush.msra.mxu0 0.0
    %1431 = vmatpush.msra.mxu0 0.0
    %1432 = vmatpush.msra.mxu0 0.0
    %1433 = vmatpush.msra.mxu0 %v1407
    %1434 = vmatmul.f32.gmra.mxu0 %v1394
    %v1435 = vpop.f32.mrf.mxu0
    %v1436 = vadd.f32 0.0, %v1435
    %1437 = vmatmul.f32.gmra.mxu0 %v1397
    %v1438 = vpop.f32.mrf.mxu0
    %v1439 = vadd.f32 0.0, %v1438
    %1440 = vmatmul.f32.gmra.mxu0 %v1400
    %v1441 = vpop.f32.mrf.mxu0
    %v1442 = vadd.f32 0.0, %v1441
    %1443 = vmatmul.f32.gmra.mxu0 %v1403
    %v1444 = vpop.f32.mrf.mxu0
    %v1445 = vadd.f32 0.0, %v1444
    %1446 = vdwg.mxu0
    %1447 = vmatpush.msra.mxu0 0.0
    %1448 = vmatpush.msra.mxu0 0.0
    %1449 = vmatpush.msra.mxu0 0.0
    %1450 = vmatpush.msra.mxu0 0.0
    %1451 = vmatpush.msra.mxu0 0.0
    %1452 = vmatpush.msra.mxu0 0.0
    %1453 = vmatpush.msra.mxu0 0.0
    %1454 = vmatpush.msra.mxu0 0.0
    %1455 = vmatpush.msra.mxu0 0.0
    %1456 = vmatpush.msra.mxu0 0.0
    %1457 = vmatpush.msra.mxu0 0.0
    %1458 = vmatpush.msra.mxu0 0.0
    %1459 = vmatpush.msra.mxu0 0.0
    %1460 = vmatpush.msra.mxu0 0.0
    %1461 = vmatpush.msra.mxu0 0.0
    %1462 = vmatpush.msra.mxu0 %v1410
    %1463 = vmatmul.f32.gmra.mxu0 %v1394
    %v1464 = vpop.f32.mrf.mxu0
    %v1465 = vadd.f32 0.0, %v1464
    %1466 = vmatmul.f32.gmra.mxu0 %v1397
    %v1467 = vpop.f32.mrf.mxu0
    %v1468 = vadd.f32 0.0, %v1467
    %1469 = vmatmul.f32.gmra.mxu0 %v1400
    %v1470 = vpop.f32.mrf.mxu0
    %v1471 = vadd.f32 0.0, %v1470
    %1472 = vmatmul.f32.gmra.mxu0 %v1403
    %v1473 = vpop.f32.mrf.mxu0
    %v1474 = vadd.f32 0.0, %v1473
    %1475 = vdwg.mxu0
    %1476 = vmatpush.msra.mxu0 0.0
    %1477 = vmatpush.msra.mxu0 0.0
    %1478 = vmatpush.msra.mxu0 0.0
    %1479 = vmatpush.msra.mxu0 0.0
    %1480 = vmatpush.msra.mxu0 0.0
    %1481 = vmatpush.msra.mxu0 0.0
    %1482 = vmatpush.msra.mxu0 0.0
    %1483 = vmatpush.msra.mxu0 0.0
    %1484 = vmatpush.msra.mxu0 0.0
    %1485 = vmatpush.msra.mxu0 0.0
    %1486 = vmatpush.msra.mxu0 0.0
    %1487 = vmatpush.msra.mxu0 0.0
    %1488 = vmatpush.msra.mxu0 0.0
    %1489 = vmatpush.msra.mxu0 0.0
    %1490 = vmatpush.msra.mxu0 0.0
    %1491 = vmatpush.msra.mxu0 %v1413
    %1492 = vmatmul.f32.gmra.mxu0 %v1394
    %v1493 = vpop.f32.mrf.mxu0
    %v1494 = vadd.f32 0.0, %v1493
    %1495 = vmatmul.f32.gmra.mxu0 %v1397
    %v1496 = vpop.f32.mrf.mxu0
    %v1497 = vadd.f32 0.0, %v1496
    %1498 = vmatmul.f32.gmra.mxu0 %v1400
    %v1499 = vpop.f32.mrf.mxu0
    %v1500 = vadd.f32 0.0, %v1499
    %1501 = vmatmul.f32.gmra.mxu0 %v1403
    %v1502 = vpop.f32.mrf.mxu0
    %v1503 = vadd.f32 0.0, %v1502
    %1504 = vdwg.mxu0
    %1505 = vmatpush.msra.mxu0 0.0
    %1506 = vmatpush.msra.mxu0 0.0
    %1507 = vmatpush.msra.mxu0 0.0
    %1508 = vmatpush.msra.mxu0 0.0
    %1509 = vmatpush.msra.mxu0 0.0
    %1510 = vmatpush.msra.mxu0 0.0
    %1511 = vmatpush.msra.mxu0 0.0
    %1512 = vmatpush.msra.mxu0 0.0
    %1513 = vmatpush.msra.mxu0 0.0
    %1514 = vmatpush.msra.mxu0 0.0
    %1515 = vmatpush.msra.mxu0 0.0
    %1516 = vmatpush.msra.mxu0 0.0
    %1517 = vmatpush.msra.mxu0 0.0
    %1518 = vmatpush.msra.mxu0 0.0
    %1519 = vmatpush.msra.mxu0 0.0
    %1520 = vmatpush.msra.mxu0 %v1416
    %1521 = vmatmul.f32.gmra.mxu0 %v1394
    %v1522 = vpop.f32.mrf.mxu0
    %v1523 = vadd.f32 0.0, %v1522
    %1524 = vmatmul.f32.gmra.mxu0 %v1397
    %v1525 = vpop.f32.mrf.mxu0
    %v1526 = vadd.f32 0.0, %v1525
    %1527 = vmatmul.f32.gmra.mxu0 %v1400
    %v1528 = vpop.f32.mrf.mxu0
    %v1529 = vadd.f32 0.0, %v1528
    %1530 = vmatmul.f32.gmra.mxu0 %v1403
    %v1531 = vpop.f32.mrf.mxu0
    %v1532 = vadd.f32 0.0, %v1531
    %1533 = vdwg.mxu0
    %v1534 = vsub.f32 %v1145, %v1436
    %v1535 = vsub.f32 %v1183, %v1465
    %v1536 = vsub.f32 %v1221, %v1494
    %v1537 = vsub.f32 %v1259, %v1523
    %v1538 = vsub.f32 %v1147, %v1439
    %v1539 = vsub.f32 %v1185, %v1468
    %v1540 = vsub.f32 %v1223, %v1497
    %v1541 = vsub.f32 %v1261, %v1526
    %v1542 = vsub.f32 %v1150, %v1442
    %v1543 = vsub.f32 %v1188, %v1471
    %v1544 = vsub.f32 %v1226, %v1500
    %v1545 = vsub.f32 %v1264, %v1529
    %v1546 = vsub.f32 %v1152, %v1445
    %v1547 = vsub.f32 %v1190, %v1474
    %v1548 = vsub.f32 %v1228, %v1503
    %v1549 = vsub.f32 %v1266, %v1532
    %v1550 = vmul.f32 %v1534, %v1534
    %v1551 = vmul.f32 %v1535, %v1535
    %v1552 = vmul.f32 %v1536, %v1536
    %v1553 = vmul.f32 %v1537, %v1537
    %v1554 = vmul.f32 %v1538, %v1538
    %v1555 = vmul.f32 %v1539, %v1539
    %v1556 = vmul.f32 %v1540, %v1540
    %v1557 = vmul.f32 %v1541, %v1541
    %v1558 = vmul.f32 %v1542, %v1542
    %v1559 = vmul.f32 %v1543, %v1543
    %v1560 = vmul.f32 %v1544, %v1544
    %v1561 = vmul.f32 %v1545, %v1545
    %v1562 = vmul.f32 %v1546, %v1546
    %v1563 = vmul.f32 %v1547, %v1547
    %v1564 = vmul.f32 %v1548, %v1548
    %v1565 = vmul.f32 %v1549, %v1549
    %1566 = vmatpush.xpose.msra.mxu0 0.0
    %1567 = vmatpush.xpose.msra.mxu0 0.0
    %1568 = vmatpush.xpose.msra.mxu0 0.0
    %1569 = vmatpush.xpose.msra.mxu0 0.0
    %1570 = vmatpush.xpose.msra.mxu0 0.0
    %1571 = vmatpush.xpose.msra.mxu0 0.0
    %1572 = vmatpush.xpose.msra.mxu0 0.0
    %1573 = vmatpush.xpose.msra.mxu0 0.0
    %1574 = vmatpush.xpose.msra.mxu0 0.0
    %1575 = vmatpush.xpose.msra.mxu0 0.0
    %1576 = vmatpush.xpose.msra.mxu0 0.0
    %1577 = vmatpush.xpose.msra.mxu0 0.0
    %1578 = vmatpush.xpose.msra.mxu0 0.0
    %1579 = vmatpush.xpose.msra.mxu0 0.0
    %1580 = vmatpush.xpose.msra.mxu0 0.0
    %1581 = vmatpush.xpose.msra.mxu0 %v1268
    %1582 = vmatmul.f32.gmra.mxu0 %v1550
    %v1583 = vpop.f32.mrf.mxu0
    %v1584 = vadd.f32 0.0, %v1583
    %1585 = vmatmul.f32.gmra.mxu0 %v1554
    %v1586 = vpop.f32.mrf.mxu0
    %v1587 = vadd.f32 0.0, %v1586
    %1588 = vmatmul.f32.gmra.mxu0 %v1558
    %v1589 = vpop.f32.mrf.mxu0
    %v1590 = vadd.f32 0.0, %v1589
    %1591 = vmatmul.f32.gmra.mxu0 %v1562
    %v1592 = vpop.f32.mrf.mxu0
    %v1593 = vadd.f32 0.0, %v1592
    %1594 = vdwg.mxu0
    %1595 = vmatpush.xpose.msra.mxu0 0.0
    %1596 = vmatpush.xpose.msra.mxu0 0.0
    %1597 = vmatpush.xpose.msra.mxu0 0.0
    %1598 = vmatpush.xpose.msra.mxu0 0.0
    %1599 = vmatpush.xpose.msra.mxu0 0.0
    %1600 = vmatpush.xpose.msra.mxu0 0.0
    %1601 = vmatpush.xpose.msra.mxu0 0.0
    %1602 = vmatpush.xpose.msra.mxu0 0.0
    %1603 = vmatpush.xpose.msra.mxu0 0.0
    %1604 = vmatpush.xpose.msra.mxu0 0.0
    %1605 = vmatpush.xpose.msra.mxu0 0.0
    %1606 = vmatpush.xpose.msra.mxu0 0.0
    %1607 = vmatpush.xpose.msra.mxu0 0.0
    %1608 = vmatpush.xpose.msra.mxu0 0.0
    %1609 = vmatpush.xpose.msra.mxu0 0.0
    %1610 = vmatpush.xpose.msra.mxu0 %v1269
    %1611 = vmatmul.f32.gmra.mxu0 %v1551
    %v1612 = vpop.f32.mrf.mxu0
    %v1613 = vadd.f32 %v1584, %v1612
    %1614 = vmatmul.f32.gmra.mxu0 %v1555
    %v1615 = vpop.f32.mrf.mxu0
    %v1616 = vadd.f32 %v1587, %v1615
    %1617 = vmatmul.f32.gmra.mxu0 %v1559
    %v1618 = vpop.f32.mrf.mxu0
    %v1619 = vadd.f32 %v1590, %v1618
    %1620 = vmatmul.f32.gmra.mxu0 %v1563
    %v1621 = vpop.f32.mrf.mxu0
    %v1622 = vadd.f32 %v1593, %v1621
    %1623 = vdwg.mxu0
    %1624 = vmatpush.xpose.msra.mxu0 0.0
    %1625 = vmatpush.xpose.msra.mxu0 0.0
    %1626 = vmatpush.xpose.msra.mxu0 0.0
    %1627 = vmatpush.xpose.msra.mxu0 0.0
    %1628 = vmatpush.xpose.msra.mxu0 0.0
    %1629 = vmatpush.xpose.msra.mxu0 0.0
    %1630 = vmatpush.xpose.msra.mxu0 0.0
    %1631 = vmatpush.xpose.msra.mxu0 0.0
    %1632 = vmatpush.xpose.msra.mxu0 0.0
    %1633 = vmatpush.xpose.msra.mxu0 0.0
    %1634 = vmatpush.xpose.msra.mxu0 0.0
    %1635 = vmatpush.xpose.msra.mxu0 0.0
    %1636 = vmatpush.xpose.msra.mxu0 0.0
    %1637 = vmatpush.xpose.msra.mxu0 0.0
    %1638 = vmatpush.xpose.msra.mxu0 0.0
    %1639 = vmatpush.xpose.msra.mxu0 %v1270
    %1640 = vmatmul.f32.gmra.mxu0 %v1552
    %v1641 = vpop.f32.mrf.mxu0
    %v1642 = vadd.f32 %v1613, %v1641
    %1643 = vmatmul.f32.gmra.mxu0 %v1556
    %v1644 = vpop.f32.mrf.mxu0
    %v1645 = vadd.f32 %v1616, %v1644
    %1646 = vmatmul.f32.gmra.mxu0 %v1560
    %v1647 = vpop.f32.mrf.mxu0
    %v1648 = vadd.f32 %v1619, %v1647
    %1649 = vmatmul.f32.gmra.mxu0 %v1564
    %v1650 = vpop.f32.mrf.mxu0
    %v1651 = vadd.f32 %v1622, %v1650
    %1652 = vdwg.mxu0
    %1653 = vmatpush.xpose.msra.mxu0 0.0
    %1654 = vmatpush.xpose.msra.mxu0 0.0
    %1655 = vmatpush.xpose.msra.mxu0 0.0
    %1656 = vmatpush.xpose.msra.mxu0 0.0
    %1657 = vmatpush.xpose.msra.mxu0 0.0
    %1658 = vmatpush.xpose.msra.mxu0 0.0
    %1659 = vmatpush.xpose.msra.mxu0 0.0
    %1660 = vmatpush.xpose.msra.mxu0 0.0
    %1661 = vmatpush.xpose.msra.mxu0 0.0
    %1662 = vmatpush.xpose.msra.mxu0 0.0
    %1663 = vmatpush.xpose.msra.mxu0 0.0
    %1664 = vmatpush.xpose.msra.mxu0 0.0
    %1665 = vmatpush.xpose.msra.mxu0 0.0
    %1666 = vmatpush.xpose.msra.mxu0 0.0
    %1667 = vmatpush.xpose.msra.mxu0 0.0
    %1668 = vmatpush.xpose.msra.mxu0 %v1271
    %1669 = vmatmul.f32.gmra.mxu0 %v1553
    %v1670 = vpop.f32.mrf.mxu0
    %v1671 = vadd.f32 %v1642, %v1670
    %1672 = vmatmul.f32.gmra.mxu0 %v1557
    %v1673 = vpop.f32.mrf.mxu0
    %v1674 = vadd.f32 %v1645, %v1673
    %1675 = vmatmul.f32.gmra.mxu0 %v1561
    %v1676 = vpop.f32.mrf.mxu0
    %v1677 = vadd.f32 %v1648, %v1676
    %1678 = vmatmul.f32.gmra.mxu0 %v1565
    %v1679 = vpop.f32.mrf.mxu0
    %v1680 = vadd.f32 %v1651, %v1679
    %1681 = vdwg.mxu0
    %v1682 = vmul.f32 %v1671, 0.0078125
    %v1683 = vmul.f32 %v1674, 0.0078125
    %v1684 = vmul.f32 %v1677, 0.0078125
    %v1685 = vmul.f32 %v1680, 0.0078125
    %v1686 = vadd.f32 %v1682, 1e-05
    %v1687 = vadd.f32 %v1683, 1e-05
    %v1688 = vadd.f32 %v1684, 1e-05
    %v1689 = vadd.f32 %v1685, 1e-05
    %v1690 = vrsqrt.pop %v1686
    %v1691 = vmul.f32 %v1690, %v1686
    %v1692 = vmul.f32 %v1691, %v1690
    %v1693 = vmul.f32 0.5, %v1692
    %v1694 = vsub.f32 1.5, %v1693
    %v1695 = vmul.f32 %v1690, %v1694
    %vm1696 = vweird.f32 %v1686
    %vm1697 = vweird.f32 %v1690
    %vm1698 = vmor %vm1696, %vm1697
    %v1699 = vsel %vm1698, %v1690, %v1695
    %v1700 = vrsqrt.pop %v1687
    %v1701 = vmul.f32 %v1700, %v1687
    %v1702 = vmul.f32 %v1701, %v1700
    %v1703 = vmul.f32 0.5, %v1702
    %v1704 = vsub.f32 1.5, %v1703
    %v1705 = vmul.f32 %v1700, %v1704
    %vm1706 = vweird.f32 %v1687
    %vm1707 = vweird.f32 %v1700
    %vm1708 = vmor %vm1706, %vm1707
    %v1709 = vsel %vm1708, %v1700, %v1705
    %v1710 = vrsqrt.pop %v1688
    %v1711 = vmul.f32 %v1710, %v1688
    %v1712 = vmul.f32 %v1711, %v1710
    %v1713 = vmul.f32 0.5, %v1712
    %v1714 = vsub.f32 1.5, %v1713
    %v1715 = vmul.f32 %v1710, %v1714
    %vm1716 = vweird.f32 %v1688
    %vm1717 = vweird.f32 %v1710
    %vm1718 = vmor %vm1716, %vm1717
    %v1719 = vsel %vm1718, %v1710, %v1715
    %v1720 = vrsqrt.pop %v1689
    %v1721 = vmul.f32 %v1720, %v1689
    %v1722 = vmul.f32 %v1721, %v1720
    %v1723 = vmul.f32 0.5, %v1722
    %v1724 = vsub.f32 1.5, %v1723
    %v1725 = vmul.f32 %v1720, %v1724
    %vm1726 = vweird.f32 %v1689
    %vm1727 = vweird.f32 %v1720
    %vm1728 = vmor %vm1726, %vm1727
    %v1729 = vsel %vm1728, %v1720, %v1725
    %v1731 = vsel %vm1392, %v1699, 0
    %v1734 = vsel %vm1392, %v1709, 0
    %v1737 = vsel %vm1392, %v1719, 0
    %v1740 = vsel %vm1392, %v1729, 0
    %1742 = vmatpush.msra.mxu0 0.0
    %1743 = vmatpush.msra.mxu0 0.0
    %1744 = vmatpush.msra.mxu0 0.0
    %1745 = vmatpush.msra.mxu0 0.0
    %1746 = vmatpush.msra.mxu0 0.0
    %1747 = vmatpush.msra.mxu0 0.0
    %1748 = vmatpush.msra.mxu0 0.0
    %1749 = vmatpush.msra.mxu0 0.0
    %1750 = vmatpush.msra.mxu0 0.0
    %1751 = vmatpush.msra.mxu0 0.0
    %1752 = vmatpush.msra.mxu0 0.0
    %1753 = vmatpush.msra.mxu0 0.0
    %1754 = vmatpush.msra.mxu0 0.0
    %1755 = vmatpush.msra.mxu0 0.0
    %1756 = vmatpush.msra.mxu0 0.0
    %1757 = vmatpush.msra.mxu0 %v1407
    %1758 = vmatmul.f32.gmra.mxu0 %v1731
    %v1759 = vpop.f32.mrf.mxu0
    %v1760 = vadd.f32 0.0, %v1759
    %1761 = vmatmul.f32.gmra.mxu0 %v1734
    %v1762 = vpop.f32.mrf.mxu0
    %v1763 = vadd.f32 0.0, %v1762
    %1764 = vmatmul.f32.gmra.mxu0 %v1737
    %v1765 = vpop.f32.mrf.mxu0
    %v1766 = vadd.f32 0.0, %v1765
    %1767 = vmatmul.f32.gmra.mxu0 %v1740
    %v1768 = vpop.f32.mrf.mxu0
    %v1769 = vadd.f32 0.0, %v1768
    %1770 = vdwg.mxu0
    %1771 = vmatpush.msra.mxu0 0.0
    %1772 = vmatpush.msra.mxu0 0.0
    %1773 = vmatpush.msra.mxu0 0.0
    %1774 = vmatpush.msra.mxu0 0.0
    %1775 = vmatpush.msra.mxu0 0.0
    %1776 = vmatpush.msra.mxu0 0.0
    %1777 = vmatpush.msra.mxu0 0.0
    %1778 = vmatpush.msra.mxu0 0.0
    %1779 = vmatpush.msra.mxu0 0.0
    %1780 = vmatpush.msra.mxu0 0.0
    %1781 = vmatpush.msra.mxu0 0.0
    %1782 = vmatpush.msra.mxu0 0.0
    %1783 = vmatpush.msra.mxu0 0.0
    %1784 = vmatpush.msra.mxu0 0.0
    %1785 = vmatpush.msra.mxu0 0.0
    %1786 = vmatpush.msra.mxu0 %v1410
    %1787 = vmatmul.f32.gmra.mxu0 %v1731
    %v1788 = vpop.f32.mrf.mxu0
    %v1789 = vadd.f32 0.0, %v1788
    %1790 = vmatmul.f32.gmra.mxu0 %v1734
    %v1791 = vpop.f32.mrf.mxu0
    %v1792 = vadd.f32 0.0, %v1791
    %1793 = vmatmul.f32.gmra.mxu0 %v1737
    %v1794 = vpop.f32.mrf.mxu0
    %v1795 = vadd.f32 0.0, %v1794
    %1796 = vmatmul.f32.gmra.mxu0 %v1740
    %v1797 = vpop.f32.mrf.mxu0
    %v1798 = vadd.f32 0.0, %v1797
    %1799 = vdwg.mxu0
    %1800 = vmatpush.msra.mxu0 0.0
    %1801 = vmatpush.msra.mxu0 0.0
    %1802 = vmatpush.msra.mxu0 0.0
    %1803 = vmatpush.msra.mxu0 0.0
    %1804 = vmatpush.msra.mxu0 0.0
    %1805 = vmatpush.msra.mxu0 0.0
    %1806 = vmatpush.msra.mxu0 0.0
    %1807 = vmatpush.msra.mxu0 0.0
    %1808 = vmatpush.msra.mxu0 0.0
    %1809 = vmatpush.msra.mxu0 0.0
    %1810 = vmatpush.msra.mxu0 0.0
    %1811 = vmatpush.msra.mxu0 0.0
    %1812 = vmatpush.msra.mxu0 0.0
    %1813 = vmatpush.msra.mxu0 0.0
    %1814 = vmatpush.msra.mxu0 0.0
    %1815 = vmatpush.msra.mxu0 %v1413
    %1816 = vmatmul.f32.gmra.mxu0 %v1731
    %v1817 = vpop.f32.mrf.mxu0
    %v1818 = vadd.f32 0.0, %v1817
    %1819 = vmatmul.f32.gmra.mxu0 %v1734
    %v1820 = vpop.f32.mrf.mxu0
    %v1821 = vadd.f32 0.0, %v1820
    %1822 = vmatmul.f32.gmra.mxu0 %v1737
    %v1823 = vpop.f32.mrf.mxu0
    %v1824 = vadd.f32 0.0, %v1823
    %1825 = vmatmul.f32.gmra.mxu0 %v1740
    %v1826 = vpop.f32.mrf.mxu0
    %v1827 = vadd.f32 0.0, %v1826
    %1828 = vdwg.mxu0
    %1829 = vmatpush.msra.mxu0 0.0
    %1830 = vmatpush.msra.mxu0 0.0
    %1831 = vmatpush.msra.mxu0 0.0
    %1832 = vmatpush.msra.mxu0 0.0
    %1833 = vmatpush.msra.mxu0 0.0
    %1834 = vmatpush.msra.mxu0 0.0
    %1835 = vmatpush.msra.mxu0 0.0
    %1836 = vmatpush.msra.mxu0 0.0
    %1837 = vmatpush.msra.mxu0 0.0
    %1838 = vmatpush.msra.mxu0 0.0
    %1839 = vmatpush.msra.mxu0 0.0
    %1840 = vmatpush.msra.mxu0 0.0
    %1841 = vmatpush.msra.mxu0 0.0
    %1842 = vmatpush.msra.mxu0 0.0
    %1843 = vmatpush.msra.mxu0 0.0
    %1844 = vmatpush.msra.mxu0 %v1416
    %1845 = vmatmul.f32.gmra.mxu0 %v1731
    %v1846 = vpop.f32.mrf.mxu0
    %v1847 = vadd.f32 0.0, %v1846
    %1848 = vmatmul.f32.gmra.mxu0 %v1734
    %v1849 = vpop.f32.mrf.mxu0
    %v1850 = vadd.f32 0.0, %v1849
    %1851 = vmatmul.f32.gmra.mxu0 %v1737
    %v1852 = vpop.f32.mrf.mxu0
    %v1853 = vadd.f32 0.0, %v1852
    %1854 = vmatmul.f32.gmra.mxu0 %v1740
    %v1855 = vpop.f32.mrf.mxu0
    %v1856 = vadd.f32 0.0, %v1855
    %1857 = vdwg.mxu0
    %s1858 = scalar_lea.vmem [#allocation8], 131
    %v1859 = vld [vmem:[%s1858] ss:$8 sm:$0xf]
    %s1860 = scalar_lea.vmem [#allocation8], 134
    %v1861 = vld [vmem:[%s1860] ss:$8 sm:$0xf]
    %v1862 = vmul.f32 %v1534, %v1760
    %v1863 = vmul.f32 %v1535, %v1789
    %v1864 = vmul.f32 %v1536, %v1818
    %v1865 = vmul.f32 %v1537, %v1847
    %v1866 = vmul.f32 %v1538, %v1763
    %v1867 = vmul.f32 %v1539, %v1792
    %v1868 = vmul.f32 %v1540, %v1821
    %v1869 = vmul.f32 %v1541, %v1850
    %v1870 = vmul.f32 %v1542, %v1766
    %v1871 = vmul.f32 %v1543, %v1795
    %v1872 = vmul.f32 %v1544, %v1824
    %v1873 = vmul.f32 %v1545, %v1853
    %v1874 = vmul.f32 %v1546, %v1769
    %v1875 = vmul.f32 %v1547, %v1798
    %v1876 = vmul.f32 %v1548, %v1827
    %v1877 = vmul.f32 %v1549, %v1856
    %v1879 = vperm.slane %v1859, 0
    %v1880 = vperm.slane %v1859, 1
    %v1881 = vperm.slane %v1859, 2
    %v1882 = vperm.slane %v1859, 3
    %v1887 = vmul.f32 %v1862, %v1879
    %v1888 = vmul.f32 %v1863, %v1880
    %v1889 = vmul.f32 %v1864, %v1881
    %v1890 = vmul.f32 %v1865, %v1882
    %v1891 = vmul.f32 %v1866, %v1879
    %v1892 = vmul.f32 %v1867, %v1880
    %v1893 = vmul.f32 %v1868, %v1881
    %v1894 = vmul.f32 %v1869, %v1882
    %v1895 = vmul.f32 %v1870, %v1879
    %v1896 = vmul.f32 %v1871, %v1880
    %v1897 = vmul.f32 %v1872, %v1881
    %v1898 = vmul.f32 %v1873, %v1882
    %v1899 = vmul.f32 %v1874, %v1879
    %v1900 = vmul.f32 %v1875, %v1880
    %v1901 = vmul.f32 %v1876, %v1881
    %v1902 = vmul.f32 %v1877, %v1882
    %v1904 = vperm.slane %v1861, 0
    %v1905 = vperm.slane %v1861, 1
    %v1906 = vperm.slane %v1861, 2
    %v1907 = vperm.slane %v1861, 3
    %v1912 = vadd.f32 %v1887, %v1904
    %v1913 = vadd.f32 %v1888, %v1905
    %v1914 = vadd.f32 %v1889, %v1906
    %v1915 = vadd.f32 %v1890, %v1907
    %v1916 = vadd.f32 %v1891, %v1904
    %v1917 = vadd.f32 %v1892, %v1905
    %v1918 = vadd.f32 %v1893, %v1906
    %v1919 = vadd.f32 %v1894, %v1907
    %v1920 = vadd.f32 %v1895, %v1904
    %v1921 = vadd.f32 %v1896, %v1905
    %v1922 = vadd.f32 %v1897, %v1906
    %v1923 = vadd.f32 %v1898, %v1907
    %v1924 = vadd.f32 %v1899, %v1904
    %v1925 = vadd.f32 %v1900, %v1905
    %v1926 = vadd.f32 %v1901, %v1906
    %v1927 = vadd.f32 %v1902, %v1907
    %vm1928 = vcmp.gt.f32.partialorder %v1912, 0.0
    %vm1929 = vcmp.gt.f32.partialorder %v1913, 0.0
    %vm1930 = vcmp.gt.f32.partialorder %v1914, 0.0
    %vm1931 = vcmp.gt.f32.partialorder %v1915, 0.0
    %vm1932 = vcmp.gt.f32.partialorder %v1916, 0.0
    %vm1933 = vcmp.gt.f32.partialorder %v1917, 0.0
    %vm1934 = vcmp.gt.f32.partialorder %v1918, 0.0
    %vm1935 = vcmp.gt.f32.partialorder %v1919, 0.0
    %vm1936 = vcmp.gt.f32.partialorder %v1920, 0.0
    %vm1937 = vcmp.gt.f32.partialorder %v1921, 0.0
    %vm1938 = vcmp.gt.f32.partialorder %v1922, 0.0
    %vm1939 = vcmp.gt.f32.partialorder %v1923, 0.0
    %vm1940 = vcmp.gt.f32.partialorder %v1924, 0.0
    %vm1941 = vcmp.gt.f32.partialorder %v1925, 0.0
    %vm1942 = vcmp.gt.f32.partialorder %v1926, 0.0
    %vm1943 = vcmp.gt.f32.partialorder %v1927, 0.0
    %v1944 = vmin.f32 %v1912, 0.0
    %v1945 = vmin.f32 %v1913, 0.0
    %v1946 = vmin.f32 %v1914, 0.0
    %v1947 = vmin.f32 %v1915, 0.0
    %v1948 = vmin.f32 %v1916, 0.0
    %v1949 = vmin.f32 %v1917, 0.0
    %v1950 = vmin.f32 %v1918, 0.0
    %v1951 = vmin.f32 %v1919, 0.0
    %v1952 = vmin.f32 %v1920, 0.0
    %v1953 = vmin.f32 %v1921, 0.0
    %v1954 = vmin.f32 %v1922, 0.0
    %v1955 = vmin.f32 %v1923, 0.0
    %v1956 = vmin.f32 %v1924, 0.0
    %v1957 = vmin.f32 %v1925, 0.0
    %v1958 = vmin.f32 %v1926, 0.0
    %v1959 = vmin.f32 %v1927, 0.0
    %v1960 = vmul.f32 %v1944, 1.442695
    %v1961 = vpow.pop %v1960
    %v1962 = vmul.f32 %v1945, 1.442695
    %v1963 = vpow.pop %v1962
    %v1964 = vmul.f32 %v1946, 1.442695
    %v1965 = vpow.pop %v1964
    %v1966 = vmul.f32 %v1947, 1.442695
    %v1967 = vpow.pop %v1966
    %v1968 = vmul.f32 %v1948, 1.442695
    %v1969 = vpow.pop %v1968
    %v1970 = vmul.f32 %v1949, 1.442695
    %v1971 = vpow.pop %v1970
    %v1972 = vmul.f32 %v1950, 1.442695
    %v1973 = vpow.pop %v1972
    %v1974 = vmul.f32 %v1951, 1.442695
    %v1975 = vpow.pop %v1974
    %v1976 = vmul.f32 %v1952, 1.442695
    %v1977 = vpow.pop %v1976
    %v1978 = vmul.f32 %v1953, 1.442695
    %v1979 = vpow.pop %v1978
    %v1980 = vmul.f32 %v1954, 1.442695
    %v1981 = vpow.pop %v1980
    %v1982 = vmul.f32 %v1955, 1.442695
    %v1983 = vpow.pop %v1982
    %v1984 = vmul.f32 %v1956, 1.442695
    %v1985 = vpow.pop %v1984
    %v1986 = vmul.f32 %v1957, 1.442695
    %v1987 = vpow.pop %v1986
    %v1988 = vmul.f32 %v1958, 1.442695
    %v1989 = vpow.pop %v1988
    %v1990 = vmul.f32 %v1959, 1.442695
    %v1991 = vpow.pop %v1990
    %v1992 = vsub.f32 %v1961, 1.0
    %v1993 = vsub.f32 %v1963, 1.0
    %v1994 = vsub.f32 %v1965, 1.0
    %v1995 = vsub.f32 %v1967, 1.0
    %v1996 = vsub.f32 %v1969, 1.0
    %v1997 = vsub.f32 %v1971, 1.0
    %v1998 = vsub.f32 %v1973, 1.0
    %v1999 = vsub.f32 %v1975, 1.0
    %v2000 = vsub.f32 %v1977, 1.0
    %v2001 = vsub.f32 %v1979, 1.0
    %v2002 = vsub.f32 %v1981, 1.0
    %v2003 = vsub.f32 %v1983, 1.0
    %v2004 = vsub.f32 %v1985, 1.0
    %v2005 = vsub.f32 %v1987, 1.0
    %v2006 = vsub.f32 %v1989, 1.0
    %v2007 = vsub.f32 %v1991, 1.0
    %v2008 = vsel %vm1928, %v1912, %v1992
    %v2009 = vsel %vm1929, %v1913, %v1993
    %v2010 = vsel %vm1930, %v1914, %v1994
    %v2011 = vsel %vm1931, %v1915, %v1995
    %v2012 = vsel %vm1932, %v1916, %v1996
    %v2013 = vsel %vm1933, %v1917, %v1997
    %v2014 = vsel %vm1934, %v1918, %v1998
    %v2015 = vsel %vm1935, %v1919, %v1999
    %v2016 = vsel %vm1936, %v1920, %v2000
    %v2017 = vsel %vm1937, %v1921, %v2001
    %v2018 = vsel %vm1938, %v1922, %v2002
    %v2019 = vsel %vm1939, %v1923, %v2003
    %v2020 = vsel %vm1940, %v1924, %v2004
    %v2021 = vsel %vm1941, %v1925, %v2005
    %v2022 = vsel %vm1942, %v1926, %v2006
    %v2023 = vsel %vm1943, %v1927, %v2007
    %v2024 = vld [vmem:[#allocation7 + $0x480] sm:$0xff]
    %v2025 = vld [vmem:[#allocation7 + $0x488] sm:$0xff]
    %v2026 = vld [vmem:[#allocation7 + $0x490] sm:$0xff]
    %v2027 = vld [vmem:[#allocation7 + $0x498] sm:$0xff]
    %v2028 = vld [vmem:[#allocation7 + $0x4a0] sm:$0xff]
    %v2029 = vld [vmem:[#allocation7 + $0x4a8] sm:$0xff]
    %v2030 = vld [vmem:[#allocation7 + $0x4b0] sm:$0xff]
    %v2031 = vld [vmem:[#allocation7 + $0x4b8] sm:$0xff]
    %v2032 = vld [vmem:[#allocation7 + $0x4c0] sm:$0xff]
    %v2033 = vld [vmem:[#allocation7 + $0x4c8] sm:$0xff]
    %v2034 = vld [vmem:[#allocation7 + $0x4d0] sm:$0xff]
    %v2035 = vld [vmem:[#allocation7 + $0x4d8] sm:$0xff]
    %v2036 = vld [vmem:[#allocation7 + $0x4e0] sm:$0xff]
    %v2037 = vld [vmem:[#allocation7 + $0x4e8] sm:$0xff]
    %v2038 = vld [vmem:[#allocation7 + $0x4f0] sm:$0xff]
    %v2039 = vld [vmem:[#allocation7 + $0x4f8] sm:$0xff]
    %v2040 = vld [vmem:[#allocation7 + $0x500] sm:$0xff]
    %v2041 = vld [vmem:[#allocation7 + $0x508] sm:$0xff]
    %v2042 = vld [vmem:[#allocation7 + $0x510] sm:$0xff]
    %v2043 = vld [vmem:[#allocation7 + $0x518] sm:$0xff]
    %v2044 = vld [vmem:[#allocation7 + $0x520] sm:$0xff]
    %v2045 = vld [vmem:[#allocation7 + $0x528] sm:$0xff]
    %v2046 = vld [vmem:[#allocation7 + $0x530] sm:$0xff]
    %v2047 = vld [vmem:[#allocation7 + $0x538] sm:$0xff]
    %v2048 = vld [vmem:[#allocation7 + $0x540] sm:$0xff]
    %v2049 = vld [vmem:[#allocation7 + $0x548] sm:$0xff]
    %v2050 = vld [vmem:[#allocation7 + $0x550] sm:$0xff]
    %v2051 = vld [vmem:[#allocation7 + $0x558] sm:$0xff]
    %v2052 = vld [vmem:[#allocation7 + $0x560] sm:$0xff]
    %v2053 = vld [vmem:[#allocation7 + $0x568] sm:$0xff]
    %v2054 = vld [vmem:[#allocation7 + $0x570] sm:$0xff]
    %v2055 = vld [vmem:[#allocation7 + $0x578] sm:$0xff]
    %v2056 = vld [vmem:[#allocation7 + $0x580] sm:$0xff]
    %v2057 = vld [vmem:[#allocation7 + $0x588] sm:$0xff]
    %v2058 = vld [vmem:[#allocation7 + $0x590] sm:$0xff]
    %v2059 = vld [vmem:[#allocation7 + $0x598] sm:$0xff]
    %v2060 = vld [vmem:[#allocation7 + $0x5a0] sm:$0xff]
    %v2061 = vld [vmem:[#allocation7 + $0x5a8] sm:$0xff]
    %v2062 = vld [vmem:[#allocation7 + $0x5b0] sm:$0xff]
    %v2063 = vld [vmem:[#allocation7 + $0x5b8] sm:$0xff]
    %v2064 = vld [vmem:[#allocation7 + $0x5c0] sm:$0xff]
    %v2065 = vld [vmem:[#allocation7 + $0x5c8] sm:$0xff]
    %v2066 = vld [vmem:[#allocation7 + $0x5d0] sm:$0xff]
    %v2067 = vld [vmem:[#allocation7 + $0x5d8] sm:$0xff]
    %v2068 = vld [vmem:[#allocation7 + $0x5e0] sm:$0xff]
    %v2069 = vld [vmem:[#allocation7 + $0x5e8] sm:$0xff]
    %v2070 = vld [vmem:[#allocation7 + $0x5f0] sm:$0xff]
    %v2071 = vld [vmem:[#allocation7 + $0x5f8] sm:$0xff]
    %v2072 = vld [vmem:[#allocation7 + $0x600] sm:$0xff]
    %v2073 = vld [vmem:[#allocation7 + $0x608] sm:$0xff]
    %v2074 = vld [vmem:[#allocation7 + $0x610] sm:$0xff]
    %v2075 = vld [vmem:[#allocation7 + $0x618] sm:$0xff]
    %v2076 = vld [vmem:[#allocation7 + $0x620] sm:$0xff]
    %v2077 = vld [vmem:[#allocation7 + $0x628] sm:$0xff]
    %v2078 = vld [vmem:[#allocation7 + $0x630] sm:$0xff]
    %v2079 = vld [vmem:[#allocation7 + $0x638] sm:$0xff]
    %v2080 = vld [vmem:[#allocation7 + $0x640] sm:$0xff]
    %v2081 = vld [vmem:[#allocation7 + $0x648] sm:$0xff]
    %v2082 = vld [vmem:[#allocation7 + $0x650] sm:$0xff]
    %v2083 = vld [vmem:[#allocation7 + $0x658] sm:$0xff]
    %v2084 = vld [vmem:[#allocation7 + $0x660] sm:$0xff]
    %v2085 = vld [vmem:[#allocation7 + $0x668] sm:$0xff]
    %v2086 = vld [vmem:[#allocation7 + $0x670] sm:$0xff]
    %v2087 = vld [vmem:[#allocation7 + $0x678] sm:$0xff]
    %v2088 = vld [vmem:[#allocation7 + $0x680] sm:$0xff]
    %v2089 = vld [vmem:[#allocation7 + $0x688] sm:$0xff]
    %v2090 = vld [vmem:[#allocation7 + $0x690] sm:$0xff]
    %v2091 = vld [vmem:[#allocation7 + $0x698] sm:$0xff]
    %v2092 = vld [vmem:[#allocation7 + $0x6a0] sm:$0xff]
    %v2093 = vld [vmem:[#allocation7 + $0x6a8] sm:$0xff]
    %v2094 = vld [vmem:[#allocation7 + $0x6b0] sm:$0xff]
    %v2095 = vld [vmem:[#allocation7 + $0x6b8] sm:$0xff]
    %v2096 = vld [vmem:[#allocation7 + $0x6c0] sm:$0xff]
    %v2097 = vld [vmem:[#allocation7 + $0x6c8] sm:$0xff]
    %v2098 = vld [vmem:[#allocation7 + $0x6d0] sm:$0xff]
    %v2099 = vld [vmem:[#allocation7 + $0x6d8] sm:$0xff]
    %v2100 = vld [vmem:[#allocation7 + $0x6e0] sm:$0xff]
    %v2101 = vld [vmem:[#allocation7 + $0x6e8] sm:$0xff]
    %v2102 = vld [vmem:[#allocation7 + $0x6f0] sm:$0xff]
    %v2103 = vld [vmem:[#allocation7 + $0x6f8] sm:$0xff]
    %v2104 = vld [vmem:[#allocation7 + $0x700] sm:$0xff]
    %v2105 = vld [vmem:[#allocation7 + $0x708] sm:$0xff]
    %v2106 = vld [vmem:[#allocation7 + $0x710] sm:$0xff]
    %v2107 = vld [vmem:[#allocation7 + $0x718] sm:$0xff]
    %v2108 = vld [vmem:[#allocation7 + $0x720] sm:$0xff]
    %v2109 = vld [vmem:[#allocation7 + $0x728] sm:$0xff]
    %v2110 = vld [vmem:[#allocation7 + $0x730] sm:$0xff]
    %v2111 = vld [vmem:[#allocation7 + $0x738] sm:$0xff]
    %v2112 = vld [vmem:[#allocation7 + $0x740] sm:$0xff]
    %v2113 = vld [vmem:[#allocation7 + $0x748] sm:$0xff]
    %v2114 = vld [vmem:[#allocation7 + $0x750] sm:$0xff]
    %v2115 = vld [vmem:[#allocation7 + $0x758] sm:$0xff]
    %v2116 = vld [vmem:[#allocation7 + $0x760] sm:$0xff]
    %v2117 = vld [vmem:[#allocation7 + $0x768] sm:$0xff]
    %v2118 = vld [vmem:[#allocation7 + $0x770] sm:$0xff]
    %v2119 = vld [vmem:[#allocation7 + $0x778] sm:$0xff]
    %v2120 = vld [vmem:[#allocation7 + $0x780] sm:$0xff]
    %v2121 = vld [vmem:[#allocation7 + $0x788] sm:$0xff]
    %v2122 = vld [vmem:[#allocation7 + $0x790] sm:$0xff]
    %v2123 = vld [vmem:[#allocation7 + $0x798] sm:$0xff]
    %v2124 = vld [vmem:[#allocation7 + $0x7a0] sm:$0xff]
    %v2125 = vld [vmem:[#allocation7 + $0x7a8] sm:$0xff]
    %v2126 = vld [vmem:[#allocation7 + $0x7b0] sm:$0xff]
    %v2127 = vld [vmem:[#allocation7 + $0x7b8] sm:$0xff]
    %v2128 = vld [vmem:[#allocation7 + $0x7c0] sm:$0xff]
    %v2129 = vld [vmem:[#allocation7 + $0x7c8] sm:$0xff]
    %v2130 = vld [vmem:[#allocation7 + $0x7d0] sm:$0xff]
    %v2131 = vld [vmem:[#allocation7 + $0x7d8] sm:$0xff]
    %v2132 = vld [vmem:[#allocation7 + $0x7e0] sm:$0xff]
    %v2133 = vld [vmem:[#allocation7 + $0x7e8] sm:$0xff]
    %v2134 = vld [vmem:[#allocation7 + $0x7f0] sm:$0xff]
    %v2135 = vld [vmem:[#allocation7 + $0x7f8] sm:$0xff]
    %v2136 = vld [vmem:[#allocation7 + $0x800] sm:$0xff]
    %v2137 = vld [vmem:[#allocation7 + $0x808] sm:$0xff]
    %v2138 = vld [vmem:[#allocation7 + $0x810] sm:$0xff]
    %v2139 = vld [vmem:[#allocation7 + $0x818] sm:$0xff]
    %v2140 = vld [vmem:[#allocation7 + $0x820] sm:$0xff]
    %v2141 = vld [vmem:[#allocation7 + $0x828] sm:$0xff]
    %v2142 = vld [vmem:[#allocation7 + $0x830] sm:$0xff]
    %v2143 = vld [vmem:[#allocation7 + $0x838] sm:$0xff]
    %v2144 = vld [vmem:[#allocation7 + $0x840] sm:$0xff]
    %v2145 = vld [vmem:[#allocation7 + $0x848] sm:$0xff]
    %v2146 = vld [vmem:[#allocation7 + $0x850] sm:$0xff]
    %v2147 = vld [vmem:[#allocation7 + $0x858] sm:$0xff]
    %v2148 = vld [vmem:[#allocation7 + $0x860] sm:$0xff]
    %v2149 = vld [vmem:[#allocation7 + $0x868] sm:$0xff]
    %v2150 = vld [vmem:[#allocation7 + $0x870] sm:$0xff]
    %v2151 = vld [vmem:[#allocation7 + $0x878] sm:$0xff]
    %v2152 = vld [vmem:[#allocation7 + $0x880] sm:$0xff]
    %v2153 = vld [vmem:[#allocation7 + $0x888] sm:$0xff]
    %v2154 = vld [vmem:[#allocation7 + $0x890] sm:$0xff]
    %v2155 = vld [vmem:[#allocation7 + $0x898] sm:$0xff]
    %v2156 = vld [vmem:[#allocation7 + $0x8a0] sm:$0xff]
    %v2157 = vld [vmem:[#allocation7 + $0x8a8] sm:$0xff]
    %v2158 = vld [vmem:[#allocation7 + $0x8b0] sm:$0xff]
    %v2159 = vld [vmem:[#allocation7 + $0x8b8] sm:$0xff]
    %v2160 = vld [vmem:[#allocation7 + $0x8c0] sm:$0xff]
    %v2161 = vld [vmem:[#allocation7 + $0x8c8] sm:$0xff]
    %v2162 = vld [vmem:[#allocation7 + $0x8d0] sm:$0xff]
    %v2163 = vld [vmem:[#allocation7 + $0x8d8] sm:$0xff]
    %v2164 = vld [vmem:[#allocation7 + $0x8e0] sm:$0xff]
    %v2165 = vld [vmem:[#allocation7 + $0x8e8] sm:$0xff]
    %v2166 = vld [vmem:[#allocation7 + $0x8f0] sm:$0xff]
    %v2167 = vld [vmem:[#allocation7 + $0x8f8] sm:$0xff]
    %v2168 = vld [vmem:[#allocation7 + $0x900] sm:$0xff]
    %v2169 = vld [vmem:[#allocation7 + $0x908] sm:$0xff]
    %v2170 = vld [vmem:[#allocation7 + $0x910] sm:$0xff]
    %v2171 = vld [vmem:[#allocation7 + $0x918] sm:$0xff]
    %v2172 = vld [vmem:[#allocation7 + $0x920] sm:$0xff]
    %v2173 = vld [vmem:[#allocation7 + $0x928] sm:$0xff]
    %v2174 = vld [vmem:[#allocation7 + $0x930] sm:$0xff]
    %v2175 = vld [vmem:[#allocation7 + $0x938] sm:$0xff]
    %v2176 = vld [vmem:[#allocation7 + $0x940] sm:$0xff]
    %v2177 = vld [vmem:[#allocation7 + $0x948] sm:$0xff]
    %v2178 = vld [vmem:[#allocation7 + $0x950] sm:$0xff]
    %v2179 = vld [vmem:[#allocation7 + $0x958] sm:$0xff]
    %v2180 = vld [vmem:[#allocation7 + $0x960] sm:$0xff]
    %v2181 = vld [vmem:[#allocation7 + $0x968] sm:$0xff]
    %v2182 = vld [vmem:[#allocation7 + $0x970] sm:$0xff]
    %v2183 = vld [vmem:[#allocation7 + $0x978] sm:$0xff]
    %v2184 = vld [vmem:[#allocation7 + $0x980] sm:$0xff]
    %v2185 = vld [vmem:[#allocation7 + $0x988] sm:$0xff]
    %v2186 = vld [vmem:[#allocation7 + $0x990] sm:$0xff]
    %v2187 = vld [vmem:[#allocation7 + $0x998] sm:$0xff]
    %v2188 = vld [vmem:[#allocation7 + $0x9a0] sm:$0xff]
    %v2189 = vld [vmem:[#allocation7 + $0x9a8] sm:$0xff]
    %v2190 = vld [vmem:[#allocation7 + $0x9b0] sm:$0xff]
    %v2191 = vld [vmem:[#allocation7 + $0x9b8] sm:$0xff]
    %v2192 = vld [vmem:[#allocation7 + $0x9c0] sm:$0xff]
    %v2193 = vld [vmem:[#allocation7 + $0x9c8] sm:$0xff]
    %v2194 = vld [vmem:[#allocation7 + $0x9d0] sm:$0xff]
    %v2195 = vld [vmem:[#allocation7 + $0x9d8] sm:$0xff]
    %v2196 = vld [vmem:[#allocation7 + $0x9e0] sm:$0xff]
    %v2197 = vld [vmem:[#allocation7 + $0x9e8] sm:$0xff]
    %v2198 = vld [vmem:[#allocation7 + $0x9f0] sm:$0xff]
    %v2199 = vld [vmem:[#allocation7 + $0x9f8] sm:$0xff]
    %v2200 = vld [vmem:[#allocation7 + $0xa00] sm:$0xff]
    %v2201 = vld [vmem:[#allocation7 + $0xa08] sm:$0xff]
    %v2202 = vld [vmem:[#allocation7 + $0xa10] sm:$0xff]
    %v2203 = vld [vmem:[#allocation7 + $0xa18] sm:$0xff]
    %v2204 = vld [vmem:[#allocation7 + $0xa20] sm:$0xff]
    %v2205 = vld [vmem:[#allocation7 + $0xa28] sm:$0xff]
    %v2206 = vld [vmem:[#allocation7 + $0xa30] sm:$0xff]
    %v2207 = vld [vmem:[#allocation7 + $0xa38] sm:$0xff]
    %v2208 = vld [vmem:[#allocation7 + $0xa40] sm:$0xff]
    %v2209 = vld [vmem:[#allocation7 + $0xa48] sm:$0xff]
    %v2210 = vld [vmem:[#allocation7 + $0xa50] sm:$0xff]
    %v2211 = vld [vmem:[#allocation7 + $0xa58] sm:$0xff]
    %v2212 = vld [vmem:[#allocation7 + $0xa60] sm:$0xff]
    %v2213 = vld [vmem:[#allocation7 + $0xa68] sm:$0xff]
    %v2214 = vld [vmem:[#allocation7 + $0xa70] sm:$0xff]
    %v2215 = vld [vmem:[#allocation7 + $0xa78] sm:$0xff]
    %v2216 = vld [vmem:[#allocation7 + $0xa80] sm:$0xff]
    %v2217 = vld [vmem:[#allocation7 + $0xa88] sm:$0xff]
    %v2218 = vld [vmem:[#allocation7 + $0xa90] sm:$0xff]
    %v2219 = vld [vmem:[#allocation7 + $0xa98] sm:$0xff]
    %v2220 = vld [vmem:[#allocation7 + $0xaa0] sm:$0xff]
    %v2221 = vld [vmem:[#allocation7 + $0xaa8] sm:$0xff]
    %v2222 = vld [vmem:[#allocation7 + $0xab0] sm:$0xff]
    %v2223 = vld [vmem:[#allocation7 + $0xab8] sm:$0xff]
    %v2224 = vld [vmem:[#allocation7 + $0xac0] sm:$0xff]
    %v2225 = vld [vmem:[#allocation7 + $0xac8] sm:$0xff]
    %v2226 = vld [vmem:[#allocation7 + $0xad0] sm:$0xff]
    %v2227 = vld [vmem:[#allocation7 + $0xad8] sm:$0xff]
    %v2228 = vld [vmem:[#allocation7 + $0xae0] sm:$0xff]
    %v2229 = vld [vmem:[#allocation7 + $0xae8] sm:$0xff]
    %v2230 = vld [vmem:[#allocation7 + $0xaf0] sm:$0xff]
    %v2231 = vld [vmem:[#allocation7 + $0xaf8] sm:$0xff]
    %v2232 = vld [vmem:[#allocation7 + $0xb00] sm:$0xff]
    %v2233 = vld [vmem:[#allocation7 + $0xb08] sm:$0xff]
    %v2234 = vld [vmem:[#allocation7 + $0xb10] sm:$0xff]
    %v2235 = vld [vmem:[#allocation7 + $0xb18] sm:$0xff]
    %v2236 = vld [vmem:[#allocation7 + $0xb20] sm:$0xff]
    %v2237 = vld [vmem:[#allocation7 + $0xb28] sm:$0xff]
    %v2238 = vld [vmem:[#allocation7 + $0xb30] sm:$0xff]
    %v2239 = vld [vmem:[#allocation7 + $0xb38] sm:$0xff]
    %v2240 = vld [vmem:[#allocation7 + $0xb40] sm:$0xff]
    %v2241 = vld [vmem:[#allocation7 + $0xb48] sm:$0xff]
    %v2242 = vld [vmem:[#allocation7 + $0xb50] sm:$0xff]
    %v2243 = vld [vmem:[#allocation7 + $0xb58] sm:$0xff]
    %v2244 = vld [vmem:[#allocation7 + $0xb60] sm:$0xff]
    %v2245 = vld [vmem:[#allocation7 + $0xb68] sm:$0xff]
    %v2246 = vld [vmem:[#allocation7 + $0xb70] sm:$0xff]
    %v2247 = vld [vmem:[#allocation7 + $0xb78] sm:$0xff]
    %v2248 = vld [vmem:[#allocation7 + $0xb80] sm:$0xff]
    %v2249 = vld [vmem:[#allocation7 + $0xb88] sm:$0xff]
    %v2250 = vld [vmem:[#allocation7 + $0xb90] sm:$0xff]
    %v2251 = vld [vmem:[#allocation7 + $0xb98] sm:$0xff]
    %v2252 = vld [vmem:[#allocation7 + $0xba0] sm:$0xff]
    %v2253 = vld [vmem:[#allocation7 + $0xba8] sm:$0xff]
    %v2254 = vld [vmem:[#allocation7 + $0xbb0] sm:$0xff]
    %v2255 = vld [vmem:[#allocation7 + $0xbb8] sm:$0xff]
    %v2256 = vld [vmem:[#allocation7 + $0xbc0] sm:$0xff]
    %v2257 = vld [vmem:[#allocation7 + $0xbc8] sm:$0xff]
    %v2258 = vld [vmem:[#allocation7 + $0xbd0] sm:$0xff]
    %v2259 = vld [vmem:[#allocation7 + $0xbd8] sm:$0xff]
    %v2260 = vld [vmem:[#allocation7 + $0xbe0] sm:$0xff]
    %v2261 = vld [vmem:[#allocation7 + $0xbe8] sm:$0xff]
    %v2262 = vld [vmem:[#allocation7 + $0xbf0] sm:$0xff]
    %v2263 = vld [vmem:[#allocation7 + $0xbf8] sm:$0xff]
    %v2264 = vld [vmem:[#allocation7 + $0xc00] sm:$0xff]
    %v2265 = vld [vmem:[#allocation7 + $0xc08] sm:$0xff]
    %v2266 = vld [vmem:[#allocation7 + $0xc10] sm:$0xff]
    %v2267 = vld [vmem:[#allocation7 + $0xc18] sm:$0xff]
    %v2268 = vld [vmem:[#allocation7 + $0xc20] sm:$0xff]
    %v2269 = vld [vmem:[#allocation7 + $0xc28] sm:$0xff]
    %v2270 = vld [vmem:[#allocation7 + $0xc30] sm:$0xff]
    %v2271 = vld [vmem:[#allocation7 + $0xc38] sm:$0xff]
    %v2272 = vld [vmem:[#allocation7 + $0xc40] sm:$0xff]
    %v2273 = vld [vmem:[#allocation7 + $0xc48] sm:$0xff]
    %v2274 = vld [vmem:[#allocation7 + $0xc50] sm:$0xff]
    %v2275 = vld [vmem:[#allocation7 + $0xc58] sm:$0xff]
    %v2276 = vld [vmem:[#allocation7 + $0xc60] sm:$0xff]
    %v2277 = vld [vmem:[#allocation7 + $0xc68] sm:$0xff]
    %v2278 = vld [vmem:[#allocation7 + $0xc70] sm:$0xff]
    %v2279 = vld [vmem:[#allocation7 + $0xc78] sm:$0xff]
    %s2280 = scalar_lea.vmem [#allocation8], 128
    %v2281 = vld [vmem:[%s2280] ss:$8 sm:$0xf]
    %v2282 = vld [vmem:[%s2280] ss:$8 sm:$0xf0]
    %v2283 = vor.u32 %v2281, %v2282
    %v2284 = vpack.c.bf16 %v2012, %v2008
    %v2285 = vpack.c.bf16 %v2013, %v2009
    %v2286 = vpack.c.bf16 %v2014, %v2010
    %v2287 = vpack.c.bf16 %v2015, %v2011
    %v2288 = vpack.c.bf16 %v2020, %v2016
    %v2289 = vpack.c.bf16 %v2021, %v2017
    %v2290 = vpack.c.bf16 %v2022, %v2018
    %v2291 = vpack.c.bf16 %v2023, %v2019
    %v2293 = vperm.slane %v2283, 0
    %v2294 = vperm.slane %v2283, 1
    %v2295 = vperm.slane %v2283, 2
    %v2296 = vperm.slane %v2283, 3
    %v2297 = vperm.slane %v2283, 4
    %v2298 = vperm.slane %v2283, 5
    %v2299 = vperm.slane %v2283, 6
    %v2300 = vperm.slane %v2283, 7
    %v2565 = vunpack.c.l.b16 %v2024
    %v2566 = vunpack.c.h.b16 %v2024
    %v2567 = vunpack.c.l.b16 %v2025
    %v2568 = vunpack.c.h.b16 %v2025
    %v2569 = vunpack.c.l.b16 %v2026
    %v2570 = vunpack.c.h.b16 %v2026
    %v2571 = vunpack.c.l.b16 %v2027
    %v2572 = vunpack.c.h.b16 %v2027
    %v2573 = vunpack.c.l.b16 %v2028
    %v2574 = vunpack.c.h.b16 %v2028
    %v2575 = vunpack.c.l.b16 %v2029
    %v2576 = vunpack.c.h.b16 %v2029
    %v2577 = vunpack.c.l.b16 %v2030
    %v2578 = vunpack.c.h.b16 %v2030
    %v2579 = vunpack.c.l.b16 %v2031
    %v2580 = vunpack.c.h.b16 %v2031
    %v2581 = vunpack.c.l.b16 %v2032
    %v2582 = vunpack.c.h.b16 %v2032
    %v2583 = vunpack.c.l.b16 %v2033
    %v2584 = vunpack.c.h.b16 %v2033
    %v2585 = vunpack.c.l.b16 %v2034
    %v2586 = vunpack.c.h.b16 %v2034
    %v2587 = vunpack.c.l.b16 %v2035
    %v2588 = vunpack.c.h.b16 %v2035
    %v2589 = vunpack.c.l.b16 %v2036
    %v2590 = vunpack.c.h.b16 %v2036
    %v2591 = vunpack.c.l.b16 %v2037
    %v2592 = vunpack.c.h.b16 %v2037
    %v2593 = vunpack.c.l.b16 %v2038
    %v2594 = vunpack.c.h.b16 %v2038
    %v2595 = vunpack.c.l.b16 %v2039
    %v2596 = vunpack.c.h.b16 %v2039
    %v2597 = vunpack.c.l.b16 %v2040
    %v2598 = vunpack.c.h.b16 %v2040
    %v2599 = vunpack.c.l.b16 %v2041
    %v2600 = vunpack.c.h.b16 %v2041
    %v2601 = vunpack.c.l.b16 %v2042
    %v2602 = vunpack.c.h.b16 %v2042
    %v2603 = vunpack.c.l.b16 %v2043
    %v2604 = vunpack.c.h.b16 %v2043
    %v2605 = vunpack.c.l.b16 %v2044
    %v2606 = vunpack.c.h.b16 %v2044
    %v2607 = vunpack.c.l.b16 %v2045
    %v2608 = vunpack.c.h.b16 %v2045
    %v2609 = vunpack.c.l.b16 %v2046
    %v2610 = vunpack.c.h.b16 %v2046
    %v2611 = vunpack.c.l.b16 %v2047
    %v2612 = vunpack.c.h.b16 %v2047
    %v2613 = vunpack.c.l.b16 %v2048
    %v2614 = vunpack.c.h.b16 %v2048
    %v2615 = vunpack.c.l.b16 %v2049
    %v2616 = vunpack.c.h.b16 %v2049
    %v2617 = vunpack.c.l.b16 %v2050
    %v2618 = vunpack.c.h.b16 %v2050
    %v2619 = vunpack.c.l.b16 %v2051
    %v2620 = vunpack.c.h.b16 %v2051
    %v2621 = vunpack.c.l.b16 %v2052
    %v2622 = vunpack.c.h.b16 %v2052
    %v2623 = vunpack.c.l.b16 %v2053
    %v2624 = vunpack.c.h.b16 %v2053
    %v2625 = vunpack.c.l.b16 %v2054
    %v2626 = vunpack.c.h.b16 %v2054
    %v2627 = vunpack.c.l.b16 %v2055
    %v2628 = vunpack.c.h.b16 %v2055
    %v2629 = vunpack.c.l.b16 %v2056
    %v2630 = vunpack.c.h.b16 %v2056
    %v2631 = vunpack.c.l.b16 %v2057
    %v2632 = vunpack.c.h.b16 %v2057
    %v2633 = vunpack.c.l.b16 %v2058
    %v2634 = vunpack.c.h.b16 %v2058
    %v2635 = vunpack.c.l.b16 %v2059
    %v2636 = vunpack.c.h.b16 %v2059
    %v2637 = vunpack.c.l.b16 %v2060
    %v2638 = vunpack.c.h.b16 %v2060
    %v2639 = vunpack.c.l.b16 %v2061
    %v2640 = vunpack.c.h.b16 %v2061
    %v2641 = vunpack.c.l.b16 %v2062
    %v2642 = vunpack.c.h.b16 %v2062
    %v2643 = vunpack.c.l.b16 %v2063
    %v2644 = vunpack.c.h.b16 %v2063
    %v2645 = vunpack.c.l.b16 %v2064
    %v2646 = vunpack.c.h.b16 %v2064
    %v2647 = vunpack.c.l.b16 %v2065
    %v2648 = vunpack.c.h.b16 %v2065
    %v2649 = vunpack.c.l.b16 %v2066
    %v2650 = vunpack.c.h.b16 %v2066
    %v2651 = vunpack.c.l.b16 %v2067
    %v2652 = vunpack.c.h.b16 %v2067
    %v2653 = vunpack.c.l.b16 %v2068
    %v2654 = vunpack.c.h.b16 %v2068
    %v2655 = vunpack.c.l.b16 %v2069
    %v2656 = vunpack.c.h.b16 %v2069
    %v2657 = vunpack.c.l.b16 %v2070
    %v2658 = vunpack.c.h.b16 %v2070
    %v2659 = vunpack.c.l.b16 %v2071
    %v2660 = vunpack.c.h.b16 %v2071
    %v2661 = vunpack.c.l.b16 %v2072
    %v2662 = vunpack.c.h.b16 %v2072
    %v2663 = vunpack.c.l.b16 %v2073
    %v2664 = vunpack.c.h.b16 %v2073
    %v2665 = vunpack.c.l.b16 %v2074
    %v2666 = vunpack.c.h.b16 %v2074
    %v2667 = vunpack.c.l.b16 %v2075
    %v2668 = vunpack.c.h.b16 %v2075
    %v2669 = vunpack.c.l.b16 %v2076
    %v2670 = vunpack.c.h.b16 %v2076
    %v2671 = vunpack.c.l.b16 %v2077
    %v2672 = vunpack.c.h.b16 %v2077
    %v2673 = vunpack.c.l.b16 %v2078
    %v2674 = vunpack.c.h.b16 %v2078
    %v2675 = vunpack.c.l.b16 %v2079
    %v2676 = vunpack.c.h.b16 %v2079
    %v2677 = vunpack.c.l.b16 %v2080
    %v2678 = vunpack.c.h.b16 %v2080
    %v2679 = vunpack.c.l.b16 %v2081
    %v2680 = vunpack.c.h.b16 %v2081
    %v2681 = vunpack.c.l.b16 %v2082
    %v2682 = vunpack.c.h.b16 %v2082
    %v2683 = vunpack.c.l.b16 %v2083
    %v2684 = vunpack.c.h.b16 %v2083
    %v2685 = vunpack.c.l.b16 %v2084
    %v2686 = vunpack.c.h.b16 %v2084
    %v2687 = vunpack.c.l.b16 %v2085
    %v2688 = vunpack.c.h.b16 %v2085
    %v2689 = vunpack.c.l.b16 %v2086
    %v2690 = vunpack.c.h.b16 %v2086
    %v2691 = vunpack.c.l.b16 %v2087
    %v2692 = vunpack.c.h.b16 %v2087
    %v2693 = vunpack.c.l.b16 %v2088
    %v2694 = vunpack.c.h.b16 %v2088
    %v2695 = vunpack.c.l.b16 %v2089
    %v2696 = vunpack.c.h.b16 %v2089
    %v2697 = vunpack.c.l.b16 %v2090
    %v2698 = vunpack.c.h.b16 %v2090
    %v2699 = vunpack.c.l.b16 %v2091
    %v2700 = vunpack.c.h.b16 %v2091
    %v2701 = vunpack.c.l.b16 %v2092
    %v2702 = vunpack.c.h.b16 %v2092
    %v2703 = vunpack.c.l.b16 %v2093
    %v2704 = vunpack.c.h.b16 %v2093
    %v2705 = vunpack.c.l.b16 %v2094
    %v2706 = vunpack.c.h.b16 %v2094
    %v2707 = vunpack.c.l.b16 %v2095
    %v2708 = vunpack.c.h.b16 %v2095
    %v2709 = vunpack.c.l.b16 %v2096
    %v2710 = vunpack.c.h.b16 %v2096
    %v2711 = vunpack.c.l.b16 %v2097
    %v2712 = vunpack.c.h.b16 %v2097
    %v2713 = vunpack.c.l.b16 %v2098
    %v2714 = vunpack.c.h.b16 %v2098
    %v2715 = vunpack.c.l.b16 %v2099
    %v2716 = vunpack.c.h.b16 %v2099
    %v2717 = vunpack.c.l.b16 %v2100
    %v2718 = vunpack.c.h.b16 %v2100
    %v2719 = vunpack.c.l.b16 %v2101
    %v2720 = vunpack.c.h.b16 %v2101
    %v2721 = vunpack.c.l.b16 %v2102
    %v2722 = vunpack.c.h.b16 %v2102
    %v2723 = vunpack.c.l.b16 %v2103
    %v2724 = vunpack.c.h.b16 %v2103
    %v2725 = vunpack.c.l.b16 %v2104
    %v2726 = vunpack.c.h.b16 %v2104
    %v2727 = vunpack.c.l.b16 %v2105
    %v2728 = vunpack.c.h.b16 %v2105
    %v2729 = vunpack.c.l.b16 %v2106
    %v2730 = vunpack.c.h.b16 %v2106
    %v2731 = vunpack.c.l.b16 %v2107
    %v2732 = vunpack.c.h.b16 %v2107
    %v2733 = vunpack.c.l.b16 %v2108
    %v2734 = vunpack.c.h.b16 %v2108
    %v2735 = vunpack.c.l.b16 %v2109
    %v2736 = vunpack.c.h.b16 %v2109
    %v2737 = vunpack.c.l.b16 %v2110
    %v2738 = vunpack.c.h.b16 %v2110
    %v2739 = vunpack.c.l.b16 %v2111
    %v2740 = vunpack.c.h.b16 %v2111
    %v2741 = vunpack.c.l.b16 %v2112
    %v2742 = vunpack.c.h.b16 %v2112
    %v2743 = vunpack.c.l.b16 %v2113
    %v2744 = vunpack.c.h.b16 %v2113
    %v2745 = vunpack.c.l.b16 %v2114
    %v2746 = vunpack.c.h.b16 %v2114
    %v2747 = vunpack.c.l.b16 %v2115
    %v2748 = vunpack.c.h.b16 %v2115
    %v2749 = vunpack.c.l.b16 %v2116
    %v2750 = vunpack.c.h.b16 %v2116
    %v2751 = vunpack.c.l.b16 %v2117
    %v2752 = vunpack.c.h.b16 %v2117
    %v2753 = vunpack.c.l.b16 %v2118
    %v2754 = vunpack.c.h.b16 %v2118
    %v2755 = vunpack.c.l.b16 %v2119
    %v2756 = vunpack.c.h.b16 %v2119
    %v2757 = vunpack.c.l.b16 %v2120
    %v2758 = vunpack.c.h.b16 %v2120
    %v2759 = vunpack.c.l.b16 %v2121
    %v2760 = vunpack.c.h.b16 %v2121
    %v2761 = vunpack.c.l.b16 %v2122
    %v2762 = vunpack.c.h.b16 %v2122
    %v2763 = vunpack.c.l.b16 %v2123
    %v2764 = vunpack.c.h.b16 %v2123
    %v2765 = vunpack.c.l.b16 %v2124
    %v2766 = vunpack.c.h.b16 %v2124
    %v2767 = vunpack.c.l.b16 %v2125
    %v2768 = vunpack.c.h.b16 %v2125
    %v2769 = vunpack.c.l.b16 %v2126
    %v2770 = vunpack.c.h.b16 %v2126
    %v2771 = vunpack.c.l.b16 %v2127
    %v2772 = vunpack.c.h.b16 %v2127
    %v2773 = vunpack.c.l.b16 %v2128
    %v2774 = vunpack.c.h.b16 %v2128
    %v2775 = vunpack.c.l.b16 %v2129
    %v2776 = vunpack.c.h.b16 %v2129
    %v2777 = vunpack.c.l.b16 %v2130
    %v2778 = vunpack.c.h.b16 %v2130
    %v2779 = vunpack.c.l.b16 %v2131
    %v2780 = vunpack.c.h.b16 %v2131
    %v2781 = vunpack.c.l.b16 %v2132
    %v2782 = vunpack.c.h.b16 %v2132
    %v2783 = vunpack.c.l.b16 %v2133
    %v2784 = vunpack.c.h.b16 %v2133
    %v2785 = vunpack.c.l.b16 %v2134
    %v2786 = vunpack.c.h.b16 %v2134
    %v2787 = vunpack.c.l.b16 %v2135
    %v2788 = vunpack.c.h.b16 %v2135
    %v2789 = vunpack.c.l.b16 %v2136
    %v2790 = vunpack.c.h.b16 %v2136
    %v2791 = vunpack.c.l.b16 %v2137
    %v2792 = vunpack.c.h.b16 %v2137
    %v2793 = vunpack.c.l.b16 %v2138
    %v2794 = vunpack.c.h.b16 %v2138
    %v2795 = vunpack.c.l.b16 %v2139
    %v2796 = vunpack.c.h.b16 %v2139
    %v2797 = vunpack.c.l.b16 %v2140
    %v2798 = vunpack.c.h.b16 %v2140
    %v2799 = vunpack.c.l.b16 %v2141
    %v2800 = vunpack.c.h.b16 %v2141
    %v2801 = vunpack.c.l.b16 %v2142
    %v2802 = vunpack.c.h.b16 %v2142
    %v2803 = vunpack.c.l.b16 %v2143
    %v2804 = vunpack.c.h.b16 %v2143
    %v2805 = vunpack.c.l.b16 %v2144
    %v2806 = vunpack.c.h.b16 %v2144
    %v2807 = vunpack.c.l.b16 %v2145
    %v2808 = vunpack.c.h.b16 %v2145
    %v2809 = vunpack.c.l.b16 %v2146
    %v2810 = vunpack.c.h.b16 %v2146
    %v2811 = vunpack.c.l.b16 %v2147
    %v2812 = vunpack.c.h.b16 %v2147
    %v2813 = vunpack.c.l.b16 %v2148
    %v2814 = vunpack.c.h.b16 %v2148
    %v2815 = vunpack.c.l.b16 %v2149
    %v2816 = vunpack.c.h.b16 %v2149
    %v2817 = vunpack.c.l.b16 %v2150
    %v2818 = vunpack.c.h.b16 %v2150
    %v2819 = vunpack.c.l.b16 %v2151
    %v2820 = vunpack.c.h.b16 %v2151
    %v2821 = vunpack.c.l.b16 %v2152
    %v2822 = vunpack.c.h.b16 %v2152
    %v2823 = vunpack.c.l.b16 %v2153
    %v2824 = vunpack.c.h.b16 %v2153
    %v2825 = vunpack.c.l.b16 %v2154
    %v2826 = vunpack.c.h.b16 %v2154
    %v2827 = vunpack.c.l.b16 %v2155
    %v2828 = vunpack.c.h.b16 %v2155
    %v2829 = vunpack.c.l.b16 %v2156
    %v2830 = vunpack.c.h.b16 %v2156
    %v2831 = vunpack.c.l.b16 %v2157
    %v2832 = vunpack.c.h.b16 %v2157
    %v2833 = vunpack.c.l.b16 %v2158
    %v2834 = vunpack.c.h.b16 %v2158
    %v2835 = vunpack.c.l.b16 %v2159
    %v2836 = vunpack.c.h.b16 %v2159
    %v2837 = vunpack.c.l.b16 %v2160
    %v2838 = vunpack.c.h.b16 %v2160
    %v2839 = vunpack.c.l.b16 %v2161
    %v2840 = vunpack.c.h.b16 %v2161
    %v2841 = vunpack.c.l.b16 %v2162
    %v2842 = vunpack.c.h.b16 %v2162
    %v2843 = vunpack.c.l.b16 %v2163
    %v2844 = vunpack.c.h.b16 %v2163
    %v2845 = vunpack.c.l.b16 %v2164
    %v2846 = vunpack.c.h.b16 %v2164
    %v2847 = vunpack.c.l.b16 %v2165
    %v2848 = vunpack.c.h.b16 %v2165
    %v2849 = vunpack.c.l.b16 %v2166
    %v2850 = vunpack.c.h.b16 %v2166
    %v2851 = vunpack.c.l.b16 %v2167
    %v2852 = vunpack.c.h.b16 %v2167
    %v2853 = vunpack.c.l.b16 %v2168
    %v2854 = vunpack.c.h.b16 %v2168
    %v2855 = vunpack.c.l.b16 %v2169
    %v2856 = vunpack.c.h.b16 %v2169
    %v2857 = vunpack.c.l.b16 %v2170
    %v2858 = vunpack.c.h.b16 %v2170
    %v2859 = vunpack.c.l.b16 %v2171
    %v2860 = vunpack.c.h.b16 %v2171
    %v2861 = vunpack.c.l.b16 %v2172
    %v2862 = vunpack.c.h.b16 %v2172
    %v2863 = vunpack.c.l.b16 %v2173
    %v2864 = vunpack.c.h.b16 %v2173
    %v2865 = vunpack.c.l.b16 %v2174
    %v2866 = vunpack.c.h.b16 %v2174
    %v2867 = vunpack.c.l.b16 %v2175
    %v2868 = vunpack.c.h.b16 %v2175
    %v2869 = vunpack.c.l.b16 %v2176
    %v2870 = vunpack.c.h.b16 %v2176
    %v2871 = vunpack.c.l.b16 %v2177
    %v2872 = vunpack.c.h.b16 %v2177
    %v2873 = vunpack.c.l.b16 %v2178
    %v2874 = vunpack.c.h.b16 %v2178
    %v2875 = vunpack.c.l.b16 %v2179
    %v2876 = vunpack.c.h.b16 %v2179
    %v2877 = vunpack.c.l.b16 %v2180
    %v2878 = vunpack.c.h.b16 %v2180
    %v2879 = vunpack.c.l.b16 %v2181
    %v2880 = vunpack.c.h.b16 %v2181
    %v2881 = vunpack.c.l.b16 %v2182
    %v2882 = vunpack.c.h.b16 %v2182
    %v2883 = vunpack.c.l.b16 %v2183
    %v2884 = vunpack.c.h.b16 %v2183
    %v2885 = vunpack.c.l.b16 %v2184
    %v2886 = vunpack.c.h.b16 %v2184
    %v2887 = vunpack.c.l.b16 %v2185
    %v2888 = vunpack.c.h.b16 %v2185
    %v2889 = vunpack.c.l.b16 %v2186
    %v2890 = vunpack.c.h.b16 %v2186
    %v2891 = vunpack.c.l.b16 %v2187
    %v2892 = vunpack.c.h.b16 %v2187
    %v2893 = vunpack.c.l.b16 %v2188
    %v2894 = vunpack.c.h.b16 %v2188
    %v2895 = vunpack.c.l.b16 %v2189
    %v2896 = vunpack.c.h.b16 %v2189
    %v2897 = vunpack.c.l.b16 %v2190
    %v2898 = vunpack.c.h.b16 %v2190
    %v2899 = vunpack.c.l.b16 %v2191
    %v2900 = vunpack.c.h.b16 %v2191
    %v2901 = vunpack.c.l.b16 %v2192
    %v2902 = vunpack.c.h.b16 %v2192
    %v2903 = vunpack.c.l.b16 %v2193
    %v2904 = vunpack.c.h.b16 %v2193
    %v2905 = vunpack.c.l.b16 %v2194
    %v2906 = vunpack.c.h.b16 %v2194
    %v2907 = vunpack.c.l.b16 %v2195
    %v2908 = vunpack.c.h.b16 %v2195
    %v2909 = vunpack.c.l.b16 %v2196
    %v2910 = vunpack.c.h.b16 %v2196
    %v2911 = vunpack.c.l.b16 %v2197
    %v2912 = vunpack.c.h.b16 %v2197
    %v2913 = vunpack.c.l.b16 %v2198
    %v2914 = vunpack.c.h.b16 %v2198
    %v2915 = vunpack.c.l.b16 %v2199
    %v2916 = vunpack.c.h.b16 %v2199
    %v2917 = vunpack.c.l.b16 %v2200
    %v2918 = vunpack.c.h.b16 %v2200
    %v2919 = vunpack.c.l.b16 %v2201
    %v2920 = vunpack.c.h.b16 %v2201
    %v2921 = vunpack.c.l.b16 %v2202
    %v2922 = vunpack.c.h.b16 %v2202
    %v2923 = vunpack.c.l.b16 %v2203
    %v2924 = vunpack.c.h.b16 %v2203
    %v2925 = vunpack.c.l.b16 %v2204
    %v2926 = vunpack.c.h.b16 %v2204
    %v2927 = vunpack.c.l.b16 %v2205
    %v2928 = vunpack.c.h.b16 %v2205
    %v2929 = vunpack.c.l.b16 %v2206
    %v2930 = vunpack.c.h.b16 %v2206
    %v2931 = vunpack.c.l.b16 %v2207
    %v2932 = vunpack.c.h.b16 %v2207
    %v2933 = vunpack.c.l.b16 %v2208
    %v2934 = vunpack.c.h.b16 %v2208
    %v2935 = vunpack.c.l.b16 %v2209
    %v2936 = vunpack.c.h.b16 %v2209
    %v2937 = vunpack.c.l.b16 %v2210
    %v2938 = vunpack.c.h.b16 %v2210
    %v2939 = vunpack.c.l.b16 %v2211
    %v2940 = vunpack.c.h.b16 %v2211
    %v2941 = vunpack.c.l.b16 %v2212
    %v2942 = vunpack.c.h.b16 %v2212
    %v2943 = vunpack.c.l.b16 %v2213
    %v2944 = vunpack.c.h.b16 %v2213
    %v2945 = vunpack.c.l.b16 %v2214
    %v2946 = vunpack.c.h.b16 %v2214
    %v2947 = vunpack.c.l.b16 %v2215
    %v2948 = vunpack.c.h.b16 %v2215
    %v2949 = vunpack.c.l.b16 %v2216
    %v2950 = vunpack.c.h.b16 %v2216
    %v2951 = vunpack.c.l.b16 %v2217
    %v2952 = vunpack.c.h.b16 %v2217
    %v2953 = vunpack.c.l.b16 %v2218
    %v2954 = vunpack.c.h.b16 %v2218
    %v2955 = vunpack.c.l.b16 %v2219
    %v2956 = vunpack.c.h.b16 %v2219
    %v2957 = vunpack.c.l.b16 %v2220
    %v2958 = vunpack.c.h.b16 %v2220
    %v2959 = vunpack.c.l.b16 %v2221
    %v2960 = vunpack.c.h.b16 %v2221
    %v2961 = vunpack.c.l.b16 %v2222
    %v2962 = vunpack.c.h.b16 %v2222
    %v2963 = vunpack.c.l.b16 %v2223
    %v2964 = vunpack.c.h.b16 %v2223
    %v2965 = vunpack.c.l.b16 %v2224
    %v2966 = vunpack.c.h.b16 %v2224
    %v2967 = vunpack.c.l.b16 %v2225
    %v2968 = vunpack.c.h.b16 %v2225
    %v2969 = vunpack.c.l.b16 %v2226
    %v2970 = vunpack.c.h.b16 %v2226
    %v2971 = vunpack.c.l.b16 %v2227
    %v2972 = vunpack.c.h.b16 %v2227
    %v2973 = vunpack.c.l.b16 %v2228
    %v2974 = vunpack.c.h.b16 %v2228
    %v2975 = vunpack.c.l.b16 %v2229
    %v2976 = vunpack.c.h.b16 %v2229
    %v2977 = vunpack.c.l.b16 %v2230
    %v2978 = vunpack.c.h.b16 %v2230
    %v2979 = vunpack.c.l.b16 %v2231
    %v2980 = vunpack.c.h.b16 %v2231
    %v2981 = vunpack.c.l.b16 %v2232
    %v2982 = vunpack.c.h.b16 %v2232
    %v2983 = vunpack.c.l.b16 %v2233
    %v2984 = vunpack.c.h.b16 %v2233
    %v2985 = vunpack.c.l.b16 %v2234
    %v2986 = vunpack.c.h.b16 %v2234
    %v2987 = vunpack.c.l.b16 %v2235
    %v2988 = vunpack.c.h.b16 %v2235
    %v2989 = vunpack.c.l.b16 %v2236
    %v2990 = vunpack.c.h.b16 %v2236
    %v2991 = vunpack.c.l.b16 %v2237
    %v2992 = vunpack.c.h.b16 %v2237
    %v2993 = vunpack.c.l.b16 %v2238
    %v2994 = vunpack.c.h.b16 %v2238
    %v2995 = vunpack.c.l.b16 %v2239
    %v2996 = vunpack.c.h.b16 %v2239
    %v2997 = vunpack.c.l.b16 %v2240
    %v2998 = vunpack.c.h.b16 %v2240
    %v2999 = vunpack.c.l.b16 %v2241
    %v3000 = vunpack.c.h.b16 %v2241
    %v3001 = vunpack.c.l.b16 %v2242
    %v3002 = vunpack.c.h.b16 %v2242
    %v3003 = vunpack.c.l.b16 %v2243
    %v3004 = vunpack.c.h.b16 %v2243
    %v3005 = vunpack.c.l.b16 %v2244
    %v3006 = vunpack.c.h.b16 %v2244
    %v3007 = vunpack.c.l.b16 %v2245
    %v3008 = vunpack.c.h.b16 %v2245
    %v3009 = vunpack.c.l.b16 %v2246
    %v3010 = vunpack.c.h.b16 %v2246
    %v3011 = vunpack.c.l.b16 %v2247
    %v3012 = vunpack.c.h.b16 %v2247
    %v3013 = vunpack.c.l.b16 %v2248
    %v3014 = vunpack.c.h.b16 %v2248
    %v3015 = vunpack.c.l.b16 %v2249
    %v3016 = vunpack.c.h.b16 %v2249
    %v3017 = vunpack.c.l.b16 %v2250
    %v3018 = vunpack.c.h.b16 %v2250
    %v3019 = vunpack.c.l.b16 %v2251
    %v3020 = vunpack.c.h.b16 %v2251
    %v3021 = vunpack.c.l.b16 %v2252
    %v3022 = vunpack.c.h.b16 %v2252
    %v3023 = vunpack.c.l.b16 %v2253
    %v3024 = vunpack.c.h.b16 %v2253
    %v3025 = vunpack.c.l.b16 %v2254
    %v3026 = vunpack.c.h.b16 %v2254
    %v3027 = vunpack.c.l.b16 %v2255
    %v3028 = vunpack.c.h.b16 %v2255
    %v3029 = vunpack.c.l.b16 %v2256
    %v3030 = vunpack.c.h.b16 %v2256
    %v3031 = vunpack.c.l.b16 %v2257
    %v3032 = vunpack.c.h.b16 %v2257
    %v3033 = vunpack.c.l.b16 %v2258
    %v3034 = vunpack.c.h.b16 %v2258
    %v3035 = vunpack.c.l.b16 %v2259
    %v3036 = vunpack.c.h.b16 %v2259
    %v3037 = vunpack.c.l.b16 %v2260
    %v3038 = vunpack.c.h.b16 %v2260
    %v3039 = vunpack.c.l.b16 %v2261
    %v3040 = vunpack.c.h.b16 %v2261
    %v3041 = vunpack.c.l.b16 %v2262
    %v3042 = vunpack.c.h.b16 %v2262
    %v3043 = vunpack.c.l.b16 %v2263
    %v3044 = vunpack.c.h.b16 %v2263
    %v3045 = vunpack.c.l.b16 %v2264
    %v3046 = vunpack.c.h.b16 %v2264
    %v3047 = vunpack.c.l.b16 %v2265
    %v3048 = vunpack.c.h.b16 %v2265
    %v3049 = vunpack.c.l.b16 %v2266
    %v3050 = vunpack.c.h.b16 %v2266
    %v3051 = vunpack.c.l.b16 %v2267
    %v3052 = vunpack.c.h.b16 %v2267
    %v3053 = vunpack.c.l.b16 %v2268
    %v3054 = vunpack.c.h.b16 %v2268
    %v3055 = vunpack.c.l.b16 %v2269
    %v3056 = vunpack.c.h.b16 %v2269
    %v3057 = vunpack.c.l.b16 %v2270
    %v3058 = vunpack.c.h.b16 %v2270
    %v3059 = vunpack.c.l.b16 %v2271
    %v3060 = vunpack.c.h.b16 %v2271
    %v3061 = vunpack.c.l.b16 %v2272
    %v3062 = vunpack.c.h.b16 %v2272
    %v3063 = vunpack.c.l.b16 %v2273
    %v3064 = vunpack.c.h.b16 %v2273
    %v3065 = vunpack.c.l.b16 %v2274
    %v3066 = vunpack.c.h.b16 %v2274
    %v3067 = vunpack.c.l.b16 %v2275
    %v3068 = vunpack.c.h.b16 %v2275
    %v3069 = vunpack.c.l.b16 %v2276
    %v3070 = vunpack.c.h.b16 %v2276
    %v3071 = vunpack.c.l.b16 %v2277
    %v3072 = vunpack.c.h.b16 %v2277
    %v3073 = vunpack.c.l.b16 %v2278
    %v3074 = vunpack.c.h.b16 %v2278
    %v3075 = vunpack.c.l.b16 %v2279
    %v3076 = vunpack.c.h.b16 %v2279
    %v3077 = vpack.c.b16 %v2573, %v2565
    %v3078 = vpack.c.b16 %v2574, %v2566
    %v3079 = vpack.c.b16 %v2575, %v2567
    %v3080 = vpack.c.b16 %v2576, %v2568
    %v3081 = vpack.c.b16 %v2577, %v2569
    %v3082 = vpack.c.b16 %v2578, %v2570
    %v3083 = vpack.c.b16 %v2579, %v2571
    %v3084 = vpack.c.b16 %v2580, %v2572
    %v3085 = vpack.c.b16 %v2589, %v2581
    %v3086 = vpack.c.b16 %v2590, %v2582
    %v3087 = vpack.c.b16 %v2591, %v2583
    %v3088 = vpack.c.b16 %v2592, %v2584
    %v3089 = vpack.c.b16 %v2593, %v2585
    %v3090 = vpack.c.b16 %v2594, %v2586
    %v3091 = vpack.c.b16 %v2595, %v2587
    %v3092 = vpack.c.b16 %v2596, %v2588
    %v3093 = vpack.c.b16 %v2605, %v2597
    %v3094 = vpack.c.b16 %v2606, %v2598
    %v3095 = vpack.c.b16 %v2607, %v2599
    %v3096 = vpack.c.b16 %v2608, %v2600
    %v3097 = vpack.c.b16 %v2609, %v2601
    %v3098 = vpack.c.b16 %v2610, %v2602
    %v3099 = vpack.c.b16 %v2611, %v2603
    %v3100 = vpack.c.b16 %v2612, %v2604
    %v3101 = vpack.c.b16 %v2621, %v2613
    %v3102 = vpack.c.b16 %v2622, %v2614
    %v3103 = vpack.c.b16 %v2623, %v2615
    %v3104 = vpack.c.b16 %v2624, %v2616
    %v3105 = vpack.c.b16 %v2625, %v2617
    %v3106 = vpack.c.b16 %v2626, %v2618
    %v3107 = vpack.c.b16 %v2627, %v2619
    %v3108 = vpack.c.b16 %v2628, %v2620
    %v3109 = vpack.c.b16 %v2637, %v2629
    %v3110 = vpack.c.b16 %v2638, %v2630
    %v3111 = vpack.c.b16 %v2639, %v2631
    %v3112 = vpack.c.b16 %v2640, %v2632
    %v3113 = vpack.c.b16 %v2641, %v2633
    %v3114 = vpack.c.b16 %v2642, %v2634
    %v3115 = vpack.c.b16 %v2643, %v2635
    %v3116 = vpack.c.b16 %v2644, %v2636
    %v3117 = vpack.c.b16 %v2653, %v2645
    %v3118 = vpack.c.b16 %v2654, %v2646
    %v3119 = vpack.c.b16 %v2655, %v2647
    %v3120 = vpack.c.b16 %v2656, %v2648
    %v3121 = vpack.c.b16 %v2657, %v2649
    %v3122 = vpack.c.b16 %v2658, %v2650
    %v3123 = vpack.c.b16 %v2659, %v2651
    %v3124 = vpack.c.b16 %v2660, %v2652
    %v3125 = vpack.c.b16 %v2669, %v2661
    %v3126 = vpack.c.b16 %v2670, %v2662
    %v3127 = vpack.c.b16 %v2671, %v2663
    %v3128 = vpack.c.b16 %v2672, %v2664
    %v3129 = vpack.c.b16 %v2673, %v2665
    %v3130 = vpack.c.b16 %v2674, %v2666
    %v3131 = vpack.c.b16 %v2675, %v2667
    %v3132 = vpack.c.b16 %v2676, %v2668
    %v3133 = vpack.c.b16 %v2685, %v2677
    %v3134 = vpack.c.b16 %v2686, %v2678
    %v3135 = vpack.c.b16 %v2687, %v2679
    %v3136 = vpack.c.b16 %v2688, %v2680
    %v3137 = vpack.c.b16 %v2689, %v2681
    %v3138 = vpack.c.b16 %v2690, %v2682
    %v3139 = vpack.c.b16 %v2691, %v2683
    %v3140 = vpack.c.b16 %v2692, %v2684
    %v3141 = vpack.c.b16 %v2701, %v2693
    %v3142 = vpack.c.b16 %v2702, %v2694
    %v3143 = vpack.c.b16 %v2703, %v2695
    %v3144 = vpack.c.b16 %v2704, %v2696
    %v3145 = vpack.c.b16 %v2705, %v2697
    %v3146 = vpack.c.b16 %v2706, %v2698
    %v3147 = vpack.c.b16 %v2707, %v2699
    %v3148 = vpack.c.b16 %v2708, %v2700
    %v3149 = vpack.c.b16 %v2717, %v2709
    %v3150 = vpack.c.b16 %v2718, %v2710
    %v3151 = vpack.c.b16 %v2719, %v2711
    %v3152 = vpack.c.b16 %v2720, %v2712
    %v3153 = vpack.c.b16 %v2721, %v2713
    %v3154 = vpack.c.b16 %v2722, %v2714
    %v3155 = vpack.c.b16 %v2723, %v2715
    %v3156 = vpack.c.b16 %v2724, %v2716
    %v3157 = vpack.c.b16 %v2733, %v2725
    %v3158 = vpack.c.b16 %v2734, %v2726
    %v3159 = vpack.c.b16 %v2735, %v2727
    %v3160 = vpack.c.b16 %v2736, %v2728
    %v3161 = vpack.c.b16 %v2737, %v2729
    %v3162 = vpack.c.b16 %v2738, %v2730
    %v3163 = vpack.c.b16 %v2739, %v2731
    %v3164 = vpack.c.b16 %v2740, %v2732
    %v3165 = vpack.c.b16 %v2749, %v2741
    %v3166 = vpack.c.b16 %v2750, %v2742
    %v3167 = vpack.c.b16 %v2751, %v2743
    %v3168 = vpack.c.b16 %v2752, %v2744
    %v3169 = vpack.c.b16 %v2753, %v2745
    %v3170 = vpack.c.b16 %v2754, %v2746
    %v3171 = vpack.c.b16 %v2755, %v2747
    %v3172 = vpack.c.b16 %v2756, %v2748
    %v3173 = vpack.c.b16 %v2765, %v2757
    %v3174 = vpack.c.b16 %v2766, %v2758
    %v3175 = vpack.c.b16 %v2767, %v2759
    %v3176 = vpack.c.b16 %v2768, %v2760
    %v3177 = vpack.c.b16 %v2769, %v2761
    %v3178 = vpack.c.b16 %v2770, %v2762
    %v3179 = vpack.c.b16 %v2771, %v2763
    %v3180 = vpack.c.b16 %v2772, %v2764
    %v3181 = vpack.c.b16 %v2781, %v2773
    %v3182 = vpack.c.b16 %v2782, %v2774
    %v3183 = vpack.c.b16 %v2783, %v2775
    %v3184 = vpack.c.b16 %v2784, %v2776
    %v3185 = vpack.c.b16 %v2785, %v2777
    %v3186 = vpack.c.b16 %v2786, %v2778
    %v3187 = vpack.c.b16 %v2787, %v2779
    %v3188 = vpack.c.b16 %v2788, %v2780
    %v3189 = vpack.c.b16 %v2797, %v2789
    %v3190 = vpack.c.b16 %v2798, %v2790
    %v3191 = vpack.c.b16 %v2799, %v2791
    %v3192 = vpack.c.b16 %v2800, %v2792
    %v3193 = vpack.c.b16 %v2801, %v2793
    %v3194 = vpack.c.b16 %v2802, %v2794
    %v3195 = vpack.c.b16 %v2803, %v2795
    %v3196 = vpack.c.b16 %v2804, %v2796
    %v3197 = vpack.c.b16 %v2813, %v2805
    %v3198 = vpack.c.b16 %v2814, %v2806
    %v3199 = vpack.c.b16 %v2815, %v2807
    %v3200 = vpack.c.b16 %v2816, %v2808
    %v3201 = vpack.c.b16 %v2817, %v2809
    %v3202 = vpack.c.b16 %v2818, %v2810
    %v3203 = vpack.c.b16 %v2819, %v2811
    %v3204 = vpack.c.b16 %v2820, %v2812
    %v3205 = vpack.c.b16 %v2829, %v2821
    %v3206 = vpack.c.b16 %v2830, %v2822
    %v3207 = vpack.c.b16 %v2831, %v2823
    %v3208 = vpack.c.b16 %v2832, %v2824
    %v3209 = vpack.c.b16 %v2833, %v2825
    %v3210 = vpack.c.b16 %v2834, %v2826
    %v3211 = vpack.c.b16 %v2835, %v2827
    %v3212 = vpack.c.b16 %v2836, %v2828
    %v3213 = vpack.c.b16 %v2845, %v2837
    %v3214 = vpack.c.b16 %v2846, %v2838
    %v3215 = vpack.c.b16 %v2847, %v2839
    %v3216 = vpack.c.b16 %v2848, %v2840
    %v3217 = vpack.c.b16 %v2849, %v2841
    %v3218 = vpack.c.b16 %v2850, %v2842
    %v3219 = vpack.c.b16 %v2851, %v2843
    %v3220 = vpack.c.b16 %v2852, %v2844
    %v3221 = vpack.c.b16 %v2861, %v2853
    %v3222 = vpack.c.b16 %v2862, %v2854
    %v3223 = vpack.c.b16 %v2863, %v2855
    %v3224 = vpack.c.b16 %v2864, %v2856
    %v3225 = vpack.c.b16 %v2865, %v2857
    %v3226 = vpack.c.b16 %v2866, %v2858
    %v3227 = vpack.c.b16 %v2867, %v2859
    %v3228 = vpack.c.b16 %v2868, %v2860
    %v3229 = vpack.c.b16 %v2877, %v2869
    %v3230 = vpack.c.b16 %v2878, %v2870
    %v3231 = vpack.c.b16 %v2879, %v2871
    %v3232 = vpack.c.b16 %v2880, %v2872
    %v3233 = vpack.c.b16 %v2881, %v2873
    %v3234 = vpack.c.b16 %v2882, %v2874
    %v3235 = vpack.c.b16 %v2883, %v2875
    %v3236 = vpack.c.b16 %v2884, %v2876
    %v3237 = vpack.c.b16 %v2893, %v2885
    %v3238 = vpack.c.b16 %v2894, %v2886
    %v3239 = vpack.c.b16 %v2895, %v2887
    %v3240 = vpack.c.b16 %v2896, %v2888
    %v3241 = vpack.c.b16 %v2897, %v2889
    %v3242 = vpack.c.b16 %v2898, %v2890
    %v3243 = vpack.c.b16 %v2899, %v2891
    %v3244 = vpack.c.b16 %v2900, %v2892
    %v3245 = vpack.c.b16 %v2909, %v2901
    %v3246 = vpack.c.b16 %v2910, %v2902
    %v3247 = vpack.c.b16 %v2911, %v2903
    %v3248 = vpack.c.b16 %v2912, %v2904
    %v3249 = vpack.c.b16 %v2913, %v2905
    %v3250 = vpack.c.b16 %v2914, %v2906
    %v3251 = vpack.c.b16 %v2915, %v2907
    %v3252 = vpack.c.b16 %v2916, %v2908
    %v3253 = vpack.c.b16 %v2925, %v2917
    %v3254 = vpack.c.b16 %v2926, %v2918
    %v3255 = vpack.c.b16 %v2927, %v2919
    %v3256 = vpack.c.b16 %v2928, %v2920
    %v3257 = vpack.c.b16 %v2929, %v2921
    %v3258 = vpack.c.b16 %v2930, %v2922
    %v3259 = vpack.c.b16 %v2931, %v2923
    %v3260 = vpack.c.b16 %v2932, %v2924
    %v3261 = vpack.c.b16 %v2941, %v2933
    %v3262 = vpack.c.b16 %v2942, %v2934
    %v3263 = vpack.c.b16 %v2943, %v2935
    %v3264 = vpack.c.b16 %v2944, %v2936
    %v3265 = vpack.c.b16 %v2945, %v2937
    %v3266 = vpack.c.b16 %v2946, %v2938
    %v3267 = vpack.c.b16 %v2947, %v2939
    %v3268 = vpack.c.b16 %v2948, %v2940
    %v3269 = vpack.c.b16 %v2957, %v2949
    %v3270 = vpack.c.b16 %v2958, %v2950
    %v3271 = vpack.c.b16 %v2959, %v2951
    %v3272 = vpack.c.b16 %v2960, %v2952
    %v3273 = vpack.c.b16 %v2961, %v2953
    %v3274 = vpack.c.b16 %v2962, %v2954
    %v3275 = vpack.c.b16 %v2963, %v2955
    %v3276 = vpack.c.b16 %v2964, %v2956
    %v3277 = vpack.c.b16 %v2973, %v2965
    %v3278 = vpack.c.b16 %v2974, %v2966
    %v3279 = vpack.c.b16 %v2975, %v2967
    %v3280 = vpack.c.b16 %v2976, %v2968
    %v3281 = vpack.c.b16 %v2977, %v2969
    %v3282 = vpack.c.b16 %v2978, %v2970
    %v3283 = vpack.c.b16 %v2979, %v2971
    %v3284 = vpack.c.b16 %v2980, %v2972
    %v3285 = vpack.c.b16 %v2989, %v2981
    %v3286 = vpack.c.b16 %v2990, %v2982
    %v3287 = vpack.c.b16 %v2991, %v2983
    %v3288 = vpack.c.b16 %v2992, %v2984
    %v3289 = vpack.c.b16 %v2993, %v2985
    %v3290 = vpack.c.b16 %v2994, %v2986
    %v3291 = vpack.c.b16 %v2995, %v2987
    %v3292 = vpack.c.b16 %v2996, %v2988
    %v3293 = vpack.c.b16 %v3005, %v2997
    %v3294 = vpack.c.b16 %v3006, %v2998
    %v3295 = vpack.c.b16 %v3007, %v2999
    %v3296 = vpack.c.b16 %v3008, %v3000
    %v3297 = vpack.c.b16 %v3009, %v3001
    %v3298 = vpack.c.b16 %v3010, %v3002
    %v3299 = vpack.c.b16 %v3011, %v3003
    %v3300 = vpack.c.b16 %v3012, %v3004
    %v3301 = vpack.c.b16 %v3021, %v3013
    %v3302 = vpack.c.b16 %v3022, %v3014
    %v3303 = vpack.c.b16 %v3023, %v3015
    %v3304 = vpack.c.b16 %v3024, %v3016
    %v3305 = vpack.c.b16 %v3025, %v3017
    %v3306 = vpack.c.b16 %v3026, %v3018
    %v3307 = vpack.c.b16 %v3027, %v3019
    %v3308 = vpack.c.b16 %v3028, %v3020
    %v3309 = vpack.c.b16 %v3037, %v3029
    %v3310 = vpack.c.b16 %v3038, %v3030
    %v3311 = vpack.c.b16 %v3039, %v3031
    %v3312 = vpack.c.b16 %v3040, %v3032
    %v3313 = vpack.c.b16 %v3041, %v3033
    %v3314 = vpack.c.b16 %v3042, %v3034
    %v3315 = vpack.c.b16 %v3043, %v3035
    %v3316 = vpack.c.b16 %v3044, %v3036
    %v3317 = vpack.c.b16 %v3053, %v3045
    %v3318 = vpack.c.b16 %v3054, %v3046
    %v3319 = vpack.c.b16 %v3055, %v3047
    %v3320 = vpack.c.b16 %v3056, %v3048
    %v3321 = vpack.c.b16 %v3057, %v3049
    %v3322 = vpack.c.b16 %v3058, %v3050
    %v3323 = vpack.c.b16 %v3059, %v3051
    %v3324 = vpack.c.b16 %v3060, %v3052
    %v3325 = vpack.c.b16 %v3069, %v3061
    %v3326 = vpack.c.b16 %v3070, %v3062
    %v3327 = vpack.c.b16 %v3071, %v3063
    %v3328 = vpack.c.b16 %v3072, %v3064
    %v3329 = vpack.c.b16 %v3073, %v3065
    %v3330 = vpack.c.b16 %v3074, %v3066
    %v3331 = vpack.c.b16 %v3075, %v3067
    %v3332 = vpack.c.b16 %v3076, %v3068
    %3589 = vmatpush.bf16.msra.mxu0 %v3133
    %3590 = vmatpush.bf16.msra.mxu0 %v3125
    %3591 = vmatpush.bf16.msra.mxu0 %v3117
    %3592 = vmatpush.bf16.msra.mxu0 %v3109
    %3593 = vmatpush.bf16.msra.mxu0 %v3101
    %3594 = vmatpush.bf16.msra.mxu0 %v3093
    %3595 = vmatpush.bf16.msra.mxu0 %v3085
    %3596 = vmatpush.bf16.msra.mxu0 %v3077
    %3597 = vmatmul.bf16.gmra.mxu0 %v2284
    %v3598 = vpop.f32.mrf.mxu0
    %v3599 = vadd.f32 %v2293, %v3598
    %v3600 = vpop.f32.mrf.mxu0
    %v3601 = vadd.f32 %v2293, %v3600
    %3602 = vmatmul.bf16.gmra.mxu0 %v2288
    %v3603 = vpop.f32.mrf.mxu0
    %v3604 = vadd.f32 %v2293, %v3603
    %v3605 = vpop.f32.mrf.mxu0
    %v3606 = vadd.f32 %v2293, %v3605
    %3607 = vdwg.mxu0
    %3608 = vmatpush.bf16.msra.mxu0 %v3197
    %3609 = vmatpush.bf16.msra.mxu0 %v3189
    %3610 = vmatpush.bf16.msra.mxu0 %v3181
    %3611 = vmatpush.bf16.msra.mxu0 %v3173
    %3612 = vmatpush.bf16.msra.mxu0 %v3165
    %3613 = vmatpush.bf16.msra.mxu0 %v3157
    %3614 = vmatpush.bf16.msra.mxu0 %v3149
    %3615 = vmatpush.bf16.msra.mxu0 %v3141
    %3616 = vmatmul.bf16.gmra.mxu0 %v2285
    %v3617 = vpop.f32.mrf.mxu0
    %v3618 = vadd.f32 %v3599, %v3617
    %v3619 = vpop.f32.mrf.mxu0
    %v3620 = vadd.f32 %v3601, %v3619
    %3621 = vmatmul.bf16.gmra.mxu0 %v2289
    %v3622 = vpop.f32.mrf.mxu0
    %v3623 = vadd.f32 %v3604, %v3622
    %v3624 = vpop.f32.mrf.mxu0
    %v3625 = vadd.f32 %v3606, %v3624
    %3626 = vdwg.mxu0
    %3627 = vmatpush.bf16.msra.mxu0 %v3261
    %3628 = vmatpush.bf16.msra.mxu0 %v3253
    %3629 = vmatpush.bf16.msra.mxu0 %v3245
    %3630 = vmatpush.bf16.msra.mxu0 %v3237
    %3631 = vmatpush.bf16.msra.mxu0 %v3229
    %3632 = vmatpush.bf16.msra.mxu0 %v3221
    %3633 = vmatpush.bf16.msra.mxu0 %v3213
    %3634 = vmatpush.bf16.msra.mxu0 %v3205
    %3635 = vmatmul.bf16.gmra.mxu0 %v2286
    %v3636 = vpop.f32.mrf.mxu0
    %v3637 = vadd.f32 %v3618, %v3636
    %v3638 = vpop.f32.mrf.mxu0
    %v3639 = vadd.f32 %v3620, %v3638
    %3640 = vmatmul.bf16.gmra.mxu0 %v2290
    %v3641 = vpop.f32.mrf.mxu0
    %v3642 = vadd.f32 %v3623, %v3641
    %v3643 = vpop.f32.mrf.mxu0
    %v3644 = vadd.f32 %v3625, %v3643
    %3645 = vdwg.mxu0
    %3646 = vmatpush.bf16.msra.mxu0 %v3325
    %3647 = vmatpush.bf16.msra.mxu0 %v3317
    %3648 = vmatpush.bf16.msra.mxu0 %v3309
    %3649 = vmatpush.bf16.msra.mxu0 %v3301
    %3650 = vmatpush.bf16.msra.mxu0 %v3293
    %3651 = vmatpush.bf16.msra.mxu0 %v3285
    %3652 = vmatpush.bf16.msra.mxu0 %v3277
    %3653 = vmatpush.bf16.msra.mxu0 %v3269
    %3654 = vmatmul.bf16.gmra.mxu0 %v2287
    %v3655 = vpop.f32.mrf.mxu0
    %v3656 = vadd.f32 %v3637, %v3655
    %v3657 = vpop.f32.mrf.mxu0
    %v3658 = vadd.f32 %v3639, %v3657
    %3659 = vmatmul.bf16.gmra.mxu0 %v2291
    %v3660 = vpop.f32.mrf.mxu0
    %v3661 = vadd.f32 %v3642, %v3660
    %v3662 = vpop.f32.mrf.mxu0
    %v3663 = vadd.f32 %v3644, %v3662
    %3664 = vdwg.mxu0
    %3665 = vmatpush.bf16.msra.mxu0 %v3134
    %3666 = vmatpush.bf16.msra.mxu0 %v3126
    %3667 = vmatpush.bf16.msra.mxu0 %v3118
    %3668 = vmatpush.bf16.msra.mxu0 %v3110
    %3669 = vmatpush.bf16.msra.mxu0 %v3102
    %3670 = vmatpush.bf16.msra.mxu0 %v3094
    %3671 = vmatpush.bf16.msra.mxu0 %v3086
    %3672 = vmatpush.bf16.msra.mxu0 %v3078
    %3673 = vmatmul.bf16.gmra.mxu0 %v2284
    %v3674 = vpop.f32.mrf.mxu0
    %v3675 = vadd.f32 %v2294, %v3674
    %v3676 = vpop.f32.mrf.mxu0
    %v3677 = vadd.f32 %v2294, %v3676
    %3678 = vmatmul.bf16.gmra.mxu0 %v2288
    %v3679 = vpop.f32.mrf.mxu0
    %v3680 = vadd.f32 %v2294, %v3679
    %v3681 = vpop.f32.mrf.mxu0
    %v3682 = vadd.f32 %v2294, %v3681
    %3683 = vdwg.mxu0
    %3684 = vmatpush.bf16.msra.mxu0 %v3198
    %3685 = vmatpush.bf16.msra.mxu0 %v3190
    %3686 = vmatpush.bf16.msra.mxu0 %v3182
    %3687 = vmatpush.bf16.msra.mxu0 %v3174
    %3688 = vmatpush.bf16.msra.mxu0 %v3166
    %3689 = vmatpush.bf16.msra.mxu0 %v3158
    %3690 = vmatpush.bf16.msra.mxu0 %v3150
    %3691 = vmatpush.bf16.msra.mxu0 %v3142
    %3692 = vmatmul.bf16.gmra.mxu0 %v2285
    %v3693 = vpop.f32.mrf.mxu0
    %v3694 = vadd.f32 %v3675, %v3693
    %v3695 = vpop.f32.mrf.mxu0
    %v3696 = vadd.f32 %v3677, %v3695
    %3697 = vmatmul.bf16.gmra.mxu0 %v2289
    %v3698 = vpop.f32.mrf.mxu0
    %v3699 = vadd.f32 %v3680, %v3698
    %v3700 = vpop.f32.mrf.mxu0
    %v3701 = vadd.f32 %v3682, %v3700
    %3702 = vdwg.mxu0
    %3703 = vmatpush.bf16.msra.mxu0 %v3262
    %3704 = vmatpush.bf16.msra.mxu0 %v3254
    %3705 = vmatpush.bf16.msra.mxu0 %v3246
    %3706 = vmatpush.bf16.msra.mxu0 %v3238
    %3707 = vmatpush.bf16.msra.mxu0 %v3230
    %3708 = vmatpush.bf16.msra.mxu0 %v3222
    %3709 = vmatpush.bf16.msra.mxu0 %v3214
    %3710 = vmatpush.bf16.msra.mxu0 %v3206
    %3711 = vmatmul.bf16.gmra.mxu0 %v2286
    %v3712 = vpop.f32.mrf.mxu0
    %v3713 = vadd.f32 %v3694, %v3712
    %v3714 = vpop.f32.mrf.mxu0
    %v3715 = vadd.f32 %v3696, %v3714
    %3716 = vmatmul.bf16.gmra.mxu0 %v2290
    %v3717 = vpop.f32.mrf.mxu0
    %v3718 = vadd.f32 %v3699, %v3717
    %v3719 = vpop.f32.mrf.mxu0
    %v3720 = vadd.f32 %v3701, %v3719
    %3721 = vdwg.mxu0
    %3722 = vmatpush.bf16.msra.mxu0 %v3326
    %3723 = vmatpush.bf16.msra.mxu0 %v3318
    %3724 = vmatpush.bf16.msra.mxu0 %v3310
    %3725 = vmatpush.bf16.msra.mxu0 %v3302
    %3726 = vmatpush.bf16.msra.mxu0 %v3294
    %3727 = vmatpush.bf16.msra.mxu0 %v3286
    %3728 = vmatpush.bf16.msra.mxu0 %v3278
    %3729 = vmatpush.bf16.msra.mxu0 %v3270
    %3730 = vmatmul.bf16.gmra.mxu0 %v2287
    %v3731 = vpop.f32.mrf.mxu0
    %v3732 = vadd.f32 %v3713, %v3731
    %v3733 = vpop.f32.mrf.mxu0
    %v3734 = vadd.f32 %v3715, %v3733
    %3735 = vmatmul.bf16.gmra.mxu0 %v2291
    %v3736 = vpop.f32.mrf.mxu0
    %v3737 = vadd.f32 %v3718, %v3736
    %v3738 = vpop.f32.mrf.mxu0
    %v3739 = vadd.f32 %v3720, %v3738
    %3740 = vdwg.mxu0
    %3741 = vmatpush.bf16.msra.mxu0 %v3135
    %3742 = vmatpush.bf16.msra.mxu0 %v3127
    %3743 = vmatpush.bf16.msra.mxu0 %v3119
    %3744 = vmatpush.bf16.msra.mxu0 %v3111
    %3745 = vmatpush.bf16.msra.mxu0 %v3103
    %3746 = vmatpush.bf16.msra.mxu0 %v3095
    %3747 = vmatpush.bf16.msra.mxu0 %v3087
    %3748 = vmatpush.bf16.msra.mxu0 %v3079
    %3749 = vmatmul.bf16.gmra.mxu0 %v2284
    %v3750 = vpop.f32.mrf.mxu0
    %v3751 = vadd.f32 %v2295, %v3750
    %v3752 = vpop.f32.mrf.mxu0
    %v3753 = vadd.f32 %v2295, %v3752
    %3754 = vmatmul.bf16.gmra.mxu0 %v2288
    %v3755 = vpop.f32.mrf.mxu0
    %v3756 = vadd.f32 %v2295, %v3755
    %v3757 = vpop.f32.mrf.mxu0
    %v3758 = vadd.f32 %v2295, %v3757
    %3759 = vdwg.mxu0
    %3760 = vmatpush.bf16.msra.mxu0 %v3199
    %3761 = vmatpush.bf16.msra.mxu0 %v3191
    %3762 = vmatpush.bf16.msra.mxu0 %v3183
    %3763 = vmatpush.bf16.msra.mxu0 %v3175
    %3764 = vmatpush.bf16.msra.mxu0 %v3167
    %3765 = vmatpush.bf16.msra.mxu0 %v3159
    %3766 = vmatpush.bf16.msra.mxu0 %v3151
    %3767 = vmatpush.bf16.msra.mxu0 %v3143
    %3768 = vmatmul.bf16.gmra.mxu0 %v2285
    %v3769 = vpop.f32.mrf.mxu0
    %v3770 = vadd.f32 %v3751, %v3769
    %v3771 = vpop.f32.mrf.mxu0
    %v3772 = vadd.f32 %v3753, %v3771
    %3773 = vmatmul.bf16.gmra.mxu0 %v2289
    %v3774 = vpop.f32.mrf.mxu0
    %v3775 = vadd.f32 %v3756, %v3774
    %v3776 = vpop.f32.mrf.mxu0
    %v3777 = vadd.f32 %v3758, %v3776
    %3778 = vdwg.mxu0
    %3779 = vmatpush.bf16.msra.mxu0 %v3263
    %3780 = vmatpush.bf16.msra.mxu0 %v3255
    %3781 = vmatpush.bf16.msra.mxu0 %v3247
    %3782 = vmatpush.bf16.msra.mxu0 %v3239
    %3783 = vmatpush.bf16.msra.mxu0 %v3231
    %3784 = vmatpush.bf16.msra.mxu0 %v3223
    %3785 = vmatpush.bf16.msra.mxu0 %v3215
    %3786 = vmatpush.bf16.msra.mxu0 %v3207
    %3787 = vmatmul.bf16.gmra.mxu0 %v2286
    %v3788 = vpop.f32.mrf.mxu0
    %v3789 = vadd.f32 %v3770, %v3788
    %v3790 = vpop.f32.mrf.mxu0
    %v3791 = vadd.f32 %v3772, %v3790
    %3792 = vmatmul.bf16.gmra.mxu0 %v2290
    %v3793 = vpop.f32.mrf.mxu0
    %v3794 = vadd.f32 %v3775, %v3793
    %v3795 = vpop.f32.mrf.mxu0
    %v3796 = vadd.f32 %v3777, %v3795
    %3797 = vdwg.mxu0
    %3798 = vmatpush.bf16.msra.mxu0 %v3327
    %3799 = vmatpush.bf16.msra.mxu0 %v3319
    %3800 = vmatpush.bf16.msra.mxu0 %v3311
    %3801 = vmatpush.bf16.msra.mxu0 %v3303
    %3802 = vmatpush.bf16.msra.mxu0 %v3295
    %3803 = vmatpush.bf16.msra.mxu0 %v3287
    %3804 = vmatpush.bf16.msra.mxu0 %v3279
    %3805 = vmatpush.bf16.msra.mxu0 %v3271
    %3806 = vmatmul.bf16.gmra.mxu0 %v2287
    %v3807 = vpop.f32.mrf.mxu0
    %v3808 = vadd.f32 %v3789, %v3807
    %v3809 = vpop.f32.mrf.mxu0
    %v3810 = vadd.f32 %v3791, %v3809
    %3811 = vmatmul.bf16.gmra.mxu0 %v2291
    %v3812 = vpop.f32.mrf.mxu0
    %v3813 = vadd.f32 %v3794, %v3812
    %v3814 = vpop.f32.mrf.mxu0
    %v3815 = vadd.f32 %v3796, %v3814
    %3816 = vdwg.mxu0
    %3817 = vmatpush.bf16.msra.mxu0 %v3136
    %3818 = vmatpush.bf16.msra.mxu0 %v3128
    %3819 = vmatpush.bf16.msra.mxu0 %v3120
    %3820 = vmatpush.bf16.msra.mxu0 %v3112
    %3821 = vmatpush.bf16.msra.mxu0 %v3104
    %3822 = vmatpush.bf16.msra.mxu0 %v3096
    %3823 = vmatpush.bf16.msra.mxu0 %v3088
    %3824 = vmatpush.bf16.msra.mxu0 %v3080
    %3825 = vmatmul.bf16.gmra.mxu0 %v2284
    %v3826 = vpop.f32.mrf.mxu0
    %v3827 = vadd.f32 %v2296, %v3826
    %v3828 = vpop.f32.mrf.mxu0
    %v3829 = vadd.f32 %v2296, %v3828
    %3830 = vmatmul.bf16.gmra.mxu0 %v2288
    %v3831 = vpop.f32.mrf.mxu0
    %v3832 = vadd.f32 %v2296, %v3831
    %v3833 = vpop.f32.mrf.mxu0
    %v3834 = vadd.f32 %v2296, %v3833
    %3835 = vdwg.mxu0
    %3836 = vmatpush.bf16.msra.mxu0 %v3200
    %3837 = vmatpush.bf16.msra.mxu0 %v3192
    %3838 = vmatpush.bf16.msra.mxu0 %v3184
    %3839 = vmatpush.bf16.msra.mxu0 %v3176
    %3840 = vmatpush.bf16.msra.mxu0 %v3168
    %3841 = vmatpush.bf16.msra.mxu0 %v3160
    %3842 = vmatpush.bf16.msra.mxu0 %v3152
    %3843 = vmatpush.bf16.msra.mxu0 %v3144
    %3844 = vmatmul.bf16.gmra.mxu0 %v2285
    %v3845 = vpop.f32.mrf.mxu0
    %v3846 = vadd.f32 %v3827, %v3845
    %v3847 = vpop.f32.mrf.mxu0
    %v3848 = vadd.f32 %v3829, %v3847
    %3849 = vmatmul.bf16.gmra.mxu0 %v2289
    %v3850 = vpop.f32.mrf.mxu0
    %v3851 = vadd.f32 %v3832, %v3850
    %v3852 = vpop.f32.mrf.mxu0
    %v3853 = vadd.f32 %v3834, %v3852
    %3854 = vdwg.mxu0
    %3855 = vmatpush.bf16.msra.mxu0 %v3264
    %3856 = vmatpush.bf16.msra.mxu0 %v3256
    %3857 = vmatpush.bf16.msra.mxu0 %v3248
    %3858 = vmatpush.bf16.msra.mxu0 %v3240
    %3859 = vmatpush.bf16.msra.mxu0 %v3232
    %3860 = vmatpush.bf16.msra.mxu0 %v3224
    %3861 = vmatpush.bf16.msra.mxu0 %v3216
    %3862 = vmatpush.bf16.msra.mxu0 %v3208
    %3863 = vmatmul.bf16.gmra.mxu0 %v2286
    %v3864 = vpop.f32.mrf.mxu0
    %v3865 = vadd.f32 %v3846, %v3864
    %v3866 = vpop.f32.mrf.mxu0
    %v3867 = vadd.f32 %v3848, %v3866
    %3868 = vmatmul.bf16.gmra.mxu0 %v2290
    %v3869 = vpop.f32.mrf.mxu0
    %v3870 = vadd.f32 %v3851, %v3869
    %v3871 = vpop.f32.mrf.mxu0
    %v3872 = vadd.f32 %v3853, %v3871
    %3873 = vdwg.mxu0
    %3874 = vmatpush.bf16.msra.mxu0 %v3328
    %3875 = vmatpush.bf16.msra.mxu0 %v3320
    %3876 = vmatpush.bf16.msra.mxu0 %v3312
    %3877 = vmatpush.bf16.msra.mxu0 %v3304
    %3878 = vmatpush.bf16.msra.mxu0 %v3296
    %3879 = vmatpush.bf16.msra.mxu0 %v3288
    %3880 = vmatpush.bf16.msra.mxu0 %v3280
    %3881 = vmatpush.bf16.msra.mxu0 %v3272
    %3882 = vmatmul.bf16.gmra.mxu0 %v2287
    %v3883 = vpop.f32.mrf.mxu0
    %v3884 = vadd.f32 %v3865, %v3883
    %v3885 = vpop.f32.mrf.mxu0
    %v3886 = vadd.f32 %v3867, %v3885
    %3887 = vmatmul.bf16.gmra.mxu0 %v2291
    %v3888 = vpop.f32.mrf.mxu0
    %v3889 = vadd.f32 %v3870, %v3888
    %v3890 = vpop.f32.mrf.mxu0
    %v3891 = vadd.f32 %v3872, %v3890
    %3892 = vdwg.mxu0
    %3893 = vmatpush.bf16.msra.mxu0 %v3137
    %3894 = vmatpush.bf16.msra.mxu0 %v3129
    %3895 = vmatpush.bf16.msra.mxu0 %v3121
    %3896 = vmatpush.bf16.msra.mxu0 %v3113
    %3897 = vmatpush.bf16.msra.mxu0 %v3105
    %3898 = vmatpush.bf16.msra.mxu0 %v3097
    %3899 = vmatpush.bf16.msra.mxu0 %v3089
    %3900 = vmatpush.bf16.msra.mxu0 %v3081
    %3901 = vmatmul.bf16.gmra.mxu0 %v2284
    %v3902 = vpop.f32.mrf.mxu0
    %v3903 = vadd.f32 %v2297, %v3902
    %v3904 = vpop.f32.mrf.mxu0
    %v3905 = vadd.f32 %v2297, %v3904
    %3906 = vmatmul.bf16.gmra.mxu0 %v2288
    %v3907 = vpop.f32.mrf.mxu0
    %v3908 = vadd.f32 %v2297, %v3907
    %v3909 = vpop.f32.mrf.mxu0
    %v3910 = vadd.f32 %v2297, %v3909
    %3911 = vdwg.mxu0
    %3912 = vmatpush.bf16.msra.mxu0 %v3201
    %3913 = vmatpush.bf16.msra.mxu0 %v3193
    %3914 = vmatpush.bf16.msra.mxu0 %v3185
    %3915 = vmatpush.bf16.msra.mxu0 %v3177
    %3916 = vmatpush.bf16.msra.mxu0 %v3169
    %3917 = vmatpush.bf16.msra.mxu0 %v3161
    %3918 = vmatpush.bf16.msra.mxu0 %v3153
    %3919 = vmatpush.bf16.msra.mxu0 %v3145
    %3920 = vmatmul.bf16.gmra.mxu0 %v2285
    %v3921 = vpop.f32.mrf.mxu0
    %v3922 = vadd.f32 %v3903, %v3921
    %v3923 = vpop.f32.mrf.mxu0
    %v3924 = vadd.f32 %v3905, %v3923
    %3925 = vmatmul.bf16.gmra.mxu0 %v2289
    %v3926 = vpop.f32.mrf.mxu0
    %v3927 = vadd.f32 %v3908, %v3926
    %v3928 = vpop.f32.mrf.mxu0
    %v3929 = vadd.f32 %v3910, %v3928
    %3930 = vdwg.mxu0
    %3931 = vmatpush.bf16.msra.mxu0 %v3265
    %3932 = vmatpush.bf16.msra.mxu0 %v3257
    %3933 = vmatpush.bf16.msra.mxu0 %v3249
    %3934 = vmatpush.bf16.msra.mxu0 %v3241
    %3935 = vmatpush.bf16.msra.mxu0 %v3233
    %3936 = vmatpush.bf16.msra.mxu0 %v3225
    %3937 = vmatpush.bf16.msra.mxu0 %v3217
    %3938 = vmatpush.bf16.msra.mxu0 %v3209
    %3939 = vmatmul.bf16.gmra.mxu0 %v2286
    %v3940 = vpop.f32.mrf.mxu0
    %v3941 = vadd.f32 %v3922, %v3940
    %v3942 = vpop.f32.mrf.mxu0
    %v3943 = vadd.f32 %v3924, %v3942
    %3944 = vmatmul.bf16.gmra.mxu0 %v2290
    %v3945 = vpop.f32.mrf.mxu0
    %v3946 = vadd.f32 %v3927, %v3945
    %v3947 = vpop.f32.mrf.mxu0
    %v3948 = vadd.f32 %v3929, %v3947
    %3949 = vdwg.mxu0
    %3950 = vmatpush.bf16.msra.mxu0 %v3329
    %3951 = vmatpush.bf16.msra.mxu0 %v3321
    %3952 = vmatpush.bf16.msra.mxu0 %v3313
    %3953 = vmatpush.bf16.msra.mxu0 %v3305
    %3954 = vmatpush.bf16.msra.mxu0 %v3297
    %3955 = vmatpush.bf16.msra.mxu0 %v3289
    %3956 = vmatpush.bf16.msra.mxu0 %v3281
    %3957 = vmatpush.bf16.msra.mxu0 %v3273
    %3958 = vmatmul.bf16.gmra.mxu0 %v2287
    %v3959 = vpop.f32.mrf.mxu0
    %v3960 = vadd.f32 %v3941, %v3959
    %v3961 = vpop.f32.mrf.mxu0
    %v3962 = vadd.f32 %v3943, %v3961
    %3963 = vmatmul.bf16.gmra.mxu0 %v2291
    %v3964 = vpop.f32.mrf.mxu0
    %v3965 = vadd.f32 %v3946, %v3964
    %v3966 = vpop.f32.mrf.mxu0
    %v3967 = vadd.f32 %v3948, %v3966
    %3968 = vdwg.mxu0
    %3969 = vmatpush.bf16.msra.mxu0 %v3138
    %3970 = vmatpush.bf16.msra.mxu0 %v3130
    %3971 = vmatpush.bf16.msra.mxu0 %v3122
    %3972 = vmatpush.bf16.msra.mxu0 %v3114
    %3973 = vmatpush.bf16.msra.mxu0 %v3106
    %3974 = vmatpush.bf16.msra.mxu0 %v3098
    %3975 = vmatpush.bf16.msra.mxu0 %v3090
    %3976 = vmatpush.bf16.msra.mxu0 %v3082
    %3977 = vmatmul.bf16.gmra.mxu0 %v2284
    %v3978 = vpop.f32.mrf.mxu0
    %v3979 = vadd.f32 %v2298, %v3978
    %v3980 = vpop.f32.mrf.mxu0
    %v3981 = vadd.f32 %v2298, %v3980
    %3982 = vmatmul.bf16.gmra.mxu0 %v2288
    %v3983 = vpop.f32.mrf.mxu0
    %v3984 = vadd.f32 %v2298, %v3983
    %v3985 = vpop.f32.mrf.mxu0
    %v3986 = vadd.f32 %v2298, %v3985
    %3987 = vdwg.mxu0
    %3988 = vmatpush.bf16.msra.mxu0 %v3202
    %3989 = vmatpush.bf16.msra.mxu0 %v3194
    %3990 = vmatpush.bf16.msra.mxu0 %v3186
    %3991 = vmatpush.bf16.msra.mxu0 %v3178
    %3992 = vmatpush.bf16.msra.mxu0 %v3170
    %3993 = vmatpush.bf16.msra.mxu0 %v3162
    %3994 = vmatpush.bf16.msra.mxu0 %v3154
    %3995 = vmatpush.bf16.msra.mxu0 %v3146
    %3996 = vmatmul.bf16.gmra.mxu0 %v2285
    %v3997 = vpop.f32.mrf.mxu0
    %v3998 = vadd.f32 %v3979, %v3997
    %v3999 = vpop.f32.mrf.mxu0
    %v4000 = vadd.f32 %v3981, %v3999
    %4001 = vmatmul.bf16.gmra.mxu0 %v2289
    %v4002 = vpop.f32.mrf.mxu0
    %v4003 = vadd.f32 %v3984, %v4002
    %v4004 = vpop.f32.mrf.mxu0
    %v4005 = vadd.f32 %v3986, %v4004
    %4006 = vdwg.mxu0
    %4007 = vmatpush.bf16.msra.mxu0 %v3266
    %4008 = vmatpush.bf16.msra.mxu0 %v3258
    %4009 = vmatpush.bf16.msra.mxu0 %v3250
    %4010 = vmatpush.bf16.msra.mxu0 %v3242
    %4011 = vmatpush.bf16.msra.mxu0 %v3234
    %4012 = vmatpush.bf16.msra.mxu0 %v3226
    %4013 = vmatpush.bf16.msra.mxu0 %v3218
    %4014 = vmatpush.bf16.msra.mxu0 %v3210
    %4015 = vmatmul.bf16.gmra.mxu0 %v2286
    %v4016 = vpop.f32.mrf.mxu0
    %v4017 = vadd.f32 %v3998, %v4016
    %v4018 = vpop.f32.mrf.mxu0
    %v4019 = vadd.f32 %v4000, %v4018
    %4020 = vmatmul.bf16.gmra.mxu0 %v2290
    %v4021 = vpop.f32.mrf.mxu0
    %v4022 = vadd.f32 %v4003, %v4021
    %v4023 = vpop.f32.mrf.mxu0
    %v4024 = vadd.f32 %v4005, %v4023
    %4025 = vdwg.mxu0
    %4026 = vmatpush.bf16.msra.mxu0 %v3330
    %4027 = vmatpush.bf16.msra.mxu0 %v3322
    %4028 = vmatpush.bf16.msra.mxu0 %v3314
    %4029 = vmatpush.bf16.msra.mxu0 %v3306
    %4030 = vmatpush.bf16.msra.mxu0 %v3298
    %4031 = vmatpush.bf16.msra.mxu0 %v3290
    %4032 = vmatpush.bf16.msra.mxu0 %v3282
    %4033 = vmatpush.bf16.msra.mxu0 %v3274
    %4034 = vmatmul.bf16.gmra.mxu0 %v2287
    %v4035 = vpop.f32.mrf.mxu0
    %v4036 = vadd.f32 %v4017, %v4035
    %v4037 = vpop.f32.mrf.mxu0
    %v4038 = vadd.f32 %v4019, %v4037
    %4039 = vmatmul.bf16.gmra.mxu0 %v2291
    %v4040 = vpop.f32.mrf.mxu0
    %v4041 = vadd.f32 %v4022, %v4040
    %v4042 = vpop.f32.mrf.mxu0
    %v4043 = vadd.f32 %v4024, %v4042
    %4044 = vdwg.mxu0
    %4045 = vmatpush.bf16.msra.mxu0 %v3139
    %4046 = vmatpush.bf16.msra.mxu0 %v3131
    %4047 = vmatpush.bf16.msra.mxu0 %v3123
    %4048 = vmatpush.bf16.msra.mxu0 %v3115
    %4049 = vmatpush.bf16.msra.mxu0 %v3107
    %4050 = vmatpush.bf16.msra.mxu0 %v3099
    %4051 = vmatpush.bf16.msra.mxu0 %v3091
    %4052 = vmatpush.bf16.msra.mxu0 %v3083
    %4053 = vmatmul.bf16.gmra.mxu0 %v2284
    %v4054 = vpop.f32.mrf.mxu0
    %v4055 = vadd.f32 %v2299, %v4054
    %v4056 = vpop.f32.mrf.mxu0
    %v4057 = vadd.f32 %v2299, %v4056
    %4058 = vmatmul.bf16.gmra.mxu0 %v2288
    %v4059 = vpop.f32.mrf.mxu0
    %v4060 = vadd.f32 %v2299, %v4059
    %v4061 = vpop.f32.mrf.mxu0
    %v4062 = vadd.f32 %v2299, %v4061
    %4063 = vdwg.mxu0
    %4064 = vmatpush.bf16.msra.mxu0 %v3203
    %4065 = vmatpush.bf16.msra.mxu0 %v3195
    %4066 = vmatpush.bf16.msra.mxu0 %v3187
    %4067 = vmatpush.bf16.msra.mxu0 %v3179
    %4068 = vmatpush.bf16.msra.mxu0 %v3171
    %4069 = vmatpush.bf16.msra.mxu0 %v3163
    %4070 = vmatpush.bf16.msra.mxu0 %v3155
    %4071 = vmatpush.bf16.msra.mxu0 %v3147
    %4072 = vmatmul.bf16.gmra.mxu0 %v2285
    %v4073 = vpop.f32.mrf.mxu0
    %v4074 = vadd.f32 %v4055, %v4073
    %v4075 = vpop.f32.mrf.mxu0
    %v4076 = vadd.f32 %v4057, %v4075
    %4077 = vmatmul.bf16.gmra.mxu0 %v2289
    %v4078 = vpop.f32.mrf.mxu0
    %v4079 = vadd.f32 %v4060, %v4078
    %v4080 = vpop.f32.mrf.mxu0
    %v4081 = vadd.f32 %v4062, %v4080
    %4082 = vdwg.mxu0
    %4083 = vmatpush.bf16.msra.mxu0 %v3267
    %4084 = vmatpush.bf16.msra.mxu0 %v3259
    %4085 = vmatpush.bf16.msra.mxu0 %v3251
    %4086 = vmatpush.bf16.msra.mxu0 %v3243
    %4087 = vmatpush.bf16.msra.mxu0 %v3235
    %4088 = vmatpush.bf16.msra.mxu0 %v3227
    %4089 = vmatpush.bf16.msra.mxu0 %v3219
    %4090 = vmatpush.bf16.msra.mxu0 %v3211
    %4091 = vmatmul.bf16.gmra.mxu0 %v2286
    %v4092 = vpop.f32.mrf.mxu0
    %v4093 = vadd.f32 %v4074, %v4092
    %v4094 = vpop.f32.mrf.mxu0
    %v4095 = vadd.f32 %v4076, %v4094
    %4096 = vmatmul.bf16.gmra.mxu0 %v2290
    %v4097 = vpop.f32.mrf.mxu0
    %v4098 = vadd.f32 %v4079, %v4097
    %v4099 = vpop.f32.mrf.mxu0
    %v4100 = vadd.f32 %v4081, %v4099
    %4101 = vdwg.mxu0
    %4102 = vmatpush.bf16.msra.mxu0 %v3331
    %4103 = vmatpush.bf16.msra.mxu0 %v3323
    %4104 = vmatpush.bf16.msra.mxu0 %v3315
    %4105 = vmatpush.bf16.msra.mxu0 %v3307
    %4106 = vmatpush.bf16.msra.mxu0 %v3299
    %4107 = vmatpush.bf16.msra.mxu0 %v3291
    %4108 = vmatpush.bf16.msra.mxu0 %v3283
    %4109 = vmatpush.bf16.msra.mxu0 %v3275
    %4110 = vmatmul.bf16.gmra.mxu0 %v2287
    %v4111 = vpop.f32.mrf.mxu0
    %v4112 = vadd.f32 %v4093, %v4111
    %v4113 = vpop.f32.mrf.mxu0
    %v4114 = vadd.f32 %v4095, %v4113
    %4115 = vmatmul.bf16.gmra.mxu0 %v2291
    %v4116 = vpop.f32.mrf.mxu0
    %v4117 = vadd.f32 %v4098, %v4116
    %v4118 = vpop.f32.mrf.mxu0
    %v4119 = vadd.f32 %v4100, %v4118
    %4120 = vdwg.mxu0
    %4121 = vmatpush.bf16.msra.mxu0 %v3140
    %4122 = vmatpush.bf16.msra.mxu0 %v3132
    %4123 = vmatpush.bf16.msra.mxu0 %v3124
    %4124 = vmatpush.bf16.msra.mxu0 %v3116
    %4125 = vmatpush.bf16.msra.mxu0 %v3108
    %4126 = vmatpush.bf16.msra.mxu0 %v3100
    %4127 = vmatpush.bf16.msra.mxu0 %v3092
    %4128 = vmatpush.bf16.msra.mxu0 %v3084
    %4129 = vmatmul.bf16.gmra.mxu0 %v2284
    %v4130 = vpop.f32.mrf.mxu0
    %v4131 = vadd.f32 %v2300, %v4130
    %v4132 = vpop.f32.mrf.mxu0
    %v4133 = vadd.f32 %v2300, %v4132
    %4134 = vmatmul.bf16.gmra.mxu0 %v2288
    %v4135 = vpop.f32.mrf.mxu0
    %v4136 = vadd.f32 %v2300, %v4135
    %v4137 = vpop.f32.mrf.mxu0
    %v4138 = vadd.f32 %v2300, %v4137
    %4139 = vdwg.mxu0
    %4140 = vmatpush.bf16.msra.mxu0 %v3204
    %4141 = vmatpush.bf16.msra.mxu0 %v3196
    %4142 = vmatpush.bf16.msra.mxu0 %v3188
    %4143 = vmatpush.bf16.msra.mxu0 %v3180
    %4144 = vmatpush.bf16.msra.mxu0 %v3172
    %4145 = vmatpush.bf16.msra.mxu0 %v3164
    %4146 = vmatpush.bf16.msra.mxu0 %v3156
    %4147 = vmatpush.bf16.msra.mxu0 %v3148
    %4148 = vmatmul.bf16.gmra.mxu0 %v2285
    %v4149 = vpop.f32.mrf.mxu0
    %v4150 = vadd.f32 %v4131, %v4149
    %v4151 = vpop.f32.mrf.mxu0
    %v4152 = vadd.f32 %v4133, %v4151
    %4153 = vmatmul.bf16.gmra.mxu0 %v2289
    %v4154 = vpop.f32.mrf.mxu0
    %v4155 = vadd.f32 %v4136, %v4154
    %v4156 = vpop.f32.mrf.mxu0
    %v4157 = vadd.f32 %v4138, %v4156
    %4158 = vdwg.mxu0
    %4159 = vmatpush.bf16.msra.mxu0 %v3268
    %4160 = vmatpush.bf16.msra.mxu0 %v3260
    %4161 = vmatpush.bf16.msra.mxu0 %v3252
    %4162 = vmatpush.bf16.msra.mxu0 %v3244
    %4163 = vmatpush.bf16.msra.mxu0 %v3236
    %4164 = vmatpush.bf16.msra.mxu0 %v3228
    %4165 = vmatpush.bf16.msra.mxu0 %v3220
    %4166 = vmatpush.bf16.msra.mxu0 %v3212
    %4167 = vmatmul.bf16.gmra.mxu0 %v2286
    %v4168 = vpop.f32.mrf.mxu0
    %v4169 = vadd.f32 %v4150, %v4168
    %v4170 = vpop.f32.mrf.mxu0
    %v4171 = vadd.f32 %v4152, %v4170
    %4172 = vmatmul.bf16.gmra.mxu0 %v2290
    %v4173 = vpop.f32.mrf.mxu0
    %v4174 = vadd.f32 %v4155, %v4173
    %v4175 = vpop.f32.mrf.mxu0
    %v4176 = vadd.f32 %v4157, %v4175
    %4177 = vdwg.mxu0
    %4178 = vmatpush.bf16.msra.mxu0 %v3332
    %4179 = vmatpush.bf16.msra.mxu0 %v3324
    %4180 = vmatpush.bf16.msra.mxu0 %v3316
    %4181 = vmatpush.bf16.msra.mxu0 %v3308
    %4182 = vmatpush.bf16.msra.mxu0 %v3300
    %4183 = vmatpush.bf16.msra.mxu0 %v3292
    %4184 = vmatpush.bf16.msra.mxu0 %v3284
    %4185 = vmatpush.bf16.msra.mxu0 %v3276
    %4186 = vmatmul.bf16.gmra.mxu0 %v2287
    %v4187 = vpop.f32.mrf.mxu0
    %v4188 = vadd.f32 %v4169, %v4187
    %v4189 = vpop.f32.mrf.mxu0
    %v4190 = vadd.f32 %v4171, %v4189
    %4191 = vmatmul.bf16.gmra.mxu0 %v2291
    %v4192 = vpop.f32.mrf.mxu0
    %v4193 = vadd.f32 %v4174, %v4192
    %v4194 = vpop.f32.mrf.mxu0
    %v4195 = vadd.f32 %v4176, %v4194
    %4196 = vdwg.mxu0
    %v4197 = vld [vmem:[#allocation8 + $0x40] sm:$0x30]
    %v4198 = vld [vmem:[#allocation8 + $0x48] sm:$0x30]
    %v4199 = vld [vmem:[#allocation8 + $0x50] sm:$0x30]
    %v4200 = vld [vmem:[#allocation8 + $0x58] sm:$0x30]
    %v4201 = vld [vmem:[#allocation8 + $0x60] sm:$0x30]
    %v4202 = vld [vmem:[#allocation8 + $0x68] sm:$0x30]
    %v4203 = vld [vmem:[#allocation8 + $0x70] sm:$0x30]
    %v4204 = vld [vmem:[#allocation8 + $0x78] sm:$0x30]
    %v4213 = vrot.slane %v4197, 4
    %v4214 = vrot.slane %v4198, 4
    %v4215 = vrot.slane %v4199, 4
    %v4216 = vrot.slane %v4200, 4
    %v4217 = vrot.slane %v4201, 4
    %v4218 = vrot.slane %v4202, 4
    %v4219 = vrot.slane %v4203, 4
    %v4220 = vrot.slane %v4204, 4
    %4229 = vmatpush.xpose.msra.mxu0 0.0
    %4230 = vmatpush.xpose.msra.mxu0 0.0
    %4231 = vmatpush.xpose.msra.mxu0 0.0
    %4232 = vmatpush.xpose.msra.mxu0 0.0
    %4233 = vmatpush.xpose.msra.mxu0 0.0
    %4234 = vmatpush.xpose.msra.mxu0 0.0
    %4235 = vmatpush.xpose.msra.mxu0 0.0
    %4236 = vmatpush.xpose.msra.mxu0 0.0
    %4237 = vmatpush.xpose.msra.mxu0 0.0
    %4238 = vmatpush.xpose.msra.mxu0 0.0
    %4239 = vmatpush.xpose.msra.mxu0 0.0
    %4240 = vmatpush.xpose.msra.mxu0 0.0
    %4241 = vmatpush.xpose.msra.mxu0 0.0
    %4242 = vmatpush.xpose.msra.mxu0 0.0
    %4243 = vmatpush.xpose.msra.mxu0 0.0
    %4244 = vmatpush.xpose.msra.mxu0 %v4213
    %4245 = vmatmul.f32.gmra.mxu0 %v3656
    %v4246 = vpop.f32.mrf.mxu0
    %v4247 = vadd.f32 0.0, %v4246
    %4248 = vmatmul.f32.gmra.mxu0 %v3658
    %v4249 = vpop.f32.mrf.mxu0
    %v4250 = vadd.f32 0.0, %v4249
    %4251 = vmatmul.f32.gmra.mxu0 %v3661
    %v4252 = vpop.f32.mrf.mxu0
    %v4253 = vadd.f32 0.0, %v4252
    %4254 = vmatmul.f32.gmra.mxu0 %v3663
    %v4255 = vpop.f32.mrf.mxu0
    %v4256 = vadd.f32 0.0, %v4255
    %4257 = vdwg.mxu0
    %4258 = vmatpush.xpose.msra.mxu0 0.0
    %4259 = vmatpush.xpose.msra.mxu0 0.0
    %4260 = vmatpush.xpose.msra.mxu0 0.0
    %4261 = vmatpush.xpose.msra.mxu0 0.0
    %4262 = vmatpush.xpose.msra.mxu0 0.0
    %4263 = vmatpush.xpose.msra.mxu0 0.0
    %4264 = vmatpush.xpose.msra.mxu0 0.0
    %4265 = vmatpush.xpose.msra.mxu0 0.0
    %4266 = vmatpush.xpose.msra.mxu0 0.0
    %4267 = vmatpush.xpose.msra.mxu0 0.0
    %4268 = vmatpush.xpose.msra.mxu0 0.0
    %4269 = vmatpush.xpose.msra.mxu0 0.0
    %4270 = vmatpush.xpose.msra.mxu0 0.0
    %4271 = vmatpush.xpose.msra.mxu0 0.0
    %4272 = vmatpush.xpose.msra.mxu0 0.0
    %4273 = vmatpush.xpose.msra.mxu0 %v4214
    %4274 = vmatmul.f32.gmra.mxu0 %v3732
    %v4275 = vpop.f32.mrf.mxu0
    %v4276 = vadd.f32 %v4247, %v4275
    %4277 = vmatmul.f32.gmra.mxu0 %v3734
    %v4278 = vpop.f32.mrf.mxu0
    %v4279 = vadd.f32 %v4250, %v4278
    %4280 = vmatmul.f32.gmra.mxu0 %v3737
    %v4281 = vpop.f32.mrf.mxu0
    %v4282 = vadd.f32 %v4253, %v4281
    %4283 = vmatmul.f32.gmra.mxu0 %v3739
    %v4284 = vpop.f32.mrf.mxu0
    %v4285 = vadd.f32 %v4256, %v4284
    %4286 = vdwg.mxu0
    %4287 = vmatpush.xpose.msra.mxu0 0.0
    %4288 = vmatpush.xpose.msra.mxu0 0.0
    %4289 = vmatpush.xpose.msra.mxu0 0.0
    %4290 = vmatpush.xpose.msra.mxu0 0.0
    %4291 = vmatpush.xpose.msra.mxu0 0.0
    %4292 = vmatpush.xpose.msra.mxu0 0.0
    %4293 = vmatpush.xpose.msra.mxu0 0.0
    %4294 = vmatpush.xpose.msra.mxu0 0.0
    %4295 = vmatpush.xpose.msra.mxu0 0.0
    %4296 = vmatpush.xpose.msra.mxu0 0.0
    %4297 = vmatpush.xpose.msra.mxu0 0.0
    %4298 = vmatpush.xpose.msra.mxu0 0.0
    %4299 = vmatpush.xpose.msra.mxu0 0.0
    %4300 = vmatpush.xpose.msra.mxu0 0.0
    %4301 = vmatpush.xpose.msra.mxu0 0.0
    %4302 = vmatpush.xpose.msra.mxu0 %v4215
    %4303 = vmatmul.f32.gmra.mxu0 %v3808
    %v4304 = vpop.f32.mrf.mxu0
    %v4305 = vadd.f32 %v4276, %v4304
    %4306 = vmatmul.f32.gmra.mxu0 %v3810
    %v4307 = vpop.f32.mrf.mxu0
    %v4308 = vadd.f32 %v4279, %v4307
    %4309 = vmatmul.f32.gmra.mxu0 %v3813
    %v4310 = vpop.f32.mrf.mxu0
    %v4311 = vadd.f32 %v4282, %v4310
    %4312 = vmatmul.f32.gmra.mxu0 %v3815
    %v4313 = vpop.f32.mrf.mxu0
    %v4314 = vadd.f32 %v4285, %v4313
    %4315 = vdwg.mxu0
    %4316 = vmatpush.xpose.msra.mxu0 0.0
    %4317 = vmatpush.xpose.msra.mxu0 0.0
    %4318 = vmatpush.xpose.msra.mxu0 0.0
    %4319 = vmatpush.xpose.msra.mxu0 0.0
    %4320 = vmatpush.xpose.msra.mxu0 0.0
    %4321 = vmatpush.xpose.msra.mxu0 0.0
    %4322 = vmatpush.xpose.msra.mxu0 0.0
    %4323 = vmatpush.xpose.msra.mxu0 0.0
    %4324 = vmatpush.xpose.msra.mxu0 0.0
    %4325 = vmatpush.xpose.msra.mxu0 0.0
    %4326 = vmatpush.xpose.msra.mxu0 0.0
    %4327 = vmatpush.xpose.msra.mxu0 0.0
    %4328 = vmatpush.xpose.msra.mxu0 0.0
    %4329 = vmatpush.xpose.msra.mxu0 0.0
    %4330 = vmatpush.xpose.msra.mxu0 0.0
    %4331 = vmatpush.xpose.msra.mxu0 %v4216
    %4332 = vmatmul.f32.gmra.mxu0 %v3884
    %v4333 = vpop.f32.mrf.mxu0
    %v4334 = vadd.f32 %v4305, %v4333
    %4335 = vmatmul.f32.gmra.mxu0 %v3886
    %v4336 = vpop.f32.mrf.mxu0
    %v4337 = vadd.f32 %v4308, %v4336
    %4338 = vmatmul.f32.gmra.mxu0 %v3889
    %v4339 = vpop.f32.mrf.mxu0
    %v4340 = vadd.f32 %v4311, %v4339
    %4341 = vmatmul.f32.gmra.mxu0 %v3891
    %v4342 = vpop.f32.mrf.mxu0
    %v4343 = vadd.f32 %v4314, %v4342
    %4344 = vdwg.mxu0
    %4345 = vmatpush.xpose.msra.mxu0 0.0
    %4346 = vmatpush.xpose.msra.mxu0 0.0
    %4347 = vmatpush.xpose.msra.mxu0 0.0
    %4348 = vmatpush.xpose.msra.mxu0 0.0
    %4349 = vmatpush.xpose.msra.mxu0 0.0
    %4350 = vmatpush.xpose.msra.mxu0 0.0
    %4351 = vmatpush.xpose.msra.mxu0 0.0
    %4352 = vmatpush.xpose.msra.mxu0 0.0
    %4353 = vmatpush.xpose.msra.mxu0 0.0
    %4354 = vmatpush.xpose.msra.mxu0 0.0
    %4355 = vmatpush.xpose.msra.mxu0 0.0
    %4356 = vmatpush.xpose.msra.mxu0 0.0
    %4357 = vmatpush.xpose.msra.mxu0 0.0
    %4358 = vmatpush.xpose.msra.mxu0 0.0
    %4359 = vmatpush.xpose.msra.mxu0 0.0
    %4360 = vmatpush.xpose.msra.mxu0 %v4217
    %4361 = vmatmul.f32.gmra.mxu0 %v3960
    %v4362 = vpop.f32.mrf.mxu0
    %v4363 = vadd.f32 %v4334, %v4362
    %4364 = vmatmul.f32.gmra.mxu0 %v3962
    %v4365 = vpop.f32.mrf.mxu0
    %v4366 = vadd.f32 %v4337, %v4365
    %4367 = vmatmul.f32.gmra.mxu0 %v3965
    %v4368 = vpop.f32.mrf.mxu0
    %v4369 = vadd.f32 %v4340, %v4368
    %4370 = vmatmul.f32.gmra.mxu0 %v3967
    %v4371 = vpop.f32.mrf.mxu0
    %v4372 = vadd.f32 %v4343, %v4371
    %4373 = vdwg.mxu0
    %4374 = vmatpush.xpose.msra.mxu0 0.0
    %4375 = vmatpush.xpose.msra.mxu0 0.0
    %4376 = vmatpush.xpose.msra.mxu0 0.0
    %4377 = vmatpush.xpose.msra.mxu0 0.0
    %4378 = vmatpush.xpose.msra.mxu0 0.0
    %4379 = vmatpush.xpose.msra.mxu0 0.0
    %4380 = vmatpush.xpose.msra.mxu0 0.0
    %4381 = vmatpush.xpose.msra.mxu0 0.0
    %4382 = vmatpush.xpose.msra.mxu0 0.0
    %4383 = vmatpush.xpose.msra.mxu0 0.0
    %4384 = vmatpush.xpose.msra.mxu0 0.0
    %4385 = vmatpush.xpose.msra.mxu0 0.0
    %4386 = vmatpush.xpose.msra.mxu0 0.0
    %4387 = vmatpush.xpose.msra.mxu0 0.0
    %4388 = vmatpush.xpose.msra.mxu0 0.0
    %4389 = vmatpush.xpose.msra.mxu0 %v4218
    %4390 = vmatmul.f32.gmra.mxu0 %v4036
    %v4391 = vpop.f32.mrf.mxu0
    %v4392 = vadd.f32 %v4363, %v4391
    %4393 = vmatmul.f32.gmra.mxu0 %v4038
    %v4394 = vpop.f32.mrf.mxu0
    %v4395 = vadd.f32 %v4366, %v4394
    %4396 = vmatmul.f32.gmra.mxu0 %v4041
    %v4397 = vpop.f32.mrf.mxu0
    %v4398 = vadd.f32 %v4369, %v4397
    %4399 = vmatmul.f32.gmra.mxu0 %v4043
    %v4400 = vpop.f32.mrf.mxu0
    %v4401 = vadd.f32 %v4372, %v4400
    %4402 = vdwg.mxu0
    %4403 = vmatpush.xpose.msra.mxu0 0.0
    %4404 = vmatpush.xpose.msra.mxu0 0.0
    %4405 = vmatpush.xpose.msra.mxu0 0.0
    %4406 = vmatpush.xpose.msra.mxu0 0.0
    %4407 = vmatpush.xpose.msra.mxu0 0.0
    %4408 = vmatpush.xpose.msra.mxu0 0.0
    %4409 = vmatpush.xpose.msra.mxu0 0.0
    %4410 = vmatpush.xpose.msra.mxu0 0.0
    %4411 = vmatpush.xpose.msra.mxu0 0.0
    %4412 = vmatpush.xpose.msra.mxu0 0.0
    %4413 = vmatpush.xpose.msra.mxu0 0.0
    %4414 = vmatpush.xpose.msra.mxu0 0.0
    %4415 = vmatpush.xpose.msra.mxu0 0.0
    %4416 = vmatpush.xpose.msra.mxu0 0.0
    %4417 = vmatpush.xpose.msra.mxu0 0.0
    %4418 = vmatpush.xpose.msra.mxu0 %v4219
    %4419 = vmatmul.f32.gmra.mxu0 %v4112
    %v4420 = vpop.f32.mrf.mxu0
    %v4421 = vadd.f32 %v4392, %v4420
    %4422 = vmatmul.f32.gmra.mxu0 %v4114
    %v4423 = vpop.f32.mrf.mxu0
    %v4424 = vadd.f32 %v4395, %v4423
    %4425 = vmatmul.f32.gmra.mxu0 %v4117
    %v4426 = vpop.f32.mrf.mxu0
    %v4427 = vadd.f32 %v4398, %v4426
    %4428 = vmatmul.f32.gmra.mxu0 %v4119
    %v4429 = vpop.f32.mrf.mxu0
    %v4430 = vadd.f32 %v4401, %v4429
    %4431 = vdwg.mxu0
    %4432 = vmatpush.xpose.msra.mxu0 0.0
    %4433 = vmatpush.xpose.msra.mxu0 0.0
    %4434 = vmatpush.xpose.msra.mxu0 0.0
    %4435 = vmatpush.xpose.msra.mxu0 0.0
    %4436 = vmatpush.xpose.msra.mxu0 0.0
    %4437 = vmatpush.xpose.msra.mxu0 0.0
    %4438 = vmatpush.xpose.msra.mxu0 0.0
    %4439 = vmatpush.xpose.msra.mxu0 0.0
    %4440 = vmatpush.xpose.msra.mxu0 0.0
    %4441 = vmatpush.xpose.msra.mxu0 0.0
    %4442 = vmatpush.xpose.msra.mxu0 0.0
    %4443 = vmatpush.xpose.msra.mxu0 0.0
    %4444 = vmatpush.xpose.msra.mxu0 0.0
    %4445 = vmatpush.xpose.msra.mxu0 0.0
    %4446 = vmatpush.xpose.msra.mxu0 0.0
    %4447 = vmatpush.xpose.msra.mxu0 %v4220
    %4448 = vmatmul.f32.gmra.mxu0 %v4188
    %v4449 = vpop.f32.mrf.mxu0
    %v4450 = vadd.f32 %v4421, %v4449
    %4451 = vmatmul.f32.gmra.mxu0 %v4190
    %v4452 = vpop.f32.mrf.mxu0
    %v4453 = vadd.f32 %v4424, %v4452
    %4454 = vmatmul.f32.gmra.mxu0 %v4193
    %v4455 = vpop.f32.mrf.mxu0
    %v4456 = vadd.f32 %v4427, %v4455
    %4457 = vmatmul.f32.gmra.mxu0 %v4195
    %v4458 = vpop.f32.mrf.mxu0
    %v4459 = vadd.f32 %v4430, %v4458
    %4460 = vdwg.mxu0
    %v4461 = vmul.f32 %v4450, 0.001953125
    %v4462 = vmul.f32 %v4453, 0.001953125
    %v4463 = vmul.f32 %v4456, 0.001953125
    %v4464 = vmul.f32 %v4459, 0.001953125
    %vm4465 = vcmask 15360
    %v4467 = vsel %vm4465, %v4461, 0
    %v4470 = vsel %vm4465, %v4462, 0
    %v4473 = vsel %vm4465, %v4463, 0
    %v4476 = vsel %vm4465, %v4464, 0
    %v4478 = vsel %vm197, %v4213, 0
    %v4480 = vsel %vm197, %v4214, 0
    %v4482 = vsel %vm197, %v4215, 0
    %v4484 = vsel %vm197, %v4216, 0
    %v4486 = vsel %vm197, %v4217, 0
    %v4488 = vsel %vm197, %v4218, 0
    %v4490 = vsel %vm197, %v4219, 0
    %v4492 = vsel %vm197, %v4220, 0
    %4494 = vmatpush.msra.mxu0 0.0
    %4495 = vmatpush.msra.mxu0 0.0
    %4496 = vmatpush.msra.mxu0 0.0
    %4497 = vmatpush.msra.mxu0 0.0
    %4498 = vmatpush.msra.mxu0 0.0
    %4499 = vmatpush.msra.mxu0 0.0
    %4500 = vmatpush.msra.mxu0 0.0
    %4501 = vmatpush.msra.mxu0 0.0
    %4502 = vmatpush.msra.mxu0 0.0
    %4503 = vmatpush.msra.mxu0 0.0
    %4504 = vmatpush.msra.mxu0 0.0
    %4505 = vmatpush.msra.mxu0 0.0
    %4506 = vmatpush.msra.mxu0 0.0
    %4507 = vmatpush.msra.mxu0 0.0
    %4508 = vmatpush.msra.mxu0 0.0
    %4509 = vmatpush.msra.mxu0 %v4478
    %4510 = vmatmul.f32.gmra.mxu0 %v4467
    %v4511 = vpop.f32.mrf.mxu0
    %v4512 = vadd.f32 0.0, %v4511
    %4513 = vmatmul.f32.gmra.mxu0 %v4470
    %v4514 = vpop.f32.mrf.mxu0
    %v4515 = vadd.f32 0.0, %v4514
    %4516 = vmatmul.f32.gmra.mxu0 %v4473
    %v4517 = vpop.f32.mrf.mxu0
    %v4518 = vadd.f32 0.0, %v4517
    %4519 = vmatmul.f32.gmra.mxu0 %v4476
    %v4520 = vpop.f32.mrf.mxu0
    %v4521 = vadd.f32 0.0, %v4520
    %4522 = vdwg.mxu0
    %4523 = vmatpush.msra.mxu0 0.0
    %4524 = vmatpush.msra.mxu0 0.0
    %4525 = vmatpush.msra.mxu0 0.0
    %4526 = vmatpush.msra.mxu0 0.0
    %4527 = vmatpush.msra.mxu0 0.0
    %4528 = vmatpush.msra.mxu0 0.0
    %4529 = vmatpush.msra.mxu0 0.0
    %4530 = vmatpush.msra.mxu0 0.0
    %4531 = vmatpush.msra.mxu0 0.0
    %4532 = vmatpush.msra.mxu0 0.0
    %4533 = vmatpush.msra.mxu0 0.0
    %4534 = vmatpush.msra.mxu0 0.0
    %4535 = vmatpush.msra.mxu0 0.0
    %4536 = vmatpush.msra.mxu0 0.0
    %4537 = vmatpush.msra.mxu0 0.0
    %4538 = vmatpush.msra.mxu0 %v4480
    %4539 = vmatmul.f32.gmra.mxu0 %v4467
    %v4540 = vpop.f32.mrf.mxu0
    %v4541 = vadd.f32 0.0, %v4540
    %4542 = vmatmul.f32.gmra.mxu0 %v4470
    %v4543 = vpop.f32.mrf.mxu0
    %v4544 = vadd.f32 0.0, %v4543
    %4545 = vmatmul.f32.gmra.mxu0 %v4473
    %v4546 = vpop.f32.mrf.mxu0
    %v4547 = vadd.f32 0.0, %v4546
    %4548 = vmatmul.f32.gmra.mxu0 %v4476
    %v4549 = vpop.f32.mrf.mxu0
    %v4550 = vadd.f32 0.0, %v4549
    %4551 = vdwg.mxu0
    %4552 = vmatpush.msra.mxu0 0.0
    %4553 = vmatpush.msra.mxu0 0.0
    %4554 = vmatpush.msra.mxu0 0.0
    %4555 = vmatpush.msra.mxu0 0.0
    %4556 = vmatpush.msra.mxu0 0.0
    %4557 = vmatpush.msra.mxu0 0.0
    %4558 = vmatpush.msra.mxu0 0.0
    %4559 = vmatpush.msra.mxu0 0.0
    %4560 = vmatpush.msra.mxu0 0.0
    %4561 = vmatpush.msra.mxu0 0.0
    %4562 = vmatpush.msra.mxu0 0.0
    %4563 = vmatpush.msra.mxu0 0.0
    %4564 = vmatpush.msra.mxu0 0.0
    %4565 = vmatpush.msra.mxu0 0.0
    %4566 = vmatpush.msra.mxu0 0.0
    %4567 = vmatpush.msra.mxu0 %v4482
    %4568 = vmatmul.f32.gmra.mxu0 %v4467
    %v4569 = vpop.f32.mrf.mxu0
    %v4570 = vadd.f32 0.0, %v4569
    %4571 = vmatmul.f32.gmra.mxu0 %v4470
    %v4572 = vpop.f32.mrf.mxu0
    %v4573 = vadd.f32 0.0, %v4572
    %4574 = vmatmul.f32.gmra.mxu0 %v4473
    %v4575 = vpop.f32.mrf.mxu0
    %v4576 = vadd.f32 0.0, %v4575
    %4577 = vmatmul.f32.gmra.mxu0 %v4476
    %v4578 = vpop.f32.mrf.mxu0
    %v4579 = vadd.f32 0.0, %v4578
    %4580 = vdwg.mxu0
    %4581 = vmatpush.msra.mxu0 0.0
    %4582 = vmatpush.msra.mxu0 0.0
    %4583 = vmatpush.msra.mxu0 0.0
    %4584 = vmatpush.msra.mxu0 0.0
    %4585 = vmatpush.msra.mxu0 0.0
    %4586 = vmatpush.msra.mxu0 0.0
    %4587 = vmatpush.msra.mxu0 0.0
    %4588 = vmatpush.msra.mxu0 0.0
    %4589 = vmatpush.msra.mxu0 0.0
    %4590 = vmatpush.msra.mxu0 0.0
    %4591 = vmatpush.msra.mxu0 0.0
    %4592 = vmatpush.msra.mxu0 0.0
    %4593 = vmatpush.msra.mxu0 0.0
    %4594 = vmatpush.msra.mxu0 0.0
    %4595 = vmatpush.msra.mxu0 0.0
    %4596 = vmatpush.msra.mxu0 %v4484
    %4597 = vmatmul.f32.gmra.mxu0 %v4467
    %v4598 = vpop.f32.mrf.mxu0
    %v4599 = vadd.f32 0.0, %v4598
    %4600 = vmatmul.f32.gmra.mxu0 %v4470
    %v4601 = vpop.f32.mrf.mxu0
    %v4602 = vadd.f32 0.0, %v4601
    %4603 = vmatmul.f32.gmra.mxu0 %v4473
    %v4604 = vpop.f32.mrf.mxu0
    %v4605 = vadd.f32 0.0, %v4604
    %4606 = vmatmul.f32.gmra.mxu0 %v4476
    %v4607 = vpop.f32.mrf.mxu0
    %v4608 = vadd.f32 0.0, %v4607
    %4609 = vdwg.mxu0
    %4610 = vmatpush.msra.mxu0 0.0
    %4611 = vmatpush.msra.mxu0 0.0
    %4612 = vmatpush.msra.mxu0 0.0
    %4613 = vmatpush.msra.mxu0 0.0
    %4614 = vmatpush.msra.mxu0 0.0
    %4615 = vmatpush.msra.mxu0 0.0
    %4616 = vmatpush.msra.mxu0 0.0
    %4617 = vmatpush.msra.mxu0 0.0
    %4618 = vmatpush.msra.mxu0 0.0
    %4619 = vmatpush.msra.mxu0 0.0
    %4620 = vmatpush.msra.mxu0 0.0
    %4621 = vmatpush.msra.mxu0 0.0
    %4622 = vmatpush.msra.mxu0 0.0
    %4623 = vmatpush.msra.mxu0 0.0
    %4624 = vmatpush.msra.mxu0 0.0
    %4625 = vmatpush.msra.mxu0 %v4486
    %4626 = vmatmul.f32.gmra.mxu0 %v4467
    %v4627 = vpop.f32.mrf.mxu0
    %v4628 = vadd.f32 0.0, %v4627
    %4629 = vmatmul.f32.gmra.mxu0 %v4470
    %v4630 = vpop.f32.mrf.mxu0
    %v4631 = vadd.f32 0.0, %v4630
    %4632 = vmatmul.f32.gmra.mxu0 %v4473
    %v4633 = vpop.f32.mrf.mxu0
    %v4634 = vadd.f32 0.0, %v4633
    %4635 = vmatmul.f32.gmra.mxu0 %v4476
    %v4636 = vpop.f32.mrf.mxu0
    %v4637 = vadd.f32 0.0, %v4636
    %4638 = vdwg.mxu0
    %4639 = vmatpush.msra.mxu0 0.0
    %4640 = vmatpush.msra.mxu0 0.0
    %4641 = vmatpush.msra.mxu0 0.0
    %4642 = vmatpush.msra.mxu0 0.0
    %4643 = vmatpush.msra.mxu0 0.0
    %4644 = vmatpush.msra.mxu0 0.0
    %4645 = vmatpush.msra.mxu0 0.0
    %4646 = vmatpush.msra.mxu0 0.0
    %4647 = vmatpush.msra.mxu0 0.0
    %4648 = vmatpush.msra.mxu0 0.0
    %4649 = vmatpush.msra.mxu0 0.0
    %4650 = vmatpush.msra.mxu0 0.0
    %4651 = vmatpush.msra.mxu0 0.0
    %4652 = vmatpush.msra.mxu0 0.0
    %4653 = vmatpush.msra.mxu0 0.0
    %4654 = vmatpush.msra.mxu0 %v4488
    %4655 = vmatmul.f32.gmra.mxu0 %v4467
    %v4656 = vpop.f32.mrf.mxu0
    %v4657 = vadd.f32 0.0, %v4656
    %4658 = vmatmul.f32.gmra.mxu0 %v4470
    %v4659 = vpop.f32.mrf.mxu0
    %v4660 = vadd.f32 0.0, %v4659
    %4661 = vmatmul.f32.gmra.mxu0 %v4473
    %v4662 = vpop.f32.mrf.mxu0
    %v4663 = vadd.f32 0.0, %v4662
    %4664 = vmatmul.f32.gmra.mxu0 %v4476
    %v4665 = vpop.f32.mrf.mxu0
    %v4666 = vadd.f32 0.0, %v4665
    %4667 = vdwg.mxu0
    %4668 = vmatpush.msra.mxu0 0.0
    %4669 = vmatpush.msra.mxu0 0.0
    %4670 = vmatpush.msra.mxu0 0.0
    %4671 = vmatpush.msra.mxu0 0.0
    %4672 = vmatpush.msra.mxu0 0.0
    %4673 = vmatpush.msra.mxu0 0.0
    %4674 = vmatpush.msra.mxu0 0.0
    %4675 = vmatpush.msra.mxu0 0.0
    %4676 = vmatpush.msra.mxu0 0.0
    %4677 = vmatpush.msra.mxu0 0.0
    %4678 = vmatpush.msra.mxu0 0.0
    %4679 = vmatpush.msra.mxu0 0.0
    %4680 = vmatpush.msra.mxu0 0.0
    %4681 = vmatpush.msra.mxu0 0.0
    %4682 = vmatpush.msra.mxu0 0.0
    %4683 = vmatpush.msra.mxu0 %v4490
    %4684 = vmatmul.f32.gmra.mxu0 %v4467
    %v4685 = vpop.f32.mrf.mxu0
    %v4686 = vadd.f32 0.0, %v4685
    %4687 = vmatmul.f32.gmra.mxu0 %v4470
    %v4688 = vpop.f32.mrf.mxu0
    %v4689 = vadd.f32 0.0, %v4688
    %4690 = vmatmul.f32.gmra.mxu0 %v4473
    %v4691 = vpop.f32.mrf.mxu0
    %v4692 = vadd.f32 0.0, %v4691
    %4693 = vmatmul.f32.gmra.mxu0 %v4476
    %v4694 = vpop.f32.mrf.mxu0
    %v4695 = vadd.f32 0.0, %v4694
    %4696 = vdwg.mxu0
    %4697 = vmatpush.msra.mxu0 0.0
    %4698 = vmatpush.msra.mxu0 0.0
    %4699 = vmatpush.msra.mxu0 0.0
    %4700 = vmatpush.msra.mxu0 0.0
    %4701 = vmatpush.msra.mxu0 0.0
    %4702 = vmatpush.msra.mxu0 0.0
    %4703 = vmatpush.msra.mxu0 0.0
    %4704 = vmatpush.msra.mxu0 0.0
    %4705 = vmatpush.msra.mxu0 0.0
    %4706 = vmatpush.msra.mxu0 0.0
    %4707 = vmatpush.msra.mxu0 0.0
    %4708 = vmatpush.msra.mxu0 0.0
    %4709 = vmatpush.msra.mxu0 0.0
    %4710 = vmatpush.msra.mxu0 0.0
    %4711 = vmatpush.msra.mxu0 0.0
    %4712 = vmatpush.msra.mxu0 %v4492
    %4713 = vmatmul.f32.gmra.mxu0 %v4467
    %v4714 = vpop.f32.mrf.mxu0
    %v4715 = vadd.f32 0.0, %v4714
    %4716 = vmatmul.f32.gmra.mxu0 %v4470
    %v4717 = vpop.f32.mrf.mxu0
    %v4718 = vadd.f32 0.0, %v4717
    %4719 = vmatmul.f32.gmra.mxu0 %v4473
    %v4720 = vpop.f32.mrf.mxu0
    %v4721 = vadd.f32 0.0, %v4720
    %4722 = vmatmul.f32.gmra.mxu0 %v4476
    %v4723 = vpop.f32.mrf.mxu0
    %v4724 = vadd.f32 0.0, %v4723
    %4725 = vdwg.mxu0
    %v4726 = vsub.f32 %v3656, %v4512
    %v4727 = vsub.f32 %v3732, %v4541
    %v4728 = vsub.f32 %v3808, %v4570
    %v4729 = vsub.f32 %v3884, %v4599
    %v4730 = vsub.f32 %v3960, %v4628
    %v4731 = vsub.f32 %v4036, %v4657
    %v4732 = vsub.f32 %v4112, %v4686
    %v4733 = vsub.f32 %v4188, %v4715
    %v4734 = vsub.f32 %v3658, %v4515
    %v4735 = vsub.f32 %v3734, %v4544
    %v4736 = vsub.f32 %v3810, %v4573
    %v4737 = vsub.f32 %v3886, %v4602
    %v4738 = vsub.f32 %v3962, %v4631
    %v4739 = vsub.f32 %v4038, %v4660
    %v4740 = vsub.f32 %v4114, %v4689
    %v4741 = vsub.f32 %v4190, %v4718
    %v4742 = vsub.f32 %v3661, %v4518
    %v4743 = vsub.f32 %v3737, %v4547
    %v4744 = vsub.f32 %v3813, %v4576
    %v4745 = vsub.f32 %v3889, %v4605
    %v4746 = vsub.f32 %v3965, %v4634
    %v4747 = vsub.f32 %v4041, %v4663
    %v4748 = vsub.f32 %v4117, %v4692
    %v4749 = vsub.f32 %v4193, %v4721
    %v4750 = vsub.f32 %v3663, %v4521
    %v4751 = vsub.f32 %v3739, %v4550
    %v4752 = vsub.f32 %v3815, %v4579
    %v4753 = vsub.f32 %v3891, %v4608
    %v4754 = vsub.f32 %v3967, %v4637
    %v4755 = vsub.f32 %v4043, %v4666
    %v4756 = vsub.f32 %v4119, %v4695
    %v4757 = vsub.f32 %v4195, %v4724
    %v4758 = vmul.f32 %v4726, %v4726
    %v4759 = vmul.f32 %v4727, %v4727
    %v4760 = vmul.f32 %v4728, %v4728
    %v4761 = vmul.f32 %v4729, %v4729
    %v4762 = vmul.f32 %v4730, %v4730
    %v4763 = vmul.f32 %v4731, %v4731
    %v4764 = vmul.f32 %v4732, %v4732
    %v4765 = vmul.f32 %v4733, %v4733
    %v4766 = vmul.f32 %v4734, %v4734
    %v4767 = vmul.f32 %v4735, %v4735
    %v4768 = vmul.f32 %v4736, %v4736
    %v4769 = vmul.f32 %v4737, %v4737
    %v4770 = vmul.f32 %v4738, %v4738
    %v4771 = vmul.f32 %v4739, %v4739
    %v4772 = vmul.f32 %v4740, %v4740
    %v4773 = vmul.f32 %v4741, %v4741
    %v4774 = vmul.f32 %v4742, %v4742
    %v4775 = vmul.f32 %v4743, %v4743
    %v4776 = vmul.f32 %v4744, %v4744
    %v4777 = vmul.f32 %v4745, %v4745
    %v4778 = vmul.f32 %v4746, %v4746
    %v4779 = vmul.f32 %v4747, %v4747
    %v4780 = vmul.f32 %v4748, %v4748
    %v4781 = vmul.f32 %v4749, %v4749
    %v4782 = vmul.f32 %v4750, %v4750
    %v4783 = vmul.f32 %v4751, %v4751
    %v4784 = vmul.f32 %v4752, %v4752
    %v4785 = vmul.f32 %v4753, %v4753
    %v4786 = vmul.f32 %v4754, %v4754
    %v4787 = vmul.f32 %v4755, %v4755
    %v4788 = vmul.f32 %v4756, %v4756
    %v4789 = vmul.f32 %v4757, %v4757
    %4790 = vmatpush.xpose.msra.mxu0 0.0
    %4791 = vmatpush.xpose.msra.mxu0 0.0
    %4792 = vmatpush.xpose.msra.mxu0 0.0
    %4793 = vmatpush.xpose.msra.mxu0 0.0
    %4794 = vmatpush.xpose.msra.mxu0 0.0
    %4795 = vmatpush.xpose.msra.mxu0 0.0
    %4796 = vmatpush.xpose.msra.mxu0 0.0
    %4797 = vmatpush.xpose.msra.mxu0 0.0
    %4798 = vmatpush.xpose.msra.mxu0 0.0
    %4799 = vmatpush.xpose.msra.mxu0 0.0
    %4800 = vmatpush.xpose.msra.mxu0 0.0
    %4801 = vmatpush.xpose.msra.mxu0 0.0
    %4802 = vmatpush.xpose.msra.mxu0 0.0
    %4803 = vmatpush.xpose.msra.mxu0 0.0
    %4804 = vmatpush.xpose.msra.mxu0 0.0
    %4805 = vmatpush.xpose.msra.mxu0 %v4213
    %4806 = vmatmul.f32.gmra.mxu0 %v4758
    %v4807 = vpop.f32.mrf.mxu0
    %v4808 = vadd.f32 0.0, %v4807
    %4809 = vmatmul.f32.gmra.mxu0 %v4766
    %v4810 = vpop.f32.mrf.mxu0
    %v4811 = vadd.f32 0.0, %v4810
    %4812 = vmatmul.f32.gmra.mxu0 %v4774
    %v4813 = vpop.f32.mrf.mxu0
    %v4814 = vadd.f32 0.0, %v4813
    %4815 = vmatmul.f32.gmra.mxu0 %v4782
    %v4816 = vpop.f32.mrf.mxu0
    %v4817 = vadd.f32 0.0, %v4816
    %4818 = vdwg.mxu0
    %4819 = vmatpush.xpose.msra.mxu0 0.0
    %4820 = vmatpush.xpose.msra.mxu0 0.0
    %4821 = vmatpush.xpose.msra.mxu0 0.0
    %4822 = vmatpush.xpose.msra.mxu0 0.0
    %4823 = vmatpush.xpose.msra.mxu0 0.0
    %4824 = vmatpush.xpose.msra.mxu0 0.0
    %4825 = vmatpush.xpose.msra.mxu0 0.0
    %4826 = vmatpush.xpose.msra.mxu0 0.0
    %4827 = vmatpush.xpose.msra.mxu0 0.0
    %4828 = vmatpush.xpose.msra.mxu0 0.0
    %4829 = vmatpush.xpose.msra.mxu0 0.0
    %4830 = vmatpush.xpose.msra.mxu0 0.0
    %4831 = vmatpush.xpose.msra.mxu0 0.0
    %4832 = vmatpush.xpose.msra.mxu0 0.0
    %4833 = vmatpush.xpose.msra.mxu0 0.0
    %4834 = vmatpush.xpose.msra.mxu0 %v4214
    %4835 = vmatmul.f32.gmra.mxu0 %v4759
    %v4836 = vpop.f32.mrf.mxu0
    %v4837 = vadd.f32 %v4808, %v4836
    %4838 = vmatmul.f32.gmra.mxu0 %v4767
    %v4839 = vpop.f32.mrf.mxu0
    %v4840 = vadd.f32 %v4811, %v4839
    %4841 = vmatmul.f32.gmra.mxu0 %v4775
    %v4842 = vpop.f32.mrf.mxu0
    %v4843 = vadd.f32 %v4814, %v4842
    %4844 = vmatmul.f32.gmra.mxu0 %v4783
    %v4845 = vpop.f32.mrf.mxu0
    %v4846 = vadd.f32 %v4817, %v4845
    %4847 = vdwg.mxu0
    %4848 = vmatpush.xpose.msra.mxu0 0.0
    %4849 = vmatpush.xpose.msra.mxu0 0.0
    %4850 = vmatpush.xpose.msra.mxu0 0.0
    %4851 = vmatpush.xpose.msra.mxu0 0.0
    %4852 = vmatpush.xpose.msra.mxu0 0.0
    %4853 = vmatpush.xpose.msra.mxu0 0.0
    %4854 = vmatpush.xpose.msra.mxu0 0.0
    %4855 = vmatpush.xpose.msra.mxu0 0.0
    %4856 = vmatpush.xpose.msra.mxu0 0.0
    %4857 = vmatpush.xpose.msra.mxu0 0.0
    %4858 = vmatpush.xpose.msra.mxu0 0.0
    %4859 = vmatpush.xpose.msra.mxu0 0.0
    %4860 = vmatpush.xpose.msra.mxu0 0.0
    %4861 = vmatpush.xpose.msra.mxu0 0.0
    %4862 = vmatpush.xpose.msra.mxu0 0.0
    %4863 = vmatpush.xpose.msra.mxu0 %v4215
    %4864 = vmatmul.f32.gmra.mxu0 %v4760
    %v4865 = vpop.f32.mrf.mxu0
    %v4866 = vadd.f32 %v4837, %v4865
    %4867 = vmatmul.f32.gmra.mxu0 %v4768
    %v4868 = vpop.f32.mrf.mxu0
    %v4869 = vadd.f32 %v4840, %v4868
    %4870 = vmatmul.f32.gmra.mxu0 %v4776
    %v4871 = vpop.f32.mrf.mxu0
    %v4872 = vadd.f32 %v4843, %v4871
    %4873 = vmatmul.f32.gmra.mxu0 %v4784
    %v4874 = vpop.f32.mrf.mxu0
    %v4875 = vadd.f32 %v4846, %v4874
    %4876 = vdwg.mxu0
    %4877 = vmatpush.xpose.msra.mxu0 0.0
    %4878 = vmatpush.xpose.msra.mxu0 0.0
    %4879 = vmatpush.xpose.msra.mxu0 0.0
    %4880 = vmatpush.xpose.msra.mxu0 0.0
    %4881 = vmatpush.xpose.msra.mxu0 0.0
    %4882 = vmatpush.xpose.msra.mxu0 0.0
    %4883 = vmatpush.xpose.msra.mxu0 0.0
    %4884 = vmatpush.xpose.msra.mxu0 0.0
    %4885 = vmatpush.xpose.msra.mxu0 0.0
    %4886 = vmatpush.xpose.msra.mxu0 0.0
    %4887 = vmatpush.xpose.msra.mxu0 0.0
    %4888 = vmatpush.xpose.msra.mxu0 0.0
    %4889 = vmatpush.xpose.msra.mxu0 0.0
    %4890 = vmatpush.xpose.msra.mxu0 0.0
    %4891 = vmatpush.xpose.msra.mxu0 0.0
    %4892 = vmatpush.xpose.msra.mxu0 %v4216
    %4893 = vmatmul.f32.gmra.mxu0 %v4761
    %v4894 = vpop.f32.mrf.mxu0
    %v4895 = vadd.f32 %v4866, %v4894
    %4896 = vmatmul.f32.gmra.mxu0 %v4769
    %v4897 = vpop.f32.mrf.mxu0
    %v4898 = vadd.f32 %v4869, %v4897
    %4899 = vmatmul.f32.gmra.mxu0 %v4777
    %v4900 = vpop.f32.mrf.mxu0
    %v4901 = vadd.f32 %v4872, %v4900
    %4902 = vmatmul.f32.gmra.mxu0 %v4785
    %v4903 = vpop.f32.mrf.mxu0
    %v4904 = vadd.f32 %v4875, %v4903
    %4905 = vdwg.mxu0
    %4906 = vmatpush.xpose.msra.mxu0 0.0
    %4907 = vmatpush.xpose.msra.mxu0 0.0
    %4908 = vmatpush.xpose.msra.mxu0 0.0
    %4909 = vmatpush.xpose.msra.mxu0 0.0
    %4910 = vmatpush.xpose.msra.mxu0 0.0
    %4911 = vmatpush.xpose.msra.mxu0 0.0
    %4912 = vmatpush.xpose.msra.mxu0 0.0
    %4913 = vmatpush.xpose.msra.mxu0 0.0
    %4914 = vmatpush.xpose.msra.mxu0 0.0
    %4915 = vmatpush.xpose.msra.mxu0 0.0
    %4916 = vmatpush.xpose.msra.mxu0 0.0
    %4917 = vmatpush.xpose.msra.mxu0 0.0
    %4918 = vmatpush.xpose.msra.mxu0 0.0
    %4919 = vmatpush.xpose.msra.mxu0 0.0
    %4920 = vmatpush.xpose.msra.mxu0 0.0
    %4921 = vmatpush.xpose.msra.mxu0 %v4217
    %4922 = vmatmul.f32.gmra.mxu0 %v4762
    %v4923 = vpop.f32.mrf.mxu0
    %v4924 = vadd.f32 %v4895, %v4923
    %4925 = vmatmul.f32.gmra.mxu0 %v4770
    %v4926 = vpop.f32.mrf.mxu0
    %v4927 = vadd.f32 %v4898, %v4926
    %4928 = vmatmul.f32.gmra.mxu0 %v4778
    %v4929 = vpop.f32.mrf.mxu0
    %v4930 = vadd.f32 %v4901, %v4929
    %4931 = vmatmul.f32.gmra.mxu0 %v4786
    %v4932 = vpop.f32.mrf.mxu0
    %v4933 = vadd.f32 %v4904, %v4932
    %4934 = vdwg.mxu0
    %4935 = vmatpush.xpose.msra.mxu0 0.0
    %4936 = vmatpush.xpose.msra.mxu0 0.0
    %4937 = vmatpush.xpose.msra.mxu0 0.0
    %4938 = vmatpush.xpose.msra.mxu0 0.0
    %4939 = vmatpush.xpose.msra.mxu0 0.0
    %4940 = vmatpush.xpose.msra.mxu0 0.0
    %4941 = vmatpush.xpose.msra.mxu0 0.0
    %4942 = vmatpush.xpose.msra.mxu0 0.0
    %4943 = vmatpush.xpose.msra.mxu0 0.0
    %4944 = vmatpush.xpose.msra.mxu0 0.0
    %4945 = vmatpush.xpose.msra.mxu0 0.0
    %4946 = vmatpush.xpose.msra.mxu0 0.0
    %4947 = vmatpush.xpose.msra.mxu0 0.0
    %4948 = vmatpush.xpose.msra.mxu0 0.0
    %4949 = vmatpush.xpose.msra.mxu0 0.0
    %4950 = vmatpush.xpose.msra.mxu0 %v4218
    %4951 = vmatmul.f32.gmra.mxu0 %v4763
    %v4952 = vpop.f32.mrf.mxu0
    %v4953 = vadd.f32 %v4924, %v4952
    %4954 = vmatmul.f32.gmra.mxu0 %v4771
    %v4955 = vpop.f32.mrf.mxu0
    %v4956 = vadd.f32 %v4927, %v4955
    %4957 = vmatmul.f32.gmra.mxu0 %v4779
    %v4958 = vpop.f32.mrf.mxu0
    %v4959 = vadd.f32 %v4930, %v4958
    %4960 = vmatmul.f32.gmra.mxu0 %v4787
    %v4961 = vpop.f32.mrf.mxu0
    %v4962 = vadd.f32 %v4933, %v4961
    %4963 = vdwg.mxu0
    %4964 = vmatpush.xpose.msra.mxu0 0.0
    %4965 = vmatpush.xpose.msra.mxu0 0.0
    %4966 = vmatpush.xpose.msra.mxu0 0.0
    %4967 = vmatpush.xpose.msra.mxu0 0.0
    %4968 = vmatpush.xpose.msra.mxu0 0.0
    %4969 = vmatpush.xpose.msra.mxu0 0.0
    %4970 = vmatpush.xpose.msra.mxu0 0.0
    %4971 = vmatpush.xpose.msra.mxu0 0.0
    %4972 = vmatpush.xpose.msra.mxu0 0.0
    %4973 = vmatpush.xpose.msra.mxu0 0.0
    %4974 = vmatpush.xpose.msra.mxu0 0.0
    %4975 = vmatpush.xpose.msra.mxu0 0.0
    %4976 = vmatpush.xpose.msra.mxu0 0.0
    %4977 = vmatpush.xpose.msra.mxu0 0.0
    %4978 = vmatpush.xpose.msra.mxu0 0.0
    %4979 = vmatpush.xpose.msra.mxu0 %v4219
    %4980 = vmatmul.f32.gmra.mxu0 %v4764
    %v4981 = vpop.f32.mrf.mxu0
    %v4982 = vadd.f32 %v4953, %v4981
    %4983 = vmatmul.f32.gmra.mxu0 %v4772
    %v4984 = vpop.f32.mrf.mxu0
    %v4985 = vadd.f32 %v4956, %v4984
    %4986 = vmatmul.f32.gmra.mxu0 %v4780
    %v4987 = vpop.f32.mrf.mxu0
    %v4988 = vadd.f32 %v4959, %v4987
    %4989 = vmatmul.f32.gmra.mxu0 %v4788
    %v4990 = vpop.f32.mrf.mxu0
    %v4991 = vadd.f32 %v4962, %v4990
    %4992 = vdwg.mxu0
    %4993 = vmatpush.xpose.msra.mxu0 0.0
    %4994 = vmatpush.xpose.msra.mxu0 0.0
    %4995 = vmatpush.xpose.msra.mxu0 0.0
    %4996 = vmatpush.xpose.msra.mxu0 0.0
    %4997 = vmatpush.xpose.msra.mxu0 0.0
    %4998 = vmatpush.xpose.msra.mxu0 0.0
    %4999 = vmatpush.xpose.msra.mxu0 0.0
    %5000 = vmatpush.xpose.msra.mxu0 0.0
    %5001 = vmatpush.xpose.msra.mxu0 0.0
    %5002 = vmatpush.xpose.msra.mxu0 0.0
    %5003 = vmatpush.xpose.msra.mxu0 0.0
    %5004 = vmatpush.xpose.msra.mxu0 0.0
    %5005 = vmatpush.xpose.msra.mxu0 0.0
    %5006 = vmatpush.xpose.msra.mxu0 0.0
    %5007 = vmatpush.xpose.msra.mxu0 0.0
    %5008 = vmatpush.xpose.msra.mxu0 %v4220
    %5009 = vmatmul.f32.gmra.mxu0 %v4765
    %v5010 = vpop.f32.mrf.mxu0
    %v5011 = vadd.f32 %v4982, %v5010
    %5012 = vmatmul.f32.gmra.mxu0 %v4773
    %v5013 = vpop.f32.mrf.mxu0
    %v5014 = vadd.f32 %v4985, %v5013
    %5015 = vmatmul.f32.gmra.mxu0 %v4781
    %v5016 = vpop.f32.mrf.mxu0
    %v5017 = vadd.f32 %v4988, %v5016
    %5018 = vmatmul.f32.gmra.mxu0 %v4789
    %v5019 = vpop.f32.mrf.mxu0
    %v5020 = vadd.f32 %v4991, %v5019
    %5021 = vdwg.mxu0
    %v5022 = vmul.f32 %v5011, 0.001953125
    %v5023 = vmul.f32 %v5014, 0.001953125
    %v5024 = vmul.f32 %v5017, 0.001953125
    %v5025 = vmul.f32 %v5020, 0.001953125
    %v5026 = vadd.f32 %v5022, 1e-05
    %v5027 = vadd.f32 %v5023, 1e-05
    %v5028 = vadd.f32 %v5024, 1e-05
    %v5029 = vadd.f32 %v5025, 1e-05
    %v5030 = vrsqrt.pop %v5026
    %v5031 = vmul.f32 %v5030, %v5026
    %v5032 = vmul.f32 %v5031, %v5030
    %v5033 = vmul.f32 0.5, %v5032
    %v5034 = vsub.f32 1.5, %v5033
    %v5035 = vmul.f32 %v5030, %v5034
    %vm5036 = vweird.f32 %v5026
    %vm5037 = vweird.f32 %v5030
    %vm5038 = vmor %vm5036, %vm5037
    %v5039 = vsel %vm5038, %v5030, %v5035
    %v5040 = vrsqrt.pop %v5027
    %v5041 = vmul.f32 %v5040, %v5027
    %v5042 = vmul.f32 %v5041, %v5040
    %v5043 = vmul.f32 0.5, %v5042
    %v5044 = vsub.f32 1.5, %v5043
    %v5045 = vmul.f32 %v5040, %v5044
    %vm5046 = vweird.f32 %v5027
    %vm5047 = vweird.f32 %v5040
    %vm5048 = vmor %vm5046, %vm5047
    %v5049 = vsel %vm5048, %v5040, %v5045
    %v5050 = vrsqrt.pop %v5028
    %v5051 = vmul.f32 %v5050, %v5028
    %v5052 = vmul.f32 %v5051, %v5050
    %v5053 = vmul.f32 0.5, %v5052
    %v5054 = vsub.f32 1.5, %v5053
    %v5055 = vmul.f32 %v5050, %v5054
    %vm5056 = vweird.f32 %v5028
    %vm5057 = vweird.f32 %v5050
    %vm5058 = vmor %vm5056, %vm5057
    %v5059 = vsel %vm5058, %v5050, %v5055
    %v5060 = vrsqrt.pop %v5029
    %v5061 = vmul.f32 %v5060, %v5029
    %v5062 = vmul.f32 %v5061, %v5060
    %v5063 = vmul.f32 0.5, %v5062
    %v5064 = vsub.f32 1.5, %v5063
    %v5065 = vmul.f32 %v5060, %v5064
    %vm5066 = vweird.f32 %v5029
    %vm5067 = vweird.f32 %v5060
    %vm5068 = vmor %vm5066, %vm5067
    %v5069 = vsel %vm5068, %v5060, %v5065
    %v5071 = vsel %vm4465, %v5039, 0
    %v5074 = vsel %vm4465, %v5049, 0
    %v5077 = vsel %vm4465, %v5059, 0
    %v5080 = vsel %vm4465, %v5069, 0
    %5082 = vmatpush.msra.mxu0 0.0
    %5083 = vmatpush.msra.mxu0 0.0
    %5084 = vmatpush.msra.mxu0 0.0
    %5085 = vmatpush.msra.mxu0 0.0
    %5086 = vmatpush.msra.mxu0 0.0
    %5087 = vmatpush.msra.mxu0 0.0
    %5088 = vmatpush.msra.mxu0 0.0
    %5089 = vmatpush.msra.mxu0 0.0
    %5090 = vmatpush.msra.mxu0 0.0
    %5091 = vmatpush.msra.mxu0 0.0
    %5092 = vmatpush.msra.mxu0 0.0
    %5093 = vmatpush.msra.mxu0 0.0
    %5094 = vmatpush.msra.mxu0 0.0
    %5095 = vmatpush.msra.mxu0 0.0
    %5096 = vmatpush.msra.mxu0 0.0
    %5097 = vmatpush.msra.mxu0 %v4478
    %5098 = vmatmul.f32.gmra.mxu0 %v5071
    %v5099 = vpop.f32.mrf.mxu0
    %v5100 = vadd.f32 0.0, %v5099
    %5101 = vmatmul.f32.gmra.mxu0 %v5074
    %v5102 = vpop.f32.mrf.mxu0
    %v5103 = vadd.f32 0.0, %v5102
    %5104 = vmatmul.f32.gmra.mxu0 %v5077
    %v5105 = vpop.f32.mrf.mxu0
    %v5106 = vadd.f32 0.0, %v5105
    %5107 = vmatmul.f32.gmra.mxu0 %v5080
    %v5108 = vpop.f32.mrf.mxu0
    %v5109 = vadd.f32 0.0, %v5108
    %5110 = vdwg.mxu0
    %5111 = vmatpush.msra.mxu0 0.0
    %5112 = vmatpush.msra.mxu0 0.0
    %5113 = vmatpush.msra.mxu0 0.0
    %5114 = vmatpush.msra.mxu0 0.0
    %5115 = vmatpush.msra.mxu0 0.0
    %5116 = vmatpush.msra.mxu0 0.0
    %5117 = vmatpush.msra.mxu0 0.0
    %5118 = vmatpush.msra.mxu0 0.0
    %5119 = vmatpush.msra.mxu0 0.0
    %5120 = vmatpush.msra.mxu0 0.0
    %5121 = vmatpush.msra.mxu0 0.0
    %5122 = vmatpush.msra.mxu0 0.0
    %5123 = vmatpush.msra.mxu0 0.0
    %5124 = vmatpush.msra.mxu0 0.0
    %5125 = vmatpush.msra.mxu0 0.0
    %5126 = vmatpush.msra.mxu0 %v4480
    %5127 = vmatmul.f32.gmra.mxu0 %v5071
    %v5128 = vpop.f32.mrf.mxu0
    %v5129 = vadd.f32 0.0, %v5128
    %5130 = vmatmul.f32.gmra.mxu0 %v5074
    %v5131 = vpop.f32.mrf.mxu0
    %v5132 = vadd.f32 0.0, %v5131
    %5133 = vmatmul.f32.gmra.mxu0 %v5077
    %v5134 = vpop.f32.mrf.mxu0
    %v5135 = vadd.f32 0.0, %v5134
    %5136 = vmatmul.f32.gmra.mxu0 %v5080
    %v5137 = vpop.f32.mrf.mxu0
    %v5138 = vadd.f32 0.0, %v5137
    %5139 = vdwg.mxu0
    %5140 = vmatpush.msra.mxu0 0.0
    %5141 = vmatpush.msra.mxu0 0.0
    %5142 = vmatpush.msra.mxu0 0.0
    %5143 = vmatpush.msra.mxu0 0.0
    %5144 = vmatpush.msra.mxu0 0.0
    %5145 = vmatpush.msra.mxu0 0.0
    %5146 = vmatpush.msra.mxu0 0.0
    %5147 = vmatpush.msra.mxu0 0.0
    %5148 = vmatpush.msra.mxu0 0.0
    %5149 = vmatpush.msra.mxu0 0.0
    %5150 = vmatpush.msra.mxu0 0.0
    %5151 = vmatpush.msra.mxu0 0.0
    %5152 = vmatpush.msra.mxu0 0.0
    %5153 = vmatpush.msra.mxu0 0.0
    %5154 = vmatpush.msra.mxu0 0.0
    %5155 = vmatpush.msra.mxu0 %v4482
    %5156 = vmatmul.f32.gmra.mxu0 %v5071
    %v5157 = vpop.f32.mrf.mxu0
    %v5158 = vadd.f32 0.0, %v5157
    %5159 = vmatmul.f32.gmra.mxu0 %v5074
    %v5160 = vpop.f32.mrf.mxu0
    %v5161 = vadd.f32 0.0, %v5160
    %5162 = vmatmul.f32.gmra.mxu0 %v5077
    %v5163 = vpop.f32.mrf.mxu0
    %v5164 = vadd.f32 0.0, %v5163
    %5165 = vmatmul.f32.gmra.mxu0 %v5080
    %v5166 = vpop.f32.mrf.mxu0
    %v5167 = vadd.f32 0.0, %v5166
    %5168 = vdwg.mxu0
    %5169 = vmatpush.msra.mxu0 0.0
    %5170 = vmatpush.msra.mxu0 0.0
    %5171 = vmatpush.msra.mxu0 0.0
    %5172 = vmatpush.msra.mxu0 0.0
    %5173 = vmatpush.msra.mxu0 0.0
    %5174 = vmatpush.msra.mxu0 0.0
    %5175 = vmatpush.msra.mxu0 0.0
    %5176 = vmatpush.msra.mxu0 0.0
    %5177 = vmatpush.msra.mxu0 0.0
    %5178 = vmatpush.msra.mxu0 0.0
    %5179 = vmatpush.msra.mxu0 0.0
    %5180 = vmatpush.msra.mxu0 0.0
    %5181 = vmatpush.msra.mxu0 0.0
    %5182 = vmatpush.msra.mxu0 0.0
    %5183 = vmatpush.msra.mxu0 0.0
    %5184 = vmatpush.msra.mxu0 %v4484
    %5185 = vmatmul.f32.gmra.mxu0 %v5071
    %v5186 = vpop.f32.mrf.mxu0
    %v5187 = vadd.f32 0.0, %v5186
    %5188 = vmatmul.f32.gmra.mxu0 %v5074
    %v5189 = vpop.f32.mrf.mxu0
    %v5190 = vadd.f32 0.0, %v5189
    %5191 = vmatmul.f32.gmra.mxu0 %v5077
    %v5192 = vpop.f32.mrf.mxu0
    %v5193 = vadd.f32 0.0, %v5192
    %5194 = vmatmul.f32.gmra.mxu0 %v5080
    %v5195 = vpop.f32.mrf.mxu0
    %v5196 = vadd.f32 0.0, %v5195
    %5197 = vdwg.mxu0
    %5198 = vmatpush.msra.mxu0 0.0
    %5199 = vmatpush.msra.mxu0 0.0
    %5200 = vmatpush.msra.mxu0 0.0
    %5201 = vmatpush.msra.mxu0 0.0
    %5202 = vmatpush.msra.mxu0 0.0
    %5203 = vmatpush.msra.mxu0 0.0
    %5204 = vmatpush.msra.mxu0 0.0
    %5205 = vmatpush.msra.mxu0 0.0
    %5206 = vmatpush.msra.mxu0 0.0
    %5207 = vmatpush.msra.mxu0 0.0
    %5208 = vmatpush.msra.mxu0 0.0
    %5209 = vmatpush.msra.mxu0 0.0
    %5210 = vmatpush.msra.mxu0 0.0
    %5211 = vmatpush.msra.mxu0 0.0
    %5212 = vmatpush.msra.mxu0 0.0
    %5213 = vmatpush.msra.mxu0 %v4486
    %5214 = vmatmul.f32.gmra.mxu0 %v5071
    %v5215 = vpop.f32.mrf.mxu0
    %v5216 = vadd.f32 0.0, %v5215
    %5217 = vmatmul.f32.gmra.mxu0 %v5074
    %v5218 = vpop.f32.mrf.mxu0
    %v5219 = vadd.f32 0.0, %v5218
    %5220 = vmatmul.f32.gmra.mxu0 %v5077
    %v5221 = vpop.f32.mrf.mxu0
    %v5222 = vadd.f32 0.0, %v5221
    %5223 = vmatmul.f32.gmra.mxu0 %v5080
    %v5224 = vpop.f32.mrf.mxu0
    %v5225 = vadd.f32 0.0, %v5224
    %5226 = vdwg.mxu0
    %5227 = vmatpush.msra.mxu0 0.0
    %5228 = vmatpush.msra.mxu0 0.0
    %5229 = vmatpush.msra.mxu0 0.0
    %5230 = vmatpush.msra.mxu0 0.0
    %5231 = vmatpush.msra.mxu0 0.0
    %5232 = vmatpush.msra.mxu0 0.0
    %5233 = vmatpush.msra.mxu0 0.0
    %5234 = vmatpush.msra.mxu0 0.0
    %5235 = vmatpush.msra.mxu0 0.0
    %5236 = vmatpush.msra.mxu0 0.0
    %5237 = vmatpush.msra.mxu0 0.0
    %5238 = vmatpush.msra.mxu0 0.0
    %5239 = vmatpush.msra.mxu0 0.0
    %5240 = vmatpush.msra.mxu0 0.0
    %5241 = vmatpush.msra.mxu0 0.0
    %5242 = vmatpush.msra.mxu0 %v4488
    %5243 = vmatmul.f32.gmra.mxu0 %v5071
    %v5244 = vpop.f32.mrf.mxu0
    %v5245 = vadd.f32 0.0, %v5244
    %5246 = vmatmul.f32.gmra.mxu0 %v5074
    %v5247 = vpop.f32.mrf.mxu0
    %v5248 = vadd.f32 0.0, %v5247
    %5249 = vmatmul.f32.gmra.mxu0 %v5077
    %v5250 = vpop.f32.mrf.mxu0
    %v5251 = vadd.f32 0.0, %v5250
    %5252 = vmatmul.f32.gmra.mxu0 %v5080
    %v5253 = vpop.f32.mrf.mxu0
    %v5254 = vadd.f32 0.0, %v5253
    %5255 = vdwg.mxu0
    %5256 = vmatpush.msra.mxu0 0.0
    %5257 = vmatpush.msra.mxu0 0.0
    %5258 = vmatpush.msra.mxu0 0.0
    %5259 = vmatpush.msra.mxu0 0.0
    %5260 = vmatpush.msra.mxu0 0.0
    %5261 = vmatpush.msra.mxu0 0.0
    %5262 = vmatpush.msra.mxu0 0.0
    %5263 = vmatpush.msra.mxu0 0.0
    %5264 = vmatpush.msra.mxu0 0.0
    %5265 = vmatpush.msra.mxu0 0.0
    %5266 = vmatpush.msra.mxu0 0.0
    %5267 = vmatpush.msra.mxu0 0.0
    %5268 = vmatpush.msra.mxu0 0.0
    %5269 = vmatpush.msra.mxu0 0.0
    %5270 = vmatpush.msra.mxu0 0.0
    %5271 = vmatpush.msra.mxu0 %v4490
    %5272 = vmatmul.f32.gmra.mxu0 %v5071
    %v5273 = vpop.f32.mrf.mxu0
    %v5274 = vadd.f32 0.0, %v5273
    %5275 = vmatmul.f32.gmra.mxu0 %v5074
    %v5276 = vpop.f32.mrf.mxu0
    %v5277 = vadd.f32 0.0, %v5276
    %5278 = vmatmul.f32.gmra.mxu0 %v5077
    %v5279 = vpop.f32.mrf.mxu0
    %v5280 = vadd.f32 0.0, %v5279
    %5281 = vmatmul.f32.gmra.mxu0 %v5080
    %v5282 = vpop.f32.mrf.mxu0
    %v5283 = vadd.f32 0.0, %v5282
    %5284 = vdwg.mxu0
    %5285 = vmatpush.msra.mxu0 0.0
    %5286 = vmatpush.msra.mxu0 0.0
    %5287 = vmatpush.msra.mxu0 0.0
    %5288 = vmatpush.msra.mxu0 0.0
    %5289 = vmatpush.msra.mxu0 0.0
    %5290 = vmatpush.msra.mxu0 0.0
    %5291 = vmatpush.msra.mxu0 0.0
    %5292 = vmatpush.msra.mxu0 0.0
    %5293 = vmatpush.msra.mxu0 0.0
    %5294 = vmatpush.msra.mxu0 0.0
    %5295 = vmatpush.msra.mxu0 0.0
    %5296 = vmatpush.msra.mxu0 0.0
    %5297 = vmatpush.msra.mxu0 0.0
    %5298 = vmatpush.msra.mxu0 0.0
    %5299 = vmatpush.msra.mxu0 0.0
    %5300 = vmatpush.msra.mxu0 %v4492
    %5301 = vmatmul.f32.gmra.mxu0 %v5071
    %v5302 = vpop.f32.mrf.mxu0
    %v5303 = vadd.f32 0.0, %v5302
    %5304 = vmatmul.f32.gmra.mxu0 %v5074
    %v5305 = vpop.f32.mrf.mxu0
    %v5306 = vadd.f32 0.0, %v5305
    %5307 = vmatmul.f32.gmra.mxu0 %v5077
    %v5308 = vpop.f32.mrf.mxu0
    %v5309 = vadd.f32 0.0, %v5308
    %5310 = vmatmul.f32.gmra.mxu0 %v5080
    %v5311 = vpop.f32.mrf.mxu0
    %v5312 = vadd.f32 0.0, %v5311
    %5313 = vdwg.mxu0
    %s5314 = scalar_lea.vmem [#allocation8], 132
    %v5315 = vld [vmem:[%s5314] ss:$8 sm:$0xf]
    %v5316 = vld [vmem:[%s5314] ss:$8 sm:$0xf0]
    %v5317 = vor.u32 %v5315, %v5316
    %s5318 = scalar_lea.vmem [#allocation8], 135
    %v5319 = vld [vmem:[%s5318] ss:$8 sm:$0xf]
    %v5320 = vld [vmem:[%s5318] ss:$8 sm:$0xf0]
    %v5321 = vor.u32 %v5319, %v5320
    %v5322 = vmul.f32 %v4726, %v5100
    %v5323 = vmul.f32 %v4727, %v5129
    %v5324 = vmul.f32 %v4728, %v5158
    %v5325 = vmul.f32 %v4729, %v5187
    %v5326 = vmul.f32 %v4730, %v5216
    %v5327 = vmul.f32 %v4731, %v5245
    %v5328 = vmul.f32 %v4732, %v5274
    %v5329 = vmul.f32 %v4733, %v5303
    %v5330 = vmul.f32 %v4734, %v5103
    %v5331 = vmul.f32 %v4735, %v5132
    %v5332 = vmul.f32 %v4736, %v5161
    %v5333 = vmul.f32 %v4737, %v5190
    %v5334 = vmul.f32 %v4738, %v5219
    %v5335 = vmul.f32 %v4739, %v5248
    %v5336 = vmul.f32 %v4740, %v5277
    %v5337 = vmul.f32 %v4741, %v5306
    %v5338 = vmul.f32 %v4742, %v5106
    %v5339 = vmul.f32 %v4743, %v5135
    %v5340 = vmul.f32 %v4744, %v5164
    %v5341 = vmul.f32 %v4745, %v5193
    %v5342 = vmul.f32 %v4746, %v5222
    %v5343 = vmul.f32 %v4747, %v5251
    %v5344 = vmul.f32 %v4748, %v5280
    %v5345 = vmul.f32 %v4749, %v5309
    %v5346 = vmul.f32 %v4750, %v5109
    %v5347 = vmul.f32 %v4751, %v5138
    %v5348 = vmul.f32 %v4752, %v5167
    %v5349 = vmul.f32 %v4753, %v5196
    %v5350 = vmul.f32 %v4754, %v5225
    %v5351 = vmul.f32 %v4755, %v5254
    %v5352 = vmul.f32 %v4756, %v5283
    %v5353 = vmul.f32 %v4757, %v5312
    %v5355 = vperm.slane %v5317, 0
    %v5356 = vperm.slane %v5317, 1
    %v5357 = vperm.slane %v5317, 2
    %v5358 = vperm.slane %v5317, 3
    %v5359 = vperm.slane %v5317, 4
    %v5360 = vperm.slane %v5317, 5
    %v5361 = vperm.slane %v5317, 6
    %v5362 = vperm.slane %v5317, 7
    %v5371 = vmul.f32 %v5322, %v5355
    %v5372 = vmul.f32 %v5323, %v5356
    %v5373 = vmul.f32 %v5324, %v5357
    %v5374 = vmul.f32 %v5325, %v5358
    %v5375 = vmul.f32 %v5326, %v5359
    %v5376 = vmul.f32 %v5327, %v5360
    %v5377 = vmul.f32 %v5328, %v5361
    %v5378 = vmul.f32 %v5329, %v5362
    %v5379 = vmul.f32 %v5330, %v5355
    %v5380 = vmul.f32 %v5331, %v5356
    %v5381 = vmul.f32 %v5332, %v5357
    %v5382 = vmul.f32 %v5333, %v5358
    %v5383 = vmul.f32 %v5334, %v5359
    %v5384 = vmul.f32 %v5335, %v5360
    %v5385 = vmul.f32 %v5336, %v5361
    %v5386 = vmul.f32 %v5337, %v5362
    %v5387 = vmul.f32 %v5338, %v5355
    %v5388 = vmul.f32 %v5339, %v5356
    %v5389 = vmul.f32 %v5340, %v5357
    %v5390 = vmul.f32 %v5341, %v5358
    %v5391 = vmul.f32 %v5342, %v5359
    %v5392 = vmul.f32 %v5343, %v5360
    %v5393 = vmul.f32 %v5344, %v5361
    %v5394 = vmul.f32 %v5345, %v5362
    %v5395 = vmul.f32 %v5346, %v5355
    %v5396 = vmul.f32 %v5347, %v5356
    %v5397 = vmul.f32 %v5348, %v5357
    %v5398 = vmul.f32 %v5349, %v5358
    %v5399 = vmul.f32 %v5350, %v5359
    %v5400 = vmul.f32 %v5351, %v5360
    %v5401 = vmul.f32 %v5352, %v5361
    %v5402 = vmul.f32 %v5353, %v5362
    %v5404 = vperm.slane %v5321, 0
    %v5405 = vperm.slane %v5321, 1
    %v5406 = vperm.slane %v5321, 2
    %v5407 = vperm.slane %v5321, 3
    %v5408 = vperm.slane %v5321, 4
    %v5409 = vperm.slane %v5321, 5
    %v5410 = vperm.slane %v5321, 6
    %v5411 = vperm.slane %v5321, 7
    %v5420 = vadd.f32 %v5371, %v5404
    %v5421 = vadd.f32 %v5372, %v5405
    %v5422 = vadd.f32 %v5373, %v5406
    %v5423 = vadd.f32 %v5374, %v5407
    %v5424 = vadd.f32 %v5375, %v5408
    %v5425 = vadd.f32 %v5376, %v5409
    %v5426 = vadd.f32 %v5377, %v5410
    %v5427 = vadd.f32 %v5378, %v5411
    %v5428 = vadd.f32 %v5379, %v5404
    %v5429 = vadd.f32 %v5380, %v5405
    %v5430 = vadd.f32 %v5381, %v5406
    %v5431 = vadd.f32 %v5382, %v5407
    %v5432 = vadd.f32 %v5383, %v5408
    %v5433 = vadd.f32 %v5384, %v5409
    %v5434 = vadd.f32 %v5385, %v5410
    %v5435 = vadd.f32 %v5386, %v5411
    %v5436 = vadd.f32 %v5387, %v5404
    %v5437 = vadd.f32 %v5388, %v5405
    %v5438 = vadd.f32 %v5389, %v5406
    %v5439 = vadd.f32 %v5390, %v5407
    %v5440 = vadd.f32 %v5391, %v5408
    %v5441 = vadd.f32 %v5392, %v5409
    %v5442 = vadd.f32 %v5393, %v5410
    %v5443 = vadd.f32 %v5394, %v5411
    %v5444 = vadd.f32 %v5395, %v5404
    %v5445 = vadd.f32 %v5396, %v5405
    %v5446 = vadd.f32 %v5397, %v5406
    %v5447 = vadd.f32 %v5398, %v5407
    %v5448 = vadd.f32 %v5399, %v5408
    %v5449 = vadd.f32 %v5400, %v5409
    %v5450 = vadd.f32 %v5401, %v5410
    %v5451 = vadd.f32 %v5402, %v5411
    %vm5452 = vcmp.gt.f32.partialorder %v5420, 0.0
    %vm5453 = vcmp.gt.f32.partialorder %v5421, 0.0
    %vm5454 = vcmp.gt.f32.partialorder %v5422, 0.0
    %vm5455 = vcmp.gt.f32.partialorder %v5423, 0.0
    %vm5456 = vcmp.gt.f32.partialorder %v5424, 0.0
    %vm5457 = vcmp.gt.f32.partialorder %v5425, 0.0
    %vm5458 = vcmp.gt.f32.partialorder %v5426, 0.0
    %vm5459 = vcmp.gt.f32.partialorder %v5427, 0.0
    %vm5460 = vcmp.gt.f32.partialorder %v5428, 0.0
    %vm5461 = vcmp.gt.f32.partialorder %v5429, 0.0
    %vm5462 = vcmp.gt.f32.partialorder %v5430, 0.0
    %vm5463 = vcmp.gt.f32.partialorder %v5431, 0.0
    %vm5464 = vcmp.gt.f32.partialorder %v5432, 0.0
    %vm5465 = vcmp.gt.f32.partialorder %v5433, 0.0
    %vm5466 = vcmp.gt.f32.partialorder %v5434, 0.0
    %vm5467 = vcmp.gt.f32.partialorder %v5435, 0.0
    %vm5468 = vcmp.gt.f32.partialorder %v5436, 0.0
    %vm5469 = vcmp.gt.f32.partialorder %v5437, 0.0
    %vm5470 = vcmp.gt.f32.partialorder %v5438, 0.0
    %vm5471 = vcmp.gt.f32.partialorder %v5439, 0.0
    %vm5472 = vcmp.gt.f32.partialorder %v5440, 0.0
    %vm5473 = vcmp.gt.f32.partialorder %v5441, 0.0
    %vm5474 = vcmp.gt.f32.partialorder %v5442, 0.0
    %vm5475 = vcmp.gt.f32.partialorder %v5443, 0.0
    %vm5476 = vcmp.gt.f32.partialorder %v5444, 0.0
    %vm5477 = vcmp.gt.f32.partialorder %v5445, 0.0
    %vm5478 = vcmp.gt.f32.partialorder %v5446, 0.0
    %vm5479 = vcmp.gt.f32.partialorder %v5447, 0.0
    %vm5480 = vcmp.gt.f32.partialorder %v5448, 0.0
    %vm5481 = vcmp.gt.f32.partialorder %v5449, 0.0
    %vm5482 = vcmp.gt.f32.partialorder %v5450, 0.0
    %vm5483 = vcmp.gt.f32.partialorder %v5451, 0.0
    %v5484 = vmin.f32 %v5420, 0.0
    %v5485 = vmin.f32 %v5421, 0.0
    %v5486 = vmin.f32 %v5422, 0.0
    %v5487 = vmin.f32 %v5423, 0.0
    %v5488 = vmin.f32 %v5424, 0.0
    %v5489 = vmin.f32 %v5425, 0.0
    %v5490 = vmin.f32 %v5426, 0.0
    %v5491 = vmin.f32 %v5427, 0.0
    %v5492 = vmin.f32 %v5428, 0.0
    %v5493 = vmin.f32 %v5429, 0.0
    %v5494 = vmin.f32 %v5430, 0.0
    %v5495 = vmin.f32 %v5431, 0.0
    %v5496 = vmin.f32 %v5432, 0.0
    %v5497 = vmin.f32 %v5433, 0.0
    %v5498 = vmin.f32 %v5434, 0.0
    %v5499 = vmin.f32 %v5435, 0.0
    %v5500 = vmin.f32 %v5436, 0.0
    %v5501 = vmin.f32 %v5437, 0.0
    %v5502 = vmin.f32 %v5438, 0.0
    %v5503 = vmin.f32 %v5439, 0.0
    %v5504 = vmin.f32 %v5440, 0.0
    %v5505 = vmin.f32 %v5441, 0.0
    %v5506 = vmin.f32 %v5442, 0.0
    %v5507 = vmin.f32 %v5443, 0.0
    %v5508 = vmin.f32 %v5444, 0.0
    %v5509 = vmin.f32 %v5445, 0.0
    %v5510 = vmin.f32 %v5446, 0.0
    %v5511 = vmin.f32 %v5447, 0.0
    %v5512 = vmin.f32 %v5448, 0.0
    %v5513 = vmin.f32 %v5449, 0.0
    %v5514 = vmin.f32 %v5450, 0.0
    %v5515 = vmin.f32 %v5451, 0.0
    %v5516 = vmul.f32 %v5484, 1.442695
    %v5517 = vpow.pop %v5516
    %v5518 = vmul.f32 %v5485, 1.442695
    %v5519 = vpow.pop %v5518
    %v5520 = vmul.f32 %v5486, 1.442695
    %v5521 = vpow.pop %v5520
    %v5522 = vmul.f32 %v5487, 1.442695
    %v5523 = vpow.pop %v5522
    %v5524 = vmul.f32 %v5488, 1.442695
    %v5525 = vpow.pop %v5524
    %v5526 = vmul.f32 %v5489, 1.442695
    %v5527 = vpow.pop %v5526
    %v5528 = vmul.f32 %v5490, 1.442695
    %v5529 = vpow.pop %v5528
    %v5530 = vmul.f32 %v5491, 1.442695
    %v5531 = vpow.pop %v5530
    %v5532 = vmul.f32 %v5492, 1.442695
    %v5533 = vpow.pop %v5532
    %v5534 = vmul.f32 %v5493, 1.442695
    %v5535 = vpow.pop %v5534
    %v5536 = vmul.f32 %v5494, 1.442695
    %v5537 = vpow.pop %v5536
    %v5538 = vmul.f32 %v5495, 1.442695
    %v5539 = vpow.pop %v5538
    %v5540 = vmul.f32 %v5496, 1.442695
    %v5541 = vpow.pop %v5540
    %v5542 = vmul.f32 %v5497, 1.442695
    %v5543 = vpow.pop %v5542
    %v5544 = vmul.f32 %v5498, 1.442695
    %v5545 = vpow.pop %v5544
    %v5546 = vmul.f32 %v5499, 1.442695
    %v5547 = vpow.pop %v5546
    %v5548 = vmul.f32 %v5500, 1.442695
    %v5549 = vpow.pop %v5548
    %v5550 = vmul.f32 %v5501, 1.442695
    %v5551 = vpow.pop %v5550
    %v5552 = vmul.f32 %v5502, 1.442695
    %v5553 = vpow.pop %v5552
    %v5554 = vmul.f32 %v5503, 1.442695
    %v5555 = vpow.pop %v5554
    %v5556 = vmul.f32 %v5504, 1.442695
    %v5557 = vpow.pop %v5556
    %v5558 = vmul.f32 %v5505, 1.442695
    %v5559 = vpow.pop %v5558
    %v5560 = vmul.f32 %v5506, 1.442695
    %v5561 = vpow.pop %v5560
    %v5562 = vmul.f32 %v5507, 1.442695
    %v5563 = vpow.pop %v5562
    %v5564 = vmul.f32 %v5508, 1.442695
    %v5565 = vpow.pop %v5564
    %v5566 = vmul.f32 %v5509, 1.442695
    %v5567 = vpow.pop %v5566
    %v5568 = vmul.f32 %v5510, 1.442695
    %v5569 = vpow.pop %v5568
    %v5570 = vmul.f32 %v5511, 1.442695
    %v5571 = vpow.pop %v5570
    %v5572 = vmul.f32 %v5512, 1.442695
    %v5573 = vpow.pop %v5572
    %v5574 = vmul.f32 %v5513, 1.442695
    %v5575 = vpow.pop %v5574
    %v5576 = vmul.f32 %v5514, 1.442695
    %v5577 = vpow.pop %v5576
    %v5578 = vmul.f32 %v5515, 1.442695
    %v5579 = vpow.pop %v5578
    %v5580 = vsub.f32 %v5517, 1.0
    %v5581 = vsub.f32 %v5519, 1.0
    %v5582 = vsub.f32 %v5521, 1.0
    %v5583 = vsub.f32 %v5523, 1.0
    %v5584 = vsub.f32 %v5525, 1.0
    %v5585 = vsub.f32 %v5527, 1.0
    %v5586 = vsub.f32 %v5529, 1.0
    %v5587 = vsub.f32 %v5531, 1.0
    %v5588 = vsub.f32 %v5533, 1.0
    %v5589 = vsub.f32 %v5535, 1.0
    %v5590 = vsub.f32 %v5537, 1.0
    %v5591 = vsub.f32 %v5539, 1.0
    %v5592 = vsub.f32 %v5541, 1.0
    %v5593 = vsub.f32 %v5543, 1.0
    %v5594 = vsub.f32 %v5545, 1.0
    %v5595 = vsub.f32 %v5547, 1.0
    %v5596 = vsub.f32 %v5549, 1.0
    %v5597 = vsub.f32 %v5551, 1.0
    %v5598 = vsub.f32 %v5553, 1.0
    %v5599 = vsub.f32 %v5555, 1.0
    %v5600 = vsub.f32 %v5557, 1.0
    %v5601 = vsub.f32 %v5559, 1.0
    %v5602 = vsub.f32 %v5561, 1.0
    %v5603 = vsub.f32 %v5563, 1.0
    %v5604 = vsub.f32 %v5565, 1.0
    %v5605 = vsub.f32 %v5567, 1.0
    %v5606 = vsub.f32 %v5569, 1.0
    %v5607 = vsub.f32 %v5571, 1.0
    %v5608 = vsub.f32 %v5573, 1.0
    %v5609 = vsub.f32 %v5575, 1.0
    %v5610 = vsub.f32 %v5577, 1.0
    %v5611 = vsub.f32 %v5579, 1.0
    %v5612 = vsel %vm5452, %v5420, %v5580
    %v5613 = vsel %vm5453, %v5421, %v5581
    %v5614 = vsel %vm5454, %v5422, %v5582
    %v5615 = vsel %vm5455, %v5423, %v5583
    %v5616 = vsel %vm5456, %v5424, %v5584
    %v5617 = vsel %vm5457, %v5425, %v5585
    %v5618 = vsel %vm5458, %v5426, %v5586
    %v5619 = vsel %vm5459, %v5427, %v5587
    %v5620 = vsel %vm5460, %v5428, %v5588
    %v5621 = vsel %vm5461, %v5429, %v5589
    %v5622 = vsel %vm5462, %v5430, %v5590
    %v5623 = vsel %vm5463, %v5431, %v5591
    %v5624 = vsel %vm5464, %v5432, %v5592
    %v5625 = vsel %vm5465, %v5433, %v5593
    %v5626 = vsel %vm5466, %v5434, %v5594
    %v5627 = vsel %vm5467, %v5435, %v5595
    %v5628 = vsel %vm5468, %v5436, %v5596
    %v5629 = vsel %vm5469, %v5437, %v5597
    %v5630 = vsel %vm5470, %v5438, %v5598
    %v5631 = vsel %vm5471, %v5439, %v5599
    %v5632 = vsel %vm5472, %v5440, %v5600
    %v5633 = vsel %vm5473, %v5441, %v5601
    %v5634 = vsel %vm5474, %v5442, %v5602
    %v5635 = vsel %vm5475, %v5443, %v5603
    %v5636 = vsel %vm5476, %v5444, %v5604
    %v5637 = vsel %vm5477, %v5445, %v5605
    %v5638 = vsel %vm5478, %v5446, %v5606
    %v5639 = vsel %vm5479, %v5447, %v5607
    %v5640 = vsel %vm5480, %v5448, %v5608
    %v5641 = vsel %vm5481, %v5449, %v5609
    %v5642 = vsel %vm5482, %v5450, %v5610
    %v5643 = vsel %vm5483, %v5451, %v5611
    %v5644 = vld [vmem:[#allocation7 + $0xc80] sm:$0xff]
    %v5645 = vld [vmem:[#allocation7 + $0xca0] sm:$0xff]
    %v5646 = vld [vmem:[#allocation7 + $0xcc0] sm:$0xff]
    %v5647 = vld [vmem:[#allocation7 + $0xce0] sm:$0xff]
    %v5648 = vld [vmem:[#allocation7 + $0xd00] sm:$0xff]
    %v5649 = vld [vmem:[#allocation7 + $0xd20] sm:$0xff]
    %v5650 = vld [vmem:[#allocation7 + $0xd40] sm:$0xff]
    %v5651 = vld [vmem:[#allocation7 + $0xd60] sm:$0xff]
    %v5652 = vld [vmem:[#allocation7 + $0xd80] sm:$0xff]
    %v5653 = vld [vmem:[#allocation7 + $0xda0] sm:$0xff]
    %v5654 = vld [vmem:[#allocation7 + $0xdc0] sm:$0xff]
    %v5655 = vld [vmem:[#allocation7 + $0xde0] sm:$0xff]
    %v5656 = vld [vmem:[#allocation7 + $0xe00] sm:$0xff]
    %v5657 = vld [vmem:[#allocation7 + $0xe20] sm:$0xff]
    %v5658 = vld [vmem:[#allocation7 + $0xe40] sm:$0xff]
    %v5659 = vld [vmem:[#allocation7 + $0xe60] sm:$0xff]
    %v5660 = vld [vmem:[#allocation7 + $0xe80] sm:$0xff]
    %v5661 = vld [vmem:[#allocation7 + $0xea0] sm:$0xff]
    %v5662 = vld [vmem:[#allocation7 + $0xec0] sm:$0xff]
    %v5663 = vld [vmem:[#allocation7 + $0xee0] sm:$0xff]
    %v5664 = vld [vmem:[#allocation7 + $0xf00] sm:$0xff]
    %v5665 = vld [vmem:[#allocation7 + $0xf20] sm:$0xff]
    %v5666 = vld [vmem:[#allocation7 + $0xf40] sm:$0xff]
    %v5667 = vld [vmem:[#allocation7 + $0xf60] sm:$0xff]
    %v5668 = vld [vmem:[#allocation7 + $0xf80] sm:$0xff]
    %v5669 = vld [vmem:[#allocation7 + $0xfa0] sm:$0xff]
    %v5670 = vld [vmem:[#allocation7 + $0xfc0] sm:$0xff]
    %v5671 = vld [vmem:[#allocation7 + $0xfe0] sm:$0xff]
    %v5672 = vld [vmem:[#allocation7 + $0x1000] sm:$0xff]
    %v5673 = vld [vmem:[#allocation7 + $0x1020] sm:$0xff]
    %v5674 = vld [vmem:[#allocation7 + $0x1040] sm:$0xff]
    %v5675 = vld [vmem:[#allocation7 + $0x1060] sm:$0xff]
    %v5676 = vld [vmem:[#allocation7 + $0x1080] sm:$0xff]
    %v5677 = vld [vmem:[#allocation7 + $0x10a0] sm:$0xff]
    %v5678 = vld [vmem:[#allocation7 + $0x10c0] sm:$0xff]
    %v5679 = vld [vmem:[#allocation7 + $0x10e0] sm:$0xff]
    %v5680 = vld [vmem:[#allocation7 + $0x1100] sm:$0xff]
    %v5681 = vld [vmem:[#allocation7 + $0x1120] sm:$0xff]
    %v5682 = vld [vmem:[#allocation7 + $0x1140] sm:$0xff]
    %v5683 = vld [vmem:[#allocation7 + $0x1160] sm:$0xff]
    %v5684 = vld [vmem:[#allocation7 + $0x1180] sm:$0xff]
    %v5685 = vld [vmem:[#allocation7 + $0x11a0] sm:$0xff]
    %v5686 = vld [vmem:[#allocation7 + $0x11c0] sm:$0xff]
    %v5687 = vld [vmem:[#allocation7 + $0x11e0] sm:$0xff]
    %v5688 = vld [vmem:[#allocation7 + $0x1200] sm:$0xff]
    %v5689 = vld [vmem:[#allocation7 + $0x1220] sm:$0xff]
    %v5690 = vld [vmem:[#allocation7 + $0x1240] sm:$0xff]
    %v5691 = vld [vmem:[#allocation7 + $0x1260] sm:$0xff]
    %v5692 = vld [vmem:[#allocation7 + $0x1280] sm:$0xff]
    %v5693 = vld [vmem:[#allocation7 + $0x12a0] sm:$0xff]
    %v5694 = vld [vmem:[#allocation7 + $0x12c0] sm:$0xff]
    %v5695 = vld [vmem:[#allocation7 + $0x12e0] sm:$0xff]
    %v5696 = vld [vmem:[#allocation7 + $0x1300] sm:$0xff]
    %v5697 = vld [vmem:[#allocation7 + $0x1320] sm:$0xff]
    %v5698 = vld [vmem:[#allocation7 + $0x1340] sm:$0xff]
    %v5699 = vld [vmem:[#allocation7 + $0x1360] sm:$0xff]
    %v5700 = vld [vmem:[#allocation7 + $0x1380] sm:$0xff]
    %v5701 = vld [vmem:[#allocation7 + $0x13a0] sm:$0xff]
    %v5702 = vld [vmem:[#allocation7 + $0x13c0] sm:$0xff]
    %v5703 = vld [vmem:[#allocation7 + $0x13e0] sm:$0xff]
    %v5704 = vld [vmem:[#allocation7 + $0x1400] sm:$0xff]
    %v5705 = vld [vmem:[#allocation7 + $0x1420] sm:$0xff]
    %v5706 = vld [vmem:[#allocation7 + $0x1440] sm:$0xff]
    %v5707 = vld [vmem:[#allocation7 + $0x1460] sm:$0xff]
    %v5708 = vld [vmem:[#allocation7 + $0x1480] sm:$0xff]
    %v5709 = vld [vmem:[#allocation7 + $0x14a0] sm:$0xff]
    %v5710 = vld [vmem:[#allocation7 + $0x14c0] sm:$0xff]
    %v5711 = vld [vmem:[#allocation7 + $0x14e0] sm:$0xff]
    %v5712 = vld [vmem:[#allocation7 + $0x1500] sm:$0xff]
    %v5713 = vld [vmem:[#allocation7 + $0x1520] sm:$0xff]
    %v5714 = vld [vmem:[#allocation7 + $0x1540] sm:$0xff]
    %v5715 = vld [vmem:[#allocation7 + $0x1560] sm:$0xff]
    %v5716 = vld [vmem:[#allocation7 + $0x1580] sm:$0xff]
    %v5717 = vld [vmem:[#allocation7 + $0x15a0] sm:$0xff]
    %v5718 = vld [vmem:[#allocation7 + $0x15c0] sm:$0xff]
    %v5719 = vld [vmem:[#allocation7 + $0x15e0] sm:$0xff]
    %v5720 = vld [vmem:[#allocation7 + $0x1600] sm:$0xff]
    %v5721 = vld [vmem:[#allocation7 + $0x1620] sm:$0xff]
    %v5722 = vld [vmem:[#allocation7 + $0x1640] sm:$0xff]
    %v5723 = vld [vmem:[#allocation7 + $0x1660] sm:$0xff]
    %v5724 = vld [vmem:[#allocation7 + $0x1680] sm:$0xff]
    %v5725 = vld [vmem:[#allocation7 + $0x16a0] sm:$0xff]
    %v5726 = vld [vmem:[#allocation7 + $0x16c0] sm:$0xff]
    %v5727 = vld [vmem:[#allocation7 + $0x16e0] sm:$0xff]
    %v5728 = vld [vmem:[#allocation7 + $0x1700] sm:$0xff]
    %v5729 = vld [vmem:[#allocation7 + $0x1720] sm:$0xff]
    %v5730 = vld [vmem:[#allocation7 + $0x1740] sm:$0xff]
    %v5731 = vld [vmem:[#allocation7 + $0x1760] sm:$0xff]
    %v5732 = vld [vmem:[#allocation7 + $0x1780] sm:$0xff]
    %v5733 = vld [vmem:[#allocation7 + $0x17a0] sm:$0xff]
    %v5734 = vld [vmem:[#allocation7 + $0x17c0] sm:$0xff]
    %v5735 = vld [vmem:[#allocation7 + $0x17e0] sm:$0xff]
    %v5736 = vld [vmem:[#allocation7 + $0x1800] sm:$0xff]
    %v5737 = vld [vmem:[#allocation7 + $0x1820] sm:$0xff]
    %v5738 = vld [vmem:[#allocation7 + $0x1840] sm:$0xff]
    %v5739 = vld [vmem:[#allocation7 + $0x1860] sm:$0xff]
    %v5740 = vld [vmem:[#allocation7 + $0x1880] sm:$0xff]
    %v5741 = vld [vmem:[#allocation7 + $0x18a0] sm:$0xff]
    %v5742 = vld [vmem:[#allocation7 + $0x18c0] sm:$0xff]
    %v5743 = vld [vmem:[#allocation7 + $0x18e0] sm:$0xff]
    %v5744 = vld [vmem:[#allocation7 + $0x1900] sm:$0xff]
    %v5745 = vld [vmem:[#allocation7 + $0x1920] sm:$0xff]
    %v5746 = vld [vmem:[#allocation7 + $0x1940] sm:$0xff]
    %v5747 = vld [vmem:[#allocation7 + $0x1960] sm:$0xff]
    %v5748 = vld [vmem:[#allocation7 + $0x1980] sm:$0xff]
    %v5749 = vld [vmem:[#allocation7 + $0x19a0] sm:$0xff]
    %v5750 = vld [vmem:[#allocation7 + $0x19c0] sm:$0xff]
    %v5751 = vld [vmem:[#allocation7 + $0x19e0] sm:$0xff]
    %v5752 = vld [vmem:[#allocation7 + $0x1a00] sm:$0xff]
    %v5753 = vld [vmem:[#allocation7 + $0x1a20] sm:$0xff]
    %v5754 = vld [vmem:[#allocation7 + $0x1a40] sm:$0xff]
    %v5755 = vld [vmem:[#allocation7 + $0x1a60] sm:$0xff]
    %v5756 = vld [vmem:[#allocation7 + $0x1a80] sm:$0xff]
    %v5757 = vld [vmem:[#allocation7 + $0x1aa0] sm:$0xff]
    %v5758 = vld [vmem:[#allocation7 + $0x1ac0] sm:$0xff]
    %v5759 = vld [vmem:[#allocation7 + $0x1ae0] sm:$0xff]
    %v5760 = vld [vmem:[#allocation7 + $0x1b00] sm:$0xff]
    %v5761 = vld [vmem:[#allocation7 + $0x1b20] sm:$0xff]
    %v5762 = vld [vmem:[#allocation7 + $0x1b40] sm:$0xff]
    %v5763 = vld [vmem:[#allocation7 + $0x1b60] sm:$0xff]
    %v5764 = vld [vmem:[#allocation7 + $0x1b80] sm:$0xff]
    %v5765 = vld [vmem:[#allocation7 + $0x1ba0] sm:$0xff]
    %v5766 = vld [vmem:[#allocation7 + $0x1bc0] sm:$0xff]
    %v5767 = vld [vmem:[#allocation7 + $0x1be0] sm:$0xff]
    %v5768 = vld [vmem:[#allocation7 + $0x1c00] sm:$0xff]
    %v5769 = vld [vmem:[#allocation7 + $0x1c20] sm:$0xff]
    %v5770 = vld [vmem:[#allocation7 + $0x1c40] sm:$0xff]
    %v5771 = vld [vmem:[#allocation7 + $0x1c60] sm:$0xff]
    %s5772 = scalar_lea.vmem [#allocation8], 129
    %v5773 = vld [vmem:[%s5772] ss:$8 sm:$0x3]
    %v5774 = vpack.c.bf16 %v5620, %v5612
    %v5775 = vpack.c.bf16 %v5621, %v5613
    %v5776 = vpack.c.bf16 %v5622, %v5614
    %v5777 = vpack.c.bf16 %v5623, %v5615
    %v5778 = vpack.c.bf16 %v5624, %v5616
    %v5779 = vpack.c.bf16 %v5625, %v5617
    %v5780 = vpack.c.bf16 %v5626, %v5618
    %v5781 = vpack.c.bf16 %v5627, %v5619
    %v5782 = vpack.c.bf16 %v5636, %v5628
    %v5783 = vpack.c.bf16 %v5637, %v5629
    %v5784 = vpack.c.bf16 %v5638, %v5630
    %v5785 = vpack.c.bf16 %v5639, %v5631
    %v5786 = vpack.c.bf16 %v5640, %v5632
    %v5787 = vpack.c.bf16 %v5641, %v5633
    %v5788 = vpack.c.bf16 %v5642, %v5634
    %v5789 = vpack.c.bf16 %v5643, %v5635
    %v5791 = vperm.slane %v5773, 0
    %v5792 = vperm.slane %v5773, 1
    %v5923 = vunpack.c.l.b16 %v5644
    %v5924 = vunpack.c.h.b16 %v5644
    %v5925 = vunpack.c.l.b16 %v5645
    %v5926 = vunpack.c.h.b16 %v5645
    %v5927 = vunpack.c.l.b16 %v5646
    %v5928 = vunpack.c.h.b16 %v5646
    %v5929 = vunpack.c.l.b16 %v5647
    %v5930 = vunpack.c.h.b16 %v5647
    %v5931 = vunpack.c.l.b16 %v5648
    %v5932 = vunpack.c.h.b16 %v5648
    %v5933 = vunpack.c.l.b16 %v5649
    %v5934 = vunpack.c.h.b16 %v5649
    %v5935 = vunpack.c.l.b16 %v5650
    %v5936 = vunpack.c.h.b16 %v5650
    %v5937 = vunpack.c.l.b16 %v5651
    %v5938 = vunpack.c.h.b16 %v5651
    %v5939 = vunpack.c.l.b16 %v5652
    %v5940 = vunpack.c.h.b16 %v5652
    %v5941 = vunpack.c.l.b16 %v5653
    %v5942 = vunpack.c.h.b16 %v5653
    %v5943 = vunpack.c.l.b16 %v5654
    %v5944 = vunpack.c.h.b16 %v5654
    %v5945 = vunpack.c.l.b16 %v5655
    %v5946 = vunpack.c.h.b16 %v5655
    %v5947 = vunpack.c.l.b16 %v5656
    %v5948 = vunpack.c.h.b16 %v5656
    %v5949 = vunpack.c.l.b16 %v5657
    %v5950 = vunpack.c.h.b16 %v5657
    %v5951 = vunpack.c.l.b16 %v5658
    %v5952 = vunpack.c.h.b16 %v5658
    %v5953 = vunpack.c.l.b16 %v5659
    %v5954 = vunpack.c.h.b16 %v5659
    %v5955 = vunpack.c.l.b16 %v5660
    %v5956 = vunpack.c.h.b16 %v5660
    %v5957 = vunpack.c.l.b16 %v5661
    %v5958 = vunpack.c.h.b16 %v5661
    %v5959 = vunpack.c.l.b16 %v5662
    %v5960 = vunpack.c.h.b16 %v5662
    %v5961 = vunpack.c.l.b16 %v5663
    %v5962 = vunpack.c.h.b16 %v5663
    %v5963 = vunpack.c.l.b16 %v5664
    %v5964 = vunpack.c.h.b16 %v5664
    %v5965 = vunpack.c.l.b16 %v5665
    %v5966 = vunpack.c.h.b16 %v5665
    %v5967 = vunpack.c.l.b16 %v5666
    %v5968 = vunpack.c.h.b16 %v5666
    %v5969 = vunpack.c.l.b16 %v5667
    %v5970 = vunpack.c.h.b16 %v5667
    %v5971 = vunpack.c.l.b16 %v5668
    %v5972 = vunpack.c.h.b16 %v5668
    %v5973 = vunpack.c.l.b16 %v5669
    %v5974 = vunpack.c.h.b16 %v5669
    %v5975 = vunpack.c.l.b16 %v5670
    %v5976 = vunpack.c.h.b16 %v5670
    %v5977 = vunpack.c.l.b16 %v5671
    %v5978 = vunpack.c.h.b16 %v5671
    %v5979 = vunpack.c.l.b16 %v5672
    %v5980 = vunpack.c.h.b16 %v5672
    %v5981 = vunpack.c.l.b16 %v5673
    %v5982 = vunpack.c.h.b16 %v5673
    %v5983 = vunpack.c.l.b16 %v5674
    %v5984 = vunpack.c.h.b16 %v5674
    %v5985 = vunpack.c.l.b16 %v5675
    %v5986 = vunpack.c.h.b16 %v5675
    %v5987 = vunpack.c.l.b16 %v5676
    %v5988 = vunpack.c.h.b16 %v5676
    %v5989 = vunpack.c.l.b16 %v5677
    %v5990 = vunpack.c.h.b16 %v5677
    %v5991 = vunpack.c.l.b16 %v5678
    %v5992 = vunpack.c.h.b16 %v5678
    %v5993 = vunpack.c.l.b16 %v5679
    %v5994 = vunpack.c.h.b16 %v5679
    %v5995 = vunpack.c.l.b16 %v5680
    %v5996 = vunpack.c.h.b16 %v5680
    %v5997 = vunpack.c.l.b16 %v5681
    %v5998 = vunpack.c.h.b16 %v5681
    %v5999 = vunpack.c.l.b16 %v5682
    %v6000 = vunpack.c.h.b16 %v5682
    %v6001 = vunpack.c.l.b16 %v5683
    %v6002 = vunpack.c.h.b16 %v5683
    %v6003 = vunpack.c.l.b16 %v5684
    %v6004 = vunpack.c.h.b16 %v5684
    %v6005 = vunpack.c.l.b16 %v5685
    %v6006 = vunpack.c.h.b16 %v5685
    %v6007 = vunpack.c.l.b16 %v5686
    %v6008 = vunpack.c.h.b16 %v5686
    %v6009 = vunpack.c.l.b16 %v5687
    %v6010 = vunpack.c.h.b16 %v5687
    %v6011 = vunpack.c.l.b16 %v5688
    %v6012 = vunpack.c.h.b16 %v5688
    %v6013 = vunpack.c.l.b16 %v5689
    %v6014 = vunpack.c.h.b16 %v5689
    %v6015 = vunpack.c.l.b16 %v5690
    %v6016 = vunpack.c.h.b16 %v5690
    %v6017 = vunpack.c.l.b16 %v5691
    %v6018 = vunpack.c.h.b16 %v5691
    %v6019 = vunpack.c.l.b16 %v5692
    %v6020 = vunpack.c.h.b16 %v5692
    %v6021 = vunpack.c.l.b16 %v5693
    %v6022 = vunpack.c.h.b16 %v5693
    %v6023 = vunpack.c.l.b16 %v5694
    %v6024 = vunpack.c.h.b16 %v5694
    %v6025 = vunpack.c.l.b16 %v5695
    %v6026 = vunpack.c.h.b16 %v5695
    %v6027 = vunpack.c.l.b16 %v5696
    %v6028 = vunpack.c.h.b16 %v5696
    %v6029 = vunpack.c.l.b16 %v5697
    %v6030 = vunpack.c.h.b16 %v5697
    %v6031 = vunpack.c.l.b16 %v5698
    %v6032 = vunpack.c.h.b16 %v5698
    %v6033 = vunpack.c.l.b16 %v5699
    %v6034 = vunpack.c.h.b16 %v5699
    %v6035 = vunpack.c.l.b16 %v5700
    %v6036 = vunpack.c.h.b16 %v5700
    %v6037 = vunpack.c.l.b16 %v5701
    %v6038 = vunpack.c.h.b16 %v5701
    %v6039 = vunpack.c.l.b16 %v5702
    %v6040 = vunpack.c.h.b16 %v5702
    %v6041 = vunpack.c.l.b16 %v5703
    %v6042 = vunpack.c.h.b16 %v5703
    %v6043 = vunpack.c.l.b16 %v5704
    %v6044 = vunpack.c.h.b16 %v5704
    %v6045 = vunpack.c.l.b16 %v5705
    %v6046 = vunpack.c.h.b16 %v5705
    %v6047 = vunpack.c.l.b16 %v5706
    %v6048 = vunpack.c.h.b16 %v5706
    %v6049 = vunpack.c.l.b16 %v5707
    %v6050 = vunpack.c.h.b16 %v5707
    %v6051 = vunpack.c.l.b16 %v5708
    %v6052 = vunpack.c.h.b16 %v5708
    %v6053 = vunpack.c.l.b16 %v5709
    %v6054 = vunpack.c.h.b16 %v5709
    %v6055 = vunpack.c.l.b16 %v5710
    %v6056 = vunpack.c.h.b16 %v5710
    %v6057 = vunpack.c.l.b16 %v5711
    %v6058 = vunpack.c.h.b16 %v5711
    %v6059 = vunpack.c.l.b16 %v5712
    %v6060 = vunpack.c.h.b16 %v5712
    %v6061 = vunpack.c.l.b16 %v5713
    %v6062 = vunpack.c.h.b16 %v5713
    %v6063 = vunpack.c.l.b16 %v5714
    %v6064 = vunpack.c.h.b16 %v5714
    %v6065 = vunpack.c.l.b16 %v5715
    %v6066 = vunpack.c.h.b16 %v5715
    %v6067 = vunpack.c.l.b16 %v5716
    %v6068 = vunpack.c.h.b16 %v5716
    %v6069 = vunpack.c.l.b16 %v5717
    %v6070 = vunpack.c.h.b16 %v5717
    %v6071 = vunpack.c.l.b16 %v5718
    %v6072 = vunpack.c.h.b16 %v5718
    %v6073 = vunpack.c.l.b16 %v5719
    %v6074 = vunpack.c.h.b16 %v5719
    %v6075 = vunpack.c.l.b16 %v5720
    %v6076 = vunpack.c.h.b16 %v5720
    %v6077 = vunpack.c.l.b16 %v5721
    %v6078 = vunpack.c.h.b16 %v5721
    %v6079 = vunpack.c.l.b16 %v5722
    %v6080 = vunpack.c.h.b16 %v5722
    %v6081 = vunpack.c.l.b16 %v5723
    %v6082 = vunpack.c.h.b16 %v5723
    %v6083 = vunpack.c.l.b16 %v5724
    %v6084 = vunpack.c.h.b16 %v5724
    %v6085 = vunpack.c.l.b16 %v5725
    %v6086 = vunpack.c.h.b16 %v5725
    %v6087 = vunpack.c.l.b16 %v5726
    %v6088 = vunpack.c.h.b16 %v5726
    %v6089 = vunpack.c.l.b16 %v5727
    %v6090 = vunpack.c.h.b16 %v5727
    %v6091 = vunpack.c.l.b16 %v5728
    %v6092 = vunpack.c.h.b16 %v5728
    %v6093 = vunpack.c.l.b16 %v5729
    %v6094 = vunpack.c.h.b16 %v5729
    %v6095 = vunpack.c.l.b16 %v5730
    %v6096 = vunpack.c.h.b16 %v5730
    %v6097 = vunpack.c.l.b16 %v5731
    %v6098 = vunpack.c.h.b16 %v5731
    %v6099 = vunpack.c.l.b16 %v5732
    %v6100 = vunpack.c.h.b16 %v5732
    %v6101 = vunpack.c.l.b16 %v5733
    %v6102 = vunpack.c.h.b16 %v5733
    %v6103 = vunpack.c.l.b16 %v5734
    %v6104 = vunpack.c.h.b16 %v5734
    %v6105 = vunpack.c.l.b16 %v5735
    %v6106 = vunpack.c.h.b16 %v5735
    %v6107 = vunpack.c.l.b16 %v5736
    %v6108 = vunpack.c.h.b16 %v5736
    %v6109 = vunpack.c.l.b16 %v5737
    %v6110 = vunpack.c.h.b16 %v5737
    %v6111 = vunpack.c.l.b16 %v5738
    %v6112 = vunpack.c.h.b16 %v5738
    %v6113 = vunpack.c.l.b16 %v5739
    %v6114 = vunpack.c.h.b16 %v5739
    %v6115 = vunpack.c.l.b16 %v5740
    %v6116 = vunpack.c.h.b16 %v5740
    %v6117 = vunpack.c.l.b16 %v5741
    %v6118 = vunpack.c.h.b16 %v5741
    %v6119 = vunpack.c.l.b16 %v5742
    %v6120 = vunpack.c.h.b16 %v5742
    %v6121 = vunpack.c.l.b16 %v5743
    %v6122 = vunpack.c.h.b16 %v5743
    %v6123 = vunpack.c.l.b16 %v5744
    %v6124 = vunpack.c.h.b16 %v5744
    %v6125 = vunpack.c.l.b16 %v5745
    %v6126 = vunpack.c.h.b16 %v5745
    %v6127 = vunpack.c.l.b16 %v5746
    %v6128 = vunpack.c.h.b16 %v5746
    %v6129 = vunpack.c.l.b16 %v5747
    %v6130 = vunpack.c.h.b16 %v5747
    %v6131 = vunpack.c.l.b16 %v5748
    %v6132 = vunpack.c.h.b16 %v5748
    %v6133 = vunpack.c.l.b16 %v5749
    %v6134 = vunpack.c.h.b16 %v5749
    %v6135 = vunpack.c.l.b16 %v5750
    %v6136 = vunpack.c.h.b16 %v5750
    %v6137 = vunpack.c.l.b16 %v5751
    %v6138 = vunpack.c.h.b16 %v5751
    %v6139 = vunpack.c.l.b16 %v5752
    %v6140 = vunpack.c.h.b16 %v5752
    %v6141 = vunpack.c.l.b16 %v5753
    %v6142 = vunpack.c.h.b16 %v5753
    %v6143 = vunpack.c.l.b16 %v5754
    %v6144 = vunpack.c.h.b16 %v5754
    %v6145 = vunpack.c.l.b16 %v5755
    %v6146 = vunpack.c.h.b16 %v5755
    %v6147 = vunpack.c.l.b16 %v5756
    %v6148 = vunpack.c.h.b16 %v5756
    %v6149 = vunpack.c.l.b16 %v5757
    %v6150 = vunpack.c.h.b16 %v5757
    %v6151 = vunpack.c.l.b16 %v5758
    %v6152 = vunpack.c.h.b16 %v5758
    %v6153 = vunpack.c.l.b16 %v5759
    %v6154 = vunpack.c.h.b16 %v5759
    %v6155 = vunpack.c.l.b16 %v5760
    %v6156 = vunpack.c.h.b16 %v5760
    %v6157 = vunpack.c.l.b16 %v5761
    %v6158 = vunpack.c.h.b16 %v5761
    %v6159 = vunpack.c.l.b16 %v5762
    %v6160 = vunpack.c.h.b16 %v5762
    %v6161 = vunpack.c.l.b16 %v5763
    %v6162 = vunpack.c.h.b16 %v5763
    %v6163 = vunpack.c.l.b16 %v5764
    %v6164 = vunpack.c.h.b16 %v5764
    %v6165 = vunpack.c.l.b16 %v5765
    %v6166 = vunpack.c.h.b16 %v5765
    %v6167 = vunpack.c.l.b16 %v5766
    %v6168 = vunpack.c.h.b16 %v5766
    %v6169 = vunpack.c.l.b16 %v5767
    %v6170 = vunpack.c.h.b16 %v5767
    %v6171 = vunpack.c.l.b16 %v5768
    %v6172 = vunpack.c.h.b16 %v5768
    %v6173 = vunpack.c.l.b16 %v5769
    %v6174 = vunpack.c.h.b16 %v5769
    %v6175 = vunpack.c.l.b16 %v5770
    %v6176 = vunpack.c.h.b16 %v5770
    %v6177 = vunpack.c.l.b16 %v5771
    %v6178 = vunpack.c.h.b16 %v5771
    %v6179 = vpack.c.b16 %v5925, %v5923
    %v6180 = vpack.c.b16 %v5926, %v5924
    %v6181 = vpack.c.b16 %v5929, %v5927
    %v6182 = vpack.c.b16 %v5930, %v5928
    %v6183 = vpack.c.b16 %v5933, %v5931
    %v6184 = vpack.c.b16 %v5934, %v5932
    %v6185 = vpack.c.b16 %v5937, %v5935
    %v6186 = vpack.c.b16 %v5938, %v5936
    %v6187 = vpack.c.b16 %v5941, %v5939
    %v6188 = vpack.c.b16 %v5942, %v5940
    %v6189 = vpack.c.b16 %v5945, %v5943
    %v6190 = vpack.c.b16 %v5946, %v5944
    %v6191 = vpack.c.b16 %v5949, %v5947
    %v6192 = vpack.c.b16 %v5950, %v5948
    %v6193 = vpack.c.b16 %v5953, %v5951
    %v6194 = vpack.c.b16 %v5954, %v5952
    %v6195 = vpack.c.b16 %v5957, %v5955
    %v6196 = vpack.c.b16 %v5958, %v5956
    %v6197 = vpack.c.b16 %v5961, %v5959
    %v6198 = vpack.c.b16 %v5962, %v5960
    %v6199 = vpack.c.b16 %v5965, %v5963
    %v6200 = vpack.c.b16 %v5966, %v5964
    %v6201 = vpack.c.b16 %v5969, %v5967
    %v6202 = vpack.c.b16 %v5970, %v5968
    %v6203 = vpack.c.b16 %v5973, %v5971
    %v6204 = vpack.c.b16 %v5974, %v5972
    %v6205 = vpack.c.b16 %v5977, %v5975
    %v6206 = vpack.c.b16 %v5978, %v5976
    %v6207 = vpack.c.b16 %v5981, %v5979
    %v6208 = vpack.c.b16 %v5982, %v5980
    %v6209 = vpack.c.b16 %v5985, %v5983
    %v6210 = vpack.c.b16 %v5986, %v5984
    %v6211 = vpack.c.b16 %v5989, %v5987
    %v6212 = vpack.c.b16 %v5990, %v5988
    %v6213 = vpack.c.b16 %v5993, %v5991
    %v6214 = vpack.c.b16 %v5994, %v5992
    %v6215 = vpack.c.b16 %v5997, %v5995
    %v6216 = vpack.c.b16 %v5998, %v5996
    %v6217 = vpack.c.b16 %v6001, %v5999
    %v6218 = vpack.c.b16 %v6002, %v6000
    %v6219 = vpack.c.b16 %v6005, %v6003
    %v6220 = vpack.c.b16 %v6006, %v6004
    %v6221 = vpack.c.b16 %v6009, %v6007
    %v6222 = vpack.c.b16 %v6010, %v6008
    %v6223 = vpack.c.b16 %v6013, %v6011
    %v6224 = vpack.c.b16 %v6014, %v6012
    %v6225 = vpack.c.b16 %v6017, %v6015
    %v6226 = vpack.c.b16 %v6018, %v6016
    %v6227 = vpack.c.b16 %v6021, %v6019
    %v6228 = vpack.c.b16 %v6022, %v6020
    %v6229 = vpack.c.b16 %v6025, %v6023
    %v6230 = vpack.c.b16 %v6026, %v6024
    %v6231 = vpack.c.b16 %v6029, %v6027
    %v6232 = vpack.c.b16 %v6030, %v6028
    %v6233 = vpack.c.b16 %v6033, %v6031
    %v6234 = vpack.c.b16 %v6034, %v6032
    %v6235 = vpack.c.b16 %v6037, %v6035
    %v6236 = vpack.c.b16 %v6038, %v6036
    %v6237 = vpack.c.b16 %v6041, %v6039
    %v6238 = vpack.c.b16 %v6042, %v6040
    %v6239 = vpack.c.b16 %v6045, %v6043
    %v6240 = vpack.c.b16 %v6046, %v6044
    %v6241 = vpack.c.b16 %v6049, %v6047
    %v6242 = vpack.c.b16 %v6050, %v6048
    %v6243 = vpack.c.b16 %v6053, %v6051
    %v6244 = vpack.c.b16 %v6054, %v6052
    %v6245 = vpack.c.b16 %v6057, %v6055
    %v6246 = vpack.c.b16 %v6058, %v6056
    %v6247 = vpack.c.b16 %v6061, %v6059
    %v6248 = vpack.c.b16 %v6062, %v6060
    %v6249 = vpack.c.b16 %v6065, %v6063
    %v6250 = vpack.c.b16 %v6066, %v6064
    %v6251 = vpack.c.b16 %v6069, %v6067
    %v6252 = vpack.c.b16 %v6070, %v6068
    %v6253 = vpack.c.b16 %v6073, %v6071
    %v6254 = vpack.c.b16 %v6074, %v6072
    %v6255 = vpack.c.b16 %v6077, %v6075
    %v6256 = vpack.c.b16 %v6078, %v6076
    %v6257 = vpack.c.b16 %v6081, %v6079
    %v6258 = vpack.c.b16 %v6082, %v6080
    %v6259 = vpack.c.b16 %v6085, %v6083
    %v6260 = vpack.c.b16 %v6086, %v6084
    %v6261 = vpack.c.b16 %v6089, %v6087
    %v6262 = vpack.c.b16 %v6090, %v6088
    %v6263 = vpack.c.b16 %v6093, %v6091
    %v6264 = vpack.c.b16 %v6094, %v6092
    %v6265 = vpack.c.b16 %v6097, %v6095
    %v6266 = vpack.c.b16 %v6098, %v6096
    %v6267 = vpack.c.b16 %v6101, %v6099
    %v6268 = vpack.c.b16 %v6102, %v6100
    %v6269 = vpack.c.b16 %v6105, %v6103
    %v6270 = vpack.c.b16 %v6106, %v6104
    %v6271 = vpack.c.b16 %v6109, %v6107
    %v6272 = vpack.c.b16 %v6110, %v6108
    %v6273 = vpack.c.b16 %v6113, %v6111
    %v6274 = vpack.c.b16 %v6114, %v6112
    %v6275 = vpack.c.b16 %v6117, %v6115
    %v6276 = vpack.c.b16 %v6118, %v6116
    %v6277 = vpack.c.b16 %v6121, %v6119
    %v6278 = vpack.c.b16 %v6122, %v6120
    %v6279 = vpack.c.b16 %v6125, %v6123
    %v6280 = vpack.c.b16 %v6126, %v6124
    %v6281 = vpack.c.b16 %v6129, %v6127
    %v6282 = vpack.c.b16 %v6130, %v6128
    %v6283 = vpack.c.b16 %v6133, %v6131
    %v6284 = vpack.c.b16 %v6134, %v6132
    %v6285 = vpack.c.b16 %v6137, %v6135
    %v6286 = vpack.c.b16 %v6138, %v6136
    %v6287 = vpack.c.b16 %v6141, %v6139
    %v6288 = vpack.c.b16 %v6142, %v6140
    %v6289 = vpack.c.b16 %v6145, %v6143
    %v6290 = vpack.c.b16 %v6146, %v6144
    %v6291 = vpack.c.b16 %v6149, %v6147
    %v6292 = vpack.c.b16 %v6150, %v6148
    %v6293 = vpack.c.b16 %v6153, %v6151
    %v6294 = vpack.c.b16 %v6154, %v6152
    %v6295 = vpack.c.b16 %v6157, %v6155
    %v6296 = vpack.c.b16 %v6158, %v6156
    %v6297 = vpack.c.b16 %v6161, %v6159
    %v6298 = vpack.c.b16 %v6162, %v6160
    %v6299 = vpack.c.b16 %v6165, %v6163
    %v6300 = vpack.c.b16 %v6166, %v6164
    %v6301 = vpack.c.b16 %v6169, %v6167
    %v6302 = vpack.c.b16 %v6170, %v6168
    %v6303 = vpack.c.b16 %v6173, %v6171
    %v6304 = vpack.c.b16 %v6174, %v6172
    %v6305 = vpack.c.b16 %v6177, %v6175
    %v6306 = vpack.c.b16 %v6178, %v6176
    %6435 = vmatpush.bf16.msra.mxu0 %v6193
    %6436 = vmatpush.bf16.msra.mxu0 %v6191
    %6437 = vmatpush.bf16.msra.mxu0 %v6189
    %6438 = vmatpush.bf16.msra.mxu0 %v6187
    %6439 = vmatpush.bf16.msra.mxu0 %v6185
    %6440 = vmatpush.bf16.msra.mxu0 %v6183
    %6441 = vmatpush.bf16.msra.mxu0 %v6181
    %6442 = vmatpush.bf16.msra.mxu0 %v6179
    %6443 = vmatmul.bf16.gmra.mxu0 %v5774
    %v6444 = vpop.f32.mrf.mxu0
    %v6445 = vadd.f32 %v5791, %v6444
    %v6446 = vpop.f32.mrf.mxu0
    %v6447 = vadd.f32 %v5791, %v6446
    %6448 = vmatmul.bf16.gmra.mxu0 %v5782
    %v6449 = vpop.f32.mrf.mxu0
    %v6450 = vadd.f32 %v5791, %v6449
    %v6451 = vpop.f32.mrf.mxu0
    %v6452 = vadd.f32 %v5791, %v6451
    %6453 = vdwg.mxu0
    %6454 = vmatpush.bf16.msra.mxu0 %v6209
    %6455 = vmatpush.bf16.msra.mxu0 %v6207
    %6456 = vmatpush.bf16.msra.mxu0 %v6205
    %6457 = vmatpush.bf16.msra.mxu0 %v6203
    %6458 = vmatpush.bf16.msra.mxu0 %v6201
    %6459 = vmatpush.bf16.msra.mxu0 %v6199
    %6460 = vmatpush.bf16.msra.mxu0 %v6197
    %6461 = vmatpush.bf16.msra.mxu0 %v6195
    %6462 = vmatmul.bf16.gmra.mxu0 %v5775
    %v6463 = vpop.f32.mrf.mxu0
    %v6464 = vadd.f32 %v6445, %v6463
    %v6465 = vpop.f32.mrf.mxu0
    %v6466 = vadd.f32 %v6447, %v6465
    %6467 = vmatmul.bf16.gmra.mxu0 %v5783
    %v6468 = vpop.f32.mrf.mxu0
    %v6469 = vadd.f32 %v6450, %v6468
    %v6470 = vpop.f32.mrf.mxu0
    %v6471 = vadd.f32 %v6452, %v6470
    %6472 = vdwg.mxu0
    %6473 = vmatpush.bf16.msra.mxu0 %v6225
    %6474 = vmatpush.bf16.msra.mxu0 %v6223
    %6475 = vmatpush.bf16.msra.mxu0 %v6221
    %6476 = vmatpush.bf16.msra.mxu0 %v6219
    %6477 = vmatpush.bf16.msra.mxu0 %v6217
    %6478 = vmatpush.bf16.msra.mxu0 %v6215
    %6479 = vmatpush.bf16.msra.mxu0 %v6213
    %6480 = vmatpush.bf16.msra.mxu0 %v6211
    %6481 = vmatmul.bf16.gmra.mxu0 %v5776
    %v6482 = vpop.f32.mrf.mxu0
    %v6483 = vadd.f32 %v6464, %v6482
    %v6484 = vpop.f32.mrf.mxu0
    %v6485 = vadd.f32 %v6466, %v6484
    %6486 = vmatmul.bf16.gmra.mxu0 %v5784
    %v6487 = vpop.f32.mrf.mxu0
    %v6488 = vadd.f32 %v6469, %v6487
    %v6489 = vpop.f32.mrf.mxu0
    %v6490 = vadd.f32 %v6471, %v6489
    %6491 = vdwg.mxu0
    %6492 = vmatpush.bf16.msra.mxu0 %v6241
    %6493 = vmatpush.bf16.msra.mxu0 %v6239
    %6494 = vmatpush.bf16.msra.mxu0 %v6237
    %6495 = vmatpush.bf16.msra.mxu0 %v6235
    %6496 = vmatpush.bf16.msra.mxu0 %v6233
    %6497 = vmatpush.bf16.msra.mxu0 %v6231
    %6498 = vmatpush.bf16.msra.mxu0 %v6229
    %6499 = vmatpush.bf16.msra.mxu0 %v6227
    %6500 = vmatmul.bf16.gmra.mxu0 %v5777
    %v6501 = vpop.f32.mrf.mxu0
    %v6502 = vadd.f32 %v6483, %v6501
    %v6503 = vpop.f32.mrf.mxu0
    %v6504 = vadd.f32 %v6485, %v6503
    %6505 = vmatmul.bf16.gmra.mxu0 %v5785
    %v6506 = vpop.f32.mrf.mxu0
    %v6507 = vadd.f32 %v6488, %v6506
    %v6508 = vpop.f32.mrf.mxu0
    %v6509 = vadd.f32 %v6490, %v6508
    %6510 = vdwg.mxu0
    %6511 = vmatpush.bf16.msra.mxu0 %v6257
    %6512 = vmatpush.bf16.msra.mxu0 %v6255
    %6513 = vmatpush.bf16.msra.mxu0 %v6253
    %6514 = vmatpush.bf16.msra.mxu0 %v6251
    %6515 = vmatpush.bf16.msra.mxu0 %v6249
    %6516 = vmatpush.bf16.msra.mxu0 %v6247
    %6517 = vmatpush.bf16.msra.mxu0 %v6245
    %6518 = vmatpush.bf16.msra.mxu0 %v6243
    %6519 = vmatmul.bf16.gmra.mxu0 %v5778
    %v6520 = vpop.f32.mrf.mxu0
    %v6521 = vadd.f32 %v6502, %v6520
    %v6522 = vpop.f32.mrf.mxu0
    %v6523 = vadd.f32 %v6504, %v6522
    %6524 = vmatmul.bf16.gmra.mxu0 %v5786
    %v6525 = vpop.f32.mrf.mxu0
    %v6526 = vadd.f32 %v6507, %v6525
    %v6527 = vpop.f32.mrf.mxu0
    %v6528 = vadd.f32 %v6509, %v6527
    %6529 = vdwg.mxu0
    %6530 = vmatpush.bf16.msra.mxu0 %v6273
    %6531 = vmatpush.bf16.msra.mxu0 %v6271
    %6532 = vmatpush.bf16.msra.mxu0 %v6269
    %6533 = vmatpush.bf16.msra.mxu0 %v6267
    %6534 = vmatpush.bf16.msra.mxu0 %v6265
    %6535 = vmatpush.bf16.msra.mxu0 %v6263
    %6536 = vmatpush.bf16.msra.mxu0 %v6261
    %6537 = vmatpush.bf16.msra.mxu0 %v6259
    %6538 = vmatmul.bf16.gmra.mxu0 %v5779
    %v6539 = vpop.f32.mrf.mxu0
    %v6540 = vadd.f32 %v6521, %v6539
    %v6541 = vpop.f32.mrf.mxu0
    %v6542 = vadd.f32 %v6523, %v6541
    %6543 = vmatmul.bf16.gmra.mxu0 %v5787
    %v6544 = vpop.f32.mrf.mxu0
    %v6545 = vadd.f32 %v6526, %v6544
    %v6546 = vpop.f32.mrf.mxu0
    %v6547 = vadd.f32 %v6528, %v6546
    %6548 = vdwg.mxu0
    %6549 = vmatpush.bf16.msra.mxu0 %v6289
    %6550 = vmatpush.bf16.msra.mxu0 %v6287
    %6551 = vmatpush.bf16.msra.mxu0 %v6285
    %6552 = vmatpush.bf16.msra.mxu0 %v6283
    %6553 = vmatpush.bf16.msra.mxu0 %v6281
    %6554 = vmatpush.bf16.msra.mxu0 %v6279
    %6555 = vmatpush.bf16.msra.mxu0 %v6277
    %6556 = vmatpush.bf16.msra.mxu0 %v6275
    %6557 = vmatmul.bf16.gmra.mxu0 %v5780
    %v6558 = vpop.f32.mrf.mxu0
    %v6559 = vadd.f32 %v6540, %v6558
    %v6560 = vpop.f32.mrf.mxu0
    %v6561 = vadd.f32 %v6542, %v6560
    %6562 = vmatmul.bf16.gmra.mxu0 %v5788
    %v6563 = vpop.f32.mrf.mxu0
    %v6564 = vadd.f32 %v6545, %v6563
    %v6565 = vpop.f32.mrf.mxu0
    %v6566 = vadd.f32 %v6547, %v6565
    %6567 = vdwg.mxu0
    %6568 = vmatpush.bf16.msra.mxu0 %v6305
    %6569 = vmatpush.bf16.msra.mxu0 %v6303
    %6570 = vmatpush.bf16.msra.mxu0 %v6301
    %6571 = vmatpush.bf16.msra.mxu0 %v6299
    %6572 = vmatpush.bf16.msra.mxu0 %v6297
    %6573 = vmatpush.bf16.msra.mxu0 %v6295
    %6574 = vmatpush.bf16.msra.mxu0 %v6293
    %6575 = vmatpush.bf16.msra.mxu0 %v6291
    %6576 = vmatmul.bf16.gmra.mxu0 %v5781
    %v6577 = vpop.f32.mrf.mxu0
    %v6578 = vadd.f32 %v6559, %v6577
    %v6579 = vpop.f32.mrf.mxu0
    %v6580 = vadd.f32 %v6561, %v6579
    %6581 = vmatmul.bf16.gmra.mxu0 %v5789
    %v6582 = vpop.f32.mrf.mxu0
    %v6583 = vadd.f32 %v6564, %v6582
    %v6584 = vpop.f32.mrf.mxu0
    %v6585 = vadd.f32 %v6566, %v6584
    %6586 = vdwg.mxu0
    %6587 = vmatpush.bf16.msra.mxu0 %v6194
    %6588 = vmatpush.bf16.msra.mxu0 %v6192
    %6589 = vmatpush.bf16.msra.mxu0 %v6190
    %6590 = vmatpush.bf16.msra.mxu0 %v6188
    %6591 = vmatpush.bf16.msra.mxu0 %v6186
    %6592 = vmatpush.bf16.msra.mxu0 %v6184
    %6593 = vmatpush.bf16.msra.mxu0 %v6182
    %6594 = vmatpush.bf16.msra.mxu0 %v6180
    %6595 = vmatmul.bf16.gmra.mxu0 %v5774
    %v6596 = vpop.f32.mrf.mxu0
    %v6597 = vadd.f32 %v5792, %v6596
    %v6598 = vpop.f32.mrf.mxu0
    %v6599 = vadd.f32 %v5792, %v6598
    %6600 = vmatmul.bf16.gmra.mxu0 %v5782
    %v6601 = vpop.f32.mrf.mxu0
    %v6602 = vadd.f32 %v5792, %v6601
    %v6603 = vpop.f32.mrf.mxu0
    %v6604 = vadd.f32 %v5792, %v6603
    %6605 = vdwg.mxu0
    %6606 = vmatpush.bf16.msra.mxu0 %v6210
    %6607 = vmatpush.bf16.msra.mxu0 %v6208
    %6608 = vmatpush.bf16.msra.mxu0 %v6206
    %6609 = vmatpush.bf16.msra.mxu0 %v6204
    %6610 = vmatpush.bf16.msra.mxu0 %v6202
    %6611 = vmatpush.bf16.msra.mxu0 %v6200
    %6612 = vmatpush.bf16.msra.mxu0 %v6198
    %6613 = vmatpush.bf16.msra.mxu0 %v6196
    %6614 = vmatmul.bf16.gmra.mxu0 %v5775
    %v6615 = vpop.f32.mrf.mxu0
    %v6616 = vadd.f32 %v6597, %v6615
    %v6617 = vpop.f32.mrf.mxu0
    %v6618 = vadd.f32 %v6599, %v6617
    %6619 = vmatmul.bf16.gmra.mxu0 %v5783
    %v6620 = vpop.f32.mrf.mxu0
    %v6621 = vadd.f32 %v6602, %v6620
    %v6622 = vpop.f32.mrf.mxu0
    %v6623 = vadd.f32 %v6604, %v6622
    %6624 = vdwg.mxu0
    %6625 = vmatpush.bf16.msra.mxu0 %v6226
    %6626 = vmatpush.bf16.msra.mxu0 %v6224
    %6627 = vmatpush.bf16.msra.mxu0 %v6222
    %6628 = vmatpush.bf16.msra.mxu0 %v6220
    %6629 = vmatpush.bf16.msra.mxu0 %v6218
    %6630 = vmatpush.bf16.msra.mxu0 %v6216
    %6631 = vmatpush.bf16.msra.mxu0 %v6214
    %6632 = vmatpush.bf16.msra.mxu0 %v6212
    %6633 = vmatmul.bf16.gmra.mxu0 %v5776
    %v6634 = vpop.f32.mrf.mxu0
    %v6635 = vadd.f32 %v6616, %v6634
    %v6636 = vpop.f32.mrf.mxu0
    %v6637 = vadd.f32 %v6618, %v6636
    %6638 = vmatmul.bf16.gmra.mxu0 %v5784
    %v6639 = vpop.f32.mrf.mxu0
    %v6640 = vadd.f32 %v6621, %v6639
    %v6641 = vpop.f32.mrf.mxu0
    %v6642 = vadd.f32 %v6623, %v6641
    %6643 = vdwg.mxu0
    %6644 = vmatpush.bf16.msra.mxu0 %v6242
    %6645 = vmatpush.bf16.msra.mxu0 %v6240
    %6646 = vmatpush.bf16.msra.mxu0 %v6238
    %6647 = vmatpush.bf16.msra.mxu0 %v6236
    %6648 = vmatpush.bf16.msra.mxu0 %v6234
    %6649 = vmatpush.bf16.msra.mxu0 %v6232
    %6650 = vmatpush.bf16.msra.mxu0 %v6230
    %6651 = vmatpush.bf16.msra.mxu0 %v6228
    %6652 = vmatmul.bf16.gmra.mxu0 %v5777
    %v6653 = vpop.f32.mrf.mxu0
    %v6654 = vadd.f32 %v6635, %v6653
    %v6655 = vpop.f32.mrf.mxu0
    %v6656 = vadd.f32 %v6637, %v6655
    %6657 = vmatmul.bf16.gmra.mxu0 %v5785
    %v6658 = vpop.f32.mrf.mxu0
    %v6659 = vadd.f32 %v6640, %v6658
    %v6660 = vpop.f32.mrf.mxu0
    %v6661 = vadd.f32 %v6642, %v6660
    %6662 = vdwg.mxu0
    %6663 = vmatpush.bf16.msra.mxu0 %v6258
    %6664 = vmatpush.bf16.msra.mxu0 %v6256
    %6665 = vmatpush.bf16.msra.mxu0 %v6254
    %6666 = vmatpush.bf16.msra.mxu0 %v6252
    %6667 = vmatpush.bf16.msra.mxu0 %v6250
    %6668 = vmatpush.bf16.msra.mxu0 %v6248
    %6669 = vmatpush.bf16.msra.mxu0 %v6246
    %6670 = vmatpush.bf16.msra.mxu0 %v6244
    %6671 = vmatmul.bf16.gmra.mxu0 %v5778
    %v6672 = vpop.f32.mrf.mxu0
    %v6673 = vadd.f32 %v6654, %v6672
    %v6674 = vpop.f32.mrf.mxu0
    %v6675 = vadd.f32 %v6656, %v6674
    %6676 = vmatmul.bf16.gmra.mxu0 %v5786
    %v6677 = vpop.f32.mrf.mxu0
    %v6678 = vadd.f32 %v6659, %v6677
    %v6679 = vpop.f32.mrf.mxu0
    %v6680 = vadd.f32 %v6661, %v6679
    %6681 = vdwg.mxu0
    %6682 = vmatpush.bf16.msra.mxu0 %v6274
    %6683 = vmatpush.bf16.msra.mxu0 %v6272
    %6684 = vmatpush.bf16.msra.mxu0 %v6270
    %6685 = vmatpush.bf16.msra.mxu0 %v6268
    %6686 = vmatpush.bf16.msra.mxu0 %v6266
    %6687 = vmatpush.bf16.msra.mxu0 %v6264
    %6688 = vmatpush.bf16.msra.mxu0 %v6262
    %6689 = vmatpush.bf16.msra.mxu0 %v6260
    %6690 = vmatmul.bf16.gmra.mxu0 %v5779
    %v6691 = vpop.f32.mrf.mxu0
    %v6692 = vadd.f32 %v6673, %v6691
    %v6693 = vpop.f32.mrf.mxu0
    %v6694 = vadd.f32 %v6675, %v6693
    %6695 = vmatmul.bf16.gmra.mxu0 %v5787
    %v6696 = vpop.f32.mrf.mxu0
    %v6697 = vadd.f32 %v6678, %v6696
    %v6698 = vpop.f32.mrf.mxu0
    %v6699 = vadd.f32 %v6680, %v6698
    %6700 = vdwg.mxu0
    %6701 = vmatpush.bf16.msra.mxu0 %v6290
    %6702 = vmatpush.bf16.msra.mxu0 %v6288
    %6703 = vmatpush.bf16.msra.mxu0 %v6286
    %6704 = vmatpush.bf16.msra.mxu0 %v6284
    %6705 = vmatpush.bf16.msra.mxu0 %v6282
    %6706 = vmatpush.bf16.msra.mxu0 %v6280
    %6707 = vmatpush.bf16.msra.mxu0 %v6278
    %6708 = vmatpush.bf16.msra.mxu0 %v6276
    %6709 = vmatmul.bf16.gmra.mxu0 %v5780
    %v6710 = vpop.f32.mrf.mxu0
    %v6711 = vadd.f32 %v6692, %v6710
    %v6712 = vpop.f32.mrf.mxu0
    %v6713 = vadd.f32 %v6694, %v6712
    %6714 = vmatmul.bf16.gmra.mxu0 %v5788
    %v6715 = vpop.f32.mrf.mxu0
    %v6716 = vadd.f32 %v6697, %v6715
    %v6717 = vpop.f32.mrf.mxu0
    %v6718 = vadd.f32 %v6699, %v6717
    %6719 = vdwg.mxu0
    %6720 = vmatpush.bf16.msra.mxu0 %v6306
    %6721 = vmatpush.bf16.msra.mxu0 %v6304
    %6722 = vmatpush.bf16.msra.mxu0 %v6302
    %6723 = vmatpush.bf16.msra.mxu0 %v6300
    %6724 = vmatpush.bf16.msra.mxu0 %v6298
    %6725 = vmatpush.bf16.msra.mxu0 %v6296
    %6726 = vmatpush.bf16.msra.mxu0 %v6294
    %6727 = vmatpush.bf16.msra.mxu0 %v6292
    %6728 = vmatmul.bf16.gmra.mxu0 %v5781
    %v6729 = vpop.f32.mrf.mxu0
    %v6730 = vadd.f32 %v6711, %v6729
    %v6731 = vpop.f32.mrf.mxu0
    %v6732 = vadd.f32 %v6713, %v6731
    %6733 = vmatmul.bf16.gmra.mxu0 %v5789
    %v6734 = vpop.f32.mrf.mxu0
    %v6735 = vadd.f32 %v6716, %v6734
    %v6736 = vpop.f32.mrf.mxu0
    %v6737 = vadd.f32 %v6718, %v6736
    %6738 = vdwg.mxu0
    %v6739 = vxor.u32 %v6578, 2147483648
    %v6740 = vxor.u32 %v6730, 2147483648
    %v6741 = vxor.u32 %v6580, 2147483648
    %v6742 = vxor.u32 %v6732, 2147483648
    %v6743 = vxor.u32 %v6583, 2147483648
    %v6744 = vxor.u32 %v6735, 2147483648
    %v6745 = vxor.u32 %v6585, 2147483648
    %v6746 = vxor.u32 %v6737, 2147483648
    %v6747 = vmul.f32 %v6739, 1.442695
    %v6748 = vpow.pop %v6747
    %v6749 = vmul.f32 %v6740, 1.442695
    %v6750 = vpow.pop %v6749
    %v6751 = vmul.f32 %v6741, 1.442695
    %v6752 = vpow.pop %v6751
    %v6753 = vmul.f32 %v6742, 1.442695
    %v6754 = vpow.pop %v6753
    %v6755 = vmul.f32 %v6743, 1.442695
    %v6756 = vpow.pop %v6755
    %v6757 = vmul.f32 %v6744, 1.442695
    %v6758 = vpow.pop %v6757
    %v6759 = vmul.f32 %v6745, 1.442695
    %v6760 = vpow.pop %v6759
    %v6761 = vmul.f32 %v6746, 1.442695
    %v6762 = vpow.pop %v6761
    %v6763 = vadd.f32 %v6748, 1.0
    %v6764 = vadd.f32 %v6750, 1.0
    %v6765 = vadd.f32 %v6752, 1.0
    %v6766 = vadd.f32 %v6754, 1.0
    %v6767 = vadd.f32 %v6756, 1.0
    %v6768 = vadd.f32 %v6758, 1.0
    %v6769 = vadd.f32 %v6760, 1.0
    %v6770 = vadd.f32 %v6762, 1.0
    %v6771 = vrcp.pop %v6763
    %v6772 = vmul.f32 %v6763, %v6771
    %v6773 = vsub.f32 1.0, %v6772
    %v6774 = vmul.f32 %v6771, %v6773
    %v6775 = vadd.f32 %v6771, %v6774
    %vm6776 = vweird.f32 %v6763
    %vm6777 = vweird.f32 %v6771
    %vm6778 = vmor %vm6776, %vm6777
    %v6779 = vsel %vm6778, %v6771, %v6775
    %v6780 = vand.u32 2147483647, %v6763
    %vm6781 = vcmp.eq.f32.partialorder %v6780, 8.507059e+37
    %v6782 = vand.u32 %v6763, 2147483648
    %v6783 = vor.u32 1.1754944e-38, %v6782
    %v6784 = vsel %vm6781, %v6783, %v6779
    %v6785 = vmul.f32 1.0, %v6784
    %v6786 = vrcp.pop %v6764
    %v6787 = vmul.f32 %v6764, %v6786
    %v6788 = vsub.f32 1.0, %v6787
    %v6789 = vmul.f32 %v6786, %v6788
    %v6790 = vadd.f32 %v6786, %v6789
    %vm6791 = vweird.f32 %v6764
    %vm6792 = vweird.f32 %v6786
    %vm6793 = vmor %vm6791, %vm6792
    %v6794 = vsel %vm6793, %v6786, %v6790
    %v6795 = vand.u32 2147483647, %v6764
    %vm6796 = vcmp.eq.f32.partialorder %v6795, 8.507059e+37
    %v6797 = vand.u32 %v6764, 2147483648
    %v6798 = vor.u32 1.1754944e-38, %v6797
    %v6799 = vsel %vm6796, %v6798, %v6794
    %v6800 = vmul.f32 1.0, %v6799
    %v6801 = vrcp.pop %v6765
    %v6802 = vmul.f32 %v6765, %v6801
    %v6803 = vsub.f32 1.0, %v6802
    %v6804 = vmul.f32 %v6801, %v6803
    %v6805 = vadd.f32 %v6801, %v6804
    %vm6806 = vweird.f32 %v6765
    %vm6807 = vweird.f32 %v6801
    %vm6808 = vmor %vm6806, %vm6807
    %v6809 = vsel %vm6808, %v6801, %v6805
    %v6810 = vand.u32 2147483647, %v6765
    %vm6811 = vcmp.eq.f32.partialorder %v6810, 8.507059e+37
    %v6812 = vand.u32 %v6765, 2147483648
    %v6813 = vor.u32 1.1754944e-38, %v6812
    %v6814 = vsel %vm6811, %v6813, %v6809
    %v6815 = vmul.f32 1.0, %v6814
    %v6816 = vrcp.pop %v6766
    %v6817 = vmul.f32 %v6766, %v6816
    %v6818 = vsub.f32 1.0, %v6817
    %v6819 = vmul.f32 %v6816, %v6818
    %v6820 = vadd.f32 %v6816, %v6819
    %vm6821 = vweird.f32 %v6766
    %vm6822 = vweird.f32 %v6816
    %vm6823 = vmor %vm6821, %vm6822
    %v6824 = vsel %vm6823, %v6816, %v6820
    %v6825 = vand.u32 2147483647, %v6766
    %vm6826 = vcmp.eq.f32.partialorder %v6825, 8.507059e+37
    %v6827 = vand.u32 %v6766, 2147483648
    %v6828 = vor.u32 1.1754944e-38, %v6827
    %v6829 = vsel %vm6826, %v6828, %v6824
    %v6830 = vmul.f32 1.0, %v6829
    %v6831 = vrcp.pop %v6767
    %v6832 = vmul.f32 %v6767, %v6831
    %v6833 = vsub.f32 1.0, %v6832
    %v6834 = vmul.f32 %v6831, %v6833
    %v6835 = vadd.f32 %v6831, %v6834
    %vm6836 = vweird.f32 %v6767
    %vm6837 = vweird.f32 %v6831
    %vm6838 = vmor %vm6836, %vm6837
    %v6839 = vsel %vm6838, %v6831, %v6835
    %v6840 = vand.u32 2147483647, %v6767
    %vm6841 = vcmp.eq.f32.partialorder %v6840, 8.507059e+37
    %v6842 = vand.u32 %v6767, 2147483648
    %v6843 = vor.u32 1.1754944e-38, %v6842
    %v6844 = vsel %vm6841, %v6843, %v6839
    %v6845 = vmul.f32 1.0, %v6844
    %v6846 = vrcp.pop %v6768
    %v6847 = vmul.f32 %v6768, %v6846
    %v6848 = vsub.f32 1.0, %v6847
    %v6849 = vmul.f32 %v6846, %v6848
    %v6850 = vadd.f32 %v6846, %v6849
    %vm6851 = vweird.f32 %v6768
    %vm6852 = vweird.f32 %v6846
    %vm6853 = vmor %vm6851, %vm6852
    %v6854 = vsel %vm6853, %v6846, %v6850
    %v6855 = vand.u32 2147483647, %v6768
    %vm6856 = vcmp.eq.f32.partialorder %v6855, 8.507059e+37
    %v6857 = vand.u32 %v6768, 2147483648
    %v6858 = vor.u32 1.1754944e-38, %v6857
    %v6859 = vsel %vm6856, %v6858, %v6854
    %v6860 = vmul.f32 1.0, %v6859
    %v6861 = vrcp.pop %v6769
    %v6862 = vmul.f32 %v6769, %v6861
    %v6863 = vsub.f32 1.0, %v6862
    %v6864 = vmul.f32 %v6861, %v6863
    %v6865 = vadd.f32 %v6861, %v6864
    %vm6866 = vweird.f32 %v6769
    %vm6867 = vweird.f32 %v6861
    %vm6868 = vmor %vm6866, %vm6867
    %v6869 = vsel %vm6868, %v6861, %v6865
    %v6870 = vand.u32 2147483647, %v6769
    %vm6871 = vcmp.eq.f32.partialorder %v6870, 8.507059e+37
    %v6872 = vand.u32 %v6769, 2147483648
    %v6873 = vor.u32 1.1754944e-38, %v6872
    %v6874 = vsel %vm6871, %v6873, %v6869
    %v6875 = vmul.f32 1.0, %v6874
    %v6876 = vrcp.pop %v6770
    %v6877 = vmul.f32 %v6770, %v6876
    %v6878 = vsub.f32 1.0, %v6877
    %v6879 = vmul.f32 %v6876, %v6878
    %v6880 = vadd.f32 %v6876, %v6879
    %vm6881 = vweird.f32 %v6770
    %vm6882 = vweird.f32 %v6876
    %vm6883 = vmor %vm6881, %vm6882
    %v6884 = vsel %vm6883, %v6876, %v6880
    %v6885 = vand.u32 2147483647, %v6770
    %vm6886 = vcmp.eq.f32.partialorder %v6885, 8.507059e+37
    %v6887 = vand.u32 %v6770, 2147483648
    %v6888 = vor.u32 1.1754944e-38, %v6887
    %v6889 = vsel %vm6886, %v6888, %v6884
    %v6890 = vmul.f32 1.0, %v6889
    %6891 = vst [vmem:[#allocation13] sm:$0xff] %v6785
    %6892 = vst [vmem:[#allocation13 + $0x8] sm:$0xff] %v6800
    %6893 = vst [vmem:[#allocation13 + $0x10] sm:$0xff] %v6815
    %6894 = vst [vmem:[#allocation13 + $0x18] sm:$0xff] %v6830
    %6895 = vst [vmem:[#allocation13 + $0x20] sm:$0xff] %v6845
    %6896 = vst [vmem:[#allocation13 + $0x28] sm:$0xff] %v6860
    %6897 = vst [vmem:[#allocation13 + $0x30] sm:$0xff] %v6875
    %6898 = vst [vmem:[#allocation13 + $0x38] sm:$0xff] %v6890
    // Predicated region
    $region34: #{tpu_custom_call.1} parent=1 // pred_check
      _
    $region35: #{tpu_custom_call.1} parent=1 // pred_check_branch
      %6900 = sbr.rel (0) target = $region37
    $region36: #{tpu_custom_call.1} parent=1 // pred_region
      %6902 = vsyncadd [#allocation4], 0
      %s6904 = sshll.u32 [#allocation10], 4
      %s6905 = int_to_ptr.vmem [resolvable:$true] %s6904
      %s6906 = sshll.u32 %s4, 4
      %s6907 = int_to_ptr.hbm [resolvable:$true] %s6906
      %6909 = dma.vmem_to_hbm [thread:$0]  %s6905, 64, %s6907, [#allocation4]
    $region37: #{tpu_custom_call.1} parent=1 // pred_fallthru
      _
    // Predicated region
    $region38: #{tpu_custom_call.1} parent=1 // pred_check
      _
    $region39: #{tpu_custom_call.1} parent=1 // pred_check_branch
      %6911 = sbr.rel (0) target = $region41
    $region40: #{tpu_custom_call.1} parent=1 // pred_region
      %6913 = vsyncadd [#allocation12], 0
      %s6914 = sshll.u32 [#allocation11], 4
      %s6915 = int_to_ptr.vmem [resolvable:$true] %s6914
      %s6916 = sshll.u32 %s5, 4
      %s6917 = int_to_ptr.hbm [resolvable:$true] %s6916
      %6922 = dma.vmem_to_hbm [thread:$0]  %s6915, 512, %s6917, [#allocation12], 128, 128, 8
    $region41: #{tpu_custom_call.1} parent=1 // pred_fallthru
      _
    // Predicated region
    $region42: #{tpu_custom_call.1} parent=1 // pred_check
      _
    $region43: #{tpu_custom_call.1} parent=1 // pred_check_branch
      %6924 = sbr.rel (0) target = $region45
    $region44: #{tpu_custom_call.1} parent=1 // pred_region
      %6926 = vsyncadd [#allocation12], 0
      %s6927 = sshll.u32 [#allocation13], 4
      %s6928 = int_to_ptr.vmem [resolvable:$true] %s6927
      %s6929 = sshll.u32 %s6, 4
      %s6930 = int_to_ptr.hbm [resolvable:$true] %s6929
      %6935 = dma.vmem_to_hbm [thread:$0]  %s6928, 1024, %s6930, [#allocation12], 256, 256, 16
    $region45: #{tpu_custom_call.1} parent=1 // pred_fallthru
      _
    // Predicated region
    $region46: #{tpu_custom_call.1} parent=1 // pred_check
      _
    $region47: #{tpu_custom_call.1} parent=1 // pred_check_branch
      %6937 = sbr.rel (0) target = $region49
    $region48: #{tpu_custom_call.1} parent=1 // pred_region
      %6939 = dma.done [#allocation4], 64
    $region49: #{tpu_custom_call.1} parent=1 // pred_fallthru
      _
    // Predicated region
    $region50: #{tpu_custom_call.1} parent=1 // pred_check
      _
    $region51: #{tpu_custom_call.1} parent=1 // pred_check_branch
      %6941 = sbr.rel (0) target = $region53
    $region52: #{tpu_custom_call.1} parent=1 // pred_region
      %6943 = dma.done [#allocation12], 512
    $region53: #{tpu_custom_call.1} parent=1 // pred_fallthru
      _
    // Predicated region
    $region54: #{tpu_custom_call.1} parent=1 // pred_check
      _
    $region55: #{tpu_custom_call.1} parent=1 // pred_check_branch
      %6945 = sbr.rel (0) target = $region57
    $region56: #{tpu_custom_call.1} parent=1 // pred_region
      %6947 = dma.done [#allocation12], 1024
    $region57: #{tpu_custom_call.1} parent=1 // pred_fallthru
      _
    %6948 = vsyncpa [#allocation3], 1
    %6949 = vsyncpa [#allocation6], 1
    %6950 = vsyncpa [#allocation9], 1
    %6951 = vsyncpa [#allocation4], 1
    %6952 = vsyncpa [#allocation12], 1

</llo_original>
